<compile_context>
chip_gen: v5e
topology: v5e:2x2
jax: 0.10.0
libtpu: 0.0.40
codegen_flags: <defaults>
</compile_context>

<pallas_src>
import functools

import jax
import jax.numpy as jnp
from jax.experimental import pallas as pl
from jax.experimental.pallas import tpu as pltpu

BN_EPS = 1e-5


def _round_up(x, m):
    return ((x + m - 1) // m) * m


def _mosaic_params(semantics, est_bytes):
    # Cap well below the smallest per-core VMEM (v7x: 64 MiB) so double
    # buffering / internal scratch always has headroom; v5e/v6e have 128 MiB.
    vlim = int(min(max(2 * est_bytes, 32 * 2**20), 48 * 2**20))
    return pltpu.CompilerParams(dimension_semantics=semantics,
                                vmem_limit_bytes=vlim)


def _bn_fold(conv_bias, bn):
    scale = bn["gamma"] / jnp.sqrt(bn["var"] + BN_EPS)
    shift = (conv_bias - bn["mean"]) * scale + bn["beta"]
    return scale, shift


# ----------------------------------------------------------------------------
# Fused matmul kernel: relu?((x @ w) * scale + shift), bf16 MXU, fp32 acc.
# ----------------------------------------------------------------------------
def _fused_matmul_kernel(x_ref, w_ref, scale_ref, shift_ref, o_ref, acc_ref, *, relu):
    @pl.when(pl.program_id(2) == 0)
    def _():
        acc_ref[...] = jnp.zeros_like(acc_ref)

    acc_ref[...] += jnp.dot(x_ref[...], w_ref[...],
                            preferred_element_type=jnp.float32)

    @pl.when(pl.program_id(2) == pl.num_programs(2) - 1)
    def _():
        y = acc_ref[...] * scale_ref[...] + shift_ref[...]
        if relu:
            y = jnp.maximum(y, 0.0)
        o_ref[...] = y.astype(o_ref.dtype)


def fused_matmul(x, w, scale, shift, relu, out_dtype=jnp.bfloat16):
    M, K = x.shape
    _, N = w.shape
    x = x.astype(jnp.bfloat16)
    w = w.astype(jnp.bfloat16)
    scale2 = jnp.asarray(scale, jnp.float32).reshape(1, N)
    shift2 = jnp.asarray(shift, jnp.float32).reshape(1, N)

    tm = min(512, _round_up(M, 8))
    Mp = _round_up(M, tm)
    tk = 512 if K > 1024 else K
    Kp = _round_up(K, tk)
    tn = 256 if N > 512 else N
    Np = _round_up(N, tn)
    # v7x megacore: guarantee >= 2 blocks along a parallel axis so the small
    # latent-space matmuls don't idle one TensorCore.
    if (Mp // tm) * (Np // tn) == 1 and tm >= 16:
        tm = _round_up(tm // 2, 8)
        Mp = _round_up(M, tm)

    if (Mp, Kp) != (M, K):
        x = jnp.pad(x, ((0, Mp - M), (0, Kp - K)))
    if (Kp, Np) != (K, N):
        w = jnp.pad(w, ((0, Kp - K), (0, Np - N)))
    if Np != N:
        scale2 = jnp.pad(scale2, ((0, 0), (0, Np - N)))
        shift2 = jnp.pad(shift2, ((0, 0), (0, Np - N)))

    out_bytes = 2 if out_dtype == jnp.bfloat16 else 4
    est = (2 * (tm * tk + tk * tn) * 2 + 2 * tm * tn * out_bytes
           + tm * tn * 4 + 16 * tn * 4)

    out = pl.pallas_call(
        functools.partial(_fused_matmul_kernel, relu=relu),
        out_shape=jax.ShapeDtypeStruct((Mp, Np), out_dtype),
        grid=(Mp // tm, Np // tn, Kp // tk),
        in_specs=[
            pl.BlockSpec((tm, tk), lambda i, j, k: (i, k)),
            pl.BlockSpec((tk, tn), lambda i, j, k: (k, j)),
            pl.BlockSpec((1, tn), lambda i, j, k: (0, j)),
            pl.BlockSpec((1, tn), lambda i, j, k: (0, j)),
        ],
        out_specs=pl.BlockSpec((tm, tn), lambda i, j, k: (i, j)),
        scratch_shapes=[pltpu.VMEM((tm, tn), jnp.float32)],
        compiler_params=_mosaic_params(("parallel", "parallel", "arbitrary"), est),
    )(x, w, scale2, shift2)

    if (Mp, Np) != (M, N):
        out = out[:M, :N]
    return out


# ----------------------------------------------------------------------------
# Fused matmul + OutConv epilogue: (relu((x@w)*scale+shift)) @ w2 + b2.
# The intermediate (full-resolution, chans[0] channels) never hits HBM.
# ----------------------------------------------------------------------------
def _fused_matmul_out_kernel(x_ref, w_ref, scale_ref, shift_ref, w2_ref, b2_ref,
                             o_ref, acc_ref):
    @pl.when(pl.program_id(1) == 0)
    def _():
        acc_ref[...] = jnp.zeros_like(acc_ref)

    acc_ref[...] += jnp.dot(x_ref[...], w_ref[...],
                            preferred_element_type=jnp.float32)

    @pl.when(pl.program_id(1) == pl.num_programs(1) - 1)
    def _():
        y = jnp.maximum(acc_ref[...] * scale_ref[...] + shift_ref[...], 0.0)
        o_ref[...] = (jnp.dot(y.astype(jnp.bfloat16), w2_ref[...],
                              preferred_element_type=jnp.float32)
                      + b2_ref[...]).astype(o_ref.dtype)


def fused_matmul_out(x, w, scale, shift, w2, b2, out_dtype=jnp.float32):
    M, K = x.shape
    _, N = w.shape
    _, P = w2.shape
    x = x.astype(jnp.bfloat16)
    w = w.astype(jnp.bfloat16)
    w2 = jnp.asarray(w2, jnp.bfloat16)
    scale2 = jnp.asarray(scale, jnp.float32).reshape(1, N)
    shift2 = jnp.asarray(shift, jnp.float32).reshape(1, N)
    b2r = jnp.asarray(b2, jnp.float32).reshape(1, P)

    tm = min(512, _round_up(M, 8))
    Mp = _round_up(M, tm)
    if Mp // tm == 1 and tm >= 16:        # give both v7x TensorCores work
        tm = _round_up(tm // 2, 8)
        Mp = _round_up(M, tm)
    tk = 512 if K > 1024 else K
    Kp = _round_up(K, tk)

    if (Mp, Kp) != (M, K):
        x = jnp.pad(x, ((0, Mp - M), (0, Kp - K)))
    if Kp != K:
        w = jnp.pad(w, ((0, Kp - K), (0, 0)))

    est = (2 * (tm * tk + tk * N) * 2 + 2 * tm * P * 4 + tm * N * 4
           + N * P * 2 + 16 * (N + P) * 4)

    out = pl.pallas_call(
        _fused_matmul_out_kernel,
        out_shape=jax.ShapeDtypeStruct((Mp, P), out_dtype),
        grid=(Mp // tm, Kp // tk),
        in_specs=[
            pl.BlockSpec((tm, tk), lambda i, k: (i, k)),
            pl.BlockSpec((tk, N), lambda i, k: (k, 0)),
            pl.BlockSpec((1, N), lambda i, k: (0, 0)),
            pl.BlockSpec((1, N), lambda i, k: (0, 0)),
            pl.BlockSpec((N, P), lambda i, k: (0, 0)),
            pl.BlockSpec((1, P), lambda i, k: (0, 0)),
        ],
        out_specs=pl.BlockSpec((tm, P), lambda i, k: (i, 0)),
        scratch_shapes=[pltpu.VMEM((tm, N), jnp.float32)],
        compiler_params=_mosaic_params(("parallel", "arbitrary"), est),
    )(x, w, scale2, shift2, w2, b2r)

    return out[:M] if Mp != M else out


# ----------------------------------------------------------------------------
# 3x3x3 Conv + BN + ReLU (no HBM im2col).
#  * grid = (cout-tiles, batch, D): weights resident across (n, d); the padded
#    input volume block depends only on the batch index so it is DMA'd once per
#    (cout-tile, batch) instead of 3x per output plane.
#  * per D-plane the 9 in-plane taps are grouped along the MXU K dimension via
#    an in-VMEM (lv, 9*cin) slab -> 3 dots per step instead of 27 RMW passes.
# ----------------------------------------------------------------------------
def _conv3x3_kernel(x_ref, w_ref, scale_ref, shift_ref, o_ref, *, lv, wp, cin, relu):
    dj = pl.program_id(2)
    acc = None
    for a in range(3):                           # taps along D
        pv = x_ref[0, dj + a]                    # (hp*wp, cin) padded plane, bf16
        slab = jnp.concatenate(
            [pv[b * wp + c: b * wp + c + lv, :]  # shifted (kh, kw) tap rows
             for b in range(3) for c in range(3)],
            axis=-1)                             # (lv, 9*cin)
        part = jnp.dot(slab, w_ref[a], preferred_element_type=jnp.float32)
        acc = part if acc is None else acc + part   # register acc, no scratch RMW
    y = acc * scale_ref[...] + shift_ref[...]
    if relu:
        y = jnp.maximum(y, 0.0)
    o_ref[0, 0] = y.astype(o_ref.dtype)


def conv3x3_bn_relu(x, w, conv_bias, bn, relu=True):
    """Conv3d(k=3, pad=1, bias) + BatchNorm(fold) + ReLU on NDHWC bf16 input.

    x: (N, D, H, W, Cin);  w: PyTorch layout (Cout, Cin, 3, 3, 3).
    """
    n, d, h, wd, cin = x.shape
    cout = w.shape[0]
    wp = _round_up(wd + 2, 8)       # sublane-aligned padded row width
    hp = h + 3                      # extra low-side H pad keeps flat tap reads in bounds
    r = hp * wp
    lv = h * wp                     # rows computed per output plane (W still padded)
    dp = d + 2

    xp = jnp.pad(x.astype(jnp.bfloat16),
                 ((0, 0), (1, 1), (1, 2), (1, wp - wd - 1), (0, 0)))
    xp = xp.reshape(n, dp, r, cin)                 # free reshape

    # (cout, cin, 3,3,3) -> (kd, 9*cin, cout): row order (kh, kw, cin) matches
    # the in-kernel slab layout.
    wt = jnp.transpose(w, (2, 3, 4, 1, 0)).reshape(3, 9 * cin, cout).astype(jnp.bfloat16)
    scale, shift = _bn_fold(conv_bias, bn)

    tn = cout if cout <= 256 else 256              # Cout tiling for deep layers
    coutp = _round_up(cout, tn)
    if coutp != cout:
        wt = jnp.pad(wt, ((0, 0), (0, 0), (0, coutp - cout)))
        scale = jnp.pad(scale, (0, coutp - cout))
        shift = jnp.pad(shift, (0, coutp - cout))
    scale2 = scale.reshape(1, coutp).astype(jnp.float32)
    shift2 = shift.reshape(1, coutp).astype(jnp.float32)

    est = (2 * dp * r * cin * 2 + 2 * 3 * 9 * cin * tn * 2
           + 2 * lv * tn * 2 + lv * 9 * cin * 2 + lv * tn * 4 + 16 * tn * 4)

    out = pl.pallas_call(
        functools.partial(_conv3x3_kernel, lv=lv, wp=wp, cin=cin, relu=relu),
        out_shape=jax.ShapeDtypeStruct((n, d, lv, coutp), jnp.bfloat16),
        grid=(coutp // tn, n, d),          # cout-tile axis OUTERMOST (weight residency)
        in_specs=[
            pl.BlockSpec((1, dp, r, cin), lambda k, i, j: (i, 0, 0, 0)),
            pl.BlockSpec((3, 9 * cin, tn), lambda k, i, j: (0, 0, k)),
            pl.BlockSpec((1, tn), lambda k, i, j: (0, k)),
            pl.BlockSpec((1, tn), lambda k, i, j: (0, k)),
        ],
        out_specs=pl.BlockSpec((1, 1, lv, tn), lambda k, i, j: (i, j, 0, k)),
        compiler_params=_mosaic_params(("parallel", "parallel", "arbitrary"), est),
    )(xp, wt, scale2, shift2)

    # (n, d, H*wp, coutp) -> (n, d, H, W, cout): free reshape + slice off W pad.
    out = out.reshape(n, d, h, wp, coutp)[:, :, :, :wd, :cout]
    return out


def double_conv3(x, p):
    x = conv3x3_bn_relu(x, p["conv1"]["w"], p["conv1"]["b"], p["bn1"], relu=True)
    x = conv3x3_bn_relu(x, p["conv2"]["w"], p["conv2"]["b"], p["bn2"], relu=True)
    return x


# ----------------------------------------------------------------------------
# MaxPool3d(2): free reshape exposes the 2x2x2 window; reduction in-kernel.
# ----------------------------------------------------------------------------
def _maxpool_kernel(x_ref, o_ref, *, h2, w2):
    v = x_ref[...]                                        # (1, 2*h2, 2*w2, 2, c)
    v = jnp.maximum(v[:, :, :, 0, :], v[:, :, :, 1, :])   # w-pair
    v = jnp.maximum(v[:, :, :w2, :], v[:, :, w2:, :])     # h-pair
    v = jnp.maximum(v[:, :h2], v[:, h2:])                 # d-pair
    o_ref[...] = v


def maxpool3d_2(x):
    n, d, h, w, c = x.shape
    d2, h2, w2 = d // 2, h // 2, w // 2
    # Pure split/merge of adjacent dims -> free reshape (no XLA transpose).
    xr = x.reshape(n * d2, 2 * h2, 2 * w2, 2, c)
    blk = 4 * h2 * w2 * 2 * c * 2
    est = 8 * blk + 2 * h2 * w2 * c * 2
    out = pl.pallas_call(
        functools.partial(_maxpool_kernel, h2=h2, w2=w2),
        out_shape=jax.ShapeDtypeStruct((n * d2, h2, w2, c), x.dtype),
        grid=(n * d2,),
        in_specs=[pl.BlockSpec((1, 2 * h2, 2 * w2, 2, c),
                               lambda i: (i, 0, 0, 0, 0))],
        out_specs=pl.BlockSpec((1, h2, w2, c), lambda i: (i, 0, 0, 0)),
        compiler_params=_mosaic_params(("parallel",), est),
    )(xr)
    return out.reshape(n, d2, h2, w2, c)


# ----------------------------------------------------------------------------
# Decoder: ConvTranspose(k=2,s=2) + DoubleConv(k=1) are pointwise per input
# voxel, so they run as fused matmuls on flattened rows.  The deconv weight is
# folded into conv1; each stage appends a 3-bit sub-voxel digit to the row
# index (free reshape).  The spatial interleave happens once, at the very end.
# ----------------------------------------------------------------------------
def _decoder_up_conv1(rows, dec):
    w_up = dec["up"]["w"]                       # (Ci, Ci, 2, 2, 2)
    b_up = dec["up"]["b"]
    w1 = dec["conv"]["conv1"]["w"][:, :, 0, 0, 0]   # (Cmid, Ci)
    b1 = dec["conv"]["conv1"]["b"]
    ci = w_up.shape[0]
    cmid = w1.shape[0]

    w_up_k = jnp.transpose(w_up, (2, 3, 4, 0, 1)).reshape(8, ci, ci)  # (k, in, out)
    w1m = w1.T                                                        # (Ci, Cmid)
    comb = jnp.einsum("kio,om->kim", w_up_k, w1m)                     # (8, Ci, Cmid)
    wmat = jnp.transpose(comb, (1, 0, 2)).reshape(ci, 8 * cmid)
    bias_tot = b_up @ w1m + b1

    scale1, shift1 = _bn_fold(bias_tot, dec["conv"]["bn1"])
    y = fused_matmul(rows, wmat, jnp.tile(scale1, 8), jnp.tile(shift1, 8),
                     relu=True)
    return y.reshape(-1, cmid)                  # append sub-voxel digit (free)


def decoder_stage(rows, dec):
    y = _decoder_up_conv1(rows, dec)
    w2 = dec["conv"]["conv2"]["w"][:, :, 0, 0, 0]   # (Cout, Cmid)
    scale2, shift2 = _bn_fold(dec["conv"]["conv2"]["b"], dec["conv"]["bn2"])
    return fused_matmul(y, w2.T, scale2, shift2, relu=True)


def decoder_stage_fused_out(rows, dec, outconv):
    """Last decoder stage: conv2 + BN + ReLU with the 1x1 OutConv fused in the
    same kernel's epilogue (no HBM round trip of the chans[0] activation)."""
    y = _decoder_up_conv1(rows, dec)
    w2 = dec["conv"]["conv2"]["w"][:, :, 0, 0, 0]
    scale2, shift2 = _bn_fold(dec["conv"]["conv2"]["b"], dec["conv"]["bn2"])
    w_out = jnp.transpose(outconv["w"][:, :, 0, 0, 0], (1, 0))  # (chans0, ncls)
    return fused_matmul_out(y, w2.T, scale2, shift2, w_out, outconv["b"])


def _unscatter(rows, n, db, hb, wb, nb, ncls):
    """Scatter decoder rows (n,db,hb,wb,k1,...,k_nb,C) back to full resolution."""
    z = rows.reshape((n, db, hb, wb) + (2,) * (3 * nb) + (ncls,))
    a_ax = [4 + 3 * s for s in range(nb)]
    b_ax = [5 + 3 * s for s in range(nb)]
    c_ax = [6 + 3 * s for s in range(nb)]
    perm = [0, 1] + a_ax + [2] + b_ax + [3] + c_ax + [4 + 3 * nb]
    z = jnp.transpose(z, perm)
    s = 2 ** nb
    return z.reshape(n, db * s, hb * s, wb * s, ncls)


# ----------------------------------------------------------------------------
# Parameter init (deterministic, synthetic, PyTorch-like layouts)
# ----------------------------------------------------------------------------
def _init_conv(key, cout, cin, k):
    kw_, kb = jax.random.split(key)
    fan_in = cin * k ** 3
    bound = 1.0 / (fan_in ** 0.5)
    return {
        "w": jax.random.uniform(kw_, (cout, cin, k, k, k), jnp.float32, -bound, bound),
        "b": jax.random.uniform(kb, (cout,), jnp.float32, -bound, bound),
    }


def _init_convtranspose(key, cin, cout, k):
    kw_, kb = jax.random.split(key)
    fan_in = cout * k ** 3
    bound = 1.0 / (fan_in ** 0.5)
    return {
        "w": jax.random.uniform(kw_, (cin, cout, k, k, k), jnp.float32, -bound, bound),
        "b": jax.random.uniform(kb, (cout,), jnp.float32, -bound, bound),
    }


def _init_bn(key, c):
    k1, k2, k3 = jax.random.split(key, 3)
    return {
        "gamma": 1.0 + 0.1 * jax.random.normal(k1, (c,), jnp.float32),
        "beta": 0.1 * jax.random.normal(k2, (c,), jnp.float32),
        "mean": 0.1 * jax.random.normal(k3, (c,), jnp.float32),
        "var": jnp.ones((c,), jnp.float32),
    }


def init_ae_params(key, n_channels, n_classes, base_channels=32, num_blocks=4):
    chans = [base_channels * 2 ** i for i in range(num_blocks + 1)]
    keys = iter(jax.random.split(key, 128))

    def dconv(cin, cout, k):
        return {
            "conv1": _init_conv(next(keys), cout, cin, k),
            "bn1": _init_bn(next(keys), cout),
            "conv2": _init_conv(next(keys), cout, cout, k),
            "bn2": _init_bn(next(keys), cout),
        }

    params = {"incoming": dconv(n_channels, chans[0], 3)}
    params["encoders"] = [dconv(chans[i], chans[i + 1], 3) for i in range(num_blocks)]
    params["decoders"] = []
    for i in range(num_blocks, 0, -1):
        params["decoders"].append({
            "up": _init_convtranspose(next(keys), chans[i], chans[i], 2),
            "conv": dconv(chans[i], chans[i - 1], 1),
        })
    params["outconv"] = _init_conv(next(keys), n_classes, chans[0], 1)
    return params


# ----------------------------------------------------------------------------
# AE forward (matches the PyTorch module with part_idxs=None)
# ----------------------------------------------------------------------------
def ae_forward(params, x_ncdhw):
    x = jnp.transpose(x_ncdhw, (0, 2, 3, 4, 1)).astype(jnp.bfloat16)  # -> NDHWC

    x = double_conv3(x, params["incoming"])          # incoming DoubleConv
    for enc in params["encoders"]:                   # Encoder = MaxPool + DoubleConv
        x = maxpool3d_2(x)
        x = double_conv3(x, enc)

    n, db, hb, wb, cb = x.shape
    rows = x.reshape(-1, cb)                         # latent rows (part_idxs=None)
    decs = params["decoders"]
    for dec in decs[:-1]:                            # Decoder stack (pointwise)
        rows = decoder_stage(rows, dec)
    # Last decoder stage with the 1x1 OutConv fused into its epilogue.
    rows = decoder_stage_fused_out(rows, decs[-1], params["outconv"])

    nb = len(decs)
    ncls = params["outconv"]["w"].shape[0]
    y = _unscatter(rows, n, db, hb, wb, nb, ncls)    # single final interleave
    return jnp.transpose(y, (0, 4, 1, 2, 3))         # NDHWC -> NCDHW


if __name__ == "__main__":
    # Small but structurally faithful config:
    #   n_channels=4, n_classes=2, base_channels=4, num_blocks=2
    #   input (N, C, D, H, W) = (2, 4, 8, 8, 8)  (spatial divisible by 2**num_blocks)
    n_channels, n_classes, base_channels, num_blocks = 4, 2, 4, 2

    key = jax.random.PRNGKey(0)
    kp, kx = jax.random.split(key)
    params = init_ae_params(kp, n_channels, n_classes, base_channels, num_blocks)
    x = jax.random.normal(kx, (2, n_channels, 8, 8, 8), jnp.float32)

    fwd = jax.jit(ae_forward)
    out = jax.block_until_ready(fwd(params, x))
    assert out.shape == (2, n_classes, 8, 8, 8), out.shape
    assert bool(jnp.all(jnp.isfinite(out)))
    print("KERNEL_OK")
</pallas_src>

<mosaic_0001>
module attributes {stable_mosaic.version = 11 : i64} {
  func.func @_conv3x3_kernel(%arg0: i32, %arg1: i32, %arg2: i32, %arg3: memref<1x10x176x4xbf16, #tpu.memory_space<vmem>>, %arg4: memref<3x36x4xbf16, #tpu.memory_space<vmem>>, %arg5: memref<1x4xf32, #tpu.memory_space<vmem>>, %arg6: memref<1x4xf32, #tpu.memory_space<vmem>>, %arg7: memref<1x1x128x4xbf16, #tpu.memory_space<vmem>>) attributes {dimension_semantics = [#tpu.dimension_semantics<parallel>, #tpu.dimension_semantics<parallel>, #tpu.dimension_semantics<arbitrary>], iteration_bounds = array<i64: 1, 2, 8>, scalar_prefetch = 0 : i64, scratch_operands = 0 : i64, tpu.core_type = #tpu.core_type<tc>, window_params = [{transform_indices = @transform_0, window_bounds = array<i64: 1, 10, 176, 4>}, {transform_indices = @transform_1, window_bounds = array<i64: 3, 36, 4>}, {transform_indices = @transform_2, window_bounds = array<i64: 1, 4>}, {transform_indices = @transform_3, window_bounds = array<i64: 1, 4>}, {transform_indices = @transform_4, window_bounds = array<i64: 1, 1, 128, 4>}]} {
    %c0_i32 = arith.constant 0 : i32
    %0 = arith.addi %arg2, %c0_i32 : i32
    %c0 = arith.constant 0 : index
    %1 = arith.index_cast %0 : i32 to index
    %c0_0 = arith.constant 0 : index
    %c0_1 = arith.constant 0 : index
    %2 = vector.load %arg3[%c0, %1, %c0_0, %c0_1] : memref<1x10x176x4xbf16, #tpu.memory_space<vmem>>, vector<1x1x176x4xbf16>
    %3 = vector.shape_cast %2 : vector<1x1x176x4xbf16> to vector<176x4xbf16>
    %4 = vector.extract_strided_slice %3 {offsets = [0, 0], sizes = [128, 4], strides = [1, 1]} : vector<176x4xbf16> to vector<128x4xbf16>
    %5 = vector.extract_strided_slice %3 {offsets = [1, 0], sizes = [128, 4], strides = [1, 1]} : vector<176x4xbf16> to vector<128x4xbf16>
    %6 = vector.extract_strided_slice %3 {offsets = [2, 0], sizes = [128, 4], strides = [1, 1]} : vector<176x4xbf16> to vector<128x4xbf16>
    %7 = vector.extract_strided_slice %3 {offsets = [16, 0], sizes = [128, 4], strides = [1, 1]} : vector<176x4xbf16> to vector<128x4xbf16>
    %8 = vector.extract_strided_slice %3 {offsets = [17, 0], sizes = [128, 4], strides = [1, 1]} : vector<176x4xbf16> to vector<128x4xbf16>
    %9 = vector.extract_strided_slice %3 {offsets = [18, 0], sizes = [128, 4], strides = [1, 1]} : vector<176x4xbf16> to vector<128x4xbf16>
    %10 = vector.extract_strided_slice %3 {offsets = [32, 0], sizes = [128, 4], strides = [1, 1]} : vector<176x4xbf16> to vector<128x4xbf16>
    %11 = vector.extract_strided_slice %3 {offsets = [33, 0], sizes = [128, 4], strides = [1, 1]} : vector<176x4xbf16> to vector<128x4xbf16>
    %12 = vector.extract_strided_slice %3 {offsets = [34, 0], sizes = [128, 4], strides = [1, 1]} : vector<176x4xbf16> to vector<128x4xbf16>
    %13 = tpu.concatenate %4, %5, %6, %7, %8, %9, %10, %11, %12 in 1 : vector<128x4xbf16>, vector<128x4xbf16>, vector<128x4xbf16>, vector<128x4xbf16>, vector<128x4xbf16>, vector<128x4xbf16>, vector<128x4xbf16>, vector<128x4xbf16>, vector<128x4xbf16> -> vector<128x36xbf16>
    %c0_2 = arith.constant 0 : index
    %c0_3 = arith.constant 0 : index
    %c0_4 = arith.constant 0 : index
    %14 = vector.load %arg4[%c0_2, %c0_3, %c0_4] : memref<3x36x4xbf16, #tpu.memory_space<vmem>>, vector<1x36x4xbf16>
    %15 = vector.shape_cast %14 : vector<1x36x4xbf16> to vector<36x4xbf16>
    %cst = arith.constant dense<0.000000e+00> : vector<128x4xf32>
    %16 = tpu.matmul %13, %15, %cst {dimension_numbers = #tpu.dot_dimension_numbers<[1], [0], [0], [1], [0, 0, 1, 1], [], []>} : vector<128x36xbf16>, vector<36x4xbf16>, vector<128x4xf32> -> vector<128x4xf32>
    %c1_i32 = arith.constant 1 : i32
    %17 = arith.addi %arg2, %c1_i32 : i32
    %c0_5 = arith.constant 0 : index
    %18 = arith.index_cast %17 : i32 to index
    %c0_6 = arith.constant 0 : index
    %c0_7 = arith.constant 0 : index
    %19 = vector.load %arg3[%c0_5, %18, %c0_6, %c0_7] : memref<1x10x176x4xbf16, #tpu.memory_space<vmem>>, vector<1x1x176x4xbf16>
    %20 = vector.shape_cast %19 : vector<1x1x176x4xbf16> to vector<176x4xbf16>
    %21 = vector.extract_strided_slice %20 {offsets = [0, 0], sizes = [128, 4], strides = [1, 1]} : vector<176x4xbf16> to vector<128x4xbf16>
    %22 = vector.extract_strided_slice %20 {offsets = [1, 0], sizes = [128, 4], strides = [1, 1]} : vector<176x4xbf16> to vector<128x4xbf16>
    %23 = vector.extract_strided_slice %20 {offsets = [2, 0], sizes = [128, 4], strides = [1, 1]} : vector<176x4xbf16> to vector<128x4xbf16>
    %24 = vector.extract_strided_slice %20 {offsets = [16, 0], sizes = [128, 4], strides = [1, 1]} : vector<176x4xbf16> to vector<128x4xbf16>
    %25 = vector.extract_strided_slice %20 {offsets = [17, 0], sizes = [128, 4], strides = [1, 1]} : vector<176x4xbf16> to vector<128x4xbf16>
    %26 = vector.extract_strided_slice %20 {offsets = [18, 0], sizes = [128, 4], strides = [1, 1]} : vector<176x4xbf16> to vector<128x4xbf16>
    %27 = vector.extract_strided_slice %20 {offsets = [32, 0], sizes = [128, 4], strides = [1, 1]} : vector<176x4xbf16> to vector<128x4xbf16>
    %28 = vector.extract_strided_slice %20 {offsets = [33, 0], sizes = [128, 4], strides = [1, 1]} : vector<176x4xbf16> to vector<128x4xbf16>
    %29 = vector.extract_strided_slice %20 {offsets = [34, 0], sizes = [128, 4], strides = [1, 1]} : vector<176x4xbf16> to vector<128x4xbf16>
    %30 = tpu.concatenate %21, %22, %23, %24, %25, %26, %27, %28, %29 in 1 : vector<128x4xbf16>, vector<128x4xbf16>, vector<128x4xbf16>, vector<128x4xbf16>, vector<128x4xbf16>, vector<128x4xbf16>, vector<128x4xbf16>, vector<128x4xbf16>, vector<128x4xbf16> -> vector<128x36xbf16>
    %c1 = arith.constant 1 : index
    %c0_8 = arith.constant 0 : index
    %c0_9 = arith.constant 0 : index
    %31 = vector.load %arg4[%c1, %c0_8, %c0_9] : memref<3x36x4xbf16, #tpu.memory_space<vmem>>, vector<1x36x4xbf16>
    %32 = vector.shape_cast %31 : vector<1x36x4xbf16> to vector<36x4xbf16>
    %cst_10 = arith.constant dense<0.000000e+00> : vector<128x4xf32>
    %33 = tpu.matmul %30, %32, %cst_10 {dimension_numbers = #tpu.dot_dimension_numbers<[1], [0], [0], [1], [0, 0, 1, 1], [], []>} : vector<128x36xbf16>, vector<36x4xbf16>, vector<128x4xf32> -> vector<128x4xf32>
    %34 = arith.addf %16, %33 : vector<128x4xf32>
    %c2_i32 = arith.constant 2 : i32
    %35 = arith.addi %arg2, %c2_i32 : i32
    %c0_11 = arith.constant 0 : index
    %36 = arith.index_cast %35 : i32 to index
    %c0_12 = arith.constant 0 : index
    %c0_13 = arith.constant 0 : index
    %37 = vector.load %arg3[%c0_11, %36, %c0_12, %c0_13] : memref<1x10x176x4xbf16, #tpu.memory_space<vmem>>, vector<1x1x176x4xbf16>
    %38 = vector.shape_cast %37 : vector<1x1x176x4xbf16> to vector<176x4xbf16>
    %39 = vector.extract_strided_slice %38 {offsets = [0, 0], sizes = [128, 4], strides = [1, 1]} : vector<176x4xbf16> to vector<128x4xbf16>
    %40 = vector.extract_strided_slice %38 {offsets = [1, 0], sizes = [128, 4], strides = [1, 1]} : vector<176x4xbf16> to vector<128x4xbf16>
    %41 = vector.extract_strided_slice %38 {offsets = [2, 0], sizes = [128, 4], strides = [1, 1]} : vector<176x4xbf16> to vector<128x4xbf16>
    %42 = vector.extract_strided_slice %38 {offsets = [16, 0], sizes = [128, 4], strides = [1, 1]} : vector<176x4xbf16> to vector<128x4xbf16>
    %43 = vector.extract_strided_slice %38 {offsets = [17, 0], sizes = [128, 4], strides = [1, 1]} : vector<176x4xbf16> to vector<128x4xbf16>
    %44 = vector.extract_strided_slice %38 {offsets = [18, 0], sizes = [128, 4], strides = [1, 1]} : vector<176x4xbf16> to vector<128x4xbf16>
    %45 = vector.extract_strided_slice %38 {offsets = [32, 0], sizes = [128, 4], strides = [1, 1]} : vector<176x4xbf16> to vector<128x4xbf16>
    %46 = vector.extract_strided_slice %38 {offsets = [33, 0], sizes = [128, 4], strides = [1, 1]} : vector<176x4xbf16> to vector<128x4xbf16>
    %47 = vector.extract_strided_slice %38 {offsets = [34, 0], sizes = [128, 4], strides = [1, 1]} : vector<176x4xbf16> to vector<128x4xbf16>
    %48 = tpu.concatenate %39, %40, %41, %42, %43, %44, %45, %46, %47 in 1 : vector<128x4xbf16>, vector<128x4xbf16>, vector<128x4xbf16>, vector<128x4xbf16>, vector<128x4xbf16>, vector<128x4xbf16>, vector<128x4xbf16>, vector<128x4xbf16>, vector<128x4xbf16> -> vector<128x36xbf16>
    %c2 = arith.constant 2 : index
    %c0_14 = arith.constant 0 : index
    %c0_15 = arith.constant 0 : index
    %49 = vector.load %arg4[%c2, %c0_14, %c0_15] : memref<3x36x4xbf16, #tpu.memory_space<vmem>>, vector<1x36x4xbf16>
    %50 = vector.shape_cast %49 : vector<1x36x4xbf16> to vector<36x4xbf16>
    %cst_16 = arith.constant dense<0.000000e+00> : vector<128x4xf32>
    %51 = tpu.matmul %48, %50, %cst_16 {dimension_numbers = #tpu.dot_dimension_numbers<[1], [0], [0], [1], [0, 0, 1, 1], [], []>} : vector<128x36xbf16>, vector<36x4xbf16>, vector<128x4xf32> -> vector<128x4xf32>
    %52 = arith.addf %34, %51 : vector<128x4xf32>
    %c0_17 = arith.constant 0 : index
    %c0_18 = arith.constant 0 : index
    %53 = vector.load %arg5[%c0_17, %c0_18] : memref<1x4xf32, #tpu.memory_space<vmem>>, vector<1x4xf32>
    %54 = vector.broadcast %53 : vector<1x4xf32> to vector<128x4xf32>
    %55 = arith.mulf %52, %54 : vector<128x4xf32>
    %c0_19 = arith.constant 0 : index
    %c0_20 = arith.constant 0 : index
    %56 = vector.load %arg6[%c0_19, %c0_20] : memref<1x4xf32, #tpu.memory_space<vmem>>, vector<1x4xf32>
    %57 = vector.broadcast %56 : vector<1x4xf32> to vector<128x4xf32>
    %58 = arith.addf %55, %57 : vector<128x4xf32>
    %cst_21 = arith.constant 0.000000e+00 : f32
    %59 = vector.broadcast %cst_21 : f32 to vector<128x4xf32>
    %60 = arith.maximumf %58, %59 : vector<128x4xf32>
    %61 = arith.truncf %60 : vector<128x4xf32> to vector<128x4xbf16>
    %c0_22 = arith.constant 0 : index
    %c0_23 = arith.constant 0 : index
    %c0_24 = arith.constant 0 : index
    %c0_25 = arith.constant 0 : index
    %62 = vector.load %arg7[%c0_22, %c0_23, %c0_24, %c0_25] : memref<1x1x128x4xbf16, #tpu.memory_space<vmem>>, vector<1x1x128x4xbf16>
    %63 = vector.shape_cast %62 : vector<1x1x128x4xbf16> to vector<128x4xbf16>
    %64 = vector.shape_cast %61 : vector<128x4xbf16> to vector<1x1x128x4xbf16>
    tpu.vector_store %arg7[%c0_22, %c0_23, %c0_24, %c0_25], %64 {strides = array<i32>} : memref<1x1x128x4xbf16, #tpu.memory_space<vmem>>, vector<1x1x128x4xbf16>,
    return
  }
  func.func @transform_0(%arg0: i32, %arg1: i32, %arg2: i32) -> (i32, i32, i32, i32) {
    %c0_i32 = arith.constant 0 : i32
    %c0_i32_0 = arith.constant 0 : i32
    %c0_i32_1 = arith.constant 0 : i32
    %c0_i32_2 = arith.constant 0 : i32
    return %arg1, %c0_i32, %c0_i32_0, %c0_i32_1 : i32, i32, i32, i32
  }
  func.func @transform_1(%arg0: i32, %arg1: i32, %arg2: i32) -> (i32, i32, i32) {
    %c0_i32 = arith.constant 0 : i32
    %c0_i32_0 = arith.constant 0 : i32
    %c0_i32_1 = arith.constant 0 : i32
    return %c0_i32, %c0_i32_0, %arg0 : i32, i32, i32
  }
  func.func @transform_2(%arg0: i32, %arg1: i32, %arg2: i32) -> (i32, i32) {
    %c0_i32 = arith.constant 0 : i32
    %c0_i32_0 = arith.constant 0 : i32
    return %c0_i32, %arg0 : i32, i32
  }
  func.func @transform_3(%arg0: i32, %arg1: i32, %arg2: i32) -> (i32, i32) {
    %c0_i32 = arith.constant 0 : i32
    %c0_i32_0 = arith.constant 0 : i32
    return %c0_i32, %arg0 : i32, i32
  }
  func.func @transform_4(%arg0: i32, %arg1: i32, %arg2: i32) -> (i32, i32, i32, i32) {
    %c0_i32 = arith.constant 0 : i32
    %c0_i32_0 = arith.constant 0 : i32
    return %arg1, %arg2, %c0_i32, %arg0 : i32, i32, i32, i32
  }
}

module attributes {stable_mosaic.version = 11 : i64} {
  func.func @_maxpool_kernel(%arg0: i32, %arg1: memref<1x8x8x2x4xbf16, #tpu.memory_space<vmem>>, %arg2: memref<1x4x4x4xbf16, #tpu.memory_space<vmem>>) attributes {dimension_semantics = [#tpu.dimension_semantics<parallel>], iteration_bounds = array<i64: 8>, scalar_prefetch = 0 : i64, scratch_operands = 0 : i64, tpu.core_type = #tpu.core_type<tc>, window_params = [{transform_indices = @transform_0, window_bounds = array<i64: 1, 8, 8, 2, 4>}, {transform_indices = @transform_1, window_bounds = array<i64: 1, 4, 4, 4>}]} {
    %c0 = arith.constant 0 : index
    %c0_0 = arith.constant 0 : index
    %c0_1 = arith.constant 0 : index
    %c0_2 = arith.constant 0 : index
    %c0_3 = arith.constant 0 : index
    %0 = vector.load %arg1[%c0, %c0_0, %c0_1, %c0_2, %c0_3] : memref<1x8x8x2x4xbf16, #tpu.memory_space<vmem>>, vector<1x8x8x2x4xbf16>
    %1 = vector.extract_strided_slice %0 {offsets = [0, 0, 0, 0, 0], sizes = [1, 8, 8, 1, 4], strides = [1, 1, 1, 1, 1]} : vector<1x8x8x2x4xbf16> to vector<1x8x8x1x4xbf16>
    %2 = vector.shape_cast %1 : vector<1x8x8x1x4xbf16> to vector<1x8x8x4xbf16>
    %3 = vector.extract_strided_slice %0 {offsets = [0, 0, 0, 1, 0], sizes = [1, 8, 8, 1, 4], strides = [1, 1, 1, 1, 1]} : vector<1x8x8x2x4xbf16> to vector<1x8x8x1x4xbf16>
    %4 = vector.shape_cast %3 : vector<1x8x8x1x4xbf16> to vector<1x8x8x4xbf16>
    %5 = arith.maximumf %2, %4 : vector<1x8x8x4xbf16>
    %6 = vector.extract_strided_slice %5 {offsets = [0, 0, 0, 0], sizes = [1, 8, 4, 4], strides = [1, 1, 1, 1]} : vector<1x8x8x4xbf16> to vector<1x8x4x4xbf16>
    %7 = vector.extract_strided_slice %5 {offsets = [0, 0, 4, 0], sizes = [1, 8, 4, 4], strides = [1, 1, 1, 1]} : vector<1x8x8x4xbf16> to vector<1x8x4x4xbf16>
    %8 = arith.maximumf %6, %7 : vector<1x8x4x4xbf16>
    %9 = vector.extract_strided_slice %8 {offsets = [0, 0, 0, 0], sizes = [1, 4, 4, 4], strides = [1, 1, 1, 1]} : vector<1x8x4x4xbf16> to vector<1x4x4x4xbf16>
    %10 = vector.extract_strided_slice %8 {offsets = [0, 4, 0, 0], sizes = [1, 4, 4, 4], strides = [1, 1, 1, 1]} : vector<1x8x4x4xbf16> to vector<1x4x4x4xbf16>
    %11 = arith.maximumf %9, %10 : vector<1x4x4x4xbf16>
    %c0_4 = arith.constant 0 : index
    %c0_5 = arith.constant 0 : index
    %c0_6 = arith.constant 0 : index
    %c0_7 = arith.constant 0 : index
    %12 = vector.load %arg2[%c0_4, %c0_5, %c0_6, %c0_7] : memref<1x4x4x4xbf16, #tpu.memory_space<vmem>>, vector<1x4x4x4xbf16>
    tpu.vector_store %arg2[%c0_4, %c0_5, %c0_6, %c0_7], %11 {strides = array<i32>} : memref<1x4x4x4xbf16, #tpu.memory_space<vmem>>, vector<1x4x4x4xbf16>,
    return
  }
  func.func @transform_0(%arg0: i32) -> (i32, i32, i32, i32, i32) {
    %c0_i32 = arith.constant 0 : i32
    %c0_i32_0 = arith.constant 0 : i32
    %c0_i32_1 = arith.constant 0 : i32
    %c0_i32_2 = arith.constant 0 : i32
    %c0_i32_3 = arith.constant 0 : i32
    return %arg0, %c0_i32, %c0_i32_0, %c0_i32_1, %c0_i32_2 : i32, i32, i32, i32, i32
  }
  func.func @transform_1(%arg0: i32) -> (i32, i32, i32, i32) {
    %c0_i32 = arith.constant 0 : i32
    %c0_i32_0 = arith.constant 0 : i32
    %c0_i32_1 = arith.constant 0 : i32
    %c0_i32_2 = arith.constant 0 : i32
    return %arg0, %c0_i32, %c0_i32_0, %c0_i32_1 : i32, i32, i32, i32
  }
}

module attributes {stable_mosaic.version = 11 : i64} {
  func.func @_conv3x3_kernel(%arg0: i32, %arg1: i32, %arg2: i32, %arg3: memref<1x6x56x4xbf16, #tpu.memory_space<vmem>>, %arg4: memref<3x36x8xbf16, #tpu.memory_space<vmem>>, %arg5: memref<1x8xf32, #tpu.memory_space<vmem>>, %arg6: memref<1x8xf32, #tpu.memory_space<vmem>>, %arg7: memref<1x1x32x8xbf16, #tpu.memory_space<vmem>>) attributes {dimension_semantics = [#tpu.dimension_semantics<parallel>, #tpu.dimension_semantics<parallel>, #tpu.dimension_semantics<arbitrary>], iteration_bounds = array<i64: 1, 2, 4>, scalar_prefetch = 0 : i64, scratch_operands = 0 : i64, tpu.core_type = #tpu.core_type<tc>, window_params = [{transform_indices = @transform_0, window_bounds = array<i64: 1, 6, 56, 4>}, {transform_indices = @transform_1, window_bounds = array<i64: 3, 36, 8>}, {transform_indices = @transform_2, window_bounds = array<i64: 1, 8>}, {transform_indices = @transform_3, window_bounds = array<i64: 1, 8>}, {transform_indices = @transform_4, window_bounds = array<i64: 1, 1, 32, 8>}]} {
    %c0_i32 = arith.constant 0 : i32
    %0 = arith.addi %arg2, %c0_i32 : i32
    %c0 = arith.constant 0 : index
    %1 = arith.index_cast %0 : i32 to index
    %c0_0 = arith.constant 0 : index
    %c0_1 = arith.constant 0 : index
    %2 = vector.load %arg3[%c0, %1, %c0_0, %c0_1] : memref<1x6x56x4xbf16, #tpu.memory_space<vmem>>, vector<1x1x56x4xbf16>
    %3 = vector.shape_cast %2 : vector<1x1x56x4xbf16> to vector<56x4xbf16>
    %4 = vector.extract_strided_slice %3 {offsets = [0, 0], sizes = [32, 4], strides = [1, 1]} : vector<56x4xbf16> to vector<32x4xbf16>
    %5 = vector.extract_strided_slice %3 {offsets = [1, 0], sizes = [32, 4], strides = [1, 1]} : vector<56x4xbf16> to vector<32x4xbf16>
    %6 = vector.extract_strided_slice %3 {offsets = [2, 0], sizes = [32, 4], strides = [1, 1]} : vector<56x4xbf16> to vector<32x4xbf16>
    %7 = vector.extract_strided_slice %3 {offsets = [8, 0], sizes = [32, 4], strides = [1, 1]} : vector<56x4xbf16> to vector<32x4xbf16>
    %8 = vector.extract_strided_slice %3 {offsets = [9, 0], sizes = [32, 4], strides = [1, 1]} : vector<56x4xbf16> to vector<32x4xbf16>
    %9 = vector.extract_strided_slice %3 {offsets = [10, 0], sizes = [32, 4], strides = [1, 1]} : vector<56x4xbf16> to vector<32x4xbf16>
    %10 = vector.extract_strided_slice %3 {offsets = [16, 0], sizes = [32, 4], strides = [1, 1]} : vector<56x4xbf16> to vector<32x4xbf16>
    %11 = vector.extract_strided_slice %3 {offsets = [17, 0], sizes = [32, 4], strides = [1, 1]} : vector<56x4xbf16> to vector<32x4xbf16>
    %12 = vector.extract_strided_slice %3 {offsets = [18, 0], sizes = [32, 4], strides = [1, 1]} : vector<56x4xbf16> to vector<32x4xbf16>
    %13 = tpu.concatenate %4, %5, %6, %7, %8, %9, %10, %11, %12 in 1 : vector<32x4xbf16>, vector<32x4xbf16>, vector<32x4xbf16>, vector<32x4xbf16>, vector<32x4xbf16>, vector<32x4xbf16>, vector<32x4xbf16>, vector<32x4xbf16>, vector<32x4xbf16> -> vector<32x36xbf16>
    %c0_2 = arith.constant 0 : index
    %c0_3 = arith.constant 0 : index
    %c0_4 = arith.constant 0 : index
    %14 = vector.load %arg4[%c0_2, %c0_3, %c0_4] : memref<3x36x8xbf16, #tpu.memory_space<vmem>>, vector<1x36x8xbf16>
    %15 = vector.shape_cast %14 : vector<1x36x8xbf16> to vector<36x8xbf16>
    %cst = arith.constant dense<0.000000e+00> : vector<32x8xf32>
    %16 = tpu.matmul %13, %15, %cst {dimension_numbers = #tpu.dot_dimension_numbers<[1], [0], [0], [1], [0, 0, 1, 1], [], []>} : vector<32x36xbf16>, vector<36x8xbf16>, vector<32x8xf32> -> vector<32x8xf32>
    %c1_i32 = arith.constant 1 : i32
    %17 = arith.addi %arg2, %c1_i32 : i32
    %c0_5 = arith.constant 0 : index
    %18 = arith.index_cast %17 : i32 to index
    %c0_6 = arith.constant 0 : index
    %c0_7 = arith.constant 0 : index
    %19 = vector.load %arg3[%c0_5, %18, %c0_6, %c0_7] : memref<1x6x56x4xbf16, #tpu.memory_space<vmem>>, vector<1x1x56x4xbf16>
    %20 = vector.shape_cast %19 : vector<1x1x56x4xbf16> to vector<56x4xbf16>
    %21 = vector.extract_strided_slice %20 {offsets = [0, 0], sizes = [32, 4], strides = [1, 1]} : vector<56x4xbf16> to vector<32x4xbf16>
    %22 = vector.extract_strided_slice %20 {offsets = [1, 0], sizes = [32, 4], strides = [1, 1]} : vector<56x4xbf16> to vector<32x4xbf16>
    %23 = vector.extract_strided_slice %20 {offsets = [2, 0], sizes = [32, 4], strides = [1, 1]} : vector<56x4xbf16> to vector<32x4xbf16>
    %24 = vector.extract_strided_slice %20 {offsets = [8, 0], sizes = [32, 4], strides = [1, 1]} : vector<56x4xbf16> to vector<32x4xbf16>
    %25 = vector.extract_strided_slice %20 {offsets = [9, 0], sizes = [32, 4], strides = [1, 1]} : vector<56x4xbf16> to vector<32x4xbf16>
    %26 = vector.extract_strided_slice %20 {offsets = [10, 0], sizes = [32, 4], strides = [1, 1]} : vector<56x4xbf16> to vector<32x4xbf16>
    %27 = vector.extract_strided_slice %20 {offsets = [16, 0], sizes = [32, 4], strides = [1, 1]} : vector<56x4xbf16> to vector<32x4xbf16>
    %28 = vector.extract_strided_slice %20 {offsets = [17, 0], sizes = [32, 4], strides = [1, 1]} : vector<56x4xbf16> to vector<32x4xbf16>
    %29 = vector.extract_strided_slice %20 {offsets = [18, 0], sizes = [32, 4], strides = [1, 1]} : vector<56x4xbf16> to vector<32x4xbf16>
    %30 = tpu.concatenate %21, %22, %23, %24, %25, %26, %27, %28, %29 in 1 : vector<32x4xbf16>, vector<32x4xbf16>, vector<32x4xbf16>, vector<32x4xbf16>, vector<32x4xbf16>, vector<32x4xbf16>, vector<32x4xbf16>, vector<32x4xbf16>, vector<32x4xbf16> -> vector<32x36xbf16>
    %c1 = arith.constant 1 : index
    %c0_8 = arith.constant 0 : index
    %c0_9 = arith.constant 0 : index
    %31 = vector.load %arg4[%c1, %c0_8, %c0_9] : memref<3x36x8xbf16, #tpu.memory_space<vmem>>, vector<1x36x8xbf16>
    %32 = vector.shape_cast %31 : vector<1x36x8xbf16> to vector<36x8xbf16>
    %cst_10 = arith.constant dense<0.000000e+00> : vector<32x8xf32>
    %33 = tpu.matmul %30, %32, %cst_10 {dimension_numbers = #tpu.dot_dimension_numbers<[1], [0], [0], [1], [0, 0, 1, 1], [], []>} : vector<32x36xbf16>, vector<36x8xbf16>, vector<32x8xf32> -> vector<32x8xf32>
    %34 = arith.addf %16, %33 : vector<32x8xf32>
    %c2_i32 = arith.constant 2 : i32
    %35 = arith.addi %arg2, %c2_i32 : i32
    %c0_11 = arith.constant 0 : index
    %36 = arith.index_cast %35 : i32 to index
    %c0_12 = arith.constant 0 : index
    %c0_13 = arith.constant 0 : index
    %37 = vector.load %arg3[%c0_11, %36, %c0_12, %c0_13] : memref<1x6x56x4xbf16, #tpu.memory_space<vmem>>, vector<1x1x56x4xbf16>
    %38 = vector.shape_cast %37 : vector<1x1x56x4xbf16> to vector<56x4xbf16>
    %39 = vector.extract_strided_slice %38 {offsets = [0, 0], sizes = [32, 4], strides = [1, 1]} : vector<56x4xbf16> to vector<32x4xbf16>
    %40 = vector.extract_strided_slice %38 {offsets = [1, 0], sizes = [32, 4], strides = [1, 1]} : vector<56x4xbf16> to vector<32x4xbf16>
    %41 = vector.extract_strided_slice %38 {offsets = [2, 0], sizes = [32, 4], strides = [1, 1]} : vector<56x4xbf16> to vector<32x4xbf16>
    %42 = vector.extract_strided_slice %38 {offsets = [8, 0], sizes = [32, 4], strides = [1, 1]} : vector<56x4xbf16> to vector<32x4xbf16>
    %43 = vector.extract_strided_slice %38 {offsets = [9, 0], sizes = [32, 4], strides = [1, 1]} : vector<56x4xbf16> to vector<32x4xbf16>
    %44 = vector.extract_strided_slice %38 {offsets = [10, 0], sizes = [32, 4], strides = [1, 1]} : vector<56x4xbf16> to vector<32x4xbf16>
    %45 = vector.extract_strided_slice %38 {offsets = [16, 0], sizes = [32, 4], strides = [1, 1]} : vector<56x4xbf16> to vector<32x4xbf16>
    %46 = vector.extract_strided_slice %38 {offsets = [17, 0], sizes = [32, 4], strides = [1, 1]} : vector<56x4xbf16> to vector<32x4xbf16>
    %47 = vector.extract_strided_slice %38 {offsets = [18, 0], sizes = [32, 4], strides = [1, 1]} : vector<56x4xbf16> to vector<32x4xbf16>
    %48 = tpu.concatenate %39, %40, %41, %42, %43, %44, %45, %46, %47 in 1 : vector<32x4xbf16>, vector<32x4xbf16>, vector<32x4xbf16>, vector<32x4xbf16>, vector<32x4xbf16>, vector<32x4xbf16>, vector<32x4xbf16>, vector<32x4xbf16>, vector<32x4xbf16> -> vector<32x36xbf16>
    %c2 = arith.constant 2 : index
    %c0_14 = arith.constant 0 : index
    %c0_15 = arith.constant 0 : index
    %49 = vector.load %arg4[%c2, %c0_14, %c0_15] : memref<3x36x8xbf16, #tpu.memory_space<vmem>>, vector<1x36x8xbf16>
    %50 = vector.shape_cast %49 : vector<1x36x8xbf16> to vector<36x8xbf16>
    %cst_16 = arith.constant dense<0.000000e+00> : vector<32x8xf32>
    %51 = tpu.matmul %48, %50, %cst_16 {dimension_numbers = #tpu.dot_dimension_numbers<[1], [0], [0], [1], [0, 0, 1, 1], [], []>} : vector<32x36xbf16>, vector<36x8xbf16>, vector<32x8xf32> -> vector<32x8xf32>
    %52 = arith.addf %34, %51 : vector<32x8xf32>
    %c0_17 = arith.constant 0 : index
    %c0_18 = arith.constant 0 : index
    %53 = vector.load %arg5[%c0_17, %c0_18] : memref<1x8xf32, #tpu.memory_space<vmem>>, vector<1x8xf32>
    %54 = vector.broadcast %53 : vector<1x8xf32> to vector<32x8xf32>
    %55 = arith.mulf %52, %54 : vector<32x8xf32>
    %c0_19 = arith.constant 0 : index
    %c0_20 = arith.constant 0 : index
    %56 = vector.load %arg6[%c0_19, %c0_20] : memref<1x8xf32, #tpu.memory_space<vmem>>, vector<1x8xf32>
    %57 = vector.broadcast %56 : vector<1x8xf32> to vector<32x8xf32>
    %58 = arith.addf %55, %57 : vector<32x8xf32>
    %cst_21 = arith.constant 0.000000e+00 : f32
    %59 = vector.broadcast %cst_21 : f32 to vector<32x8xf32>
    %60 = arith.maximumf %58, %59 : vector<32x8xf32>
    %61 = arith.truncf %60 : vector<32x8xf32> to vector<32x8xbf16>
    %c0_22 = arith.constant 0 : index
    %c0_23 = arith.constant 0 : index
    %c0_24 = arith.constant 0 : index
    %c0_25 = arith.constant 0 : index
    %62 = vector.load %arg7[%c0_22, %c0_23, %c0_24, %c0_25] : memref<1x1x32x8xbf16, #tpu.memory_space<vmem>>, vector<1x1x32x8xbf16>
    %63 = vector.shape_cast %62 : vector<1x1x32x8xbf16> to vector<32x8xbf16>
    %64 = vector.shape_cast %61 : vector<32x8xbf16> to vector<1x1x32x8xbf16>
    tpu.vector_store %arg7[%c0_22, %c0_23, %c0_24, %c0_25], %64 {strides = array<i32>} : memref<1x1x32x8xbf16, #tpu.memory_space<vmem>>, vector<1x1x32x8xbf16>,
    return
  }
  func.func @transform_0(%arg0: i32, %arg1: i32, %arg2: i32) -> (i32, i32, i32, i32) {
    %c0_i32 = arith.constant 0 : i32
    %c0_i32_0 = arith.constant 0 : i32
    %c0_i32_1 = arith.constant 0 : i32
    %c0_i32_2 = arith.constant 0 : i32
    return %arg1, %c0_i32, %c0_i32_0, %c0_i32_1 : i32, i32, i32, i32
  }
  func.func @transform_1(%arg0: i32, %arg1: i32, %arg2: i32) -> (i32, i32, i32) {
    %c0_i32 = arith.constant 0 : i32
    %c0_i32_0 = arith.constant 0 : i32
    %c0_i32_1 = arith.constant 0 : i32
    return %c0_i32, %c0_i32_0, %arg0 : i32, i32, i32
  }
  func.func @transform_2(%arg0: i32, %arg1: i32, %arg2: i32) -> (i32, i32) {
    %c0_i32 = arith.constant 0 : i32
    %c0_i32_0 = arith.constant 0 : i32
    return %c0_i32, %arg0 : i32, i32
  }
  func.func @transform_3(%arg0: i32, %arg1: i32, %arg2: i32) -> (i32, i32) {
    %c0_i32 = arith.constant 0 : i32
    %c0_i32_0 = arith.constant 0 : i32
    return %c0_i32, %arg0 : i32, i32
  }
  func.func @transform_4(%arg0: i32, %arg1: i32, %arg2: i32) -> (i32, i32, i32, i32) {
    %c0_i32 = arith.constant 0 : i32
    %c0_i32_0 = arith.constant 0 : i32
    return %arg1, %arg2, %c0_i32, %arg0 : i32, i32, i32, i32
  }
}

module attributes {stable_mosaic.version = 11 : i64} {
  func.func @_maxpool_kernel(%arg0: i32, %arg1: memref<1x4x4x2x8xbf16, #tpu.memory_space<vmem>>, %arg2: memref<1x2x2x8xbf16, #tpu.memory_space<vmem>>) attributes {dimension_semantics = [#tpu.dimension_semantics<parallel>], iteration_bounds = array<i64: 4>, scalar_prefetch = 0 : i64, scratch_operands = 0 : i64, tpu.core_type = #tpu.core_type<tc>, window_params = [{transform_indices = @transform_0, window_bounds = array<i64: 1, 4, 4, 2, 8>}, {transform_indices = @transform_1, window_bounds = array<i64: 1, 2, 2, 8>}]} {
    %c0 = arith.constant 0 : index
    %c0_0 = arith.constant 0 : index
    %c0_1 = arith.constant 0 : index
    %c0_2 = arith.constant 0 : index
    %c0_3 = arith.constant 0 : index
    %0 = vector.load %arg1[%c0, %c0_0, %c0_1, %c0_2, %c0_3] : memref<1x4x4x2x8xbf16, #tpu.memory_space<vmem>>, vector<1x4x4x2x8xbf16>
    %1 = vector.extract_strided_slice %0 {offsets = [0, 0, 0, 0, 0], sizes = [1, 4, 4, 1, 8], strides = [1, 1, 1, 1, 1]} : vector<1x4x4x2x8xbf16> to vector<1x4x4x1x8xbf16>
    %2 = vector.shape_cast %1 : vector<1x4x4x1x8xbf16> to vector<1x4x4x8xbf16>
    %3 = vector.extract_strided_slice %0 {offsets = [0, 0, 0, 1, 0], sizes = [1, 4, 4, 1, 8], strides = [1, 1, 1, 1, 1]} : vector<1x4x4x2x8xbf16> to vector<1x4x4x1x8xbf16>
    %4 = vector.shape_cast %3 : vector<1x4x4x1x8xbf16> to vector<1x4x4x8xbf16>
    %5 = arith.maximumf %2, %4 : vector<1x4x4x8xbf16>
    %6 = vector.extract_strided_slice %5 {offsets = [0, 0, 0, 0], sizes = [1, 4, 2, 8], strides = [1, 1, 1, 1]} : vector<1x4x4x8xbf16> to vector<1x4x2x8xbf16>
    %7 = vector.extract_strided_slice %5 {offsets = [0, 0, 2, 0], sizes = [1, 4, 2, 8], strides = [1, 1, 1, 1]} : vector<1x4x4x8xbf16> to vector<1x4x2x8xbf16>
    %8 = arith.maximumf %6, %7 : vector<1x4x2x8xbf16>
    %9 = vector.extract_strided_slice %8 {offsets = [0, 0, 0, 0], sizes = [1, 2, 2, 8], strides = [1, 1, 1, 1]} : vector<1x4x2x8xbf16> to vector<1x2x2x8xbf16>
    %10 = vector.extract_strided_slice %8 {offsets = [0, 2, 0, 0], sizes = [1, 2, 2, 8], strides = [1, 1, 1, 1]} : vector<1x4x2x8xbf16> to vector<1x2x2x8xbf16>
    %11 = arith.maximumf %9, %10 : vector<1x2x2x8xbf16>
    %c0_4 = arith.constant 0 : index
    %c0_5 = arith.constant 0 : index
    %c0_6 = arith.constant 0 : index
    %c0_7 = arith.constant 0 : index
    %12 = vector.load %arg2[%c0_4, %c0_5, %c0_6, %c0_7] : memref<1x2x2x8xbf16, #tpu.memory_space<vmem>>, vector<1x2x2x8xbf16>
    tpu.vector_store %arg2[%c0_4, %c0_5, %c0_6, %c0_7], %11 {strides = array<i32>} : memref<1x2x2x8xbf16, #tpu.memory_space<vmem>>, vector<1x2x2x8xbf16>,
    return
  }
  func.func @transform_0(%arg0: i32) -> (i32, i32, i32, i32, i32) {
    %c0_i32 = arith.constant 0 : i32
    %c0_i32_0 = arith.constant 0 : i32
    %c0_i32_1 = arith.constant 0 : i32
    %c0_i32_2 = arith.constant 0 : i32
    %c0_i32_3 = arith.constant 0 : i32
    return %arg0, %c0_i32, %c0_i32_0, %c0_i32_1, %c0_i32_2 : i32, i32, i32, i32, i32
  }
  func.func @transform_1(%arg0: i32) -> (i32, i32, i32, i32) {
    %c0_i32 = arith.constant 0 : i32
    %c0_i32_0 = arith.constant 0 : i32
    %c0_i32_1 = arith.constant 0 : i32
    %c0_i32_2 = arith.constant 0 : i32
    return %arg0, %c0_i32, %c0_i32_0, %c0_i32_1 : i32, i32, i32, i32
  }
}

module attributes {stable_mosaic.version = 11 : i64} {
  func.func @_conv3x3_kernel(%arg0: i32, %arg1: i32, %arg2: i32, %arg3: memref<1x6x56x8xbf16, #tpu.memory_space<vmem>>, %arg4: memref<3x72x8xbf16, #tpu.memory_space<vmem>>, %arg5: memref<1x8xf32, #tpu.memory_space<vmem>>, %arg6: memref<1x8xf32, #tpu.memory_space<vmem>>, %arg7: memref<1x1x32x8xbf16, #tpu.memory_space<vmem>>) attributes {dimension_semantics = [#tpu.dimension_semantics<parallel>, #tpu.dimension_semantics<parallel>, #tpu.dimension_semantics<arbitrary>], iteration_bounds = array<i64: 1, 2, 4>, scalar_prefetch = 0 : i64, scratch_operands = 0 : i64, tpu.core_type = #tpu.core_type<tc>, window_params = [{transform_indices = @transform_0, window_bounds = array<i64: 1, 6, 56, 8>}, {transform_indices = @transform_1, window_bounds = array<i64: 3, 72, 8>}, {transform_indices = @transform_2, window_bounds = array<i64: 1, 8>}, {transform_indices = @transform_3, window_bounds = array<i64: 1, 8>}, {transform_indices = @transform_4, window_bounds = array<i64: 1, 1, 32, 8>}]} {
    %c0_i32 = arith.constant 0 : i32
    %0 = arith.addi %arg2, %c0_i32 : i32
    %c0 = arith.constant 0 : index
    %1 = arith.index_cast %0 : i32 to index
    %c0_0 = arith.constant 0 : index
    %c0_1 = arith.constant 0 : index
    %2 = vector.load %arg3[%c0, %1, %c0_0, %c0_1] : memref<1x6x56x8xbf16, #tpu.memory_space<vmem>>, vector<1x1x56x8xbf16>
    %3 = vector.shape_cast %2 : vector<1x1x56x8xbf16> to vector<56x8xbf16>
    %4 = vector.extract_strided_slice %3 {offsets = [0, 0], sizes = [32, 8], strides = [1, 1]} : vector<56x8xbf16> to vector<32x8xbf16>
    %5 = vector.extract_strided_slice %3 {offsets = [1, 0], sizes = [32, 8], strides = [1, 1]} : vector<56x8xbf16> to vector<32x8xbf16>
    %6 = vector.extract_strided_slice %3 {offsets = [2, 0], sizes = [32, 8], strides = [1, 1]} : vector<56x8xbf16> to vector<32x8xbf16>
    %7 = vector.extract_strided_slice %3 {offsets = [8, 0], sizes = [32, 8], strides = [1, 1]} : vector<56x8xbf16> to vector<32x8xbf16>
    %8 = vector.extract_strided_slice %3 {offsets = [9, 0], sizes = [32, 8], strides = [1, 1]} : vector<56x8xbf16> to vector<32x8xbf16>
    %9 = vector.extract_strided_slice %3 {offsets = [10, 0], sizes = [32, 8], strides = [1, 1]} : vector<56x8xbf16> to vector<32x8xbf16>
    %10 = vector.extract_strided_slice %3 {offsets = [16, 0], sizes = [32, 8], strides = [1, 1]} : vector<56x8xbf16> to vector<32x8xbf16>
    %11 = vector.extract_strided_slice %3 {offsets = [17, 0], sizes = [32, 8], strides = [1, 1]} : vector<56x8xbf16> to vector<32x8xbf16>
    %12 = vector.extract_strided_slice %3 {offsets = [18, 0], sizes = [32, 8], strides = [1, 1]} : vector<56x8xbf16> to vector<32x8xbf16>
    %13 = tpu.concatenate %4, %5, %6, %7, %8, %9, %10, %11, %12 in 1 : vector<32x8xbf16>, vector<32x8xbf16>, vector<32x8xbf16>, vector<32x8xbf16>, vector<32x8xbf16>, vector<32x8xbf16>, vector<32x8xbf16>, vector<32x8xbf16>, vector<32x8xbf16> -> vector<32x72xbf16>
    %c0_2 = arith.constant 0 : index
    %c0_3 = arith.constant 0 : index
    %c0_4 = arith.constant 0 : index
    %14 = vector.load %arg4[%c0_2, %c0_3, %c0_4] : memref<3x72x8xbf16, #tpu.memory_space<vmem>>, vector<1x72x8xbf16>
    %15 = vector.shape_cast %14 : vector<1x72x8xbf16> to vector<72x8xbf16>
    %cst = arith.constant dense<0.000000e+00> : vector<32x8xf32>
    %16 = tpu.matmul %13, %15, %cst {dimension_numbers = #tpu.dot_dimension_numbers<[1], [0], [0], [1], [0, 0, 1, 1], [], []>} : vector<32x72xbf16>, vector<72x8xbf16>, vector<32x8xf32> -> vector<32x8xf32>
    %c1_i32 = arith.constant 1 : i32
    %17 = arith.addi %arg2, %c1_i32 : i32
    %c0_5 = arith.constant 0 : index
    %18 = arith.index_cast %17 : i32 to index
    %c0_6 = arith.constant 0 : index
    %c0_7 = arith.constant 0 : index
    %19 = vector.load %arg3[%c0_5, %18, %c0_6, %c0_7] : memref<1x6x56x8xbf16, #tpu.memory_space<vmem>>, vector<1x1x56x8xbf16>
    %20 = vector.shape_cast %19 : vector<1x1x56x8xbf16> to vector<56x8xbf16>
    %21 = vector.extract_strided_slice %20 {offsets = [0, 0], sizes = [32, 8], strides = [1, 1]} : vector<56x8xbf16> to vector<32x8xbf16>
    %22 = vector.extract_strided_slice %20 {offsets = [1, 0], sizes = [32, 8], strides = [1, 1]} : vector<56x8xbf16> to vector<32x8xbf16>
    %23 = vector.extract_strided_slice %20 {offsets = [2, 0], sizes = [32, 8], strides = [1, 1]} : vector<56x8xbf16> to vector<32x8xbf16>
    %24 = vector.extract_strided_slice %20 {offsets = [8, 0], sizes = [32, 8], strides = [1, 1]} : vector<56x8xbf16> to vector<32x8xbf16>
    %25 = vector.extract_strided_slice %20 {offsets = [9, 0], sizes = [32, 8], strides = [1, 1]} : vector<56x8xbf16> to vector<32x8xbf16>
    %26 = vector.extract_strided_slice %20 {offsets = [10, 0], sizes = [32, 8], strides = [1, 1]} : vector<56x8xbf16> to vector<32x8xbf16>
    %27 = vector.extract_strided_slice %20 {offsets = [16, 0], sizes = [32, 8], strides = [1, 1]} : vector<56x8xbf16> to vector<32x8xbf16>
    %28 = vector.extract_strided_slice %20 {offsets = [17, 0], sizes = [32, 8], strides = [1, 1]} : vector<56x8xbf16> to vector<32x8xbf16>
    %29 = vector.extract_strided_slice %20 {offsets = [18, 0], sizes = [32, 8], strides = [1, 1]} : vector<56x8xbf16> to vector<32x8xbf16>
    %30 = tpu.concatenate %21, %22, %23, %24, %25, %26, %27, %28, %29 in 1 : vector<32x8xbf16>, vector<32x8xbf16>, vector<32x8xbf16>, vector<32x8xbf16>, vector<32x8xbf16>, vector<32x8xbf16>, vector<32x8xbf16>, vector<32x8xbf16>, vector<32x8xbf16> -> vector<32x72xbf16>
    %c1 = arith.constant 1 : index
    %c0_8 = arith.constant 0 : index
    %c0_9 = arith.constant 0 : index
    %31 = vector.load %arg4[%c1, %c0_8, %c0_9] : memref<3x72x8xbf16, #tpu.memory_space<vmem>>, vector<1x72x8xbf16>
    %32 = vector.shape_cast %31 : vector<1x72x8xbf16> to vector<72x8xbf16>
    %cst_10 = arith.constant dense<0.000000e+00> : vector<32x8xf32>
    %33 = tpu.matmul %30, %32, %cst_10 {dimension_numbers = #tpu.dot_dimension_numbers<[1], [0], [0], [1], [0, 0, 1, 1], [], []>} : vector<32x72xbf16>, vector<72x8xbf16>, vector<32x8xf32> -> vector<32x8xf32>
    %34 = arith.addf %16, %33 : vector<32x8xf32>
    %c2_i32 = arith.constant 2 : i32
    %35 = arith.addi %arg2, %c2_i32 : i32
    %c0_11 = arith.constant 0 : index
    %36 = arith.index_cast %35 : i32 to index
    %c0_12 = arith.constant 0 : index
    %c0_13 = arith.constant 0 : index
    %37 = vector.load %arg3[%c0_11, %36, %c0_12, %c0_13] : memref<1x6x56x8xbf16, #tpu.memory_space<vmem>>, vector<1x1x56x8xbf16>
    %38 = vector.shape_cast %37 : vector<1x1x56x8xbf16> to vector<56x8xbf16>
    %39 = vector.extract_strided_slice %38 {offsets = [0, 0], sizes = [32, 8], strides = [1, 1]} : vector<56x8xbf16> to vector<32x8xbf16>
    %40 = vector.extract_strided_slice %38 {offsets = [1, 0], sizes = [32, 8], strides = [1, 1]} : vector<56x8xbf16> to vector<32x8xbf16>
    %41 = vector.extract_strided_slice %38 {offsets = [2, 0], sizes = [32, 8], strides = [1, 1]} : vector<56x8xbf16> to vector<32x8xbf16>
    %42 = vector.extract_strided_slice %38 {offsets = [8, 0], sizes = [32, 8], strides = [1, 1]} : vector<56x8xbf16> to vector<32x8xbf16>
    %43 = vector.extract_strided_slice %38 {offsets = [9, 0], sizes = [32, 8], strides = [1, 1]} : vector<56x8xbf16> to vector<32x8xbf16>
    %44 = vector.extract_strided_slice %38 {offsets = [10, 0], sizes = [32, 8], strides = [1, 1]} : vector<56x8xbf16> to vector<32x8xbf16>
    %45 = vector.extract_strided_slice %38 {offsets = [16, 0], sizes = [32, 8], strides = [1, 1]} : vector<56x8xbf16> to vector<32x8xbf16>
    %46 = vector.extract_strided_slice %38 {offsets = [17, 0], sizes = [32, 8], strides = [1, 1]} : vector<56x8xbf16> to vector<32x8xbf16>
    %47 = vector.extract_strided_slice %38 {offsets = [18, 0], sizes = [32, 8], strides = [1, 1]} : vector<56x8xbf16> to vector<32x8xbf16>
    %48 = tpu.concatenate %39, %40, %41, %42, %43, %44, %45, %46, %47 in 1 : vector<32x8xbf16>, vector<32x8xbf16>, vector<32x8xbf16>, vector<32x8xbf16>, vector<32x8xbf16>, vector<32x8xbf16>, vector<32x8xbf16>, vector<32x8xbf16>, vector<32x8xbf16> -> vector<32x72xbf16>
    %c2 = arith.constant 2 : index
    %c0_14 = arith.constant 0 : index
    %c0_15 = arith.constant 0 : index
    %49 = vector.load %arg4[%c2, %c0_14, %c0_15] : memref<3x72x8xbf16, #tpu.memory_space<vmem>>, vector<1x72x8xbf16>
    %50 = vector.shape_cast %49 : vector<1x72x8xbf16> to vector<72x8xbf16>
    %cst_16 = arith.constant dense<0.000000e+00> : vector<32x8xf32>
    %51 = tpu.matmul %48, %50, %cst_16 {dimension_numbers = #tpu.dot_dimension_numbers<[1], [0], [0], [1], [0, 0, 1, 1], [], []>} : vector<32x72xbf16>, vector<72x8xbf16>, vector<32x8xf32> -> vector<32x8xf32>
    %52 = arith.addf %34, %51 : vector<32x8xf32>
    %c0_17 = arith.constant 0 : index
    %c0_18 = arith.constant 0 : index
    %53 = vector.load %arg5[%c0_17, %c0_18] : memref<1x8xf32, #tpu.memory_space<vmem>>, vector<1x8xf32>
    %54 = vector.broadcast %53 : vector<1x8xf32> to vector<32x8xf32>
    %55 = arith.mulf %52, %54 : vector<32x8xf32>
    %c0_19 = arith.constant 0 : index
    %c0_20 = arith.constant 0 : index
    %56 = vector.load %arg6[%c0_19, %c0_20] : memref<1x8xf32, #tpu.memory_space<vmem>>, vector<1x8xf32>
    %57 = vector.broadcast %56 : vector<1x8xf32> to vector<32x8xf32>
    %58 = arith.addf %55, %57 : vector<32x8xf32>
    %cst_21 = arith.constant 0.000000e+00 : f32
    %59 = vector.broadcast %cst_21 : f32 to vector<32x8xf32>
    %60 = arith.maximumf %58, %59 : vector<32x8xf32>
    %61 = arith.truncf %60 : vector<32x8xf32> to vector<32x8xbf16>
    %c0_22 = arith.constant 0 : index
    %c0_23 = arith.constant 0 : index
    %c0_24 = arith.constant 0 : index
    %c0_25 = arith.constant 0 : index
    %62 = vector.load %arg7[%c0_22, %c0_23, %c0_24, %c0_25] : memref<1x1x32x8xbf16, #tpu.memory_space<vmem>>, vector<1x1x32x8xbf16>
    %63 = vector.shape_cast %62 : vector<1x1x32x8xbf16> to vector<32x8xbf16>
    %64 = vector.shape_cast %61 : vector<32x8xbf16> to vector<1x1x32x8xbf16>
    tpu.vector_store %arg7[%c0_22, %c0_23, %c0_24, %c0_25], %64 {strides = array<i32>} : memref<1x1x32x8xbf16, #tpu.memory_space<vmem>>, vector<1x1x32x8xbf16>,
    return
  }
  func.func @transform_0(%arg0: i32, %arg1: i32, %arg2: i32) -> (i32, i32, i32, i32) {
    %c0_i32 = arith.constant 0 : i32
    %c0_i32_0 = arith.constant 0 : i32
    %c0_i32_1 = arith.constant 0 : i32
    %c0_i32_2 = arith.constant 0 : i32
    return %arg1, %c0_i32, %c0_i32_0, %c0_i32_1 : i32, i32, i32, i32
  }
  func.func @transform_1(%arg0: i32, %arg1: i32, %arg2: i32) -> (i32, i32, i32) {
    %c0_i32 = arith.constant 0 : i32
    %c0_i32_0 = arith.constant 0 : i32
    %c0_i32_1 = arith.constant 0 : i32
    return %c0_i32, %c0_i32_0, %arg0 : i32, i32, i32
  }
  func.func @transform_2(%arg0: i32, %arg1: i32, %arg2: i32) -> (i32, i32) {
    %c0_i32 = arith.constant 0 : i32
    %c0_i32_0 = arith.constant 0 : i32
    return %c0_i32, %arg0 : i32, i32
  }
  func.func @transform_3(%arg0: i32, %arg1: i32, %arg2: i32) -> (i32, i32) {
    %c0_i32 = arith.constant 0 : i32
    %c0_i32_0 = arith.constant 0 : i32
    return %c0_i32, %arg0 : i32, i32
  }
  func.func @transform_4(%arg0: i32, %arg1: i32, %arg2: i32) -> (i32, i32, i32, i32) {
    %c0_i32 = arith.constant 0 : i32
    %c0_i32_0 = arith.constant 0 : i32
    return %arg1, %arg2, %c0_i32, %arg0 : i32, i32, i32, i32
  }
}

module attributes {stable_mosaic.version = 11 : i64} {
  func.func @_conv3x3_kernel(%arg0: i32, %arg1: i32, %arg2: i32, %arg3: memref<1x4x40x8xbf16, #tpu.memory_space<vmem>>, %arg4: memref<3x72x16xbf16, #tpu.memory_space<vmem>>, %arg5: memref<1x16xf32, #tpu.memory_space<vmem>>, %arg6: memref<1x16xf32, #tpu.memory_space<vmem>>, %arg7: memref<1x1x16x16xbf16, #tpu.memory_space<vmem>>) attributes {dimension_semantics = [#tpu.dimension_semantics<parallel>, #tpu.dimension_semantics<parallel>, #tpu.dimension_semantics<arbitrary>], iteration_bounds = array<i64: 1, 2, 2>, scalar_prefetch = 0 : i64, scratch_operands = 0 : i64, tpu.core_type = #tpu.core_type<tc>, window_params = [{transform_indices = @transform_0, window_bounds = array<i64: 1, 4, 40, 8>}, {transform_indices = @transform_1, window_bounds = array<i64: 3, 72, 16>}, {transform_indices = @transform_2, window_bounds = array<i64: 1, 16>}, {transform_indices = @transform_3, window_bounds = array<i64: 1, 16>}, {transform_indices = @transform_4, window_bounds = array<i64: 1, 1, 16, 16>}]} {
    %c0_i32 = arith.constant 0 : i32
    %0 = arith.addi %arg2, %c0_i32 : i32
    %c0 = arith.constant 0 : index
    %1 = arith.index_cast %0 : i32 to index
    %c0_0 = arith.constant 0 : index
    %c0_1 = arith.constant 0 : index
    %2 = vector.load %arg3[%c0, %1, %c0_0, %c0_1] : memref<1x4x40x8xbf16, #tpu.memory_space<vmem>>, vector<1x1x40x8xbf16>
    %3 = vector.shape_cast %2 : vector<1x1x40x8xbf16> to vector<40x8xbf16>
    %4 = vector.extract_strided_slice %3 {offsets = [0, 0], sizes = [16, 8], strides = [1, 1]} : vector<40x8xbf16> to vector<16x8xbf16>
    %5 = vector.extract_strided_slice %3 {offsets = [1, 0], sizes = [16, 8], strides = [1, 1]} : vector<40x8xbf16> to vector<16x8xbf16>
    %6 = vector.extract_strided_slice %3 {offsets = [2, 0], sizes = [16, 8], strides = [1, 1]} : vector<40x8xbf16> to vector<16x8xbf16>
    %7 = vector.extract_strided_slice %3 {offsets = [8, 0], sizes = [16, 8], strides = [1, 1]} : vector<40x8xbf16> to vector<16x8xbf16>
    %8 = vector.extract_strided_slice %3 {offsets = [9, 0], sizes = [16, 8], strides = [1, 1]} : vector<40x8xbf16> to vector<16x8xbf16>
    %9 = vector.extract_strided_slice %3 {offsets = [10, 0], sizes = [16, 8], strides = [1, 1]} : vector<40x8xbf16> to vector<16x8xbf16>
    %10 = vector.extract_strided_slice %3 {offsets = [16, 0], sizes = [16, 8], strides = [1, 1]} : vector<40x8xbf16> to vector<16x8xbf16>
    %11 = vector.extract_strided_slice %3 {offsets = [17, 0], sizes = [16, 8], strides = [1, 1]} : vector<40x8xbf16> to vector<16x8xbf16>
    %12 = vector.extract_strided_slice %3 {offsets = [18, 0], sizes = [16, 8], strides = [1, 1]} : vector<40x8xbf16> to vector<16x8xbf16>
    %13 = tpu.concatenate %4, %5, %6, %7, %8, %9, %10, %11, %12 in 1 : vector<16x8xbf16>, vector<16x8xbf16>, vector<16x8xbf16>, vector<16x8xbf16>, vector<16x8xbf16>, vector<16x8xbf16>, vector<16x8xbf16>, vector<16x8xbf16>, vector<16x8xbf16> -> vector<16x72xbf16>
    %c0_2 = arith.constant 0 : index
    %c0_3 = arith.constant 0 : index
    %c0_4 = arith.constant 0 : index
    %14 = vector.load %arg4[%c0_2, %c0_3, %c0_4] : memref<3x72x16xbf16, #tpu.memory_space<vmem>>, vector<1x72x16xbf16>
    %15 = vector.shape_cast %14 : vector<1x72x16xbf16> to vector<72x16xbf16>
    %cst = arith.constant dense<0.000000e+00> : vector<16x16xf32>
    %16 = tpu.matmul %13, %15, %cst {dimension_numbers = #tpu.dot_dimension_numbers<[1], [0], [0], [1], [0, 0, 1, 1], [], []>} : vector<16x72xbf16>, vector<72x16xbf16>, vector<16x16xf32> -> vector<16x16xf32>
    %c1_i32 = arith.constant 1 : i32
    %17 = arith.addi %arg2, %c1_i32 : i32
    %c0_5 = arith.constant 0 : index
    %18 = arith.index_cast %17 : i32 to index
    %c0_6 = arith.constant 0 : index
    %c0_7 = arith.constant 0 : index
    %19 = vector.load %arg3[%c0_5, %18, %c0_6, %c0_7] : memref<1x4x40x8xbf16, #tpu.memory_space<vmem>>, vector<1x1x40x8xbf16>
    %20 = vector.shape_cast %19 : vector<1x1x40x8xbf16> to vector<40x8xbf16>
    %21 = vector.extract_strided_slice %20 {offsets = [0, 0], sizes = [16, 8], strides = [1, 1]} : vector<40x8xbf16> to vector<16x8xbf16>
    %22 = vector.extract_strided_slice %20 {offsets = [1, 0], sizes = [16, 8], strides = [1, 1]} : vector<40x8xbf16> to vector<16x8xbf16>
    %23 = vector.extract_strided_slice %20 {offsets = [2, 0], sizes = [16, 8], strides = [1, 1]} : vector<40x8xbf16> to vector<16x8xbf16>
    %24 = vector.extract_strided_slice %20 {offsets = [8, 0], sizes = [16, 8], strides = [1, 1]} : vector<40x8xbf16> to vector<16x8xbf16>
    %25 = vector.extract_strided_slice %20 {offsets = [9, 0], sizes = [16, 8], strides = [1, 1]} : vector<40x8xbf16> to vector<16x8xbf16>
    %26 = vector.extract_strided_slice %20 {offsets = [10, 0], sizes = [16, 8], strides = [1, 1]} : vector<40x8xbf16> to vector<16x8xbf16>
    %27 = vector.extract_strided_slice %20 {offsets = [16, 0], sizes = [16, 8], strides = [1, 1]} : vector<40x8xbf16> to vector<16x8xbf16>
    %28 = vector.extract_strided_slice %20 {offsets = [17, 0], sizes = [16, 8], strides = [1, 1]} : vector<40x8xbf16> to vector<16x8xbf16>
    %29 = vector.extract_strided_slice %20 {offsets = [18, 0], sizes = [16, 8], strides = [1, 1]} : vector<40x8xbf16> to vector<16x8xbf16>
    %30 = tpu.concatenate %21, %22, %23, %24, %25, %26, %27, %28, %29 in 1 : vector<16x8xbf16>, vector<16x8xbf16>, vector<16x8xbf16>, vector<16x8xbf16>, vector<16x8xbf16>, vector<16x8xbf16>, vector<16x8xbf16>, vector<16x8xbf16>, vector<16x8xbf16> -> vector<16x72xbf16>
    %c1 = arith.constant 1 : index
    %c0_8 = arith.constant 0 : index
    %c0_9 = arith.constant 0 : index
    %31 = vector.load %arg4[%c1, %c0_8, %c0_9] : memref<3x72x16xbf16, #tpu.memory_space<vmem>>, vector<1x72x16xbf16>
    %32 = vector.shape_cast %31 : vector<1x72x16xbf16> to vector<72x16xbf16>
    %cst_10 = arith.constant dense<0.000000e+00> : vector<16x16xf32>
    %33 = tpu.matmul %30, %32, %cst_10 {dimension_numbers = #tpu.dot_dimension_numbers<[1], [0], [0], [1], [0, 0, 1, 1], [], []>} : vector<16x72xbf16>, vector<72x16xbf16>, vector<16x16xf32> -> vector<16x16xf32>
    %34 = arith.addf %16, %33 : vector<16x16xf32>
    %c2_i32 = arith.constant 2 : i32
    %35 = arith.addi %arg2, %c2_i32 : i32
    %c0_11 = arith.constant 0 : index
    %36 = arith.index_cast %35 : i32 to index
    %c0_12 = arith.constant 0 : index
    %c0_13 = arith.constant 0 : index
    %37 = vector.load %arg3[%c0_11, %36, %c0_12, %c0_13] : memref<1x4x40x8xbf16, #tpu.memory_space<vmem>>, vector<1x1x40x8xbf16>
    %38 = vector.shape_cast %37 : vector<1x1x40x8xbf16> to vector<40x8xbf16>
    %39 = vector.extract_strided_slice %38 {offsets = [0, 0], sizes = [16, 8], strides = [1, 1]} : vector<40x8xbf16> to vector<16x8xbf16>
    %40 = vector.extract_strided_slice %38 {offsets = [1, 0], sizes = [16, 8], strides = [1, 1]} : vector<40x8xbf16> to vector<16x8xbf16>
    %41 = vector.extract_strided_slice %38 {offsets = [2, 0], sizes = [16, 8], strides = [1, 1]} : vector<40x8xbf16> to vector<16x8xbf16>
    %42 = vector.extract_strided_slice %38 {offsets = [8, 0], sizes = [16, 8], strides = [1, 1]} : vector<40x8xbf16> to vector<16x8xbf16>
    %43 = vector.extract_strided_slice %38 {offsets = [9, 0], sizes = [16, 8], strides = [1, 1]} : vector<40x8xbf16> to vector<16x8xbf16>
    %44 = vector.extract_strided_slice %38 {offsets = [10, 0], sizes = [16, 8], strides = [1, 1]} : vector<40x8xbf16> to vector<16x8xbf16>
    %45 = vector.extract_strided_slice %38 {offsets = [16, 0], sizes = [16, 8], strides = [1, 1]} : vector<40x8xbf16> to vector<16x8xbf16>
    %46 = vector.extract_strided_slice %38 {offsets = [17, 0], sizes = [16, 8], strides = [1, 1]} : vector<40x8xbf16> to vector<16x8xbf16>
    %47 = vector.extract_strided_slice %38 {offsets = [18, 0], sizes = [16, 8], strides = [1, 1]} : vector<40x8xbf16> to vector<16x8xbf16>
    %48 = tpu.concatenate %39, %40, %41, %42, %43, %44, %45, %46, %47 in 1 : vector<16x8xbf16>, vector<16x8xbf16>, vector<16x8xbf16>, vector<16x8xbf16>, vector<16x8xbf16>, vector<16x8xbf16>, vector<16x8xbf16>, vector<16x8xbf16>, vector<16x8xbf16> -> vector<16x72xbf16>
    %c2 = arith.constant 2 : index
    %c0_14 = arith.constant 0 : index
    %c0_15 = arith.constant 0 : index
    %49 = vector.load %arg4[%c2, %c0_14, %c0_15] : memref<3x72x16xbf16, #tpu.memory_space<vmem>>, vector<1x72x16xbf16>
    %50 = vector.shape_cast %49 : vector<1x72x16xbf16> to vector<72x16xbf16>
    %cst_16 = arith.constant dense<0.000000e+00> : vector<16x16xf32>
    %51 = tpu.matmul %48, %50, %cst_16 {dimension_numbers = #tpu.dot_dimension_numbers<[1], [0], [0], [1], [0, 0, 1, 1], [], []>} : vector<16x72xbf16>, vector<72x16xbf16>, vector<16x16xf32> -> vector<16x16xf32>
    %52 = arith.addf %34, %51 : vector<16x16xf32>
    %c0_17 = arith.constant 0 : index
    %c0_18 = arith.constant 0 : index
    %53 = vector.load %arg5[%c0_17, %c0_18] : memref<1x16xf32, #tpu.memory_space<vmem>>, vector<1x16xf32>
    %54 = vector.broadcast %53 : vector<1x16xf32> to vector<16x16xf32>
    %55 = arith.mulf %52, %54 : vector<16x16xf32>
    %c0_19 = arith.constant 0 : index
    %c0_20 = arith.constant 0 : index
    %56 = vector.load %arg6[%c0_19, %c0_20] : memref<1x16xf32, #tpu.memory_space<vmem>>, vector<1x16xf32>
    %57 = vector.broadcast %56 : vector<1x16xf32> to vector<16x16xf32>
    %58 = arith.addf %55, %57 : vector<16x16xf32>
    %cst_21 = arith.constant 0.000000e+00 : f32
    %59 = vector.broadcast %cst_21 : f32 to vector<16x16xf32>
    %60 = arith.maximumf %58, %59 : vector<16x16xf32>
    %61 = arith.truncf %60 : vector<16x16xf32> to vector<16x16xbf16>
    %c0_22 = arith.constant 0 : index
    %c0_23 = arith.constant 0 : index
    %c0_24 = arith.constant 0 : index
    %c0_25 = arith.constant 0 : index
    %62 = vector.load %arg7[%c0_22, %c0_23, %c0_24, %c0_25] : memref<1x1x16x16xbf16, #tpu.memory_space<vmem>>, vector<1x1x16x16xbf16>
    %63 = vector.shape_cast %62 : vector<1x1x16x16xbf16> to vector<16x16xbf16>
    %64 = vector.shape_cast %61 : vector<16x16xbf16> to vector<1x1x16x16xbf16>
    tpu.vector_store %arg7[%c0_22, %c0_23, %c0_24, %c0_25], %64 {strides = array<i32>} : memref<1x1x16x16xbf16, #tpu.memory_space<vmem>>, vector<1x1x16x16xbf16>,
    return
  }
  func.func @transform_0(%arg0: i32, %arg1: i32, %arg2: i32) -> (i32, i32, i32, i32) {
    %c0_i32 = arith.constant 0 : i32
    %c0_i32_0 = arith.constant 0 : i32
    %c0_i32_1 = arith.constant 0 : i32
    %c0_i32_2 = arith.constant 0 : i32
    return %arg1, %c0_i32, %c0_i32_0, %c0_i32_1 : i32, i32, i32, i32
  }
  func.func @transform_1(%arg0: i32, %arg1: i32, %arg2: i32) -> (i32, i32, i32) {
    %c0_i32 = arith.constant 0 : i32
    %c0_i32_0 = arith.constant 0 : i32
    %c0_i32_1 = arith.constant 0 : i32
    return %c0_i32, %c0_i32_0, %arg0 : i32, i32, i32
  }
  func.func @transform_2(%arg0: i32, %arg1: i32, %arg2: i32) -> (i32, i32) {
    %c0_i32 = arith.constant 0 : i32
    %c0_i32_0 = arith.constant 0 : i32
    return %c0_i32, %arg0 : i32, i32
  }
  func.func @transform_3(%arg0: i32, %arg1: i32, %arg2: i32) -> (i32, i32) {
    %c0_i32 = arith.constant 0 : i32
    %c0_i32_0 = arith.constant 0 : i32
    return %c0_i32, %arg0 : i32, i32
  }
  func.func @transform_4(%arg0: i32, %arg1: i32, %arg2: i32) -> (i32, i32, i32, i32) {
    %c0_i32 = arith.constant 0 : i32
    %c0_i32_0 = arith.constant 0 : i32
    return %arg1, %arg2, %c0_i32, %arg0 : i32, i32, i32, i32
  }
}

module attributes {stable_mosaic.version = 11 : i64} {
  func.func @_conv3x3_kernel(%arg0: i32, %arg1: i32, %arg2: i32, %arg3: memref<1x4x40x16xbf16, #tpu.memory_space<vmem>>, %arg4: memref<3x144x16xbf16, #tpu.memory_space<vmem>>, %arg5: memref<1x16xf32, #tpu.memory_space<vmem>>, %arg6: memref<1x16xf32, #tpu.memory_space<vmem>>, %arg7: memref<1x1x16x16xbf16, #tpu.memory_space<vmem>>) attributes {dimension_semantics = [#tpu.dimension_semantics<parallel>, #tpu.dimension_semantics<parallel>, #tpu.dimension_semantics<arbitrary>], iteration_bounds = array<i64: 1, 2, 2>, scalar_prefetch = 0 : i64, scratch_operands = 0 : i64, tpu.core_type = #tpu.core_type<tc>, window_params = [{transform_indices = @transform_0, window_bounds = array<i64: 1, 4, 40, 16>}, {transform_indices = @transform_1, window_bounds = array<i64: 3, 144, 16>}, {transform_indices = @transform_2, window_bounds = array<i64: 1, 16>}, {transform_indices = @transform_3, window_bounds = array<i64: 1, 16>}, {transform_indices = @transform_4, window_bounds = array<i64: 1, 1, 16, 16>}]} {
    %c0_i32 = arith.constant 0 : i32
    %0 = arith.addi %arg2, %c0_i32 : i32
    %c0 = arith.constant 0 : index
    %1 = arith.index_cast %0 : i32 to index
    %c0_0 = arith.constant 0 : index
    %c0_1 = arith.constant 0 : index
    %2 = vector.load %arg3[%c0, %1, %c0_0, %c0_1] : memref<1x4x40x16xbf16, #tpu.memory_space<vmem>>, vector<1x1x40x16xbf16>
    %3 = vector.shape_cast %2 : vector<1x1x40x16xbf16> to vector<40x16xbf16>
    %4 = vector.extract_strided_slice %3 {offsets = [0, 0], sizes = [16, 16], strides = [1, 1]} : vector<40x16xbf16> to vector<16x16xbf16>
    %5 = vector.extract_strided_slice %3 {offsets = [1, 0], sizes = [16, 16], strides = [1, 1]} : vector<40x16xbf16> to vector<16x16xbf16>
    %6 = vector.extract_strided_slice %3 {offsets = [2, 0], sizes = [16, 16], strides = [1, 1]} : vector<40x16xbf16> to vector<16x16xbf16>
    %7 = vector.extract_strided_slice %3 {offsets = [8, 0], sizes = [16, 16], strides = [1, 1]} : vector<40x16xbf16> to vector<16x16xbf16>
    %8 = vector.extract_strided_slice %3 {offsets = [9, 0], sizes = [16, 16], strides = [1, 1]} : vector<40x16xbf16> to vector<16x16xbf16>
    %9 = vector.extract_strided_slice %3 {offsets = [10, 0], sizes = [16, 16], strides = [1, 1]} : vector<40x16xbf16> to vector<16x16xbf16>
    %10 = vector.extract_strided_slice %3 {offsets = [16, 0], sizes = [16, 16], strides = [1, 1]} : vector<40x16xbf16> to vector<16x16xbf16>
    %11 = vector.extract_strided_slice %3 {offsets = [17, 0], sizes = [16, 16], strides = [1, 1]} : vector<40x16xbf16> to vector<16x16xbf16>
    %12 = vector.extract_strided_slice %3 {offsets = [18, 0], sizes = [16, 16], strides = [1, 1]} : vector<40x16xbf16> to vector<16x16xbf16>
    %13 = tpu.concatenate %4, %5, %6, %7, %8, %9, %10, %11, %12 in 1 : vector<16x16xbf16>, vector<16x16xbf16>, vector<16x16xbf16>, vector<16x16xbf16>, vector<16x16xbf16>, vector<16x16xbf16>, vector<16x16xbf16>, vector<16x16xbf16>, vector<16x16xbf16> -> vector<16x144xbf16>
    %c0_2 = arith.constant 0 : index
    %c0_3 = arith.constant 0 : index
    %c0_4 = arith.constant 0 : index
    %14 = vector.load %arg4[%c0_2, %c0_3, %c0_4] : memref<3x144x16xbf16, #tpu.memory_space<vmem>>, vector<1x144x16xbf16>
    %15 = vector.shape_cast %14 : vector<1x144x16xbf16> to vector<144x16xbf16>
    %cst = arith.constant dense<0.000000e+00> : vector<16x16xf32>
    %16 = tpu.matmul %13, %15, %cst {dimension_numbers = #tpu.dot_dimension_numbers<[1], [0], [0], [1], [0, 0, 1, 1], [], []>} : vector<16x144xbf16>, vector<144x16xbf16>, vector<16x16xf32> -> vector<16x16xf32>
    %c1_i32 = arith.constant 1 : i32
    %17 = arith.addi %arg2, %c1_i32 : i32
    %c0_5 = arith.constant 0 : index
    %18 = arith.index_cast %17 : i32 to index
    %c0_6 = arith.constant 0 : index
    %c0_7 = arith.constant 0 : index
    %19 = vector.load %arg3[%c0_5, %18, %c0_6, %c0_7] : memref<1x4x40x16xbf16, #tpu.memory_space<vmem>>, vector<1x1x40x16xbf16>
    %20 = vector.shape_cast %19 : vector<1x1x40x16xbf16> to vector<40x16xbf16>
    %21 = vector.extract_strided_slice %20 {offsets = [0, 0], sizes = [16, 16], strides = [1, 1]} : vector<40x16xbf16> to vector<16x16xbf16>
    %22 = vector.extract_strided_slice %20 {offsets = [1, 0], sizes = [16, 16], strides = [1, 1]} : vector<40x16xbf16> to vector<16x16xbf16>
    %23 = vector.extract_strided_slice %20 {offsets = [2, 0], sizes = [16, 16], strides = [1, 1]} : vector<40x16xbf16> to vector<16x16xbf16>
    %24 = vector.extract_strided_slice %20 {offsets = [8, 0], sizes = [16, 16], strides = [1, 1]} : vector<40x16xbf16> to vector<16x16xbf16>
    %25 = vector.extract_strided_slice %20 {offsets = [9, 0], sizes = [16, 16], strides = [1, 1]} : vector<40x16xbf16> to vector<16x16xbf16>
    %26 = vector.extract_strided_slice %20 {offsets = [10, 0], sizes = [16, 16], strides = [1, 1]} : vector<40x16xbf16> to vector<16x16xbf16>
    %27 = vector.extract_strided_slice %20 {offsets = [16, 0], sizes = [16, 16], strides = [1, 1]} : vector<40x16xbf16> to vector<16x16xbf16>
    %28 = vector.extract_strided_slice %20 {offsets = [17, 0], sizes = [16, 16], strides = [1, 1]} : vector<40x16xbf16> to vector<16x16xbf16>
    %29 = vector.extract_strided_slice %20 {offsets = [18, 0], sizes = [16, 16], strides = [1, 1]} : vector<40x16xbf16> to vector<16x16xbf16>
    %30 = tpu.concatenate %21, %22, %23, %24, %25, %26, %27, %28, %29 in 1 : vector<16x16xbf16>, vector<16x16xbf16>, vector<16x16xbf16>, vector<16x16xbf16>, vector<16x16xbf16>, vector<16x16xbf16>, vector<16x16xbf16>, vector<16x16xbf16>, vector<16x16xbf16> -> vector<16x144xbf16>
    %c1 = arith.constant 1 : index
    %c0_8 = arith.constant 0 : index
    %c0_9 = arith.constant 0 : index
    %31 = vector.load %arg4[%c1, %c0_8, %c0_9] : memref<3x144x16xbf16, #tpu.memory_space<vmem>>, vector<1x144x16xbf16>
    %32 = vector.shape_cast %31 : vector<1x144x16xbf16> to vector<144x16xbf16>
    %cst_10 = arith.constant dense<0.000000e+00> : vector<16x16xf32>
    %33 = tpu.matmul %30, %32, %cst_10 {dimension_numbers = #tpu.dot_dimension_numbers<[1], [0], [0], [1], [0, 0, 1, 1], [], []>} : vector<16x144xbf16>, vector<144x16xbf16>, vector<16x16xf32> -> vector<16x16xf32>
    %34 = arith.addf %16, %33 : vector<16x16xf32>
    %c2_i32 = arith.constant 2 : i32
    %35 = arith.addi %arg2, %c2_i32 : i32
    %c0_11 = arith.constant 0 : index
    %36 = arith.index_cast %35 : i32 to index
    %c0_12 = arith.constant 0 : index
    %c0_13 = arith.constant 0 : index
    %37 = vector.load %arg3[%c0_11, %36, %c0_12, %c0_13] : memref<1x4x40x16xbf16, #tpu.memory_space<vmem>>, vector<1x1x40x16xbf16>
    %38 = vector.shape_cast %37 : vector<1x1x40x16xbf16> to vector<40x16xbf16>
    %39 = vector.extract_strided_slice %38 {offsets = [0, 0], sizes = [16, 16], strides = [1, 1]} : vector<40x16xbf16> to vector<16x16xbf16>
    %40 = vector.extract_strided_slice %38 {offsets = [1, 0], sizes = [16, 16], strides = [1, 1]} : vector<40x16xbf16> to vector<16x16xbf16>
    %41 = vector.extract_strided_slice %38 {offsets = [2, 0], sizes = [16, 16], strides = [1, 1]} : vector<40x16xbf16> to vector<16x16xbf16>
    %42 = vector.extract_strided_slice %38 {offsets = [8, 0], sizes = [16, 16], strides = [1, 1]} : vector<40x16xbf16> to vector<16x16xbf16>
    %43 = vector.extract_strided_slice %38 {offsets = [9, 0], sizes = [16, 16], strides = [1, 1]} : vector<40x16xbf16> to vector<16x16xbf16>
    %44 = vector.extract_strided_slice %38 {offsets = [10, 0], sizes = [16, 16], strides = [1, 1]} : vector<40x16xbf16> to vector<16x16xbf16>
    %45 = vector.extract_strided_slice %38 {offsets = [16, 0], sizes = [16, 16], strides = [1, 1]} : vector<40x16xbf16> to vector<16x16xbf16>
    %46 = vector.extract_strided_slice %38 {offsets = [17, 0], sizes = [16, 16], strides = [1, 1]} : vector<40x16xbf16> to vector<16x16xbf16>
    %47 = vector.extract_strided_slice %38 {offsets = [18, 0], sizes = [16, 16], strides = [1, 1]} : vector<40x16xbf16> to vector<16x16xbf16>
    %48 = tpu.concatenate %39, %40, %41, %42, %43, %44, %45, %46, %47 in 1 : vector<16x16xbf16>, vector<16x16xbf16>, vector<16x16xbf16>, vector<16x16xbf16>, vector<16x16xbf16>, vector<16x16xbf16>, vector<16x16xbf16>, vector<16x16xbf16>, vector<16x16xbf16> -> vector<16x144xbf16>
    %c2 = arith.constant 2 : index
    %c0_14 = arith.constant 0 : index
    %c0_15 = arith.constant 0 : index
    %49 = vector.load %arg4[%c2, %c0_14, %c0_15] : memref<3x144x16xbf16, #tpu.memory_space<vmem>>, vector<1x144x16xbf16>
    %50 = vector.shape_cast %49 : vector<1x144x16xbf16> to vector<144x16xbf16>
    %cst_16 = arith.constant dense<0.000000e+00> : vector<16x16xf32>
    %51 = tpu.matmul %48, %50, %cst_16 {dimension_numbers = #tpu.dot_dimension_numbers<[1], [0], [0], [1], [0, 0, 1, 1], [], []>} : vector<16x144xbf16>, vector<144x16xbf16>, vector<16x16xf32> -> vector<16x16xf32>
    %52 = arith.addf %34, %51 : vector<16x16xf32>
    %c0_17 = arith.constant 0 : index
    %c0_18 = arith.constant 0 : index
    %53 = vector.load %arg5[%c0_17, %c0_18] : memref<1x16xf32, #tpu.memory_space<vmem>>, vector<1x16xf32>
    %54 = vector.broadcast %53 : vector<1x16xf32> to vector<16x16xf32>
    %55 = arith.mulf %52, %54 : vector<16x16xf32>
    %c0_19 = arith.constant 0 : index
    %c0_20 = arith.constant 0 : index
    %56 = vector.load %arg6[%c0_19, %c0_20] : memref<1x16xf32, #tpu.memory_space<vmem>>, vector<1x16xf32>
    %57 = vector.broadcast %56 : vector<1x16xf32> to vector<16x16xf32>
    %58 = arith.addf %55, %57 : vector<16x16xf32>
    %cst_21 = arith.constant 0.000000e+00 : f32
    %59 = vector.broadcast %cst_21 : f32 to vector<16x16xf32>
    %60 = arith.maximumf %58, %59 : vector<16x16xf32>
    %61 = arith.truncf %60 : vector<16x16xf32> to vector<16x16xbf16>
    %c0_22 = arith.constant 0 : index
    %c0_23 = arith.constant 0 : index
    %c0_24 = arith.constant 0 : index
    %c0_25 = arith.constant 0 : index
    %62 = vector.load %arg7[%c0_22, %c0_23, %c0_24, %c0_25] : memref<1x1x16x16xbf16, #tpu.memory_space<vmem>>, vector<1x1x16x16xbf16>
    %63 = vector.shape_cast %62 : vector<1x1x16x16xbf16> to vector<16x16xbf16>
    %64 = vector.shape_cast %61 : vector<16x16xbf16> to vector<1x1x16x16xbf16>
    tpu.vector_store %arg7[%c0_22, %c0_23, %c0_24, %c0_25], %64 {strides = array<i32>} : memref<1x1x16x16xbf16, #tpu.memory_space<vmem>>, vector<1x1x16x16xbf16>,
    return
  }
  func.func @transform_0(%arg0: i32, %arg1: i32, %arg2: i32) -> (i32, i32, i32, i32) {
    %c0_i32 = arith.constant 0 : i32
    %c0_i32_0 = arith.constant 0 : i32
    %c0_i32_1 = arith.constant 0 : i32
    %c0_i32_2 = arith.constant 0 : i32
    return %arg1, %c0_i32, %c0_i32_0, %c0_i32_1 : i32, i32, i32, i32
  }
  func.func @transform_1(%arg0: i32, %arg1: i32, %arg2: i32) -> (i32, i32, i32) {
    %c0_i32 = arith.constant 0 : i32
    %c0_i32_0 = arith.constant 0 : i32
    %c0_i32_1 = arith.constant 0 : i32
    return %c0_i32, %c0_i32_0, %arg0 : i32, i32, i32
  }
  func.func @transform_2(%arg0: i32, %arg1: i32, %arg2: i32) -> (i32, i32) {
    %c0_i32 = arith.constant 0 : i32
    %c0_i32_0 = arith.constant 0 : i32
    return %c0_i32, %arg0 : i32, i32
  }
  func.func @transform_3(%arg0: i32, %arg1: i32, %arg2: i32) -> (i32, i32) {
    %c0_i32 = arith.constant 0 : i32
    %c0_i32_0 = arith.constant 0 : i32
    return %c0_i32, %arg0 : i32, i32
  }
  func.func @transform_4(%arg0: i32, %arg1: i32, %arg2: i32) -> (i32, i32, i32, i32) {
    %c0_i32 = arith.constant 0 : i32
    %c0_i32_0 = arith.constant 0 : i32
    return %arg1, %arg2, %c0_i32, %arg0 : i32, i32, i32, i32
  }
}

module attributes {stable_mosaic.version = 11 : i64} {
  func.func @_fused_matmul_kernel(%arg0: i32, %arg1: i32, %arg2: i32, %arg3: memref<8x16xbf16, #tpu.memory_space<vmem>>, %arg4: memref<16x64xbf16, #tpu.memory_space<vmem>>, %arg5: memref<1x64xf32, #tpu.memory_space<vmem>>, %arg6: memref<1x64xf32, #tpu.memory_space<vmem>>, %arg7: memref<8x64xbf16, #tpu.memory_space<vmem>>, %arg8: memref<8x64xf32, #tpu.memory_space<vmem>>) attributes {dimension_semantics = [#tpu.dimension_semantics<parallel>, #tpu.dimension_semantics<parallel>, #tpu.dimension_semantics<arbitrary>], iteration_bounds = array<i64: 2, 1, 1>, scalar_prefetch = 0 : i64, scratch_operands = 1 : i64, tpu.core_type = #tpu.core_type<tc>, window_params = [{transform_indices = @transform_0, window_bounds = array<i64: 8, 16>}, {transform_indices = @transform_1, window_bounds = array<i64: 16, 64>}, {transform_indices = @transform_2, window_bounds = array<i64: 1, 64>}, {transform_indices = @transform_3, window_bounds = array<i64: 1, 64>}, {transform_indices = @transform_4, window_bounds = array<i64: 8, 64>}]} {
    %c0_i32 = arith.constant 0 : i32
    %0 = arith.cmpi eq, %arg2, %c0_i32 : i32
    %1 = arith.extui %0 : i1 to i32
    %c0_i32_0 = arith.constant 0 : i32
    %2 = arith.cmpi ne, %1, %c0_i32_0 : i32
    scf.if %2 {
      %cst_10 = arith.constant 0.000000e+00 : f32
      %12 = vector.broadcast %cst_10 : f32 to vector<8x64xf32>
      %c0_11 = arith.constant 0 : index
      %c0_12 = arith.constant 0 : index
      %13 = vector.load %arg8[%c0_11, %c0_12] : memref<8x64xf32, #tpu.memory_space<vmem>>, vector<8x64xf32>
      tpu.vector_store %arg8[%c0_11, %c0_12], %12 {strides = array<i32>} : memref<8x64xf32, #tpu.memory_space<vmem>>, vector<8x64xf32>,
    } else {
    }
    %c0 = arith.constant 0 : index
    %c0_1 = arith.constant 0 : index
    %3 = vector.load %arg8[%c0, %c0_1] : memref<8x64xf32, #tpu.memory_space<vmem>>, vector<8x64xf32>
    %c0_2 = arith.constant 0 : index
    %c0_3 = arith.constant 0 : index
    %4 = vector.load %arg3[%c0_2, %c0_3] : memref<8x16xbf16, #tpu.memory_space<vmem>>, vector<8x16xbf16>
    %c0_4 = arith.constant 0 : index
    %c0_5 = arith.constant 0 : index
    %5 = vector.load %arg4[%c0_4, %c0_5] : memref<16x64xbf16, #tpu.memory_space<vmem>>, vector<16x64xbf16>
    %cst = arith.constant dense<0.000000e+00> : vector<8x64xf32>
    %6 = tpu.matmul %4, %5, %cst {dimension_numbers = #tpu.dot_dimension_numbers<[1], [0], [0], [1], [0, 0, 1, 1], [], []>} : vector<8x16xbf16>, vector<16x64xbf16>, vector<8x64xf32> -> vector<8x64xf32>
    %7 = arith.addf %3, %6 : vector<8x64xf32>
    %c0_6 = arith.constant 0 : index
    %c0_7 = arith.constant 0 : index
    %8 = vector.load %arg8[%c0_6, %c0_7] : memref<8x64xf32, #tpu.memory_space<vmem>>, vector<8x64xf32>
    tpu.vector_store %arg8[%c0_6, %c0_7], %7 {strides = array<i32>} : memref<8x64xf32, #tpu.memory_space<vmem>>, vector<8x64xf32>,
    %c0_i32_8 = arith.constant 0 : i32
    %9 = arith.cmpi eq, %arg2, %c0_i32_8 : i32
    %10 = arith.extui %9 : i1 to i32
    %c0_i32_9 = arith.constant 0 : i32
    %11 = arith.cmpi ne, %10, %c0_i32_9 : i32
    scf.if %11 {
      %c0_10 = arith.constant 0 : index
      %c0_11 = arith.constant 0 : index
      %12 = vector.load %arg8[%c0_10, %c0_11] : memref<8x64xf32, #tpu.memory_space<vmem>>, vector<8x64xf32>
      %c0_12 = arith.constant 0 : index
      %c0_13 = arith.constant 0 : index
      %13 = vector.load %arg5[%c0_12, %c0_13] : memref<1x64xf32, #tpu.memory_space<vmem>>, vector<1x64xf32>
      %14 = vector.broadcast %13 : vector<1x64xf32> to vector<8x64xf32>
      %15 = arith.mulf %12, %14 : vector<8x64xf32>
      %c0_14 = arith.constant 0 : index
      %c0_15 = arith.constant 0 : index
      %16 = vector.load %arg6[%c0_14, %c0_15] : memref<1x64xf32, #tpu.memory_space<vmem>>, vector<1x64xf32>
      %17 = vector.broadcast %16 : vector<1x64xf32> to vector<8x64xf32>
      %18 = arith.addf %15, %17 : vector<8x64xf32>
      %cst_16 = arith.constant 0.000000e+00 : f32
      %19 = vector.broadcast %cst_16 : f32 to vector<8x64xf32>
      %20 = arith.maximumf %18, %19 : vector<8x64xf32>
      %21 = arith.truncf %20 : vector<8x64xf32> to vector<8x64xbf16>
      %c0_17 = arith.constant 0 : index
      %c0_18 = arith.constant 0 : index
      %22 = vector.load %arg7[%c0_17, %c0_18] : memref<8x64xbf16, #tpu.memory_space<vmem>>, vector<8x64xbf16>
      tpu.vector_store %arg7[%c0_17, %c0_18], %21 {strides = array<i32>} : memref<8x64xbf16, #tpu.memory_space<vmem>>, vector<8x64xbf16>,
    } else {
    }
    return
  }
  func.func @transform_0(%arg0: i32, %arg1: i32, %arg2: i32) -> (i32, i32) {
    %c0_i32 = arith.constant 0 : i32
    return %arg0, %arg2 : i32, i32
  }
  func.func @transform_1(%arg0: i32, %arg1: i32, %arg2: i32) -> (i32, i32) {
    %c0_i32 = arith.constant 0 : i32
    return %arg2, %arg1 : i32, i32
  }
  func.func @transform_2(%arg0: i32, %arg1: i32, %arg2: i32) -> (i32, i32) {
    %c0_i32 = arith.constant 0 : i32
    %c0_i32_0 = arith.constant 0 : i32
    return %c0_i32, %arg1 : i32, i32
  }
  func.func @transform_3(%arg0: i32, %arg1: i32, %arg2: i32) -> (i32, i32) {
    %c0_i32 = arith.constant 0 : i32
    %c0_i32_0 = arith.constant 0 : i32
    return %c0_i32, %arg1 : i32, i32
  }
  func.func @transform_4(%arg0: i32, %arg1: i32, %arg2: i32) -> (i32, i32) {
    %c0_i32 = arith.constant 0 : i32
    return %arg0, %arg1 : i32, i32
  }
}

module attributes {stable_mosaic.version = 11 : i64} {
  func.func @_fused_matmul_kernel(%arg0: i32, %arg1: i32, %arg2: i32, %arg3: memref<64x8xbf16, #tpu.memory_space<vmem>>, %arg4: memref<8x8xbf16, #tpu.memory_space<vmem>>, %arg5: memref<1x8xf32, #tpu.memory_space<vmem>>, %arg6: memref<1x8xf32, #tpu.memory_space<vmem>>, %arg7: memref<64x8xbf16, #tpu.memory_space<vmem>>, %arg8: memref<64x8xf32, #tpu.memory_space<vmem>>) attributes {dimension_semantics = [#tpu.dimension_semantics<parallel>, #tpu.dimension_semantics<parallel>, #tpu.dimension_semantics<arbitrary>], iteration_bounds = array<i64: 2, 1, 1>, scalar_prefetch = 0 : i64, scratch_operands = 1 : i64, tpu.core_type = #tpu.core_type<tc>, window_params = [{transform_indices = @transform_0, window_bounds = array<i64: 64, 8>}, {transform_indices = @transform_1, window_bounds = array<i64: 8, 8>}, {transform_indices = @transform_2, window_bounds = array<i64: 1, 8>}, {transform_indices = @transform_3, window_bounds = array<i64: 1, 8>}, {transform_indices = @transform_4, window_bounds = array<i64: 64, 8>}]} {
    %c0_i32 = arith.constant 0 : i32
    %0 = arith.cmpi eq, %arg2, %c0_i32 : i32
    %1 = arith.extui %0 : i1 to i32
    %c0_i32_0 = arith.constant 0 : i32
    %2 = arith.cmpi ne, %1, %c0_i32_0 : i32
    scf.if %2 {
      %cst_10 = arith.constant 0.000000e+00 : f32
      %12 = vector.broadcast %cst_10 : f32 to vector<64x8xf32>
      %c0_11 = arith.constant 0 : index
      %c0_12 = arith.constant 0 : index
      %13 = vector.load %arg8[%c0_11, %c0_12] : memref<64x8xf32, #tpu.memory_space<vmem>>, vector<64x8xf32>
      tpu.vector_store %arg8[%c0_11, %c0_12], %12 {strides = array<i32>} : memref<64x8xf32, #tpu.memory_space<vmem>>, vector<64x8xf32>,
    } else {
    }
    %c0 = arith.constant 0 : index
    %c0_1 = arith.constant 0 : index
    %3 = vector.load %arg8[%c0, %c0_1] : memref<64x8xf32, #tpu.memory_space<vmem>>, vector<64x8xf32>
    %c0_2 = arith.constant 0 : index
    %c0_3 = arith.constant 0 : index
    %4 = vector.load %arg3[%c0_2, %c0_3] : memref<64x8xbf16, #tpu.memory_space<vmem>>, vector<64x8xbf16>
    %c0_4 = arith.constant 0 : index
    %c0_5 = arith.constant 0 : index
    %5 = vector.load %arg4[%c0_4, %c0_5] : memref<8x8xbf16, #tpu.memory_space<vmem>>, vector<8x8xbf16>
    %cst = arith.constant dense<0.000000e+00> : vector<64x8xf32>
    %6 = tpu.matmul %4, %5, %cst {dimension_numbers = #tpu.dot_dimension_numbers<[1], [0], [0], [1], [0, 0, 1, 1], [], []>} : vector<64x8xbf16>, vector<8x8xbf16>, vector<64x8xf32> -> vector<64x8xf32>
    %7 = arith.addf %3, %6 : vector<64x8xf32>
    %c0_6 = arith.constant 0 : index
    %c0_7 = arith.constant 0 : index
    %8 = vector.load %arg8[%c0_6, %c0_7] : memref<64x8xf32, #tpu.memory_space<vmem>>, vector<64x8xf32>
    tpu.vector_store %arg8[%c0_6, %c0_7], %7 {strides = array<i32>} : memref<64x8xf32, #tpu.memory_space<vmem>>, vector<64x8xf32>,
    %c0_i32_8 = arith.constant 0 : i32
    %9 = arith.cmpi eq, %arg2, %c0_i32_8 : i32
    %10 = arith.extui %9 : i1 to i32
    %c0_i32_9 = arith.constant 0 : i32
    %11 = arith.cmpi ne, %10, %c0_i32_9 : i32
    scf.if %11 {
      %c0_10 = arith.constant 0 : index
      %c0_11 = arith.constant 0 : index
      %12 = vector.load %arg8[%c0_10, %c0_11] : memref<64x8xf32, #tpu.memory_space<vmem>>, vector<64x8xf32>
      %c0_12 = arith.constant 0 : index
      %c0_13 = arith.constant 0 : index
      %13 = vector.load %arg5[%c0_12, %c0_13] : memref<1x8xf32, #tpu.memory_space<vmem>>, vector<1x8xf32>
      %14 = vector.broadcast %13 : vector<1x8xf32> to vector<64x8xf32>
      %15 = arith.mulf %12, %14 : vector<64x8xf32>
      %c0_14 = arith.constant 0 : index
      %c0_15 = arith.constant 0 : index
      %16 = vector.load %arg6[%c0_14, %c0_15] : memref<1x8xf32, #tpu.memory_space<vmem>>, vector<1x8xf32>
      %17 = vector.broadcast %16 : vector<1x8xf32> to vector<64x8xf32>
      %18 = arith.addf %15, %17 : vector<64x8xf32>
      %cst_16 = arith.constant 0.000000e+00 : f32
      %19 = vector.broadcast %cst_16 : f32 to vector<64x8xf32>
      %20 = arith.maximumf %18, %19 : vector<64x8xf32>
      %21 = arith.truncf %20 : vector<64x8xf32> to vector<64x8xbf16>
      %c0_17 = arith.constant 0 : index
      %c0_18 = arith.constant 0 : index
      %22 = vector.load %arg7[%c0_17, %c0_18] : memref<64x8xbf16, #tpu.memory_space<vmem>>, vector<64x8xbf16>
      tpu.vector_store %arg7[%c0_17, %c0_18], %21 {strides = array<i32>} : memref<64x8xbf16, #tpu.memory_space<vmem>>, vector<64x8xbf16>,
    } else {
    }
    return
  }
  func.func @transform_0(%arg0: i32, %arg1: i32, %arg2: i32) -> (i32, i32) {
    %c0_i32 = arith.constant 0 : i32
    return %arg0, %arg2 : i32, i32
  }
  func.func @transform_1(%arg0: i32, %arg1: i32, %arg2: i32) -> (i32, i32) {
    %c0_i32 = arith.constant 0 : i32
    return %arg2, %arg1 : i32, i32
  }
  func.func @transform_2(%arg0: i32, %arg1: i32, %arg2: i32) -> (i32, i32) {
    %c0_i32 = arith.constant 0 : i32
    %c0_i32_0 = arith.constant 0 : i32
    return %c0_i32, %arg1 : i32, i32
  }
  func.func @transform_3(%arg0: i32, %arg1: i32, %arg2: i32) -> (i32, i32) {
    %c0_i32 = arith.constant 0 : i32
    %c0_i32_0 = arith.constant 0 : i32
    return %c0_i32, %arg1 : i32, i32
  }
  func.func @transform_4(%arg0: i32, %arg1: i32, %arg2: i32) -> (i32, i32) {
    %c0_i32 = arith.constant 0 : i32
    return %arg0, %arg1 : i32, i32
  }
}

module attributes {stable_mosaic.version = 11 : i64} {
  func.func @_fused_matmul_kernel(%arg0: i32, %arg1: i32, %arg2: i32, %arg3: memref<64x8xbf16, #tpu.memory_space<vmem>>, %arg4: memref<8x32xbf16, #tpu.memory_space<vmem>>, %arg5: memref<1x32xf32, #tpu.memory_space<vmem>>, %arg6: memref<1x32xf32, #tpu.memory_space<vmem>>, %arg7: memref<64x32xbf16, #tpu.memory_space<vmem>>, %arg8: memref<64x32xf32, #tpu.memory_space<vmem>>) attributes {dimension_semantics = [#tpu.dimension_semantics<parallel>, #tpu.dimension_semantics<parallel>, #tpu.dimension_semantics<arbitrary>], iteration_bounds = array<i64: 2, 1, 1>, scalar_prefetch = 0 : i64, scratch_operands = 1 : i64, tpu.core_type = #tpu.core_type<tc>, window_params = [{transform_indices = @transform_0, window_bounds = array<i64: 64, 8>}, {transform_indices = @transform_1, window_bounds = array<i64: 8, 32>}, {transform_indices = @transform_2, window_bounds = array<i64: 1, 32>}, {transform_indices = @transform_3, window_bounds = array<i64: 1, 32>}, {transform_indices = @transform_4, window_bounds = array<i64: 64, 32>}]} {
    %c0_i32 = arith.constant 0 : i32
    %0 = arith.cmpi eq, %arg2, %c0_i32 : i32
    %1 = arith.extui %0 : i1 to i32
    %c0_i32_0 = arith.constant 0 : i32
    %2 = arith.cmpi ne, %1, %c0_i32_0 : i32
    scf.if %2 {
      %cst_10 = arith.constant 0.000000e+00 : f32
      %12 = vector.broadcast %cst_10 : f32 to vector<64x32xf32>
      %c0_11 = arith.constant 0 : index
      %c0_12 = arith.constant 0 : index
      %13 = vector.load %arg8[%c0_11, %c0_12] : memref<64x32xf32, #tpu.memory_space<vmem>>, vector<64x32xf32>
      tpu.vector_store %arg8[%c0_11, %c0_12], %12 {strides = array<i32>} : memref<64x32xf32, #tpu.memory_space<vmem>>, vector<64x32xf32>,
    } else {
    }
    %c0 = arith.constant 0 : index
    %c0_1 = arith.constant 0 : index
    %3 = vector.load %arg8[%c0, %c0_1] : memref<64x32xf32, #tpu.memory_space<vmem>>, vector<64x32xf32>
    %c0_2 = arith.constant 0 : index
    %c0_3 = arith.constant 0 : index
    %4 = vector.load %arg3[%c0_2, %c0_3] : memref<64x8xbf16, #tpu.memory_space<vmem>>, vector<64x8xbf16>
    %c0_4 = arith.constant 0 : index
    %c0_5 = arith.constant 0 : index
    %5 = vector.load %arg4[%c0_4, %c0_5] : memref<8x32xbf16, #tpu.memory_space<vmem>>, vector<8x32xbf16>
    %cst = arith.constant dense<0.000000e+00> : vector<64x32xf32>
    %6 = tpu.matmul %4, %5, %cst {dimension_numbers = #tpu.dot_dimension_numbers<[1], [0], [0], [1], [0, 0, 1, 1], [], []>} : vector<64x8xbf16>, vector<8x32xbf16>, vector<64x32xf32> -> vector<64x32xf32>
    %7 = arith.addf %3, %6 : vector<64x32xf32>
    %c0_6 = arith.constant 0 : index
    %c0_7 = arith.constant 0 : index
    %8 = vector.load %arg8[%c0_6, %c0_7] : memref<64x32xf32, #tpu.memory_space<vmem>>, vector<64x32xf32>
    tpu.vector_store %arg8[%c0_6, %c0_7], %7 {strides = array<i32>} : memref<64x32xf32, #tpu.memory_space<vmem>>, vector<64x32xf32>,
    %c0_i32_8 = arith.constant 0 : i32
    %9 = arith.cmpi eq, %arg2, %c0_i32_8 : i32
    %10 = arith.extui %9 : i1 to i32
    %c0_i32_9 = arith.constant 0 : i32
    %11 = arith.cmpi ne, %10, %c0_i32_9 : i32
    scf.if %11 {
      %c0_10 = arith.constant 0 : index
      %c0_11 = arith.constant 0 : index
      %12 = vector.load %arg8[%c0_10, %c0_11] : memref<64x32xf32, #tpu.memory_space<vmem>>, vector<64x32xf32>
      %c0_12 = arith.constant 0 : index
      %c0_13 = arith.constant 0 : index
      %13 = vector.load %arg5[%c0_12, %c0_13] : memref<1x32xf32, #tpu.memory_space<vmem>>, vector<1x32xf32>
      %14 = vector.broadcast %13 : vector<1x32xf32> to vector<64x32xf32>
      %15 = arith.mulf %12, %14 : vector<64x32xf32>
      %c0_14 = arith.constant 0 : index
      %c0_15 = arith.constant 0 : index
      %16 = vector.load %arg6[%c0_14, %c0_15] : memref<1x32xf32, #tpu.memory_space<vmem>>, vector<1x32xf32>
      %17 = vector.broadcast %16 : vector<1x32xf32> to vector<64x32xf32>
      %18 = arith.addf %15, %17 : vector<64x32xf32>
      %cst_16 = arith.constant 0.000000e+00 : f32
      %19 = vector.broadcast %cst_16 : f32 to vector<64x32xf32>
      %20 = arith.maximumf %18, %19 : vector<64x32xf32>
      %21 = arith.truncf %20 : vector<64x32xf32> to vector<64x32xbf16>
      %c0_17 = arith.constant 0 : index
      %c0_18 = arith.constant 0 : index
      %22 = vector.load %arg7[%c0_17, %c0_18] : memref<64x32xbf16, #tpu.memory_space<vmem>>, vector<64x32xbf16>
      tpu.vector_store %arg7[%c0_17, %c0_18], %21 {strides = array<i32>} : memref<64x32xbf16, #tpu.memory_space<vmem>>, vector<64x32xbf16>,
    } else {
    }
    return
  }
  func.func @transform_0(%arg0: i32, %arg1: i32, %arg2: i32) -> (i32, i32) {
    %c0_i32 = arith.constant 0 : i32
    return %arg0, %arg2 : i32, i32
  }
  func.func @transform_1(%arg0: i32, %arg1: i32, %arg2: i32) -> (i32, i32) {
    %c0_i32 = arith.constant 0 : i32
    return %arg2, %arg1 : i32, i32
  }
  func.func @transform_2(%arg0: i32, %arg1: i32, %arg2: i32) -> (i32, i32) {
    %c0_i32 = arith.constant 0 : i32
    %c0_i32_0 = arith.constant 0 : i32
    return %c0_i32, %arg1 : i32, i32
  }
  func.func @transform_3(%arg0: i32, %arg1: i32, %arg2: i32) -> (i32, i32) {
    %c0_i32 = arith.constant 0 : i32
    %c0_i32_0 = arith.constant 0 : i32
    return %c0_i32, %arg1 : i32, i32
  }
  func.func @transform_4(%arg0: i32, %arg1: i32, %arg2: i32) -> (i32, i32) {
    %c0_i32 = arith.constant 0 : i32
    return %arg0, %arg1 : i32, i32
  }
}

module attributes {stable_mosaic.version = 11 : i64} {
  func.func @_fused_matmul_out_kernel(%arg0: i32, %arg1: i32, %arg2: memref<512x4xbf16, #tpu.memory_space<vmem>>, %arg3: memref<4x4xbf16, #tpu.memory_space<vmem>>, %arg4: memref<1x4xf32, #tpu.memory_space<vmem>>, %arg5: memref<1x4xf32, #tpu.memory_space<vmem>>, %arg6: memref<4x2xbf16, #tpu.memory_space<vmem>>, %arg7: memref<1x2xf32, #tpu.memory_space<vmem>>, %arg8: memref<512x2xf32, #tpu.memory_space<vmem>>, %arg9: memref<512x4xf32, #tpu.memory_space<vmem>>) attributes {dimension_semantics = [#tpu.dimension_semantics<parallel>, #tpu.dimension_semantics<arbitrary>], iteration_bounds = array<i64: 2, 1>, scalar_prefetch = 0 : i64, scratch_operands = 1 : i64, tpu.core_type = #tpu.core_type<tc>, window_params = [{transform_indices = @transform_0, window_bounds = array<i64: 512, 4>}, {transform_indices = @transform_1, window_bounds = array<i64: 4, 4>}, {pipeline_mode = #tpu.pipeline_mode<synchronous>, transform_indices = @transform_2, window_bounds = array<i64: 1, 4>}, {pipeline_mode = #tpu.pipeline_mode<synchronous>, transform_indices = @transform_3, window_bounds = array<i64: 1, 4>}, {pipeline_mode = #tpu.pipeline_mode<synchronous>, transform_indices = @transform_4, window_bounds = array<i64: 4, 2>}, {pipeline_mode = #tpu.pipeline_mode<synchronous>, transform_indices = @transform_5, window_bounds = array<i64: 1, 2>}, {transform_indices = @transform_6, window_bounds = array<i64: 512, 2>}]} {
    %c0_i32 = arith.constant 0 : i32
    %0 = arith.cmpi eq, %arg1, %c0_i32 : i32
    %1 = arith.extui %0 : i1 to i32
    %c0_i32_0 = arith.constant 0 : i32
    %2 = arith.cmpi ne, %1, %c0_i32_0 : i32
    scf.if %2 {
      %cst_10 = arith.constant 0.000000e+00 : f32
      %12 = vector.broadcast %cst_10 : f32 to vector<512x4xf32>
      %c0_11 = arith.constant 0 : index
      %c0_12 = arith.constant 0 : index
      %13 = vector.load %arg9[%c0_11, %c0_12] : memref<512x4xf32, #tpu.memory_space<vmem>>, vector<512x4xf32>
      tpu.vector_store %arg9[%c0_11, %c0_12], %12 {strides = array<i32>} : memref<512x4xf32, #tpu.memory_space<vmem>>, vector<512x4xf32>,
    } else {
    }
    %c0 = arith.constant 0 : index
    %c0_1 = arith.constant 0 : index
    %3 = vector.load %arg9[%c0, %c0_1] : memref<512x4xf32, #tpu.memory_space<vmem>>, vector<512x4xf32>
    %c0_2 = arith.constant 0 : index
    %c0_3 = arith.constant 0 : index
    %4 = vector.load %arg2[%c0_2, %c0_3] : memref<512x4xbf16, #tpu.memory_space<vmem>>, vector<512x4xbf16>
    %c0_4 = arith.constant 0 : index
    %c0_5 = arith.constant 0 : index
    %5 = vector.load %arg3[%c0_4, %c0_5] : memref<4x4xbf16, #tpu.memory_space<vmem>>, vector<4x4xbf16>
    %cst = arith.constant dense<0.000000e+00> : vector<512x4xf32>
    %6 = tpu.matmul %4, %5, %cst {dimension_numbers = #tpu.dot_dimension_numbers<[1], [0], [0], [1], [0, 0, 1, 1], [], []>} : vector<512x4xbf16>, vector<4x4xbf16>, vector<512x4xf32> -> vector<512x4xf32>
    %7 = arith.addf %3, %6 : vector<512x4xf32>
    %c0_6 = arith.constant 0 : index
    %c0_7 = arith.constant 0 : index
    %8 = vector.load %arg9[%c0_6, %c0_7] : memref<512x4xf32, #tpu.memory_space<vmem>>, vector<512x4xf32>
    tpu.vector_store %arg9[%c0_6, %c0_7], %7 {strides = array<i32>} : memref<512x4xf32, #tpu.memory_space<vmem>>, vector<512x4xf32>,
    %c0_i32_8 = arith.constant 0 : i32
    %9 = arith.cmpi eq, %arg1, %c0_i32_8 : i32
    %10 = arith.extui %9 : i1 to i32
    %c0_i32_9 = arith.constant 0 : i32
    %11 = arith.cmpi ne, %10, %c0_i32_9 : i32
    scf.if %11 {
      %c0_10 = arith.constant 0 : index
      %c0_11 = arith.constant 0 : index
      %12 = vector.load %arg9[%c0_10, %c0_11] : memref<512x4xf32, #tpu.memory_space<vmem>>, vector<512x4xf32>
      %c0_12 = arith.constant 0 : index
      %c0_13 = arith.constant 0 : index
      %13 = vector.load %arg4[%c0_12, %c0_13] : memref<1x4xf32, #tpu.memory_space<vmem>>, vector<1x4xf32>
      %14 = vector.broadcast %13 : vector<1x4xf32> to vector<512x4xf32>
      %15 = arith.mulf %12, %14 : vector<512x4xf32>
      %c0_14 = arith.constant 0 : index
      %c0_15 = arith.constant 0 : index
      %16 = vector.load %arg5[%c0_14, %c0_15] : memref<1x4xf32, #tpu.memory_space<vmem>>, vector<1x4xf32>
      %17 = vector.broadcast %16 : vector<1x4xf32> to vector<512x4xf32>
      %18 = arith.addf %15, %17 : vector<512x4xf32>
      %cst_16 = arith.constant 0.000000e+00 : f32
      %19 = vector.broadcast %cst_16 : f32 to vector<512x4xf32>
      %20 = arith.maximumf %18, %19 : vector<512x4xf32>
      %21 = arith.truncf %20 : vector<512x4xf32> to vector<512x4xbf16>
      %c0_17 = arith.constant 0 : index
      %c0_18 = arith.constant 0 : index
      %22 = vector.load %arg6[%c0_17, %c0_18] : memref<4x2xbf16, #tpu.memory_space<vmem>>, vector<4x2xbf16>
      %cst_19 = arith.constant dense<0.000000e+00> : vector<512x2xf32>
      %23 = tpu.matmul %21, %22, %cst_19 {dimension_numbers = #tpu.dot_dimension_numbers<[1], [0], [0], [1], [0, 0, 1, 1], [], []>} : vector<512x4xbf16>, vector<4x2xbf16>, vector<512x2xf32> -> vector<512x2xf32>
      %c0_20 = arith.constant 0 : index
      %c0_21 = arith.constant 0 : index
      %24 = vector.load %arg7[%c0_20, %c0_21] : memref<1x2xf32, #tpu.memory_space<vmem>>, vector<1x2xf32>
      %25 = vector.broadcast %24 : vector<1x2xf32> to vector<512x2xf32>
      %26 = arith.addf %23, %25 : vector<512x2xf32>
      %c0_22 = arith.constant 0 : index
      %c0_23 = arith.constant 0 : index
      %27 = vector.load %arg8[%c0_22, %c0_23] : memref<512x2xf32, #tpu.memory_space<vmem>>, vector<512x2xf32>
      tpu.vector_store %arg8[%c0_22, %c0_23], %26 {strides = array<i32>} : memref<512x2xf32, #tpu.memory_space<vmem>>, vector<512x2xf32>,
    } else {
    }
    return
  }
  func.func @transform_0(%arg0: i32, %arg1: i32) -> (i32, i32) {
    %c0_i32 = arith.constant 0 : i32
    return %arg0, %arg1 : i32, i32
  }
  func.func @transform_1(%arg0: i32, %arg1: i32) -> (i32, i32) {
    %c0_i32 = arith.constant 0 : i32
    %c0_i32_0 = arith.constant 0 : i32
    return %arg1, %c0_i32 : i32, i32
  }
  func.func @transform_2(%arg0: i32, %arg1: i32) -> (i32, i32) {
    %c0_i32 = arith.constant 0 : i32
    %c0_i32_0 = arith.constant 0 : i32
    %c0_i32_1 = arith.constant 0 : i32
    return %c0_i32, %c0_i32_0 : i32, i32
  }
  func.func @transform_3(%arg0: i32, %arg1: i32) -> (i32, i32) {
    %c0_i32 = arith.constant 0 : i32
    %c0_i32_0 = arith.constant 0 : i32
    %c0_i32_1 = arith.constant 0 : i32
    return %c0_i32, %c0_i32_0 : i32, i32
  }
  func.func @transform_4(%arg0: i32, %arg1: i32) -> (i32, i32) {
    %c0_i32 = arith.constant 0 : i32
    %c0_i32_0 = arith.constant 0 : i32
    %c0_i32_1 = arith.constant 0 : i32
    return %c0_i32, %c0_i32_0 : i32, i32
  }
  func.func @transform_5(%arg0: i32, %arg1: i32) -> (i32, i32) {
    %c0_i32 = arith.constant 0 : i32
    %c0_i32_0 = arith.constant 0 : i32
    %c0_i32_1 = arith.constant 0 : i32
    return %c0_i32, %c0_i32_0 : i32, i32
  }
  func.func @transform_6(%arg0: i32, %arg1: i32) -> (i32, i32) {
    %c0_i32 = arith.constant 0 : i32
    %c0_i32_0 = arith.constant 0 : i32
    return %arg0, %c0_i32 : i32, i32
  }
}

</mosaic_0001>

<llo_original>
// kernel: ae_forward.14
$region0: #{ae_forward.14}
  #allocation0 [shape = 'u32[]', space=smem, size = 0x4, offset = 0x4, fixed_abs, tag = 'smem constant byte address 0x4 - core index']
  #allocation1 [shape = 'u32[72,128]{1,0:T(1,128)}', space=vmem, size = 0x9000, scoped, tag = 'internal scratch']
  %s0 = inlined_call_operand.vmem [shape: bf16[8,8,8,2,4], index: 0, kind: input, shape index: {}]
  %s1 = inlined_call_operand.vmem [shape: bf16[8,4,4,4], index: 1, kind: output, shape index: {}]
  %s2 = sld [smem:[#allocation0]]
  $region37: #{ae_forward.14} parent=0
    _
  %s4 = ssub.s32 1, %s2
  %s5 = scalar_select 0, %s4, %s2
  loop: start=0, step=1, limit=10
  $region2: #{ae_forward.14} parent=0 // loop_pre_header
    _
  $region3: #{ae_forward.14} parent=0 // loop_header
    %s7 = sphi 0, %s11
    %p8 = scmp.ge.s32.totalorder %s7, 10
    %s17 = sphi 0, %s19
    %s20 = sphi 0, %s17
    %s21 = sphi 0, %s20
    %s37 = sphi 0, %s21
    %s43 = sphi 0, %s45
    %s46 = sphi 0, %s43
    %s47 = sphi 0, %s46
    %s63 = sphi 0, %s47
  $region4: #{ae_forward.14} parent=0 // loop_header_branch
    %10 = sbr.rel (%p8) target = $region8
  $region5: #{ae_forward.14} parent=0 // loop_body
    %s12 = ssub.s32 %s7, 1
    %s13 = ssub.s32 %s7, 2
    %s14 = sadd.s32 %s7, 1
    %s15 = ssub.s32 %s7, %s14
    %p16 = scmp.eq.s32.totalorder %s15, 0
    %s18 = sadd.s32 %s17, 1
    %s19 = scalar_select %p16, %s17, %s18
    %p22 = pneg %p16
    %p23 = scmp.eq.s32.totalorder %s7, 7
    %p24 = por %p22, %p23
    %p25 = scmp.ne.s32.totalorder %s17, %s20
    %p26 = scmp.eq.s32.totalorder %s7, 0
    %p27 = por %p25, %p26
    %p28 = scmp.ne.s32.totalorder %s17, %s20
    %p29 = scmp.eq.s32.totalorder %s12, 7
    %p30 = por %p28, %p29
    %p31 = scmp.ne.s32.totalorder %s20, %s21
    %p32 = scmp.eq.s32.totalorder %s12, 0
    %p33 = por %p31, %p32
    %p34 = scmp.ne.s32.totalorder %s20, %s21
    %p35 = scmp.eq.s32.totalorder %s13, 7
    %p36 = por %p34, %p35
    %p38 = scmp.ne.s32.totalorder %s21, %s37
    %p39 = scmp.eq.s32.totalorder %s13, 0
    %p40 = por %p38, %p39
    %s41 = ssub.s32 %s7, %s14
    %p42 = scmp.eq.s32.totalorder %s41, 0
    %s44 = sadd.s32 %s43, 1
    %s45 = scalar_select %p42, %s43, %s44
    %p48 = pneg %p42
    %p49 = scmp.eq.s32.totalorder %s7, 7
    %p50 = por %p48, %p49
    %p51 = scmp.ne.s32.totalorder %s43, %s46
    %p52 = scmp.eq.s32.totalorder %s7, 0
    %p53 = por %p51, %p52
    %p54 = scmp.ne.s32.totalorder %s43, %s46
    %p55 = scmp.eq.s32.totalorder %s12, 7
    %p56 = por %p54, %p55
    %p57 = scmp.ne.s32.totalorder %s46, %s47
    %p58 = scmp.eq.s32.totalorder %s12, 0
    %p59 = por %p57, %p58
    %p60 = scmp.ne.s32.totalorder %s46, %s47
    %p61 = scmp.eq.s32.totalorder %s13, 7
    %p62 = por %p60, %p61
    %p64 = scmp.ne.s32.totalorder %s47, %s63
    %p65 = scmp.eq.s32.totalorder %s13, 0
    %p66 = por %p64, %p65
    %p67 = scmp.le.s32.totalorder 1, %s7
    %p68 = scmp.lt.s32.totalorder %s7, 9
    %p69 = pnand %p67, %p68
    %p70 = pneg %p69
    // Predicated region
    $region9: #{ae_forward.14} parent=5 // pred_check
      _
    $region10: #{ae_forward.14} parent=5 // pred_check_branch
      %72 = sbr.rel (%p69) target = $region12
    $region11: #{ae_forward.14} parent=5 // pred_region
      %s73 = ssub.s32 %s7, 1
    $region12: #{ae_forward.14} parent=5 // pred_fallthru
      _
    %p74 = scmp.lt.s32.totalorder %s7, 8
    // Predicated region
    $region13: #{ae_forward.14} parent=5 // pred_check
      %p75 = pneg %p74
    $region14: #{ae_forward.14} parent=5 // pred_check_branch
      %77 = sbr.rel (%p75) target = $region16
    $region15: #{ae_forward.14} parent=5 // pred_region
      // Predicated region
      $region17: #{ae_forward.14} parent=15 // pred_check
        %p78 = pneg %p27
      $region18: #{ae_forward.14} parent=15 // pred_check_branch
        %80 = sbr.rel (%p78) target = $region20
      $region19: #{ae_forward.14} parent=15 // pred_region
        %p81 = scmp.lt.s32.totalorder %s7, 7
        %s82 = scalar_select %p81, %s7, 7
        %s83 = smul.addr %s82, 64
        %s84 = scalar_lea.vmem %s0, %s83
      $region20: #{ae_forward.14} parent=15 // pred_fallthru
        _
    $region16: #{ae_forward.14} parent=5 // pred_fallthru
      _
    %p85 = scmp.le.s32.totalorder 1, %s7
    %p86 = scmp.lt.s32.totalorder %s7, 9
    %p87 = pnand %p85, %p86
    %p88 = pneg %p87
    // Predicated region
    $region21: #{ae_forward.14} parent=5 // pred_check
      _
    $region22: #{ae_forward.14} parent=5 // pred_check_branch
      %90 = sbr.rel (%p87) target = $region24
    $region23: #{ae_forward.14} parent=5 // pred_region
      %s91 = ssub.s32 %s7, 1
      %p92 = scmp.lt.s32.totalorder %s12, 7
      %s93 = scalar_select %p92, %s12, 7
      %s94 = smul.addr %s93, 64
      %s95 = scalar_lea.vmem %s0, %s94
      %p96 = pneg %p33
      %p97 = pneg %p30
      %p98 = pneg %p59
      %p99 = pneg %p56
      %p100 = scmp.lt.s32.totalorder %s12, 7
      %s101 = scalar_select %p100, %s12, 7
      %s102 = smul.addr %s101, 4
      %s103 = smul.addr %s102, 2
      %s104 = scalar_lea.vmem %s1, %s103
      %p105 = scmp.lt.s32.totalorder %s12, 7
      %s106 = scalar_select %p105, %s12, 7
      %s107 = smul.addr %s106, 64
      %s108 = scalar_lea.vmem %s0, %s107
      %p109 = scmp.lt.s32.totalorder %s12, 7
      %s110 = scalar_select %p109, %s12, 7
      %s111 = smul.addr %s110, 4
      %s112 = smul.addr %s111, 2
      %s113 = scalar_lea.vmem %s1, %s112
      %v114 = vld [vmem:[%s108] sm:$0x1]
      %v115 = vld [vmem:[%s108 + $0x1] sm:$0x1]
      %v116 = vld [vmem:[%s108 + $0x2] sm:$0x1]
      %v117 = vld [vmem:[%s108 + $0x3] sm:$0x1]
      %v118 = vld [vmem:[%s108 + $0x4] sm:$0x1]
      %v119 = vld [vmem:[%s108 + $0x5] sm:$0x1]
      %v120 = vld [vmem:[%s108 + $0x6] sm:$0x1]
      %v121 = vld [vmem:[%s108 + $0x7] sm:$0x1]
      %v122 = vld [vmem:[%s108 + $0x8] sm:$0x1]
      %v123 = vld [vmem:[%s108 + $0x9] sm:$0x1]
      %v124 = vld [vmem:[%s108 + $0xa] sm:$0x1]
      %v125 = vld [vmem:[%s108 + $0xb] sm:$0x1]
      %v126 = vld [vmem:[%s108 + $0xc] sm:$0x1]
      %v127 = vld [vmem:[%s108 + $0xd] sm:$0x1]
      %v128 = vld [vmem:[%s108 + $0xe] sm:$0x1]
      %v129 = vld [vmem:[%s108 + $0xf] sm:$0x1]
      %v130 = vld [vmem:[%s108 + $0x10] sm:$0x1]
      %v131 = vld [vmem:[%s108 + $0x11] sm:$0x1]
      %v132 = vld [vmem:[%s108 + $0x12] sm:$0x1]
      %v133 = vld [vmem:[%s108 + $0x13] sm:$0x1]
      %v134 = vld [vmem:[%s108 + $0x14] sm:$0x1]
      %v135 = vld [vmem:[%s108 + $0x15] sm:$0x1]
      %v136 = vld [vmem:[%s108 + $0x16] sm:$0x1]
      %v137 = vld [vmem:[%s108 + $0x17] sm:$0x1]
      %v138 = vld [vmem:[%s108 + $0x18] sm:$0x1]
      %v139 = vld [vmem:[%s108 + $0x19] sm:$0x1]
      %v140 = vld [vmem:[%s108 + $0x1a] sm:$0x1]
      %v141 = vld [vmem:[%s108 + $0x1b] sm:$0x1]
      %v142 = vld [vmem:[%s108 + $0x1c] sm:$0x1]
      %v143 = vld [vmem:[%s108 + $0x1d] sm:$0x1]
      %v144 = vld [vmem:[%s108 + $0x1e] sm:$0x1]
      %v145 = vld [vmem:[%s108 + $0x1f] sm:$0x1]
      %v146 = vld [vmem:[%s108 + $0x20] sm:$0x1]
      %v147 = vld [vmem:[%s108 + $0x21] sm:$0x1]
      %v148 = vld [vmem:[%s108 + $0x22] sm:$0x1]
      %v149 = vld [vmem:[%s108 + $0x23] sm:$0x1]
      %v150 = vld [vmem:[%s108 + $0x24] sm:$0x1]
      %v151 = vld [vmem:[%s108 + $0x25] sm:$0x1]
      %v152 = vld [vmem:[%s108 + $0x26] sm:$0x1]
      %v153 = vld [vmem:[%s108 + $0x27] sm:$0x1]
      %v154 = vld [vmem:[%s108 + $0x28] sm:$0x1]
      %v155 = vld [vmem:[%s108 + $0x29] sm:$0x1]
      %v156 = vld [vmem:[%s108 + $0x2a] sm:$0x1]
      %v157 = vld [vmem:[%s108 + $0x2b] sm:$0x1]
      %v158 = vld [vmem:[%s108 + $0x2c] sm:$0x1]
      %v159 = vld [vmem:[%s108 + $0x2d] sm:$0x1]
      %v160 = vld [vmem:[%s108 + $0x2e] sm:$0x1]
      %v161 = vld [vmem:[%s108 + $0x2f] sm:$0x1]
      %v162 = vld [vmem:[%s108 + $0x30] sm:$0x1]
      %v163 = vld [vmem:[%s108 + $0x31] sm:$0x1]
      %v164 = vld [vmem:[%s108 + $0x32] sm:$0x1]
      %v165 = vld [vmem:[%s108 + $0x33] sm:$0x1]
      %v166 = vld [vmem:[%s108 + $0x34] sm:$0x1]
      %v167 = vld [vmem:[%s108 + $0x35] sm:$0x1]
      %v168 = vld [vmem:[%s108 + $0x36] sm:$0x1]
      %v169 = vld [vmem:[%s108 + $0x37] sm:$0x1]
      %v170 = vld [vmem:[%s108 + $0x38] sm:$0x1]
      %v171 = vld [vmem:[%s108 + $0x39] sm:$0x1]
      %v172 = vld [vmem:[%s108 + $0x3a] sm:$0x1]
      %v173 = vld [vmem:[%s108 + $0x3b] sm:$0x1]
      %v174 = vld [vmem:[%s108 + $0x3c] sm:$0x1]
      %v175 = vld [vmem:[%s108 + $0x3d] sm:$0x1]
      %v176 = vld [vmem:[%s108 + $0x3e] sm:$0x1]
      %v177 = vld [vmem:[%s108 + $0x3f] sm:$0x1]
      %v178 = vunpack.c.l.bf16 %v114
      %v179 = vunpack.c.l.bf16 %v115
      %v180 = vunpack.c.l.bf16 %v116
      %v181 = vunpack.c.l.bf16 %v117
      %v182 = vunpack.c.l.bf16 %v118
      %v183 = vunpack.c.l.bf16 %v119
      %v184 = vunpack.c.l.bf16 %v120
      %v185 = vunpack.c.l.bf16 %v121
      %v186 = vunpack.c.l.bf16 %v122
      %v187 = vunpack.c.l.bf16 %v123
      %v188 = vunpack.c.l.bf16 %v124
      %v189 = vunpack.c.l.bf16 %v125
      %v190 = vunpack.c.l.bf16 %v126
      %v191 = vunpack.c.l.bf16 %v127
      %v192 = vunpack.c.l.bf16 %v128
      %v193 = vunpack.c.l.bf16 %v129
      %v194 = vunpack.c.l.bf16 %v130
      %v195 = vunpack.c.l.bf16 %v131
      %v196 = vunpack.c.l.bf16 %v132
      %v197 = vunpack.c.l.bf16 %v133
      %v198 = vunpack.c.l.bf16 %v134
      %v199 = vunpack.c.l.bf16 %v135
      %v200 = vunpack.c.l.bf16 %v136
      %v201 = vunpack.c.l.bf16 %v137
      %v202 = vunpack.c.l.bf16 %v138
      %v203 = vunpack.c.l.bf16 %v139
      %v204 = vunpack.c.l.bf16 %v140
      %v205 = vunpack.c.l.bf16 %v141
      %v206 = vunpack.c.l.bf16 %v142
      %v207 = vunpack.c.l.bf16 %v143
      %v208 = vunpack.c.l.bf16 %v144
      %v209 = vunpack.c.l.bf16 %v145
      %v210 = vunpack.c.l.bf16 %v146
      %v211 = vunpack.c.l.bf16 %v147
      %v212 = vunpack.c.l.bf16 %v148
      %v213 = vunpack.c.l.bf16 %v149
      %v214 = vunpack.c.l.bf16 %v150
      %v215 = vunpack.c.l.bf16 %v151
      %v216 = vunpack.c.l.bf16 %v152
      %v217 = vunpack.c.l.bf16 %v153
      %v218 = vunpack.c.l.bf16 %v154
      %v219 = vunpack.c.l.bf16 %v155
      %v220 = vunpack.c.l.bf16 %v156
      %v221 = vunpack.c.l.bf16 %v157
      %v222 = vunpack.c.l.bf16 %v158
      %v223 = vunpack.c.l.bf16 %v159
      %v224 = vunpack.c.l.bf16 %v160
      %v225 = vunpack.c.l.bf16 %v161
      %v226 = vunpack.c.l.bf16 %v162
      %v227 = vunpack.c.l.bf16 %v163
      %v228 = vunpack.c.l.bf16 %v164
      %v229 = vunpack.c.l.bf16 %v165
      %v230 = vunpack.c.l.bf16 %v166
      %v231 = vunpack.c.l.bf16 %v167
      %v232 = vunpack.c.l.bf16 %v168
      %v233 = vunpack.c.l.bf16 %v169
      %v234 = vunpack.c.l.bf16 %v170
      %v235 = vunpack.c.l.bf16 %v171
      %v236 = vunpack.c.l.bf16 %v172
      %v237 = vunpack.c.l.bf16 %v173
      %v238 = vunpack.c.l.bf16 %v174
      %v239 = vunpack.c.l.bf16 %v175
      %v240 = vunpack.c.l.bf16 %v176
      %v241 = vunpack.c.l.bf16 %v177
      %v306 = vrot.slane %v178, 7
      %v307 = vrot.slane %v306, 2
      %v308 = vrot.slane %v179, 7
      %v309 = vrot.slane %v308, 2
      %v310 = vrot.slane %v180, 7
      %v311 = vrot.slane %v310, 2
      %v312 = vrot.slane %v181, 7
      %v313 = vrot.slane %v312, 2
      %v314 = vrot.slane %v182, 7
      %v315 = vrot.slane %v314, 2
      %v316 = vrot.slane %v183, 7
      %v317 = vrot.slane %v316, 2
      %v318 = vrot.slane %v184, 7
      %v319 = vrot.slane %v318, 2
      %v320 = vrot.slane %v185, 7
      %v321 = vrot.slane %v320, 2
      %v322 = vrot.slane %v186, 7
      %v323 = vrot.slane %v322, 2
      %v324 = vrot.slane %v187, 7
      %v325 = vrot.slane %v324, 2
      %v326 = vrot.slane %v188, 7
      %v327 = vrot.slane %v326, 2
      %v328 = vrot.slane %v189, 7
      %v329 = vrot.slane %v328, 2
      %v330 = vrot.slane %v190, 7
      %v331 = vrot.slane %v330, 2
      %v332 = vrot.slane %v191, 7
      %v333 = vrot.slane %v332, 2
      %v334 = vrot.slane %v192, 7
      %v335 = vrot.slane %v334, 2
      %v336 = vrot.slane %v193, 7
      %v337 = vrot.slane %v336, 2
      %v338 = vrot.slane %v194, 7
      %v339 = vrot.slane %v338, 2
      %v340 = vrot.slane %v195, 7
      %v341 = vrot.slane %v340, 2
      %v342 = vrot.slane %v196, 7
      %v343 = vrot.slane %v342, 2
      %v344 = vrot.slane %v197, 7
      %v345 = vrot.slane %v344, 2
      %v346 = vrot.slane %v198, 7
      %v347 = vrot.slane %v346, 2
      %v348 = vrot.slane %v199, 7
      %v349 = vrot.slane %v348, 2
      %v350 = vrot.slane %v200, 7
      %v351 = vrot.slane %v350, 2
      %v352 = vrot.slane %v201, 7
      %v353 = vrot.slane %v352, 2
      %v354 = vrot.slane %v202, 7
      %v355 = vrot.slane %v354, 2
      %v356 = vrot.slane %v203, 7
      %v357 = vrot.slane %v356, 2
      %v358 = vrot.slane %v204, 7
      %v359 = vrot.slane %v358, 2
      %v360 = vrot.slane %v205, 7
      %v361 = vrot.slane %v360, 2
      %v362 = vrot.slane %v206, 7
      %v363 = vrot.slane %v362, 2
      %v364 = vrot.slane %v207, 7
      %v365 = vrot.slane %v364, 2
      %v366 = vrot.slane %v208, 7
      %v367 = vrot.slane %v366, 2
      %v368 = vrot.slane %v209, 7
      %v369 = vrot.slane %v368, 2
      %v370 = vrot.slane %v210, 7
      %v371 = vrot.slane %v370, 2
      %v372 = vrot.slane %v211, 7
      %v373 = vrot.slane %v372, 2
      %v374 = vrot.slane %v212, 7
      %v375 = vrot.slane %v374, 2
      %v376 = vrot.slane %v213, 7
      %v377 = vrot.slane %v376, 2
      %v378 = vrot.slane %v214, 7
      %v379 = vrot.slane %v378, 2
      %v380 = vrot.slane %v215, 7
      %v381 = vrot.slane %v380, 2
      %v382 = vrot.slane %v216, 7
      %v383 = vrot.slane %v382, 2
      %v384 = vrot.slane %v217, 7
      %v385 = vrot.slane %v384, 2
      %v386 = vrot.slane %v218, 7
      %v387 = vrot.slane %v386, 2
      %v388 = vrot.slane %v219, 7
      %v389 = vrot.slane %v388, 2
      %v390 = vrot.slane %v220, 7
      %v391 = vrot.slane %v390, 2
      %v392 = vrot.slane %v221, 7
      %v393 = vrot.slane %v392, 2
      %v394 = vrot.slane %v222, 7
      %v395 = vrot.slane %v394, 2
      %v396 = vrot.slane %v223, 7
      %v397 = vrot.slane %v396, 2
      %v398 = vrot.slane %v224, 7
      %v399 = vrot.slane %v398, 2
      %v400 = vrot.slane %v225, 7
      %v401 = vrot.slane %v400, 2
      %v402 = vrot.slane %v226, 7
      %v403 = vrot.slane %v402, 2
      %v404 = vrot.slane %v227, 7
      %v405 = vrot.slane %v404, 2
      %v406 = vrot.slane %v228, 7
      %v407 = vrot.slane %v406, 2
      %v408 = vrot.slane %v229, 7
      %v409 = vrot.slane %v408, 2
      %v410 = vrot.slane %v230, 7
      %v411 = vrot.slane %v410, 2
      %v412 = vrot.slane %v231, 7
      %v413 = vrot.slane %v412, 2
      %v414 = vrot.slane %v232, 7
      %v415 = vrot.slane %v414, 2
      %v416 = vrot.slane %v233, 7
      %v417 = vrot.slane %v416, 2
      %v418 = vrot.slane %v234, 7
      %v419 = vrot.slane %v418, 2
      %v420 = vrot.slane %v235, 7
      %v421 = vrot.slane %v420, 2
      %v422 = vrot.slane %v236, 7
      %v423 = vrot.slane %v422, 2
      %v424 = vrot.slane %v237, 7
      %v425 = vrot.slane %v424, 2
      %v426 = vrot.slane %v238, 7
      %v427 = vrot.slane %v426, 2
      %v428 = vrot.slane %v239, 7
      %v429 = vrot.slane %v428, 2
      %v430 = vrot.slane %v240, 7
      %v431 = vrot.slane %v430, 2
      %v432 = vrot.slane %v241, 7
      %v433 = vrot.slane %v432, 2
      %v498 = vmax.f32 %v178, %v307
      %v499 = vmax.f32 %v179, %v309
      %v500 = vmax.f32 %v180, %v311
      %v501 = vmax.f32 %v181, %v313
      %v502 = vmax.f32 %v182, %v315
      %v503 = vmax.f32 %v183, %v317
      %v504 = vmax.f32 %v184, %v319
      %v505 = vmax.f32 %v185, %v321
      %v506 = vmax.f32 %v186, %v323
      %v507 = vmax.f32 %v187, %v325
      %v508 = vmax.f32 %v188, %v327
      %v509 = vmax.f32 %v189, %v329
      %v510 = vmax.f32 %v190, %v331
      %v511 = vmax.f32 %v191, %v333
      %v512 = vmax.f32 %v192, %v335
      %v513 = vmax.f32 %v193, %v337
      %v514 = vmax.f32 %v194, %v339
      %v515 = vmax.f32 %v195, %v341
      %v516 = vmax.f32 %v196, %v343
      %v517 = vmax.f32 %v197, %v345
      %v518 = vmax.f32 %v198, %v347
      %v519 = vmax.f32 %v199, %v349
      %v520 = vmax.f32 %v200, %v351
      %v521 = vmax.f32 %v201, %v353
      %v522 = vmax.f32 %v202, %v355
      %v523 = vmax.f32 %v203, %v357
      %v524 = vmax.f32 %v204, %v359
      %v525 = vmax.f32 %v205, %v361
      %v526 = vmax.f32 %v206, %v363
      %v527 = vmax.f32 %v207, %v365
      %v528 = vmax.f32 %v208, %v367
      %v529 = vmax.f32 %v209, %v369
      %v530 = vmax.f32 %v210, %v371
      %v531 = vmax.f32 %v211, %v373
      %v532 = vmax.f32 %v212, %v375
      %v533 = vmax.f32 %v213, %v377
      %v534 = vmax.f32 %v214, %v379
      %v535 = vmax.f32 %v215, %v381
      %v536 = vmax.f32 %v216, %v383
      %v537 = vmax.f32 %v217, %v385
      %v538 = vmax.f32 %v218, %v387
      %v539 = vmax.f32 %v219, %v389
      %v540 = vmax.f32 %v220, %v391
      %v541 = vmax.f32 %v221, %v393
      %v542 = vmax.f32 %v222, %v395
      %v543 = vmax.f32 %v223, %v397
      %v544 = vmax.f32 %v224, %v399
      %v545 = vmax.f32 %v225, %v401
      %v546 = vmax.f32 %v226, %v403
      %v547 = vmax.f32 %v227, %v405
      %v548 = vmax.f32 %v228, %v407
      %v549 = vmax.f32 %v229, %v409
      %v550 = vmax.f32 %v230, %v411
      %v551 = vmax.f32 %v231, %v413
      %v552 = vmax.f32 %v232, %v415
      %v553 = vmax.f32 %v233, %v417
      %v554 = vmax.f32 %v234, %v419
      %v555 = vmax.f32 %v235, %v421
      %v556 = vmax.f32 %v236, %v423
      %v557 = vmax.f32 %v237, %v425
      %v558 = vmax.f32 %v238, %v427
      %v559 = vmax.f32 %v239, %v429
      %v560 = vmax.f32 %v240, %v431
      %v561 = vmax.f32 %v241, %v433
      %v562 = vpack.c.bf16 %v498, %v498
      %v563 = vpack.c.bf16 %v499, %v499
      %v564 = vpack.c.bf16 %v500, %v500
      %v565 = vpack.c.bf16 %v501, %v501
      %v566 = vpack.c.bf16 %v502, %v502
      %v567 = vpack.c.bf16 %v503, %v503
      %v568 = vpack.c.bf16 %v504, %v504
      %v569 = vpack.c.bf16 %v505, %v505
      %v570 = vpack.c.bf16 %v506, %v506
      %v571 = vpack.c.bf16 %v507, %v507
      %v572 = vpack.c.bf16 %v508, %v508
      %v573 = vpack.c.bf16 %v509, %v509
      %v574 = vpack.c.bf16 %v510, %v510
      %v575 = vpack.c.bf16 %v511, %v511
      %v576 = vpack.c.bf16 %v512, %v512
      %v577 = vpack.c.bf16 %v513, %v513
      %v578 = vpack.c.bf16 %v514, %v514
      %v579 = vpack.c.bf16 %v515, %v515
      %v580 = vpack.c.bf16 %v516, %v516
      %v581 = vpack.c.bf16 %v517, %v517
      %v582 = vpack.c.bf16 %v518, %v518
      %v583 = vpack.c.bf16 %v519, %v519
      %v584 = vpack.c.bf16 %v520, %v520
      %v585 = vpack.c.bf16 %v521, %v521
      %v586 = vpack.c.bf16 %v522, %v522
      %v587 = vpack.c.bf16 %v523, %v523
      %v588 = vpack.c.bf16 %v524, %v524
      %v589 = vpack.c.bf16 %v525, %v525
      %v590 = vpack.c.bf16 %v526, %v526
      %v591 = vpack.c.bf16 %v527, %v527
      %v592 = vpack.c.bf16 %v528, %v528
      %v593 = vpack.c.bf16 %v529, %v529
      %v594 = vpack.c.bf16 %v530, %v530
      %v595 = vpack.c.bf16 %v531, %v531
      %v596 = vpack.c.bf16 %v532, %v532
      %v597 = vpack.c.bf16 %v533, %v533
      %v598 = vpack.c.bf16 %v534, %v534
      %v599 = vpack.c.bf16 %v535, %v535
      %v600 = vpack.c.bf16 %v536, %v536
      %v601 = vpack.c.bf16 %v537, %v537
      %v602 = vpack.c.bf16 %v538, %v538
      %v603 = vpack.c.bf16 %v539, %v539
      %v604 = vpack.c.bf16 %v540, %v540
      %v605 = vpack.c.bf16 %v541, %v541
      %v606 = vpack.c.bf16 %v542, %v542
      %v607 = vpack.c.bf16 %v543, %v543
      %v608 = vpack.c.bf16 %v544, %v544
      %v609 = vpack.c.bf16 %v545, %v545
      %v610 = vpack.c.bf16 %v546, %v546
      %v611 = vpack.c.bf16 %v547, %v547
      %v612 = vpack.c.bf16 %v548, %v548
      %v613 = vpack.c.bf16 %v549, %v549
      %v614 = vpack.c.bf16 %v550, %v550
      %v615 = vpack.c.bf16 %v551, %v551
      %v616 = vpack.c.bf16 %v552, %v552
      %v617 = vpack.c.bf16 %v553, %v553
      %v618 = vpack.c.bf16 %v554, %v554
      %v619 = vpack.c.bf16 %v555, %v555
      %v620 = vpack.c.bf16 %v556, %v556
      %v621 = vpack.c.bf16 %v557, %v557
      %v622 = vpack.c.bf16 %v558, %v558
      %v623 = vpack.c.bf16 %v559, %v559
      %v624 = vpack.c.bf16 %v560, %v560
      %v625 = vpack.c.bf16 %v561, %v561
      %v626 = vunpack.c.l.bf16 %v562
      %v627 = vunpack.c.l.bf16 %v563
      %v628 = vunpack.c.l.bf16 %v564
      %v629 = vunpack.c.l.bf16 %v565
      %v630 = vunpack.c.l.bf16 %v570
      %v631 = vunpack.c.l.bf16 %v571
      %v632 = vunpack.c.l.bf16 %v572
      %v633 = vunpack.c.l.bf16 %v573
      %v634 = vunpack.c.l.bf16 %v578
      %v635 = vunpack.c.l.bf16 %v579
      %v636 = vunpack.c.l.bf16 %v580
      %v637 = vunpack.c.l.bf16 %v581
      %v638 = vunpack.c.l.bf16 %v586
      %v639 = vunpack.c.l.bf16 %v587
      %v640 = vunpack.c.l.bf16 %v588
      %v641 = vunpack.c.l.bf16 %v589
      %v642 = vunpack.c.l.bf16 %v594
      %v643 = vunpack.c.l.bf16 %v595
      %v644 = vunpack.c.l.bf16 %v596
      %v645 = vunpack.c.l.bf16 %v597
      %v646 = vunpack.c.l.bf16 %v602
      %v647 = vunpack.c.l.bf16 %v603
      %v648 = vunpack.c.l.bf16 %v604
      %v649 = vunpack.c.l.bf16 %v605
      %v650 = vunpack.c.l.bf16 %v610
      %v651 = vunpack.c.l.bf16 %v611
      %v652 = vunpack.c.l.bf16 %v612
      %v653 = vunpack.c.l.bf16 %v613
      %v654 = vunpack.c.l.bf16 %v618
      %v655 = vunpack.c.l.bf16 %v619
      %v656 = vunpack.c.l.bf16 %v620
      %v657 = vunpack.c.l.bf16 %v621
      %v658 = vunpack.c.l.bf16 %v566
      %v659 = vunpack.c.l.bf16 %v567
      %v660 = vunpack.c.l.bf16 %v568
      %v661 = vunpack.c.l.bf16 %v569
      %v662 = vunpack.c.l.bf16 %v574
      %v663 = vunpack.c.l.bf16 %v575
      %v664 = vunpack.c.l.bf16 %v576
      %v665 = vunpack.c.l.bf16 %v577
      %v666 = vunpack.c.l.bf16 %v582
      %v667 = vunpack.c.l.bf16 %v583
      %v668 = vunpack.c.l.bf16 %v584
      %v669 = vunpack.c.l.bf16 %v585
      %v670 = vunpack.c.l.bf16 %v590
      %v671 = vunpack.c.l.bf16 %v591
      %v672 = vunpack.c.l.bf16 %v592
      %v673 = vunpack.c.l.bf16 %v593
      %v674 = vunpack.c.l.bf16 %v598
      %v675 = vunpack.c.l.bf16 %v599
      %v676 = vunpack.c.l.bf16 %v600
      %v677 = vunpack.c.l.bf16 %v601
      %v678 = vunpack.c.l.bf16 %v606
      %v679 = vunpack.c.l.bf16 %v607
      %v680 = vunpack.c.l.bf16 %v608
      %v681 = vunpack.c.l.bf16 %v609
      %v682 = vunpack.c.l.bf16 %v614
      %v683 = vunpack.c.l.bf16 %v615
      %v684 = vunpack.c.l.bf16 %v616
      %v685 = vunpack.c.l.bf16 %v617
      %v686 = vunpack.c.l.bf16 %v622
      %v687 = vunpack.c.l.bf16 %v623
      %v688 = vunpack.c.l.bf16 %v624
      %v689 = vunpack.c.l.bf16 %v625
      %v690 = vmax.f32 %v626, %v658
      %v691 = vmax.f32 %v627, %v659
      %v692 = vmax.f32 %v628, %v660
      %v693 = vmax.f32 %v629, %v661
      %v694 = vmax.f32 %v630, %v662
      %v695 = vmax.f32 %v631, %v663
      %v696 = vmax.f32 %v632, %v664
      %v697 = vmax.f32 %v633, %v665
      %v698 = vmax.f32 %v634, %v666
      %v699 = vmax.f32 %v635, %v667
      %v700 = vmax.f32 %v636, %v668
      %v701 = vmax.f32 %v637, %v669
      %v702 = vmax.f32 %v638, %v670
      %v703 = vmax.f32 %v639, %v671
      %v704 = vmax.f32 %v640, %v672
      %v705 = vmax.f32 %v641, %v673
      %v706 = vmax.f32 %v642, %v674
      %v707 = vmax.f32 %v643, %v675
      %v708 = vmax.f32 %v644, %v676
      %v709 = vmax.f32 %v645, %v677
      %v710 = vmax.f32 %v646, %v678
      %v711 = vmax.f32 %v647, %v679
      %v712 = vmax.f32 %v648, %v680
      %v713 = vmax.f32 %v649, %v681
      %v714 = vmax.f32 %v650, %v682
      %v715 = vmax.f32 %v651, %v683
      %v716 = vmax.f32 %v652, %v684
      %v717 = vmax.f32 %v653, %v685
      %v718 = vmax.f32 %v654, %v686
      %v719 = vmax.f32 %v655, %v687
      %v720 = vmax.f32 %v656, %v688
      %v721 = vmax.f32 %v657, %v689
      %v722 = vpack.c.bf16 %v690, %v690
      %v723 = vpack.c.bf16 %v691, %v691
      %v724 = vpack.c.bf16 %v692, %v692
      %v725 = vpack.c.bf16 %v693, %v693
      %v726 = vpack.c.bf16 %v694, %v694
      %v727 = vpack.c.bf16 %v695, %v695
      %v728 = vpack.c.bf16 %v696, %v696
      %v729 = vpack.c.bf16 %v697, %v697
      %v730 = vpack.c.bf16 %v698, %v698
      %v731 = vpack.c.bf16 %v699, %v699
      %v732 = vpack.c.bf16 %v700, %v700
      %v733 = vpack.c.bf16 %v701, %v701
      %v734 = vpack.c.bf16 %v702, %v702
      %v735 = vpack.c.bf16 %v703, %v703
      %v736 = vpack.c.bf16 %v704, %v704
      %v737 = vpack.c.bf16 %v705, %v705
      %v738 = vpack.c.bf16 %v706, %v706
      %v739 = vpack.c.bf16 %v707, %v707
      %v740 = vpack.c.bf16 %v708, %v708
      %v741 = vpack.c.bf16 %v709, %v709
      %v742 = vpack.c.bf16 %v710, %v710
      %v743 = vpack.c.bf16 %v711, %v711
      %v744 = vpack.c.bf16 %v712, %v712
      %v745 = vpack.c.bf16 %v713, %v713
      %v746 = vpack.c.bf16 %v714, %v714
      %v747 = vpack.c.bf16 %v715, %v715
      %v748 = vpack.c.bf16 %v716, %v716
      %v749 = vpack.c.bf16 %v717, %v717
      %v750 = vpack.c.bf16 %v718, %v718
      %v751 = vpack.c.bf16 %v719, %v719
      %v752 = vpack.c.bf16 %v720, %v720
      %v753 = vpack.c.bf16 %v721, %v721
      %v754 = vunpack.c.l.bf16 %v722
      %v755 = vunpack.c.l.bf16 %v723
      %v756 = vunpack.c.l.bf16 %v724
      %v757 = vunpack.c.l.bf16 %v725
      %v758 = vunpack.c.l.bf16 %v726
      %v759 = vunpack.c.l.bf16 %v727
      %v760 = vunpack.c.l.bf16 %v728
      %v761 = vunpack.c.l.bf16 %v729
      %v762 = vunpack.c.l.bf16 %v730
      %v763 = vunpack.c.l.bf16 %v731
      %v764 = vunpack.c.l.bf16 %v732
      %v765 = vunpack.c.l.bf16 %v733
      %v766 = vunpack.c.l.bf16 %v734
      %v767 = vunpack.c.l.bf16 %v735
      %v768 = vunpack.c.l.bf16 %v736
      %v769 = vunpack.c.l.bf16 %v737
      %v770 = vunpack.c.l.bf16 %v738
      %v771 = vunpack.c.l.bf16 %v739
      %v772 = vunpack.c.l.bf16 %v740
      %v773 = vunpack.c.l.bf16 %v741
      %v774 = vunpack.c.l.bf16 %v742
      %v775 = vunpack.c.l.bf16 %v743
      %v776 = vunpack.c.l.bf16 %v744
      %v777 = vunpack.c.l.bf16 %v745
      %v778 = vunpack.c.l.bf16 %v746
      %v779 = vunpack.c.l.bf16 %v747
      %v780 = vunpack.c.l.bf16 %v748
      %v781 = vunpack.c.l.bf16 %v749
      %v782 = vunpack.c.l.bf16 %v750
      %v783 = vunpack.c.l.bf16 %v751
      %v784 = vunpack.c.l.bf16 %v752
      %v785 = vunpack.c.l.bf16 %v753
      %v786 = vmax.f32 %v754, %v770
      %v787 = vmax.f32 %v755, %v771
      %v788 = vmax.f32 %v756, %v772
      %v789 = vmax.f32 %v757, %v773
      %v790 = vmax.f32 %v758, %v774
      %v791 = vmax.f32 %v759, %v775
      %v792 = vmax.f32 %v760, %v776
      %v793 = vmax.f32 %v761, %v777
      %v794 = vmax.f32 %v762, %v778
      %v795 = vmax.f32 %v763, %v779
      %v796 = vmax.f32 %v764, %v780
      %v797 = vmax.f32 %v765, %v781
      %v798 = vmax.f32 %v766, %v782
      %v799 = vmax.f32 %v767, %v783
      %v800 = vmax.f32 %v768, %v784
      %v801 = vmax.f32 %v769, %v785
      %v802 = vpack.c.bf16 %v786, %v786
      %v803 = vpack.c.bf16 %v787, %v787
      %v804 = vpack.c.bf16 %v788, %v788
      %v805 = vpack.c.bf16 %v789, %v789
      %v806 = vpack.c.bf16 %v790, %v790
      %v807 = vpack.c.bf16 %v791, %v791
      %v808 = vpack.c.bf16 %v792, %v792
      %v809 = vpack.c.bf16 %v793, %v793
      %v810 = vpack.c.bf16 %v794, %v794
      %v811 = vpack.c.bf16 %v795, %v795
      %v812 = vpack.c.bf16 %v796, %v796
      %v813 = vpack.c.bf16 %v797, %v797
      %v814 = vpack.c.bf16 %v798, %v798
      %v815 = vpack.c.bf16 %v799, %v799
      %v816 = vpack.c.bf16 %v800, %v800
      %v817 = vpack.c.bf16 %v801, %v801
      %v834 = vrot.slane %v802, 2
      %v835 = vrot.slane %v803, 2
      %v836 = vrot.slane %v804, 2
      %v837 = vrot.slane %v805, 2
      %v838 = vrot.slane %v806, 2
      %v839 = vrot.slane %v807, 2
      %v840 = vrot.slane %v808, 2
      %v841 = vrot.slane %v809, 2
      %v842 = vrot.slane %v810, 2
      %v843 = vrot.slane %v811, 2
      %v844 = vrot.slane %v812, 2
      %v845 = vrot.slane %v813, 2
      %v846 = vrot.slane %v814, 2
      %v847 = vrot.slane %v815, 2
      %v848 = vrot.slane %v816, 2
      %v849 = vrot.slane %v817, 2
      %vm850 = vcmask 1041408
      %v853 = vsel %vm850, %v802, %v834
      %v856 = vsel %vm850, %v803, %v835
      %v859 = vsel %vm850, %v804, %v836
      %v862 = vsel %vm850, %v805, %v837
      %v865 = vsel %vm850, %v806, %v838
      %v868 = vsel %vm850, %v807, %v839
      %v871 = vsel %vm850, %v808, %v840
      %v874 = vsel %vm850, %v809, %v841
      %v877 = vsel %vm850, %v810, %v842
      %v880 = vsel %vm850, %v811, %v843
      %v883 = vsel %vm850, %v812, %v844
      %v886 = vsel %vm850, %v813, %v845
      %v889 = vsel %vm850, %v814, %v846
      %v892 = vsel %vm850, %v815, %v847
      %v895 = vsel %vm850, %v816, %v848
      %v898 = vsel %vm850, %v817, %v849
      %899 = vst [vmem:[#allocation1] ss:$2 sm:$0xff] %v853
      %v900 = vld.sshfl [vmem:[#allocation1] sm:$0xff pattern:$0x75643120]
      %s902 = scalar_lea.vmem [#allocation1], 16
      %903 = vst [vmem:[%s902] ss:$2 sm:$0xff] %v856
      %v904 = vld.sshfl [vmem:[#allocation1 + $0x10] sm:$0xff pattern:$0x75643120]
      %s906 = scalar_lea.vmem [#allocation1], 32
      %907 = vst [vmem:[%s906] ss:$2 sm:$0xff] %v859
      %v908 = vld.sshfl [vmem:[#allocation1 + $0x20] sm:$0xff pattern:$0x75643120]
      %s910 = scalar_lea.vmem [#allocation1], 48
      %911 = vst [vmem:[%s910] ss:$2 sm:$0xff] %v862
      %v912 = vld.sshfl [vmem:[#allocation1 + $0x30] sm:$0xff pattern:$0x75643120]
      %914 = vst [vmem:[#allocation1] ss:$2 sm:$0xff] %v865
      %v915 = vld.sshfl [vmem:[#allocation1] sm:$0xff pattern:$0x75643120]
      %917 = vst [vmem:[%s902] ss:$2 sm:$0xff] %v868
      %v918 = vld.sshfl [vmem:[#allocation1 + $0x10] sm:$0xff pattern:$0x75643120]
      %920 = vst [vmem:[%s906] ss:$2 sm:$0xff] %v871
      %v921 = vld.sshfl [vmem:[#allocation1 + $0x20] sm:$0xff pattern:$0x75643120]
      %923 = vst [vmem:[%s910] ss:$2 sm:$0xff] %v874
      %v924 = vld.sshfl [vmem:[#allocation1 + $0x30] sm:$0xff pattern:$0x75643120]
      %926 = vst [vmem:[#allocation1] ss:$2 sm:$0xff] %v877
      %v927 = vld.sshfl [vmem:[#allocation1] sm:$0xff pattern:$0x75643120]
      %929 = vst [vmem:[%s902] ss:$2 sm:$0xff] %v880
      %v930 = vld.sshfl [vmem:[#allocation1 + $0x10] sm:$0xff pattern:$0x75643120]
      %932 = vst [vmem:[%s906] ss:$2 sm:$0xff] %v883
      %v933 = vld.sshfl [vmem:[#allocation1 + $0x20] sm:$0xff pattern:$0x75643120]
      %935 = vst [vmem:[%s910] ss:$2 sm:$0xff] %v886
      %v936 = vld.sshfl [vmem:[#allocation1 + $0x30] sm:$0xff pattern:$0x75643120]
      %938 = vst [vmem:[#allocation1] ss:$2 sm:$0xff] %v889
      %v939 = vld.sshfl [vmem:[#allocation1] sm:$0xff pattern:$0x75643120]
      %941 = vst [vmem:[%s902] ss:$2 sm:$0xff] %v892
      %v942 = vld.sshfl [vmem:[#allocation1 + $0x10] sm:$0xff pattern:$0x75643120]
      %944 = vst [vmem:[%s906] ss:$2 sm:$0xff] %v895
      %v945 = vld.sshfl [vmem:[#allocation1 + $0x20] sm:$0xff pattern:$0x75643120]
      %947 = vst [vmem:[%s910] ss:$2 sm:$0xff] %v898
      %v948 = vld.sshfl [vmem:[#allocation1 + $0x30] sm:$0xff pattern:$0x75643120]
      %v950 = vunpack.c.l.b16 %v900
      %v951 = vunpack.c.l.b16 %v904
      %v952 = vunpack.c.l.b16 %v908
      %v953 = vunpack.c.l.b16 %v912
      %v954 = vunpack.c.l.b16 %v915
      %v955 = vunpack.c.l.b16 %v918
      %v956 = vunpack.c.l.b16 %v921
      %v957 = vunpack.c.l.b16 %v924
      %v958 = vunpack.c.l.b16 %v927
      %v959 = vunpack.c.l.b16 %v930
      %v960 = vunpack.c.l.b16 %v933
      %v961 = vunpack.c.l.b16 %v936
      %v962 = vunpack.c.l.b16 %v939
      %v963 = vunpack.c.l.b16 %v942
      %v964 = vunpack.c.l.b16 %v945
      %v965 = vunpack.c.l.b16 %v948
      %v966 = vrot.slane %v951, 7
      %vm967 = vcmask 1041409
      %v968 = vsel %vm967, %v966, %v950
      %v969 = vrot.slane %v952, 6
      %vm970 = vcmask 1042434
      %v971 = vsel %vm970, %v969, %v968
      %v972 = vrot.slane %v953, 5
      %vm973 = vcmask 1043459
      %v974 = vsel %vm973, %v972, %v971
      %v975 = vrot.slane %v955, 7
      %v976 = vsel %vm967, %v975, %v954
      %v977 = vrot.slane %v956, 6
      %v978 = vsel %vm970, %v977, %v976
      %v979 = vrot.slane %v957, 5
      %v980 = vsel %vm973, %v979, %v978
      %v981 = vrot.slane %v959, 7
      %v982 = vsel %vm967, %v981, %v958
      %v983 = vrot.slane %v960, 6
      %v984 = vsel %vm970, %v983, %v982
      %v985 = vrot.slane %v961, 5
      %v986 = vsel %vm973, %v985, %v984
      %v987 = vrot.slane %v963, 7
      %v988 = vsel %vm967, %v987, %v962
      %v989 = vrot.slane %v964, 6
      %v990 = vsel %vm970, %v989, %v988
      %v991 = vrot.slane %v965, 5
      %v992 = vsel %vm973, %v991, %v990
      %v993 = vpack.c.b16 %v974, %v974
      %v994 = vpack.c.b16 %v980, %v980
      %v995 = vpack.c.b16 %v986, %v986
      %v996 = vpack.c.b16 %v992, %v992
      %v997 = vrot.slane %v993, 2
      %v998 = vrot.slane %v994, 2
      %v999 = vrot.slane %v995, 2
      %v1000 = vrot.slane %v996, 2
      %v1003 = vsel %vm850, %v993, %v997
      %v1006 = vsel %vm850, %v994, %v998
      %v1009 = vsel %vm850, %v995, %v999
      %v1012 = vsel %vm850, %v996, %v1000
      %vm1017 = vcmask 25600
      %1018 = vst.msk [vmem:[%s113] sm:$0x3] %vm1017, %v1003
      %1019 = vst.msk [vmem:[%s113 + $0x2] sm:$0x3] %vm1017, %v1006
      %1020 = vst.msk [vmem:[%s113 + $0x4] sm:$0x3] %vm1017, %v1009
      %1021 = vst.msk [vmem:[%s113 + $0x6] sm:$0x3] %vm1017, %v1012
      %p1022 = scmp.lt.s32.totalorder %s12, 7
      %s1023 = scalar_select %p1022, %s12, 7
      %s1024 = smul.addr %s1023, 4
      %s1025 = smul.addr %s1024, 2
      %s1026 = scalar_lea.vmem %s1, %s1025
      // Predicated region
      $region25: #{ae_forward.14} parent=23 // pred_check
        %p1027 = pneg %p56
      $region26: #{ae_forward.14} parent=23 // pred_check_branch
        %1029 = sbr.rel (%p1027) target = $region28
      $region27: #{ae_forward.14} parent=23 // pred_region
        _
      $region28: #{ae_forward.14} parent=23 // pred_fallthru
        _
    $region24: #{ae_forward.14} parent=5 // pred_fallthru
      _
    %p1030 = scmp.le.s32.totalorder 2, %s7
    // Predicated region
    $region29: #{ae_forward.14} parent=5 // pred_check
      %p1031 = pneg %p1030
    $region30: #{ae_forward.14} parent=5 // pred_check_branch
      %1033 = sbr.rel (%p1031) target = $region32
    $region31: #{ae_forward.14} parent=5 // pred_region
      %s1034 = ssub.s32 %s7, 2
      // Predicated region
      $region33: #{ae_forward.14} parent=31 // pred_check
        %p1035 = pneg %p62
      $region34: #{ae_forward.14} parent=31 // pred_check_branch
        %1037 = sbr.rel (%p1035) target = $region36
      $region35: #{ae_forward.14} parent=31 // pred_region
        %p1038 = scmp.lt.s32.totalorder %s13, 7
        %s1039 = scalar_select %p1038, %s13, 7
        %s1040 = smul.addr %s1039, 4
        %s1041 = smul.addr %s1040, 2
        %s1042 = scalar_lea.vmem %s1, %s1041
      $region36: #{ae_forward.14} parent=31 // pred_fallthru
        _
    $region32: #{ae_forward.14} parent=5 // pred_fallthru
      _
  $region6: #{ae_forward.14} parent=0 // loop_footer
    %s11 = sadd.s32 1, %s7
  $region7: #{ae_forward.14} parent=0 // loop_footer_branch
    %6 = sbr.rel target = $region3
  $region8: #{ae_forward.14} parent=0 // loop_exit
    _

// kernel: ae_forward.12
$region0: #{ae_forward.12}
  #allocation0 [shape = 'u32[]', space=smem, size = 0x4, offset = 0x4, fixed_abs, tag = 'smem constant byte address 0x4 - core index']
  #allocation1 [shape = 'u32[72,128]{1,0:T(1,128)}', space=vmem, size = 0x9000, scoped, tag = 'internal scratch']
  %s0 = inlined_call_operand.vmem [shape: bf16[2,10,176,4], index: 0, kind: input, shape index: {}]
  %s1 = inlined_call_operand.vmem [shape: bf16[3,36,4], index: 1, kind: input, shape index: {}]
  %s2 = inlined_call_operand.vmem [shape: f32[1,4], index: 2, kind: input, shape index: {}]
  %s3 = inlined_call_operand.vmem [shape: f32[1,4], index: 3, kind: input, shape index: {}]
  %s4 = inlined_call_operand.vmem [shape: bf16[2,8,128,4], index: 4, kind: output, shape index: {}]
  %s5 = sld [smem:[#allocation0]]
  $region49: #{ae_forward.12} parent=0
    _
  %s7 = ssub.s32 1, %s5
  %s8 = scalar_select 0, %s7, %s5
  loop: start=0, step=1, limit=18
  $region2: #{ae_forward.12} parent=0 // loop_pre_header
    _
  $region3: #{ae_forward.12} parent=0 // loop_header
    %s10 = sphi 0, %s14
    %p11 = scmp.ge.s32.totalorder %s10, 18
    %s17 = sphi 0, %s36
    %s18 = sphi 0, %s32
    %s19 = sphi 0, %s28
    %s20 = sphi 0, %s17
    %s21 = sphi 0, %s18
    %s22 = sphi 0, %s19
    %s23 = sphi 0, %s20
    %s24 = sphi 0, %s21
    %s25 = sphi 0, %s22
    %s39 = sphi 0, %s41
    %s42 = sphi 0, %s39
    %s43 = sphi 0, %s42
    %s59 = sphi 0, %s43
    %s65 = sphi 0, %s67
    %s68 = sphi 0, %s65
    %s69 = sphi 0, %s68
    %s85 = sphi 0, %s69
    %s91 = sphi 0, %s93
    %s94 = sphi 0, %s91
    %s95 = sphi 0, %s94
    %s111 = sphi 0, %s95
    %s117 = sphi 0, %s119
    %s120 = sphi 0, %s117
    %s121 = sphi 0, %s120
    %s137 = sphi 0, %s121
    %s147 = sphi 0, %s149
    %s150 = sphi 0, %s147
    %s151 = sphi 0, %s150
    %s167 = sphi 0, %s151
  $region4: #{ae_forward.12} parent=0 // loop_header_branch
    %13 = sbr.rel (%p11) target = $region8
  $region5: #{ae_forward.12} parent=0 // loop_body
    %s15 = ssub.s32 %s10, 1
    %s16 = ssub.s32 %s10, 2
    %s26 = sadd.s32 1, %s19
    %p27 = scmp.ge.s32.totalorder %s26, 8
    %s28 = scalar_select %p27, 0, %s26
    %s29 = sadd.s32 1, %s18
    %s30 = scalar_select %p27, %s29, %s18
    %p31 = scmp.ge.s32.totalorder %s30, 2
    %s32 = scalar_select %p31, 0, %s30
    %s33 = sadd.s32 1, %s17
    %s34 = scalar_select %p31, %s33, %s17
    %p35 = scmp.ge.s32.totalorder %s34, 1
    %s36 = scalar_select %p35, 0, %s34
    %s37 = ssub.s32 %s18, %s32
    %p38 = scmp.eq.s32.totalorder %s37, 0
    %s40 = sadd.s32 %s39, 1
    %s41 = scalar_select %p38, %s39, %s40
    %p44 = pneg %p38
    %p45 = scmp.eq.s32.totalorder %s10, 15
    %p46 = por %p44, %p45
    %p47 = scmp.ne.s32.totalorder %s39, %s42
    %p48 = scmp.eq.s32.totalorder %s10, 0
    %p49 = por %p47, %p48
    %p50 = scmp.ne.s32.totalorder %s39, %s42
    %p51 = scmp.eq.s32.totalorder %s15, 15
    %p52 = por %p50, %p51
    %p53 = scmp.ne.s32.totalorder %s42, %s43
    %p54 = scmp.eq.s32.totalorder %s15, 0
    %p55 = por %p53, %p54
    %p56 = scmp.ne.s32.totalorder %s42, %s43
    %p57 = scmp.eq.s32.totalorder %s16, 15
    %p58 = por %p56, %p57
    %p60 = scmp.ne.s32.totalorder %s43, %s59
    %p61 = scmp.eq.s32.totalorder %s16, 0
    %p62 = por %p60, %p61
    %s63 = ssub.s32 %s17, %s36
    %p64 = scmp.eq.s32.totalorder %s63, 0
    %s66 = sadd.s32 %s65, 1
    %s67 = scalar_select %p64, %s65, %s66
    %p70 = pneg %p64
    %p71 = scmp.eq.s32.totalorder %s10, 15
    %p72 = por %p70, %p71
    %p73 = scmp.ne.s32.totalorder %s65, %s68
    %p74 = scmp.eq.s32.totalorder %s10, 0
    %p75 = por %p73, %p74
    %p76 = scmp.ne.s32.totalorder %s65, %s68
    %p77 = scmp.eq.s32.totalorder %s15, 15
    %p78 = por %p76, %p77
    %p79 = scmp.ne.s32.totalorder %s68, %s69
    %p80 = scmp.eq.s32.totalorder %s15, 0
    %p81 = por %p79, %p80
    %p82 = scmp.ne.s32.totalorder %s68, %s69
    %p83 = scmp.eq.s32.totalorder %s16, 15
    %p84 = por %p82, %p83
    %p86 = scmp.ne.s32.totalorder %s69, %s85
    %p87 = scmp.eq.s32.totalorder %s16, 0
    %p88 = por %p86, %p87
    %s89 = ssub.s32 %s17, %s36
    %p90 = scmp.eq.s32.totalorder %s89, 0
    %s92 = sadd.s32 %s91, 1
    %s93 = scalar_select %p90, %s91, %s92
    %p96 = pneg %p90
    %p97 = scmp.eq.s32.totalorder %s10, 15
    %p98 = por %p96, %p97
    %p99 = scmp.ne.s32.totalorder %s91, %s94
    %p100 = scmp.eq.s32.totalorder %s10, 0
    %p101 = por %p99, %p100
    %p102 = scmp.ne.s32.totalorder %s91, %s94
    %p103 = scmp.eq.s32.totalorder %s15, 15
    %p104 = por %p102, %p103
    %p105 = scmp.ne.s32.totalorder %s94, %s95
    %p106 = scmp.eq.s32.totalorder %s15, 0
    %p107 = por %p105, %p106
    %p108 = scmp.ne.s32.totalorder %s94, %s95
    %p109 = scmp.eq.s32.totalorder %s16, 15
    %p110 = por %p108, %p109
    %p112 = scmp.ne.s32.totalorder %s95, %s111
    %p113 = scmp.eq.s32.totalorder %s16, 0
    %p114 = por %p112, %p113
    %s115 = ssub.s32 %s17, %s36
    %p116 = scmp.eq.s32.totalorder %s115, 0
    %s118 = sadd.s32 %s117, 1
    %s119 = scalar_select %p116, %s117, %s118
    %p122 = pneg %p116
    %p123 = scmp.eq.s32.totalorder %s10, 15
    %p124 = por %p122, %p123
    %p125 = scmp.ne.s32.totalorder %s117, %s120
    %p126 = scmp.eq.s32.totalorder %s10, 0
    %p127 = por %p125, %p126
    %p128 = scmp.ne.s32.totalorder %s117, %s120
    %p129 = scmp.eq.s32.totalorder %s15, 15
    %p130 = por %p128, %p129
    %p131 = scmp.ne.s32.totalorder %s120, %s121
    %p132 = scmp.eq.s32.totalorder %s15, 0
    %p133 = por %p131, %p132
    %p134 = scmp.ne.s32.totalorder %s120, %s121
    %p135 = scmp.eq.s32.totalorder %s16, 15
    %p136 = por %p134, %p135
    %p138 = scmp.ne.s32.totalorder %s121, %s137
    %p139 = scmp.eq.s32.totalorder %s16, 0
    %p140 = por %p138, %p139
    %s141 = ssub.s32 %s18, %s32
    %s142 = ssub.s32 %s19, %s28
    %s143 = sor.u32 %s141, %s142
    %s144 = ssub.s32 %s17, %s36
    %s145 = sor.u32 %s143, %s144
    %p146 = scmp.eq.s32.totalorder %s145, 0
    %s148 = sadd.s32 %s147, 1
    %s149 = scalar_select %p146, %s147, %s148
    %p152 = pneg %p146
    %p153 = scmp.eq.s32.totalorder %s10, 15
    %p154 = por %p152, %p153
    %p155 = scmp.ne.s32.totalorder %s147, %s150
    %p156 = scmp.eq.s32.totalorder %s10, 0
    %p157 = por %p155, %p156
    %p158 = scmp.ne.s32.totalorder %s147, %s150
    %p159 = scmp.eq.s32.totalorder %s15, 15
    %p160 = por %p158, %p159
    %p161 = scmp.ne.s32.totalorder %s150, %s151
    %p162 = scmp.eq.s32.totalorder %s15, 0
    %p163 = por %p161, %p162
    %p164 = scmp.ne.s32.totalorder %s150, %s151
    %p165 = scmp.eq.s32.totalorder %s16, 15
    %p166 = por %p164, %p165
    %p168 = scmp.ne.s32.totalorder %s151, %s167
    %p169 = scmp.eq.s32.totalorder %s16, 0
    %p170 = por %p168, %p169
    %p171 = scmp.le.s32.totalorder 1, %s10
    %p172 = scmp.lt.s32.totalorder %s10, 17
    %p173 = pnand %p171, %p172
    %p174 = pneg %p173
    // Predicated region
    $region9: #{ae_forward.12} parent=5 // pred_check
      _
    $region10: #{ae_forward.12} parent=5 // pred_check_branch
      %176 = sbr.rel (%p173) target = $region12
    $region11: #{ae_forward.12} parent=5 // pred_region
      %s177 = ssub.s32 %s10, 1
      // Predicated region
      $region13: #{ae_forward.12} parent=11 // pred_check
        %p178 = pneg %p81
      $region14: #{ae_forward.12} parent=11 // pred_check_branch
        %180 = sbr.rel (%p178) target = $region16
      $region15: #{ae_forward.12} parent=11 // pred_region
        %p181 = scmp.lt.s32.totalorder %s20, 0
        %s182 = scalar_select %p181, %s20, 0
        %s183 = smul.addr %s182, 4
        %s184 = scalar_lea.vmem %s1, %s183
      $region16: #{ae_forward.12} parent=11 // pred_fallthru
        _
      // Predicated region
      $region17: #{ae_forward.12} parent=11 // pred_check
        %p185 = pneg %p107
      $region18: #{ae_forward.12} parent=11 // pred_check_branch
        %187 = sbr.rel (%p185) target = $region20
      $region19: #{ae_forward.12} parent=11 // pred_region
        %p188 = scmp.lt.s32.totalorder %s20, 0
        %s189 = scalar_select %p188, %s20, 0
        %s190 = scalar_lea.vmem %s2, %s189
      $region20: #{ae_forward.12} parent=11 // pred_fallthru
        _
      // Predicated region
      $region21: #{ae_forward.12} parent=11 // pred_check
        %p191 = pneg %p133
      $region22: #{ae_forward.12} parent=11 // pred_check_branch
        %193 = sbr.rel (%p191) target = $region24
      $region23: #{ae_forward.12} parent=11 // pred_region
        %p194 = scmp.lt.s32.totalorder %s20, 0
        %s195 = scalar_select %p194, %s20, 0
        %s196 = scalar_lea.vmem %s3, %s195
      $region24: #{ae_forward.12} parent=11 // pred_fallthru
        _
    $region12: #{ae_forward.12} parent=5 // pred_fallthru
      _
    %p197 = scmp.lt.s32.totalorder %s10, 16
    // Predicated region
    $region25: #{ae_forward.12} parent=5 // pred_check
      %p198 = pneg %p197
    $region26: #{ae_forward.12} parent=5 // pred_check_branch
      %200 = sbr.rel (%p198) target = $region28
    $region27: #{ae_forward.12} parent=5 // pred_region
      // Predicated region
      $region29: #{ae_forward.12} parent=27 // pred_check
        %p201 = pneg %p49
      $region30: #{ae_forward.12} parent=27 // pred_check_branch
        %203 = sbr.rel (%p201) target = $region32
      $region31: #{ae_forward.12} parent=27 // pred_region
        %p204 = scmp.lt.s32.totalorder %s18, 1
        %s205 = scalar_select %p204, %s18, 1
        %s206 = smul.addr %s205, 220
        %s207 = smul.addr %s206, 4
        %s208 = scalar_lea.vmem %s0, %s207
      $region32: #{ae_forward.12} parent=27 // pred_fallthru
        _
    $region28: #{ae_forward.12} parent=5 // pred_fallthru
      _
    %p209 = scmp.le.s32.totalorder 1, %s10
    %p210 = scmp.lt.s32.totalorder %s10, 17
    %p211 = pnand %p209, %p210
    %p212 = pneg %p211
    // Predicated region
    $region33: #{ae_forward.12} parent=5 // pred_check
      _
    $region34: #{ae_forward.12} parent=5 // pred_check_branch
      %214 = sbr.rel (%p211) target = $region36
    $region35: #{ae_forward.12} parent=5 // pred_region
      %s215 = ssub.s32 %s10, 1
      %p216 = scmp.lt.s32.totalorder %s21, 1
      %s217 = scalar_select %p216, %s21, 1
      %s218 = smul.addr %s217, 220
      %s219 = smul.addr %s218, 4
      %s220 = scalar_lea.vmem %s0, %s219
      %p221 = pneg %p55
      %p222 = pneg %p52
      %p223 = scmp.lt.s32.totalorder %s20, 0
      %s224 = scalar_select %p223, %s20, 0
      %s225 = smul.addr %s224, 4
      %s226 = scalar_lea.vmem %s1, %s225
      %p227 = pneg %p81
      %p228 = pneg %p78
      %p229 = scmp.lt.s32.totalorder %s20, 0
      %s230 = scalar_select %p229, %s20, 0
      %s231 = scalar_lea.vmem %s2, %s230
      %p232 = pneg %p107
      %p233 = pneg %p104
      %p234 = scmp.lt.s32.totalorder %s20, 0
      %s235 = scalar_select %p234, %s20, 0
      %s236 = scalar_lea.vmem %s3, %s235
      %p237 = pneg %p133
      %p238 = pneg %p130
      %p239 = pneg %p163
      %p240 = pneg %p160
      %p241 = scmp.lt.s32.totalorder %s21, 1
      %s242 = scalar_select %p241, %s21, 1
      %p243 = scmp.lt.s32.totalorder %s22, 7
      %s244 = scalar_select %p243, %s22, 7
      %p245 = scmp.lt.s32.totalorder %s20, 0
      %s246 = scalar_select %p245, %s20, 0
      %s247 = smul.addr %s244, 16
      %s248 = sadd.s32 %s246, %s247
      %s249 = smul.addr %s242, 128
      %s250 = sadd.s32 %s248, %s249
      %s251 = smul.addr %s250, 4
      %s252 = scalar_lea.vmem %s4, %s251
      %p253 = scmp.lt.s32.totalorder %s21, 1
      %s254 = scalar_select %p253, %s21, 1
      %s255 = smul.addr %s254, 220
      %s256 = smul.addr %s255, 4
      %s257 = scalar_lea.vmem %s0, %s256
      %p258 = scmp.lt.s32.totalorder %s20, 0
      %s259 = scalar_select %p258, %s20, 0
      %s260 = smul.addr %s259, 4
      %s261 = scalar_lea.vmem %s1, %s260
      %p262 = scmp.lt.s32.totalorder %s20, 0
      %s263 = scalar_select %p262, %s20, 0
      %s264 = scalar_lea.vmem %s2, %s263
      %p265 = scmp.lt.s32.totalorder %s20, 0
      %s266 = scalar_select %p265, %s20, 0
      %s267 = scalar_lea.vmem %s3, %s266
      %p268 = scmp.lt.s32.totalorder %s21, 1
      %s269 = scalar_select %p268, %s21, 1
      %p270 = scmp.lt.s32.totalorder %s22, 7
      %s271 = scalar_select %p270, %s22, 7
      %p272 = scmp.lt.s32.totalorder %s20, 0
      %s273 = scalar_select %p272, %s20, 0
      %s274 = smul.addr %s271, 16
      %s275 = sadd.s32 %s273, %s274
      %s276 = smul.addr %s269, 128
      %s277 = sadd.s32 %s275, %s276
      %s278 = smul.addr %s277, 4
      %s279 = scalar_lea.vmem %s4, %s278
      %s281 = smul.u32 %s22, 22
      %s282 = smul.addr %s281, 4
      %s283 = scalar_lea.vmem %s257, %s282
      %v284 = vld [vmem:[%s283] sm:$0xf]
      %v285 = vld [vmem:[%s283 + $0x4] sm:$0xf]
      %v286 = vld [vmem:[%s283 + $0x8] sm:$0xf]
      %v287 = vld [vmem:[%s283 + $0xc] sm:$0xf]
      %v288 = vld [vmem:[%s283 + $0x10] sm:$0xf]
      %v289 = vld [vmem:[%s283 + $0x14] sm:$0xf]
      %v290 = vld [vmem:[%s283 + $0x18] sm:$0xf]
      %v291 = vld [vmem:[%s283 + $0x1c] sm:$0xf]
      %v292 = vld [vmem:[%s283 + $0x20] sm:$0xf]
      %v293 = vld [vmem:[%s283 + $0x24] sm:$0xf]
      %v294 = vld [vmem:[%s283 + $0x28] sm:$0xf]
      %v295 = vld [vmem:[%s283 + $0x2c] sm:$0xf]
      %v296 = vld [vmem:[%s283 + $0x30] sm:$0xf]
      %v297 = vld [vmem:[%s283 + $0x34] sm:$0xf]
      %v298 = vld [vmem:[%s283 + $0x38] sm:$0xf]
      %v299 = vld [vmem:[%s283 + $0x3c] sm:$0xf]
      %v300 = vld [vmem:[%s283 + $0x40] sm:$0xf]
      %v301 = vld [vmem:[%s283 + $0x44] sm:$0xf]
      %v302 = vld [vmem:[%s283 + $0x48] sm:$0xf]
      %v303 = vld [vmem:[%s283 + $0x4c] sm:$0xf]
      %v304 = vld [vmem:[%s283 + $0x50] sm:$0xf]
      %v321 = vunpack.c.l.b16 %v284
      %v322 = vunpack.c.l.b16 %v285
      %v323 = vunpack.c.l.b16 %v286
      %v324 = vunpack.c.l.b16 %v287
      %v325 = vunpack.c.l.b16 %v288
      %v326 = vunpack.c.l.b16 %v289
      %v327 = vunpack.c.l.b16 %v290
      %v328 = vunpack.c.l.b16 %v291
      %v329 = vunpack.c.l.b16 %v292
      %v330 = vunpack.c.l.b16 %v293
      %v331 = vunpack.c.l.b16 %v294
      %v332 = vunpack.c.l.b16 %v295
      %v333 = vunpack.c.l.b16 %v296
      %v334 = vunpack.c.l.b16 %v297
      %v335 = vunpack.c.l.b16 %v298
      %v336 = vunpack.c.l.b16 %v299
      %v337 = vpack.c.b16 %v322, %v321
      %v338 = vpack.c.b16 %v324, %v323
      %v339 = vpack.c.b16 %v326, %v325
      %v340 = vpack.c.b16 %v328, %v327
      %v341 = vpack.c.b16 %v330, %v329
      %v342 = vpack.c.b16 %v332, %v331
      %v343 = vpack.c.b16 %v334, %v333
      %v344 = vpack.c.b16 %v336, %v335
      %v346 = vunpack.c.l.b16 %v300
      %v347 = vpack.c.b16 %v346, %v346
      %vm348 = vsmask.f32 7424
      %v350 = vshrl.u32 %v337, 16
      %v352 = vshll.u32 %v337, 16
      %v354 = vrot.slane %v352, 1
      %v355 = vor.u32 %v350, %v354
      %v357 = vshll.u32 %v338, 16
      %v359 = vrot.slane %v357, 1
      %v360 = vsel %vm348, %v355, %v359
      %v361 = vshrl.u32 %v338, 16
      %v363 = vor.u32 %v361, %v359
      %v365 = vshll.u32 %v339, 16
      %v367 = vrot.slane %v365, 1
      %v368 = vsel %vm348, %v363, %v367
      %v369 = vshrl.u32 %v339, 16
      %v371 = vor.u32 %v369, %v367
      %v373 = vshll.u32 %v340, 16
      %v375 = vrot.slane %v373, 1
      %v376 = vsel %vm348, %v371, %v375
      %v377 = vshrl.u32 %v340, 16
      %v379 = vor.u32 %v377, %v375
      %v381 = vshll.u32 %v341, 16
      %v383 = vrot.slane %v381, 1
      %v384 = vsel %vm348, %v379, %v383
      %v385 = vshrl.u32 %v341, 16
      %v387 = vor.u32 %v385, %v383
      %v389 = vshll.u32 %v342, 16
      %v391 = vrot.slane %v389, 1
      %v392 = vsel %vm348, %v387, %v391
      %v393 = vshrl.u32 %v342, 16
      %v395 = vor.u32 %v393, %v391
      %v397 = vshll.u32 %v343, 16
      %v399 = vrot.slane %v397, 1
      %v400 = vsel %vm348, %v395, %v399
      %v401 = vshrl.u32 %v343, 16
      %v403 = vor.u32 %v401, %v399
      %v405 = vshll.u32 %v344, 16
      %v407 = vrot.slane %v405, 1
      %v408 = vsel %vm348, %v403, %v407
      %v409 = vshrl.u32 %v344, 16
      %v411 = vor.u32 %v409, %v407
      %v413 = vshll.u32 %v347, 16
      %v415 = vrot.slane %v413, 1
      %v416 = vsel %vm348, %v411, %v415
      %417 = vrot.lane.b32.xlu0 %v360, 4
      %v418 = vpop.permute.xlu0 %417
      %419 = vrot.lane.b32.xlu0 %v368, 4
      %v420 = vpop.permute.xlu0 %419
      %421 = vrot.lane.b32.xlu0 %v376, 4
      %v422 = vpop.permute.xlu0 %421
      %423 = vrot.lane.b32.xlu0 %v384, 4
      %v424 = vpop.permute.xlu0 %423
      %425 = vrot.lane.b32.xlu0 %v392, 4
      %v426 = vpop.permute.xlu0 %425
      %427 = vrot.lane.b32.xlu0 %v400, 4
      %v428 = vpop.permute.xlu0 %427
      %429 = vrot.lane.b32.xlu0 %v408, 4
      %v430 = vpop.permute.xlu0 %429
      %431 = vrot.lane.b32.xlu0 %v416, 4
      %v432 = vpop.permute.xlu0 %431
      %vm433 = vcmask 1046528
      %v434 = vrot.slane %v337, 1
      %v435 = vrot.slane %v338, 1
      %v436 = vsel %vm433, %v434, %v435
      %v437 = vrot.slane %v339, 1
      %v438 = vsel %vm433, %v435, %v437
      %v439 = vrot.slane %v340, 1
      %v440 = vsel %vm433, %v437, %v439
      %v441 = vrot.slane %v341, 1
      %v442 = vsel %vm433, %v439, %v441
      %v443 = vrot.slane %v342, 1
      %v444 = vsel %vm433, %v441, %v443
      %v445 = vrot.slane %v343, 1
      %v446 = vsel %vm433, %v443, %v445
      %v447 = vrot.slane %v344, 1
      %v448 = vsel %vm433, %v445, %v447
      %v449 = vrot.slane %v347, 1
      %v450 = vsel %vm433, %v447, %v449
      %451 = vrot.lane.b32.xlu0 %v436, 8
      %v452 = vpop.permute.xlu0 %451
      %453 = vrot.lane.b32.xlu0 %v438, 8
      %v454 = vpop.permute.xlu0 %453
      %455 = vrot.lane.b32.xlu0 %v440, 8
      %v456 = vpop.permute.xlu0 %455
      %457 = vrot.lane.b32.xlu0 %v442, 8
      %v458 = vpop.permute.xlu0 %457
      %459 = vrot.lane.b32.xlu0 %v444, 8
      %v460 = vpop.permute.xlu0 %459
      %461 = vrot.lane.b32.xlu0 %v446, 8
      %v462 = vpop.permute.xlu0 %461
      %463 = vrot.lane.b32.xlu0 %v448, 8
      %v464 = vpop.permute.xlu0 %463
      %465 = vrot.lane.b32.xlu0 %v450, 8
      %v466 = vpop.permute.xlu0 %465
      %v468 = vunpack.c.l.b16 %v301
      %v469 = vpack.c.b16 %v468, %v346
      %470 = vrot.lane.b32.xlu0 %v338, 12
      %v471 = vpop.permute.xlu0 %470
      %472 = vrot.lane.b32.xlu0 %v339, 12
      %v473 = vpop.permute.xlu0 %472
      %474 = vrot.lane.b32.xlu0 %v340, 12
      %v475 = vpop.permute.xlu0 %474
      %476 = vrot.lane.b32.xlu0 %v341, 12
      %v477 = vpop.permute.xlu0 %476
      %478 = vrot.lane.b32.xlu0 %v342, 12
      %v479 = vpop.permute.xlu0 %478
      %480 = vrot.lane.b32.xlu0 %v343, 12
      %v481 = vpop.permute.xlu0 %480
      %482 = vrot.lane.b32.xlu0 %v344, 12
      %v483 = vpop.permute.xlu0 %482
      %484 = vrot.lane.b32.xlu0 %v469, 12
      %v485 = vpop.permute.xlu0 %484
      %v487 = vunpack.c.l.b16 %v302
      %v488 = vpack.c.b16 %v487, %v487
      %v490 = vshll.u32 %v469, 16
      %v492 = vrot.slane %v490, 1
      %v493 = vsel %vm348, %v411, %v492
      %v494 = vshrl.u32 %v469, 16
      %v496 = vor.u32 %v494, %v492
      %v498 = vshll.u32 %v488, 16
      %v500 = vrot.slane %v498, 1
      %v501 = vsel %vm348, %v496, %v500
      %502 = vrot.lane.b32.xlu0 %v368, 16
      %v503 = vpop.permute.xlu0 %502
      %504 = vrot.lane.b32.xlu0 %v376, 16
      %v505 = vpop.permute.xlu0 %504
      %506 = vrot.lane.b32.xlu0 %v384, 16
      %v507 = vpop.permute.xlu0 %506
      %508 = vrot.lane.b32.xlu0 %v392, 16
      %v509 = vpop.permute.xlu0 %508
      %510 = vrot.lane.b32.xlu0 %v400, 16
      %v511 = vpop.permute.xlu0 %510
      %512 = vrot.lane.b32.xlu0 %v408, 16
      %v513 = vpop.permute.xlu0 %512
      %514 = vrot.lane.b32.xlu0 %v493, 16
      %v515 = vpop.permute.xlu0 %514
      %516 = vrot.lane.b32.xlu0 %v501, 16
      %v517 = vpop.permute.xlu0 %516
      %v518 = vrot.slane %v469, 1
      %v519 = vsel %vm433, %v447, %v518
      %v520 = vrot.slane %v488, 1
      %v521 = vsel %vm433, %v518, %v520
      %522 = vrot.lane.b32.xlu0 %v438, 20
      %v523 = vpop.permute.xlu0 %522
      %524 = vrot.lane.b32.xlu0 %v440, 20
      %v525 = vpop.permute.xlu0 %524
      %526 = vrot.lane.b32.xlu0 %v442, 20
      %v527 = vpop.permute.xlu0 %526
      %528 = vrot.lane.b32.xlu0 %v444, 20
      %v529 = vpop.permute.xlu0 %528
      %530 = vrot.lane.b32.xlu0 %v446, 20
      %v531 = vpop.permute.xlu0 %530
      %532 = vrot.lane.b32.xlu0 %v448, 20
      %v533 = vpop.permute.xlu0 %532
      %534 = vrot.lane.b32.xlu0 %v519, 20
      %v535 = vpop.permute.xlu0 %534
      %536 = vrot.lane.b32.xlu0 %v521, 20
      %v537 = vpop.permute.xlu0 %536
      %v539 = vunpack.c.l.b16 %v303
      %v540 = vpack.c.b16 %v539, %v487
      %541 = vrot.lane.b32.xlu0 %v339, 24
      %v542 = vpop.permute.xlu0 %541
      %543 = vrot.lane.b32.xlu0 %v340, 24
      %v544 = vpop.permute.xlu0 %543
      %545 = vrot.lane.b32.xlu0 %v341, 24
      %v546 = vpop.permute.xlu0 %545
      %547 = vrot.lane.b32.xlu0 %v342, 24
      %v548 = vpop.permute.xlu0 %547
      %549 = vrot.lane.b32.xlu0 %v343, 24
      %v550 = vpop.permute.xlu0 %549
      %551 = vrot.lane.b32.xlu0 %v344, 24
      %v552 = vpop.permute.xlu0 %551
      %553 = vrot.lane.b32.xlu0 %v469, 24
      %v554 = vpop.permute.xlu0 %553
      %555 = vrot.lane.b32.xlu0 %v540, 24
      %v556 = vpop.permute.xlu0 %555
      %v558 = vunpack.c.l.b16 %v304
      %v559 = vpack.c.b16 %v558, %v558
      %v561 = vshll.u32 %v540, 16
      %v563 = vrot.slane %v561, 1
      %v564 = vsel %vm348, %v496, %v563
      %v565 = vshrl.u32 %v540, 16
      %v567 = vor.u32 %v565, %v563
      %v569 = vshll.u32 %v559, 16
      %v571 = vrot.slane %v569, 1
      %v572 = vsel %vm348, %v567, %v571
      %573 = vrot.lane.b32.xlu0 %v376, 28
      %v574 = vpop.permute.xlu0 %573
      %575 = vrot.lane.b32.xlu0 %v384, 28
      %v576 = vpop.permute.xlu0 %575
      %577 = vrot.lane.b32.xlu0 %v392, 28
      %v578 = vpop.permute.xlu0 %577
      %579 = vrot.lane.b32.xlu0 %v400, 28
      %v580 = vpop.permute.xlu0 %579
      %581 = vrot.lane.b32.xlu0 %v408, 28
      %v582 = vpop.permute.xlu0 %581
      %583 = vrot.lane.b32.xlu0 %v493, 28
      %v584 = vpop.permute.xlu0 %583
      %585 = vrot.lane.b32.xlu0 %v564, 28
      %v586 = vpop.permute.xlu0 %585
      %587 = vrot.lane.b32.xlu0 %v572, 28
      %v588 = vpop.permute.xlu0 %587
      %v589 = vrot.slane %v540, 1
      %v590 = vsel %vm433, %v518, %v589
      %v591 = vrot.slane %v559, 1
      %v592 = vsel %vm433, %v589, %v591
      %593 = vrot.lane.b32.xlu0 %v440, 32
      %v594 = vpop.permute.xlu0 %593
      %595 = vrot.lane.b32.xlu0 %v442, 32
      %v596 = vpop.permute.xlu0 %595
      %597 = vrot.lane.b32.xlu0 %v444, 32
      %v598 = vpop.permute.xlu0 %597
      %599 = vrot.lane.b32.xlu0 %v446, 32
      %v600 = vpop.permute.xlu0 %599
      %601 = vrot.lane.b32.xlu0 %v448, 32
      %v602 = vpop.permute.xlu0 %601
      %603 = vrot.lane.b32.xlu0 %v519, 32
      %v604 = vpop.permute.xlu0 %603
      %605 = vrot.lane.b32.xlu0 %v590, 32
      %v606 = vpop.permute.xlu0 %605
      %607 = vrot.lane.b32.xlu0 %v592, 32
      %v608 = vpop.permute.xlu0 %607
      %vm609 = vcmask 31744
      %v611 = vsel %vm609, %v337, %v418
      %v613 = vsel %vm609, %v338, %v420
      %v615 = vsel %vm609, %v339, %v422
      %v617 = vsel %vm609, %v340, %v424
      %v619 = vsel %vm609, %v341, %v426
      %v621 = vsel %vm609, %v342, %v428
      %v623 = vsel %vm609, %v343, %v430
      %v625 = vsel %vm609, %v344, %v432
      %vm626 = vcmask 64512
      %v628 = vsel %vm626, %v611, %v452
      %v630 = vsel %vm626, %v613, %v454
      %v632 = vsel %vm626, %v615, %v456
      %v634 = vsel %vm626, %v617, %v458
      %v636 = vsel %vm626, %v619, %v460
      %v638 = vsel %vm626, %v621, %v462
      %v640 = vsel %vm626, %v623, %v464
      %v642 = vsel %vm626, %v625, %v466
      %vm643 = vcmask 97280
      %v645 = vsel %vm643, %v628, %v471
      %v647 = vsel %vm643, %v630, %v473
      %v649 = vsel %vm643, %v632, %v475
      %v651 = vsel %vm643, %v634, %v477
      %v653 = vsel %vm643, %v636, %v479
      %v655 = vsel %vm643, %v638, %v481
      %v657 = vsel %vm643, %v640, %v483
      %v659 = vsel %vm643, %v642, %v485
      %vm660 = vcmask 130048
      %v662 = vsel %vm660, %v645, %v503
      %v664 = vsel %vm660, %v647, %v505
      %v666 = vsel %vm660, %v649, %v507
      %v668 = vsel %vm660, %v651, %v509
      %v670 = vsel %vm660, %v653, %v511
      %v672 = vsel %vm660, %v655, %v513
      %v674 = vsel %vm660, %v657, %v515
      %v676 = vsel %vm660, %v659, %v517
      %vm677 = vcmask 162816
      %v679 = vsel %vm677, %v662, %v523
      %v681 = vsel %vm677, %v664, %v525
      %v683 = vsel %vm677, %v666, %v527
      %v685 = vsel %vm677, %v668, %v529
      %v687 = vsel %vm677, %v670, %v531
      %v689 = vsel %vm677, %v672, %v533
      %v691 = vsel %vm677, %v674, %v535
      %v693 = vsel %vm677, %v676, %v537
      %vm694 = vcmask 195584
      %v696 = vsel %vm694, %v679, %v542
      %v698 = vsel %vm694, %v681, %v544
      %v700 = vsel %vm694, %v683, %v546
      %v702 = vsel %vm694, %v685, %v548
      %v704 = vsel %vm694, %v687, %v550
      %v706 = vsel %vm694, %v689, %v552
      %v708 = vsel %vm694, %v691, %v554
      %v710 = vsel %vm694, %v693, %v556
      %vm711 = vcmask 228352
      %v713 = vsel %vm711, %v696, %v574
      %v715 = vsel %vm711, %v698, %v576
      %v717 = vsel %vm711, %v700, %v578
      %v719 = vsel %vm711, %v702, %v580
      %v721 = vsel %vm711, %v704, %v582
      %v723 = vsel %vm711, %v706, %v584
      %v725 = vsel %vm711, %v708, %v586
      %v727 = vsel %vm711, %v710, %v588
      %vm728 = vcmask 261120
      %v730 = vsel %vm728, %v713, %v594
      %v732 = vsel %vm728, %v715, %v596
      %v734 = vsel %vm728, %v717, %v598
      %v736 = vsel %vm728, %v719, %v600
      %v738 = vsel %vm728, %v721, %v602
      %v740 = vsel %vm728, %v723, %v604
      %v742 = vsel %vm728, %v725, %v606
      %v744 = vsel %vm728, %v727, %v608
      %v745 = vld [vmem:[%s261] sm:$0xf]
      %v746 = vld [vmem:[%s261 + $0x4] sm:$0xf]
      %v747 = vld [vmem:[%s261 + $0x8] sm:$0xf]
      %v748 = vld [vmem:[%s261 + $0xc] sm:$0xf]
      %v749 = vld [vmem:[%s261 + $0x10] sm:$0x3]
      %s750 = sadd.s32 %s22, 1
      %s751 = smul.u32 %s750, 22
      %s752 = smul.addr %s751, 4
      %s753 = scalar_lea.vmem %s257, %s752
      %v754 = vld [vmem:[%s753] sm:$0xf]
      %v755 = vld [vmem:[%s753 + $0x4] sm:$0xf]
      %v756 = vld [vmem:[%s753 + $0x8] sm:$0xf]
      %v757 = vld [vmem:[%s753 + $0xc] sm:$0xf]
      %v758 = vld [vmem:[%s753 + $0x10] sm:$0xf]
      %v759 = vld [vmem:[%s753 + $0x14] sm:$0xf]
      %v760 = vld [vmem:[%s753 + $0x18] sm:$0xf]
      %v761 = vld [vmem:[%s753 + $0x1c] sm:$0xf]
      %v762 = vld [vmem:[%s753 + $0x20] sm:$0xf]
      %v763 = vld [vmem:[%s753 + $0x24] sm:$0xf]
      %v764 = vld [vmem:[%s753 + $0x28] sm:$0xf]
      %v765 = vld [vmem:[%s753 + $0x2c] sm:$0xf]
      %v766 = vld [vmem:[%s753 + $0x30] sm:$0xf]
      %v767 = vld [vmem:[%s753 + $0x34] sm:$0xf]
      %v768 = vld [vmem:[%s753 + $0x38] sm:$0xf]
      %v769 = vld [vmem:[%s753 + $0x3c] sm:$0xf]
      %v770 = vld [vmem:[%s753 + $0x40] sm:$0xf]
      %v771 = vld [vmem:[%s753 + $0x44] sm:$0xf]
      %v772 = vld [vmem:[%s753 + $0x48] sm:$0xf]
      %v773 = vld [vmem:[%s753 + $0x4c] sm:$0xf]
      %v774 = vld [vmem:[%s753 + $0x50] sm:$0xf]
      %v791 = vunpack.c.l.b16 %v754
      %v792 = vunpack.c.l.b16 %v755
      %v793 = vunpack.c.l.b16 %v756
      %v794 = vunpack.c.l.b16 %v757
      %v795 = vunpack.c.l.b16 %v758
      %v796 = vunpack.c.l.b16 %v759
      %v797 = vunpack.c.l.b16 %v760
      %v798 = vunpack.c.l.b16 %v761
      %v799 = vunpack.c.l.b16 %v762
      %v800 = vunpack.c.l.b16 %v763
      %v801 = vunpack.c.l.b16 %v764
      %v802 = vunpack.c.l.b16 %v765
      %v803 = vunpack.c.l.b16 %v766
      %v804 = vunpack.c.l.b16 %v767
      %v805 = vunpack.c.l.b16 %v768
      %v806 = vunpack.c.l.b16 %v769
      %v807 = vpack.c.b16 %v792, %v791
      %v808 = vpack.c.b16 %v794, %v793
      %v809 = vpack.c.b16 %v796, %v795
      %v810 = vpack.c.b16 %v798, %v797
      %v811 = vpack.c.b16 %v800, %v799
      %v812 = vpack.c.b16 %v802, %v801
      %v813 = vpack.c.b16 %v804, %v803
      %v814 = vpack.c.b16 %v806, %v805
      %v816 = vunpack.c.l.b16 %v770
      %v817 = vpack.c.b16 %v816, %v816
      %v819 = vshrl.u32 %v807, 16
      %v821 = vshll.u32 %v807, 16
      %v823 = vrot.slane %v821, 1
      %v824 = vor.u32 %v819, %v823
      %v826 = vshll.u32 %v808, 16
      %v828 = vrot.slane %v826, 1
      %v829 = vsel %vm348, %v824, %v828
      %v830 = vshrl.u32 %v808, 16
      %v832 = vor.u32 %v830, %v828
      %v834 = vshll.u32 %v809, 16
      %v836 = vrot.slane %v834, 1
      %v837 = vsel %vm348, %v832, %v836
      %v838 = vshrl.u32 %v809, 16
      %v840 = vor.u32 %v838, %v836
      %v842 = vshll.u32 %v810, 16
      %v844 = vrot.slane %v842, 1
      %v845 = vsel %vm348, %v840, %v844
      %v846 = vshrl.u32 %v810, 16
      %v848 = vor.u32 %v846, %v844
      %v850 = vshll.u32 %v811, 16
      %v852 = vrot.slane %v850, 1
      %v853 = vsel %vm348, %v848, %v852
      %v854 = vshrl.u32 %v811, 16
      %v856 = vor.u32 %v854, %v852
      %v858 = vshll.u32 %v812, 16
      %v860 = vrot.slane %v858, 1
      %v861 = vsel %vm348, %v856, %v860
      %v862 = vshrl.u32 %v812, 16
      %v864 = vor.u32 %v862, %v860
      %v866 = vshll.u32 %v813, 16
      %v868 = vrot.slane %v866, 1
      %v869 = vsel %vm348, %v864, %v868
      %v870 = vshrl.u32 %v813, 16
      %v872 = vor.u32 %v870, %v868
      %v874 = vshll.u32 %v814, 16
      %v876 = vrot.slane %v874, 1
      %v877 = vsel %vm348, %v872, %v876
      %v878 = vshrl.u32 %v814, 16
      %v880 = vor.u32 %v878, %v876
      %v882 = vshll.u32 %v817, 16
      %v884 = vrot.slane %v882, 1
      %v885 = vsel %vm348, %v880, %v884
      %886 = vrot.lane.b32.xlu0 %v829, 4
      %v887 = vpop.permute.xlu0 %886
      %888 = vrot.lane.b32.xlu0 %v837, 4
      %v889 = vpop.permute.xlu0 %888
      %890 = vrot.lane.b32.xlu0 %v845, 4
      %v891 = vpop.permute.xlu0 %890
      %892 = vrot.lane.b32.xlu0 %v853, 4
      %v893 = vpop.permute.xlu0 %892
      %894 = vrot.lane.b32.xlu0 %v861, 4
      %v895 = vpop.permute.xlu0 %894
      %896 = vrot.lane.b32.xlu0 %v869, 4
      %v897 = vpop.permute.xlu0 %896
      %898 = vrot.lane.b32.xlu0 %v877, 4
      %v899 = vpop.permute.xlu0 %898
      %900 = vrot.lane.b32.xlu0 %v885, 4
      %v901 = vpop.permute.xlu0 %900
      %v902 = vrot.slane %v807, 1
      %v903 = vrot.slane %v808, 1
      %v904 = vsel %vm433, %v902, %v903
      %v905 = vrot.slane %v809, 1
      %v906 = vsel %vm433, %v903, %v905
      %v907 = vrot.slane %v810, 1
      %v908 = vsel %vm433, %v905, %v907
      %v909 = vrot.slane %v811, 1
      %v910 = vsel %vm433, %v907, %v909
      %v911 = vrot.slane %v812, 1
      %v912 = vsel %vm433, %v909, %v911
      %v913 = vrot.slane %v813, 1
      %v914 = vsel %vm433, %v911, %v913
      %v915 = vrot.slane %v814, 1
      %v916 = vsel %vm433, %v913, %v915
      %v917 = vrot.slane %v817, 1
      %v918 = vsel %vm433, %v915, %v917
      %919 = vrot.lane.b32.xlu0 %v904, 8
      %v920 = vpop.permute.xlu0 %919
      %921 = vrot.lane.b32.xlu0 %v906, 8
      %v922 = vpop.permute.xlu0 %921
      %923 = vrot.lane.b32.xlu0 %v908, 8
      %v924 = vpop.permute.xlu0 %923
      %925 = vrot.lane.b32.xlu0 %v910, 8
      %v926 = vpop.permute.xlu0 %925
      %927 = vrot.lane.b32.xlu0 %v912, 8
      %v928 = vpop.permute.xlu0 %927
      %929 = vrot.lane.b32.xlu0 %v914, 8
      %v930 = vpop.permute.xlu0 %929
      %931 = vrot.lane.b32.xlu0 %v916, 8
      %v932 = vpop.permute.xlu0 %931
      %933 = vrot.lane.b32.xlu0 %v918, 8
      %v934 = vpop.permute.xlu0 %933
      %v936 = vunpack.c.l.b16 %v771
      %v937 = vpack.c.b16 %v936, %v816
      %938 = vrot.lane.b32.xlu0 %v808, 12
      %v939 = vpop.permute.xlu0 %938
      %940 = vrot.lane.b32.xlu0 %v809, 12
      %v941 = vpop.permute.xlu0 %940
      %942 = vrot.lane.b32.xlu0 %v810, 12
      %v943 = vpop.permute.xlu0 %942
      %944 = vrot.lane.b32.xlu0 %v811, 12
      %v945 = vpop.permute.xlu0 %944
      %946 = vrot.lane.b32.xlu0 %v812, 12
      %v947 = vpop.permute.xlu0 %946
      %948 = vrot.lane.b32.xlu0 %v813, 12
      %v949 = vpop.permute.xlu0 %948
      %950 = vrot.lane.b32.xlu0 %v814, 12
      %v951 = vpop.permute.xlu0 %950
      %952 = vrot.lane.b32.xlu0 %v937, 12
      %v953 = vpop.permute.xlu0 %952
      %v955 = vunpack.c.l.b16 %v772
      %v956 = vpack.c.b16 %v955, %v955
      %v958 = vshll.u32 %v937, 16
      %v960 = vrot.slane %v958, 1
      %v961 = vsel %vm348, %v880, %v960
      %v962 = vshrl.u32 %v937, 16
      %v964 = vor.u32 %v962, %v960
      %v966 = vshll.u32 %v956, 16
      %v968 = vrot.slane %v966, 1
      %v969 = vsel %vm348, %v964, %v968
      %970 = vrot.lane.b32.xlu0 %v837, 16
      %v971 = vpop.permute.xlu0 %970
      %972 = vrot.lane.b32.xlu0 %v845, 16
      %v973 = vpop.permute.xlu0 %972
      %974 = vrot.lane.b32.xlu0 %v853, 16
      %v975 = vpop.permute.xlu0 %974
      %976 = vrot.lane.b32.xlu0 %v861, 16
      %v977 = vpop.permute.xlu0 %976
      %978 = vrot.lane.b32.xlu0 %v869, 16
      %v979 = vpop.permute.xlu0 %978
      %980 = vrot.lane.b32.xlu0 %v877, 16
      %v981 = vpop.permute.xlu0 %980
      %982 = vrot.lane.b32.xlu0 %v961, 16
      %v983 = vpop.permute.xlu0 %982
      %984 = vrot.lane.b32.xlu0 %v969, 16
      %v985 = vpop.permute.xlu0 %984
      %v986 = vrot.slane %v937, 1
      %v987 = vsel %vm433, %v915, %v986
      %v988 = vrot.slane %v956, 1
      %v989 = vsel %vm433, %v986, %v988
      %990 = vrot.lane.b32.xlu0 %v906, 20
      %v991 = vpop.permute.xlu0 %990
      %992 = vrot.lane.b32.xlu0 %v908, 20
      %v993 = vpop.permute.xlu0 %992
      %994 = vrot.lane.b32.xlu0 %v910, 20
      %v995 = vpop.permute.xlu0 %994
      %996 = vrot.lane.b32.xlu0 %v912, 20
      %v997 = vpop.permute.xlu0 %996
      %998 = vrot.lane.b32.xlu0 %v914, 20
      %v999 = vpop.permute.xlu0 %998
      %1000 = vrot.lane.b32.xlu0 %v916, 20
      %v1001 = vpop.permute.xlu0 %1000
      %1002 = vrot.lane.b32.xlu0 %v987, 20
      %v1003 = vpop.permute.xlu0 %1002
      %1004 = vrot.lane.b32.xlu0 %v989, 20
      %v1005 = vpop.permute.xlu0 %1004
      %v1007 = vunpack.c.l.b16 %v773
      %v1008 = vpack.c.b16 %v1007, %v955
      %1009 = vrot.lane.b32.xlu0 %v809, 24
      %v1010 = vpop.permute.xlu0 %1009
      %1011 = vrot.lane.b32.xlu0 %v810, 24
      %v1012 = vpop.permute.xlu0 %1011
      %1013 = vrot.lane.b32.xlu0 %v811, 24
      %v1014 = vpop.permute.xlu0 %1013
      %1015 = vrot.lane.b32.xlu0 %v812, 24
      %v1016 = vpop.permute.xlu0 %1015
      %1017 = vrot.lane.b32.xlu0 %v813, 24
      %v1018 = vpop.permute.xlu0 %1017
      %1019 = vrot.lane.b32.xlu0 %v814, 24
      %v1020 = vpop.permute.xlu0 %1019
      %1021 = vrot.lane.b32.xlu0 %v937, 24
      %v1022 = vpop.permute.xlu0 %1021
      %1023 = vrot.lane.b32.xlu0 %v1008, 24
      %v1024 = vpop.permute.xlu0 %1023
      %v1026 = vunpack.c.l.b16 %v774
      %v1027 = vpack.c.b16 %v1026, %v1026
      %v1029 = vshll.u32 %v1008, 16
      %v1031 = vrot.slane %v1029, 1
      %v1032 = vsel %vm348, %v964, %v1031
      %v1033 = vshrl.u32 %v1008, 16
      %v1035 = vor.u32 %v1033, %v1031
      %v1037 = vshll.u32 %v1027, 16
      %v1039 = vrot.slane %v1037, 1
      %v1040 = vsel %vm348, %v1035, %v1039
      %1041 = vrot.lane.b32.xlu0 %v845, 28
      %v1042 = vpop.permute.xlu0 %1041
      %1043 = vrot.lane.b32.xlu0 %v853, 28
      %v1044 = vpop.permute.xlu0 %1043
      %1045 = vrot.lane.b32.xlu0 %v861, 28
      %v1046 = vpop.permute.xlu0 %1045
      %1047 = vrot.lane.b32.xlu0 %v869, 28
      %v1048 = vpop.permute.xlu0 %1047
      %1049 = vrot.lane.b32.xlu0 %v877, 28
      %v1050 = vpop.permute.xlu0 %1049
      %1051 = vrot.lane.b32.xlu0 %v961, 28
      %v1052 = vpop.permute.xlu0 %1051
      %1053 = vrot.lane.b32.xlu0 %v1032, 28
      %v1054 = vpop.permute.xlu0 %1053
      %1055 = vrot.lane.b32.xlu0 %v1040, 28
      %v1056 = vpop.permute.xlu0 %1055
      %v1057 = vrot.slane %v1008, 1
      %v1058 = vsel %vm433, %v986, %v1057
      %v1059 = vrot.slane %v1027, 1
      %v1060 = vsel %vm433, %v1057, %v1059
      %1061 = vrot.lane.b32.xlu0 %v908, 32
      %v1062 = vpop.permute.xlu0 %1061
      %1063 = vrot.lane.b32.xlu0 %v910, 32
      %v1064 = vpop.permute.xlu0 %1063
      %1065 = vrot.lane.b32.xlu0 %v912, 32
      %v1066 = vpop.permute.xlu0 %1065
      %1067 = vrot.lane.b32.xlu0 %v914, 32
      %v1068 = vpop.permute.xlu0 %1067
      %1069 = vrot.lane.b32.xlu0 %v916, 32
      %v1070 = vpop.permute.xlu0 %1069
      %1071 = vrot.lane.b32.xlu0 %v987, 32
      %v1072 = vpop.permute.xlu0 %1071
      %1073 = vrot.lane.b32.xlu0 %v1058, 32
      %v1074 = vpop.permute.xlu0 %1073
      %1075 = vrot.lane.b32.xlu0 %v1060, 32
      %v1076 = vpop.permute.xlu0 %1075
      %v1078 = vsel %vm609, %v807, %v887
      %v1080 = vsel %vm609, %v808, %v889
      %v1082 = vsel %vm609, %v809, %v891
      %v1084 = vsel %vm609, %v810, %v893
      %v1086 = vsel %vm609, %v811, %v895
      %v1088 = vsel %vm609, %v812, %v897
      %v1090 = vsel %vm609, %v813, %v899
      %v1092 = vsel %vm609, %v814, %v901
      %v1094 = vsel %vm626, %v1078, %v920
      %v1096 = vsel %vm626, %v1080, %v922
      %v1098 = vsel %vm626, %v1082, %v924
      %v1100 = vsel %vm626, %v1084, %v926
      %v1102 = vsel %vm626, %v1086, %v928
      %v1104 = vsel %vm626, %v1088, %v930
      %v1106 = vsel %vm626, %v1090, %v932
      %v1108 = vsel %vm626, %v1092, %v934
      %v1110 = vsel %vm643, %v1094, %v939
      %v1112 = vsel %vm643, %v1096, %v941
      %v1114 = vsel %vm643, %v1098, %v943
      %v1116 = vsel %vm643, %v1100, %v945
      %v1118 = vsel %vm643, %v1102, %v947
      %v1120 = vsel %vm643, %v1104, %v949
      %v1122 = vsel %vm643, %v1106, %v951
      %v1124 = vsel %vm643, %v1108, %v953
      %v1126 = vsel %vm660, %v1110, %v971
      %v1128 = vsel %vm660, %v1112, %v973
      %v1130 = vsel %vm660, %v1114, %v975
      %v1132 = vsel %vm660, %v1116, %v977
      %v1134 = vsel %vm660, %v1118, %v979
      %v1136 = vsel %vm660, %v1120, %v981
      %v1138 = vsel %vm660, %v1122, %v983
      %v1140 = vsel %vm660, %v1124, %v985
      %v1142 = vsel %vm677, %v1126, %v991
      %v1144 = vsel %vm677, %v1128, %v993
      %v1146 = vsel %vm677, %v1130, %v995
      %v1148 = vsel %vm677, %v1132, %v997
      %v1150 = vsel %vm677, %v1134, %v999
      %v1152 = vsel %vm677, %v1136, %v1001
      %v1154 = vsel %vm677, %v1138, %v1003
      %v1156 = vsel %vm677, %v1140, %v1005
      %v1158 = vsel %vm694, %v1142, %v1010
      %v1160 = vsel %vm694, %v1144, %v1012
      %v1162 = vsel %vm694, %v1146, %v1014
      %v1164 = vsel %vm694, %v1148, %v1016
      %v1166 = vsel %vm694, %v1150, %v1018
      %v1168 = vsel %vm694, %v1152, %v1020
      %v1170 = vsel %vm694, %v1154, %v1022
      %v1172 = vsel %vm694, %v1156, %v1024
      %v1174 = vsel %vm711, %v1158, %v1042
      %v1176 = vsel %vm711, %v1160, %v1044
      %v1178 = vsel %vm711, %v1162, %v1046
      %v1180 = vsel %vm711, %v1164, %v1048
      %v1182 = vsel %vm711, %v1166, %v1050
      %v1184 = vsel %vm711, %v1168, %v1052
      %v1186 = vsel %vm711, %v1170, %v1054
      %v1188 = vsel %vm711, %v1172, %v1056
      %v1190 = vsel %vm728, %v1174, %v1062
      %v1192 = vsel %vm728, %v1176, %v1064
      %v1194 = vsel %vm728, %v1178, %v1066
      %v1196 = vsel %vm728, %v1180, %v1068
      %v1198 = vsel %vm728, %v1182, %v1070
      %v1200 = vsel %vm728, %v1184, %v1072
      %v1202 = vsel %vm728, %v1186, %v1074
      %v1204 = vsel %vm728, %v1188, %v1076
      %s1205 = scalar_lea.vmem %s261, 20
      %v1206 = vld [vmem:[%s1205] sm:$0xf]
      %v1207 = vld [vmem:[%s1205 + $0x4] sm:$0xf]
      %v1208 = vld [vmem:[%s1205 + $0x8] sm:$0xf]
      %v1209 = vld [vmem:[%s1205 + $0xc] sm:$0xf]
      %v1210 = vld [vmem:[%s1205 + $0x10] sm:$0x3]
      %v1216 = vunpack.c.l.b16 %v1206
      %v1217 = vunpack.c.l.b16 %v1207
      %v1218 = vunpack.c.l.b16 %v1208
      %v1219 = vunpack.c.l.b16 %v1209
      %v1220 = vunpack.c.l.b16 %v1210
      %v1221 = vpack.c.b16 %v1217, %v1216
      %v1222 = vpack.c.b16 %v1219, %v1218
      %v1223 = vpack.c.b16 %v1220, %v1220
      %vm1226 = vcmask 293888
      %v1227 = vsel %vm1226, %v1190, 0
      %v1229 = vsel %vm1226, %v1192, 0
      %v1231 = vsel %vm1226, %v1194, 0
      %v1233 = vsel %vm1226, %v1196, 0
      %v1235 = vsel %vm1226, %v1198, 0
      %v1237 = vsel %vm1226, %v1200, 0
      %v1239 = vsel %vm1226, %v1202, 0
      %v1241 = vsel %vm1226, %v1204, 0
      %vm1243 = vcmask 1041408
      %v1245 = vsel %vm1243, %v1223, 0
      %1247 = vmatpush.bf16.msra.mxu0 0
      %1248 = vmatpush.bf16.msra.mxu0 0
      %1249 = vmatpush.bf16.msra.mxu0 0
      %1250 = vmatpush.bf16.msra.mxu0 0
      %1251 = vmatpush.bf16.msra.mxu0 0
      %1252 = vmatpush.bf16.msra.mxu0 %v1245
      %1253 = vmatpush.bf16.msra.mxu0 %v1222
      %1254 = vmatpush.bf16.msra.mxu0 %v1221
      %1255 = vmatmul.bf16.gmra.mxu0 %v1227
      %v1256 = vpop.f32.mrf.mxu0
      %v1257 = vadd.f32 0.0, %v1256
      %v1258 = vpop.f32.mrf.mxu0
      %v1259 = vadd.f32 0.0, %v1258
      %1260 = vmatmul.bf16.gmra.mxu0 %v1229
      %v1261 = vpop.f32.mrf.mxu0
      %v1262 = vadd.f32 0.0, %v1261
      %v1263 = vpop.f32.mrf.mxu0
      %v1264 = vadd.f32 0.0, %v1263
      %1265 = vmatmul.bf16.gmra.mxu0 %v1231
      %v1266 = vpop.f32.mrf.mxu0
      %v1267 = vadd.f32 0.0, %v1266
      %v1268 = vpop.f32.mrf.mxu0
      %v1269 = vadd.f32 0.0, %v1268
      %1270 = vmatmul.bf16.gmra.mxu0 %v1233
      %v1271 = vpop.f32.mrf.mxu0
      %v1272 = vadd.f32 0.0, %v1271
      %v1273 = vpop.f32.mrf.mxu0
      %v1274 = vadd.f32 0.0, %v1273
      %1275 = vmatmul.bf16.gmra.mxu0 %v1235
      %v1276 = vpop.f32.mrf.mxu0
      %v1277 = vadd.f32 0.0, %v1276
      %v1278 = vpop.f32.mrf.mxu0
      %v1279 = vadd.f32 0.0, %v1278
      %1280 = vmatmul.bf16.gmra.mxu0 %v1237
      %v1281 = vpop.f32.mrf.mxu0
      %v1282 = vadd.f32 0.0, %v1281
      %v1283 = vpop.f32.mrf.mxu0
      %v1284 = vadd.f32 0.0, %v1283
      %1285 = vmatmul.bf16.gmra.mxu0 %v1239
      %v1286 = vpop.f32.mrf.mxu0
      %v1287 = vadd.f32 0.0, %v1286
      %v1288 = vpop.f32.mrf.mxu0
      %v1289 = vadd.f32 0.0, %v1288
      %1290 = vmatmul.bf16.gmra.mxu0 %v1241
      %v1291 = vpop.f32.mrf.mxu0
      %v1292 = vadd.f32 0.0, %v1291
      %v1293 = vpop.f32.mrf.mxu0
      %v1294 = vadd.f32 0.0, %v1293
      %1295 = vdwg.mxu0
      %v1301 = vunpack.c.l.b16 %v745
      %v1302 = vunpack.c.l.b16 %v746
      %v1303 = vunpack.c.l.b16 %v747
      %v1304 = vunpack.c.l.b16 %v748
      %v1305 = vunpack.c.l.b16 %v749
      %v1306 = vpack.c.b16 %v1302, %v1301
      %v1307 = vpack.c.b16 %v1304, %v1303
      %v1308 = vpack.c.b16 %v1305, %v1305
      %v1311 = vsel %vm1226, %v730, 0
      %v1313 = vsel %vm1226, %v732, 0
      %v1315 = vsel %vm1226, %v734, 0
      %v1317 = vsel %vm1226, %v736, 0
      %v1319 = vsel %vm1226, %v738, 0
      %v1321 = vsel %vm1226, %v740, 0
      %v1323 = vsel %vm1226, %v742, 0
      %v1325 = vsel %vm1226, %v744, 0
      %v1328 = vsel %vm1243, %v1308, 0
      %1330 = vmatpush.bf16.msra.mxu0 0
      %1331 = vmatpush.bf16.msra.mxu0 0
      %1332 = vmatpush.bf16.msra.mxu0 0
      %1333 = vmatpush.bf16.msra.mxu0 0
      %1334 = vmatpush.bf16.msra.mxu0 0
      %1335 = vmatpush.bf16.msra.mxu0 %v1328
      %1336 = vmatpush.bf16.msra.mxu0 %v1307
      %1337 = vmatpush.bf16.msra.mxu0 %v1306
      %1338 = vmatmul.bf16.gmra.mxu0 %v1311
      %v1339 = vpop.f32.mrf.mxu0
      %v1340 = vadd.f32 %v1257, %v1339
      %v1341 = vpop.f32.mrf.mxu0
      %v1342 = vadd.f32 %v1259, %v1341
      %1343 = vmatmul.bf16.gmra.mxu0 %v1313
      %v1344 = vpop.f32.mrf.mxu0
      %v1345 = vadd.f32 %v1262, %v1344
      %v1346 = vpop.f32.mrf.mxu0
      %v1347 = vadd.f32 %v1264, %v1346
      %1348 = vmatmul.bf16.gmra.mxu0 %v1315
      %v1349 = vpop.f32.mrf.mxu0
      %v1350 = vadd.f32 %v1267, %v1349
      %v1351 = vpop.f32.mrf.mxu0
      %v1352 = vadd.f32 %v1269, %v1351
      %1353 = vmatmul.bf16.gmra.mxu0 %v1317
      %v1354 = vpop.f32.mrf.mxu0
      %v1355 = vadd.f32 %v1272, %v1354
      %v1356 = vpop.f32.mrf.mxu0
      %v1357 = vadd.f32 %v1274, %v1356
      %1358 = vmatmul.bf16.gmra.mxu0 %v1319
      %v1359 = vpop.f32.mrf.mxu0
      %v1360 = vadd.f32 %v1277, %v1359
      %v1361 = vpop.f32.mrf.mxu0
      %v1362 = vadd.f32 %v1279, %v1361
      %1363 = vmatmul.bf16.gmra.mxu0 %v1321
      %v1364 = vpop.f32.mrf.mxu0
      %v1365 = vadd.f32 %v1282, %v1364
      %v1366 = vpop.f32.mrf.mxu0
      %v1367 = vadd.f32 %v1284, %v1366
      %1368 = vmatmul.bf16.gmra.mxu0 %v1323
      %v1369 = vpop.f32.mrf.mxu0
      %v1370 = vadd.f32 %v1287, %v1369
      %v1371 = vpop.f32.mrf.mxu0
      %v1372 = vadd.f32 %v1289, %v1371
      %1373 = vmatmul.bf16.gmra.mxu0 %v1325
      %v1374 = vpop.f32.mrf.mxu0
      %v1375 = vadd.f32 %v1292, %v1374
      %v1376 = vpop.f32.mrf.mxu0
      %v1377 = vadd.f32 %v1294, %v1376
      %1378 = vdwg.mxu0
      %s1379 = sadd.s32 %s22, 2
      %s1380 = smul.u32 %s1379, 22
      %s1381 = smul.addr %s1380, 4
      %s1382 = scalar_lea.vmem %s257, %s1381
      %v1383 = vld [vmem:[%s1382] sm:$0xf]
      %v1384 = vld [vmem:[%s1382 + $0x4] sm:$0xf]
      %v1385 = vld [vmem:[%s1382 + $0x8] sm:$0xf]
      %v1386 = vld [vmem:[%s1382 + $0xc] sm:$0xf]
      %v1387 = vld [vmem:[%s1382 + $0x10] sm:$0xf]
      %v1388 = vld [vmem:[%s1382 + $0x14] sm:$0xf]
      %v1389 = vld [vmem:[%s1382 + $0x18] sm:$0xf]
      %v1390 = vld [vmem:[%s1382 + $0x1c] sm:$0xf]
      %v1391 = vld [vmem:[%s1382 + $0x20] sm:$0xf]
      %v1392 = vld [vmem:[%s1382 + $0x24] sm:$0xf]
      %v1393 = vld [vmem:[%s1382 + $0x28] sm:$0xf]
      %v1394 = vld [vmem:[%s1382 + $0x2c] sm:$0xf]
      %v1395 = vld [vmem:[%s1382 + $0x30] sm:$0xf]
      %v1396 = vld [vmem:[%s1382 + $0x34] sm:$0xf]
      %v1397 = vld [vmem:[%s1382 + $0x38] sm:$0xf]
      %v1398 = vld [vmem:[%s1382 + $0x3c] sm:$0xf]
      %v1399 = vld [vmem:[%s1382 + $0x40] sm:$0xf]
      %v1400 = vld [vmem:[%s1382 + $0x44] sm:$0xf]
      %v1401 = vld [vmem:[%s1382 + $0x48] sm:$0xf]
      %v1402 = vld [vmem:[%s1382 + $0x4c] sm:$0xf]
      %v1403 = vld [vmem:[%s1382 + $0x50] sm:$0xf]
      %v1420 = vunpack.c.l.b16 %v1383
      %v1421 = vunpack.c.l.b16 %v1384
      %v1422 = vunpack.c.l.b16 %v1385
      %v1423 = vunpack.c.l.b16 %v1386
      %v1424 = vunpack.c.l.b16 %v1387
      %v1425 = vunpack.c.l.b16 %v1388
      %v1426 = vunpack.c.l.b16 %v1389
      %v1427 = vunpack.c.l.b16 %v1390
      %v1428 = vunpack.c.l.b16 %v1391
      %v1429 = vunpack.c.l.b16 %v1392
      %v1430 = vunpack.c.l.b16 %v1393
      %v1431 = vunpack.c.l.b16 %v1394
      %v1432 = vunpack.c.l.b16 %v1395
      %v1433 = vunpack.c.l.b16 %v1396
      %v1434 = vunpack.c.l.b16 %v1397
      %v1435 = vunpack.c.l.b16 %v1398
      %v1436 = vpack.c.b16 %v1421, %v1420
      %v1437 = vpack.c.b16 %v1423, %v1422
      %v1438 = vpack.c.b16 %v1425, %v1424
      %v1439 = vpack.c.b16 %v1427, %v1426
      %v1440 = vpack.c.b16 %v1429, %v1428
      %v1441 = vpack.c.b16 %v1431, %v1430
      %v1442 = vpack.c.b16 %v1433, %v1432
      %v1443 = vpack.c.b16 %v1435, %v1434
      %v1445 = vunpack.c.l.b16 %v1399
      %v1446 = vpack.c.b16 %v1445, %v1445
      %v1448 = vshrl.u32 %v1436, 16
      %v1450 = vshll.u32 %v1436, 16
      %v1452 = vrot.slane %v1450, 1
      %v1453 = vor.u32 %v1448, %v1452
      %v1455 = vshll.u32 %v1437, 16
      %v1457 = vrot.slane %v1455, 1
      %v1458 = vsel %vm348, %v1453, %v1457
      %v1459 = vshrl.u32 %v1437, 16
      %v1461 = vor.u32 %v1459, %v1457
      %v1463 = vshll.u32 %v1438, 16
      %v1465 = vrot.slane %v1463, 1
      %v1466 = vsel %vm348, %v1461, %v1465
      %v1467 = vshrl.u32 %v1438, 16
      %v1469 = vor.u32 %v1467, %v1465
      %v1471 = vshll.u32 %v1439, 16
      %v1473 = vrot.slane %v1471, 1
      %v1474 = vsel %vm348, %v1469, %v1473
      %v1475 = vshrl.u32 %v1439, 16
      %v1477 = vor.u32 %v1475, %v1473
      %v1479 = vshll.u32 %v1440, 16
      %v1481 = vrot.slane %v1479, 1
      %v1482 = vsel %vm348, %v1477, %v1481
      %v1483 = vshrl.u32 %v1440, 16
      %v1485 = vor.u32 %v1483, %v1481
      %v1487 = vshll.u32 %v1441, 16
      %v1489 = vrot.slane %v1487, 1
      %v1490 = vsel %vm348, %v1485, %v1489
      %v1491 = vshrl.u32 %v1441, 16
      %v1493 = vor.u32 %v1491, %v1489
      %v1495 = vshll.u32 %v1442, 16
      %v1497 = vrot.slane %v1495, 1
      %v1498 = vsel %vm348, %v1493, %v1497
      %v1499 = vshrl.u32 %v1442, 16
      %v1501 = vor.u32 %v1499, %v1497
      %v1503 = vshll.u32 %v1443, 16
      %v1505 = vrot.slane %v1503, 1
      %v1506 = vsel %vm348, %v1501, %v1505
      %v1507 = vshrl.u32 %v1443, 16
      %v1509 = vor.u32 %v1507, %v1505
      %v1511 = vshll.u32 %v1446, 16
      %v1513 = vrot.slane %v1511, 1
      %v1514 = vsel %vm348, %v1509, %v1513
      %1515 = vrot.lane.b32.xlu0 %v1458, 4
      %v1516 = vpop.permute.xlu0 %1515
      %1517 = vrot.lane.b32.xlu0 %v1466, 4
      %v1518 = vpop.permute.xlu0 %1517
      %1519 = vrot.lane.b32.xlu0 %v1474, 4
      %v1520 = vpop.permute.xlu0 %1519
      %1521 = vrot.lane.b32.xlu0 %v1482, 4
      %v1522 = vpop.permute.xlu0 %1521
      %1523 = vrot.lane.b32.xlu0 %v1490, 4
      %v1524 = vpop.permute.xlu0 %1523
      %1525 = vrot.lane.b32.xlu0 %v1498, 4
      %v1526 = vpop.permute.xlu0 %1525
      %1527 = vrot.lane.b32.xlu0 %v1506, 4
      %v1528 = vpop.permute.xlu0 %1527
      %1529 = vrot.lane.b32.xlu0 %v1514, 4
      %v1530 = vpop.permute.xlu0 %1529
      %v1531 = vrot.slane %v1436, 1
      %v1532 = vrot.slane %v1437, 1
      %v1533 = vsel %vm433, %v1531, %v1532
      %v1534 = vrot.slane %v1438, 1
      %v1535 = vsel %vm433, %v1532, %v1534
      %v1536 = vrot.slane %v1439, 1
      %v1537 = vsel %vm433, %v1534, %v1536
      %v1538 = vrot.slane %v1440, 1
      %v1539 = vsel %vm433, %v1536, %v1538
      %v1540 = vrot.slane %v1441, 1
      %v1541 = vsel %vm433, %v1538, %v1540
      %v1542 = vrot.slane %v1442, 1
      %v1543 = vsel %vm433, %v1540, %v1542
      %v1544 = vrot.slane %v1443, 1
      %v1545 = vsel %vm433, %v1542, %v1544
      %v1546 = vrot.slane %v1446, 1
      %v1547 = vsel %vm433, %v1544, %v1546
      %1548 = vrot.lane.b32.xlu0 %v1533, 8
      %v1549 = vpop.permute.xlu0 %1548
      %1550 = vrot.lane.b32.xlu0 %v1535, 8
      %v1551 = vpop.permute.xlu0 %1550
      %1552 = vrot.lane.b32.xlu0 %v1537, 8
      %v1553 = vpop.permute.xlu0 %1552
      %1554 = vrot.lane.b32.xlu0 %v1539, 8
      %v1555 = vpop.permute.xlu0 %1554
      %1556 = vrot.lane.b32.xlu0 %v1541, 8
      %v1557 = vpop.permute.xlu0 %1556
      %1558 = vrot.lane.b32.xlu0 %v1543, 8
      %v1559 = vpop.permute.xlu0 %1558
      %1560 = vrot.lane.b32.xlu0 %v1545, 8
      %v1561 = vpop.permute.xlu0 %1560
      %1562 = vrot.lane.b32.xlu0 %v1547, 8
      %v1563 = vpop.permute.xlu0 %1562
      %v1565 = vunpack.c.l.b16 %v1400
      %v1566 = vpack.c.b16 %v1565, %v1445
      %1567 = vrot.lane.b32.xlu0 %v1437, 12
      %v1568 = vpop.permute.xlu0 %1567
      %1569 = vrot.lane.b32.xlu0 %v1438, 12
      %v1570 = vpop.permute.xlu0 %1569
      %1571 = vrot.lane.b32.xlu0 %v1439, 12
      %v1572 = vpop.permute.xlu0 %1571
      %1573 = vrot.lane.b32.xlu0 %v1440, 12
      %v1574 = vpop.permute.xlu0 %1573
      %1575 = vrot.lane.b32.xlu0 %v1441, 12
      %v1576 = vpop.permute.xlu0 %1575
      %1577 = vrot.lane.b32.xlu0 %v1442, 12
      %v1578 = vpop.permute.xlu0 %1577
      %1579 = vrot.lane.b32.xlu0 %v1443, 12
      %v1580 = vpop.permute.xlu0 %1579
      %1581 = vrot.lane.b32.xlu0 %v1566, 12
      %v1582 = vpop.permute.xlu0 %1581
      %v1584 = vunpack.c.l.b16 %v1401
      %v1585 = vpack.c.b16 %v1584, %v1584
      %v1587 = vshll.u32 %v1566, 16
      %v1589 = vrot.slane %v1587, 1
      %v1590 = vsel %vm348, %v1509, %v1589
      %v1591 = vshrl.u32 %v1566, 16
      %v1593 = vor.u32 %v1591, %v1589
      %v1595 = vshll.u32 %v1585, 16
      %v1597 = vrot.slane %v1595, 1
      %v1598 = vsel %vm348, %v1593, %v1597
      %1599 = vrot.lane.b32.xlu0 %v1466, 16
      %v1600 = vpop.permute.xlu0 %1599
      %1601 = vrot.lane.b32.xlu0 %v1474, 16
      %v1602 = vpop.permute.xlu0 %1601
      %1603 = vrot.lane.b32.xlu0 %v1482, 16
      %v1604 = vpop.permute.xlu0 %1603
      %1605 = vrot.lane.b32.xlu0 %v1490, 16
      %v1606 = vpop.permute.xlu0 %1605
      %1607 = vrot.lane.b32.xlu0 %v1498, 16
      %v1608 = vpop.permute.xlu0 %1607
      %1609 = vrot.lane.b32.xlu0 %v1506, 16
      %v1610 = vpop.permute.xlu0 %1609
      %1611 = vrot.lane.b32.xlu0 %v1590, 16
      %v1612 = vpop.permute.xlu0 %1611
      %1613 = vrot.lane.b32.xlu0 %v1598, 16
      %v1614 = vpop.permute.xlu0 %1613
      %v1615 = vrot.slane %v1566, 1
      %v1616 = vsel %vm433, %v1544, %v1615
      %v1617 = vrot.slane %v1585, 1
      %v1618 = vsel %vm433, %v1615, %v1617
      %1619 = vrot.lane.b32.xlu0 %v1535, 20
      %v1620 = vpop.permute.xlu0 %1619
      %1621 = vrot.lane.b32.xlu0 %v1537, 20
      %v1622 = vpop.permute.xlu0 %1621
      %1623 = vrot.lane.b32.xlu0 %v1539, 20
      %v1624 = vpop.permute.xlu0 %1623
      %1625 = vrot.lane.b32.xlu0 %v1541, 20
      %v1626 = vpop.permute.xlu0 %1625
      %1627 = vrot.lane.b32.xlu0 %v1543, 20
      %v1628 = vpop.permute.xlu0 %1627
      %1629 = vrot.lane.b32.xlu0 %v1545, 20
      %v1630 = vpop.permute.xlu0 %1629
      %1631 = vrot.lane.b32.xlu0 %v1616, 20
      %v1632 = vpop.permute.xlu0 %1631
      %1633 = vrot.lane.b32.xlu0 %v1618, 20
      %v1634 = vpop.permute.xlu0 %1633
      %v1636 = vunpack.c.l.b16 %v1402
      %v1637 = vpack.c.b16 %v1636, %v1584
      %1638 = vrot.lane.b32.xlu0 %v1438, 24
      %v1639 = vpop.permute.xlu0 %1638
      %1640 = vrot.lane.b32.xlu0 %v1439, 24
      %v1641 = vpop.permute.xlu0 %1640
      %1642 = vrot.lane.b32.xlu0 %v1440, 24
      %v1643 = vpop.permute.xlu0 %1642
      %1644 = vrot.lane.b32.xlu0 %v1441, 24
      %v1645 = vpop.permute.xlu0 %1644
      %1646 = vrot.lane.b32.xlu0 %v1442, 24
      %v1647 = vpop.permute.xlu0 %1646
      %1648 = vrot.lane.b32.xlu0 %v1443, 24
      %v1649 = vpop.permute.xlu0 %1648
      %1650 = vrot.lane.b32.xlu0 %v1566, 24
      %v1651 = vpop.permute.xlu0 %1650
      %1652 = vrot.lane.b32.xlu0 %v1637, 24
      %v1653 = vpop.permute.xlu0 %1652
      %v1655 = vunpack.c.l.b16 %v1403
      %v1656 = vpack.c.b16 %v1655, %v1655
      %v1658 = vshll.u32 %v1637, 16
      %v1660 = vrot.slane %v1658, 1
      %v1661 = vsel %vm348, %v1593, %v1660
      %v1662 = vshrl.u32 %v1637, 16
      %v1664 = vor.u32 %v1662, %v1660
      %v1666 = vshll.u32 %v1656, 16
      %v1668 = vrot.slane %v1666, 1
      %v1669 = vsel %vm348, %v1664, %v1668
      %1670 = vrot.lane.b32.xlu0 %v1474, 28
      %v1671 = vpop.permute.xlu0 %1670
      %1672 = vrot.lane.b32.xlu0 %v1482, 28
      %v1673 = vpop.permute.xlu0 %1672
      %1674 = vrot.lane.b32.xlu0 %v1490, 28
      %v1675 = vpop.permute.xlu0 %1674
      %1676 = vrot.lane.b32.xlu0 %v1498, 28
      %v1677 = vpop.permute.xlu0 %1676
      %1678 = vrot.lane.b32.xlu0 %v1506, 28
      %v1679 = vpop.permute.xlu0 %1678
      %1680 = vrot.lane.b32.xlu0 %v1590, 28
      %v1681 = vpop.permute.xlu0 %1680
      %1682 = vrot.lane.b32.xlu0 %v1661, 28
      %v1683 = vpop.permute.xlu0 %1682
      %1684 = vrot.lane.b32.xlu0 %v1669, 28
      %v1685 = vpop.permute.xlu0 %1684
      %v1686 = vrot.slane %v1637, 1
      %v1687 = vsel %vm433, %v1615, %v1686
      %v1688 = vrot.slane %v1656, 1
      %v1689 = vsel %vm433, %v1686, %v1688
      %1690 = vrot.lane.b32.xlu0 %v1537, 32
      %v1691 = vpop.permute.xlu0 %1690
      %1692 = vrot.lane.b32.xlu0 %v1539, 32
      %v1693 = vpop.permute.xlu0 %1692
      %1694 = vrot.lane.b32.xlu0 %v1541, 32
      %v1695 = vpop.permute.xlu0 %1694
      %1696 = vrot.lane.b32.xlu0 %v1543, 32
      %v1697 = vpop.permute.xlu0 %1696
      %1698 = vrot.lane.b32.xlu0 %v1545, 32
      %v1699 = vpop.permute.xlu0 %1698
      %1700 = vrot.lane.b32.xlu0 %v1616, 32
      %v1701 = vpop.permute.xlu0 %1700
      %1702 = vrot.lane.b32.xlu0 %v1687, 32
      %v1703 = vpop.permute.xlu0 %1702
      %1704 = vrot.lane.b32.xlu0 %v1689, 32
      %v1705 = vpop.permute.xlu0 %1704
      %v1707 = vsel %vm609, %v1436, %v1516
      %v1709 = vsel %vm609, %v1437, %v1518
      %v1711 = vsel %vm609, %v1438, %v1520
      %v1713 = vsel %vm609, %v1439, %v1522
      %v1715 = vsel %vm609, %v1440, %v1524
      %v1717 = vsel %vm609, %v1441, %v1526
      %v1719 = vsel %vm609, %v1442, %v1528
      %v1721 = vsel %vm609, %v1443, %v1530
      %v1723 = vsel %vm626, %v1707, %v1549
      %v1725 = vsel %vm626, %v1709, %v1551
      %v1727 = vsel %vm626, %v1711, %v1553
      %v1729 = vsel %vm626, %v1713, %v1555
      %v1731 = vsel %vm626, %v1715, %v1557
      %v1733 = vsel %vm626, %v1717, %v1559
      %v1735 = vsel %vm626, %v1719, %v1561
      %v1737 = vsel %vm626, %v1721, %v1563
      %v1739 = vsel %vm643, %v1723, %v1568
      %v1741 = vsel %vm643, %v1725, %v1570
      %v1743 = vsel %vm643, %v1727, %v1572
      %v1745 = vsel %vm643, %v1729, %v1574
      %v1747 = vsel %vm643, %v1731, %v1576
      %v1749 = vsel %vm643, %v1733, %v1578
      %v1751 = vsel %vm643, %v1735, %v1580
      %v1753 = vsel %vm643, %v1737, %v1582
      %v1755 = vsel %vm660, %v1739, %v1600
      %v1757 = vsel %vm660, %v1741, %v1602
      %v1759 = vsel %vm660, %v1743, %v1604
      %v1761 = vsel %vm660, %v1745, %v1606
      %v1763 = vsel %vm660, %v1747, %v1608
      %v1765 = vsel %vm660, %v1749, %v1610
      %v1767 = vsel %vm660, %v1751, %v1612
      %v1769 = vsel %vm660, %v1753, %v1614
      %v1771 = vsel %vm677, %v1755, %v1620
      %v1773 = vsel %vm677, %v1757, %v1622
      %v1775 = vsel %vm677, %v1759, %v1624
      %v1777 = vsel %vm677, %v1761, %v1626
      %v1779 = vsel %vm677, %v1763, %v1628
      %v1781 = vsel %vm677, %v1765, %v1630
      %v1783 = vsel %vm677, %v1767, %v1632
      %v1785 = vsel %vm677, %v1769, %v1634
      %v1787 = vsel %vm694, %v1771, %v1639
      %v1789 = vsel %vm694, %v1773, %v1641
      %v1791 = vsel %vm694, %v1775, %v1643
      %v1793 = vsel %vm694, %v1777, %v1645
      %v1795 = vsel %vm694, %v1779, %v1647
      %v1797 = vsel %vm694, %v1781, %v1649
      %v1799 = vsel %vm694, %v1783, %v1651
      %v1801 = vsel %vm694, %v1785, %v1653
      %v1803 = vsel %vm711, %v1787, %v1671
      %v1805 = vsel %vm711, %v1789, %v1673
      %v1807 = vsel %vm711, %v1791, %v1675
      %v1809 = vsel %vm711, %v1793, %v1677
      %v1811 = vsel %vm711, %v1795, %v1679
      %v1813 = vsel %vm711, %v1797, %v1681
      %v1815 = vsel %vm711, %v1799, %v1683
      %v1817 = vsel %vm711, %v1801, %v1685
      %v1819 = vsel %vm728, %v1803, %v1691
      %v1821 = vsel %vm728, %v1805, %v1693
      %v1823 = vsel %vm728, %v1807, %v1695
      %v1825 = vsel %vm728, %v1809, %v1697
      %v1827 = vsel %vm728, %v1811, %v1699
      %v1829 = vsel %vm728, %v1813, %v1701
      %v1831 = vsel %vm728, %v1815, %v1703
      %v1833 = vsel %vm728, %v1817, %v1705
      %s1834 = scalar_lea.vmem %s261, 40
      %v1835 = vld [vmem:[%s1834] sm:$0xf]
      %v1836 = vld [vmem:[%s1834 + $0x4] sm:$0xf]
      %v1837 = vld [vmem:[%s1834 + $0x8] sm:$0xf]
      %v1838 = vld [vmem:[%s1834 + $0xc] sm:$0xf]
      %v1839 = vld [vmem:[%s1834 + $0x10] sm:$0x3]
      %v1845 = vunpack.c.l.b16 %v1835
      %v1846 = vunpack.c.l.b16 %v1836
      %v1847 = vunpack.c.l.b16 %v1837
      %v1848 = vunpack.c.l.b16 %v1838
      %v1849 = vunpack.c.l.b16 %v1839
      %v1850 = vpack.c.b16 %v1846, %v1845
      %v1851 = vpack.c.b16 %v1848, %v1847
      %v1852 = vpack.c.b16 %v1849, %v1849
      %v1855 = vsel %vm1226, %v1819, 0
      %v1857 = vsel %vm1226, %v1821, 0
      %v1859 = vsel %vm1226, %v1823, 0
      %v1861 = vsel %vm1226, %v1825, 0
      %v1863 = vsel %vm1226, %v1827, 0
      %v1865 = vsel %vm1226, %v1829, 0
      %v1867 = vsel %vm1226, %v1831, 0
      %v1869 = vsel %vm1226, %v1833, 0
      %v1872 = vsel %vm1243, %v1852, 0
      %1874 = vmatpush.bf16.msra.mxu0 0
      %1875 = vmatpush.bf16.msra.mxu0 0
      %1876 = vmatpush.bf16.msra.mxu0 0
      %1877 = vmatpush.bf16.msra.mxu0 0
      %1878 = vmatpush.bf16.msra.mxu0 0
      %1879 = vmatpush.bf16.msra.mxu0 %v1872
      %1880 = vmatpush.bf16.msra.mxu0 %v1851
      %1881 = vmatpush.bf16.msra.mxu0 %v1850
      %1882 = vmatmul.bf16.gmra.mxu0 %v1855
      %v1883 = vpop.f32.mrf.mxu0
      %v1884 = vadd.f32 0.0, %v1883
      %v1885 = vpop.f32.mrf.mxu0
      %v1886 = vadd.f32 0.0, %v1885
      %1887 = vmatmul.bf16.gmra.mxu0 %v1857
      %v1888 = vpop.f32.mrf.mxu0
      %v1889 = vadd.f32 0.0, %v1888
      %v1890 = vpop.f32.mrf.mxu0
      %v1891 = vadd.f32 0.0, %v1890
      %1892 = vmatmul.bf16.gmra.mxu0 %v1859
      %v1893 = vpop.f32.mrf.mxu0
      %v1894 = vadd.f32 0.0, %v1893
      %v1895 = vpop.f32.mrf.mxu0
      %v1896 = vadd.f32 0.0, %v1895
      %1897 = vmatmul.bf16.gmra.mxu0 %v1861
      %v1898 = vpop.f32.mrf.mxu0
      %v1899 = vadd.f32 0.0, %v1898
      %v1900 = vpop.f32.mrf.mxu0
      %v1901 = vadd.f32 0.0, %v1900
      %1902 = vmatmul.bf16.gmra.mxu0 %v1863
      %v1903 = vpop.f32.mrf.mxu0
      %v1904 = vadd.f32 0.0, %v1903
      %v1905 = vpop.f32.mrf.mxu0
      %v1906 = vadd.f32 0.0, %v1905
      %1907 = vmatmul.bf16.gmra.mxu0 %v1865
      %v1908 = vpop.f32.mrf.mxu0
      %v1909 = vadd.f32 0.0, %v1908
      %v1910 = vpop.f32.mrf.mxu0
      %v1911 = vadd.f32 0.0, %v1910
      %1912 = vmatmul.bf16.gmra.mxu0 %v1867
      %v1913 = vpop.f32.mrf.mxu0
      %v1914 = vadd.f32 0.0, %v1913
      %v1915 = vpop.f32.mrf.mxu0
      %v1916 = vadd.f32 0.0, %v1915
      %1917 = vmatmul.bf16.gmra.mxu0 %v1869
      %v1918 = vpop.f32.mrf.mxu0
      %v1919 = vadd.f32 0.0, %v1918
      %v1920 = vpop.f32.mrf.mxu0
      %v1921 = vadd.f32 0.0, %v1920
      %1922 = vdwg.mxu0
      %v1923 = vadd.f32 %v1340, %v1884
      %v1924 = vadd.f32 %v1342, %v1886
      %v1925 = vadd.f32 %v1345, %v1889
      %v1926 = vadd.f32 %v1347, %v1891
      %v1927 = vadd.f32 %v1350, %v1894
      %v1928 = vadd.f32 %v1352, %v1896
      %v1929 = vadd.f32 %v1355, %v1899
      %v1930 = vadd.f32 %v1357, %v1901
      %v1931 = vadd.f32 %v1360, %v1904
      %v1932 = vadd.f32 %v1362, %v1906
      %v1933 = vadd.f32 %v1365, %v1909
      %v1934 = vadd.f32 %v1367, %v1911
      %v1935 = vadd.f32 %v1370, %v1914
      %v1936 = vadd.f32 %v1372, %v1916
      %v1937 = vadd.f32 %v1375, %v1919
      %v1938 = vadd.f32 %v1377, %v1921
      %v1939 = vld [vmem:[%s264] sm:$0x1]
      %v1941 = vperm.slane %v1939, 0
      %v1943 = vmul.f32 %v1923, %v1941
      %v1944 = vmul.f32 %v1924, %v1941
      %v1945 = vmul.f32 %v1925, %v1941
      %v1946 = vmul.f32 %v1926, %v1941
      %v1947 = vmul.f32 %v1927, %v1941
      %v1948 = vmul.f32 %v1928, %v1941
      %v1949 = vmul.f32 %v1929, %v1941
      %v1950 = vmul.f32 %v1930, %v1941
      %v1951 = vmul.f32 %v1931, %v1941
      %v1952 = vmul.f32 %v1932, %v1941
      %v1953 = vmul.f32 %v1933, %v1941
      %v1954 = vmul.f32 %v1934, %v1941
      %v1955 = vmul.f32 %v1935, %v1941
      %v1956 = vmul.f32 %v1936, %v1941
      %v1957 = vmul.f32 %v1937, %v1941
      %v1958 = vmul.f32 %v1938, %v1941
      %v1959 = vld [vmem:[%s267] sm:$0x1]
      %v1961 = vperm.slane %v1959, 0
      %v1963 = vadd.f32 %v1943, %v1961
      %v1964 = vadd.f32 %v1944, %v1961
      %v1965 = vadd.f32 %v1945, %v1961
      %v1966 = vadd.f32 %v1946, %v1961
      %v1967 = vadd.f32 %v1947, %v1961
      %v1968 = vadd.f32 %v1948, %v1961
      %v1969 = vadd.f32 %v1949, %v1961
      %v1970 = vadd.f32 %v1950, %v1961
      %v1971 = vadd.f32 %v1951, %v1961
      %v1972 = vadd.f32 %v1952, %v1961
      %v1973 = vadd.f32 %v1953, %v1961
      %v1974 = vadd.f32 %v1954, %v1961
      %v1975 = vadd.f32 %v1955, %v1961
      %v1976 = vadd.f32 %v1956, %v1961
      %v1977 = vadd.f32 %v1957, %v1961
      %v1978 = vadd.f32 %v1958, %v1961
      %v1979 = vmax.f32 %v1963, 0.0
      %v1980 = vmax.f32 %v1964, 0.0
      %v1981 = vmax.f32 %v1965, 0.0
      %v1982 = vmax.f32 %v1966, 0.0
      %v1983 = vmax.f32 %v1967, 0.0
      %v1984 = vmax.f32 %v1968, 0.0
      %v1985 = vmax.f32 %v1969, 0.0
      %v1986 = vmax.f32 %v1970, 0.0
      %v1987 = vmax.f32 %v1971, 0.0
      %v1988 = vmax.f32 %v1972, 0.0
      %v1989 = vmax.f32 %v1973, 0.0
      %v1990 = vmax.f32 %v1974, 0.0
      %v1991 = vmax.f32 %v1975, 0.0
      %v1992 = vmax.f32 %v1976, 0.0
      %v1993 = vmax.f32 %v1977, 0.0
      %v1994 = vmax.f32 %v1978, 0.0
      %v1995 = vpack.c.bf16 %v1979, %v1979
      %v1996 = vpack.c.bf16 %v1980, %v1980
      %v1997 = vpack.c.bf16 %v1981, %v1981
      %v1998 = vpack.c.bf16 %v1982, %v1982
      %v1999 = vpack.c.bf16 %v1983, %v1983
      %v2000 = vpack.c.bf16 %v1984, %v1984
      %v2001 = vpack.c.bf16 %v1985, %v1985
      %v2002 = vpack.c.bf16 %v1986, %v1986
      %v2003 = vpack.c.bf16 %v1987, %v1987
      %v2004 = vpack.c.bf16 %v1988, %v1988
      %v2005 = vpack.c.bf16 %v1989, %v1989
      %v2006 = vpack.c.bf16 %v1990, %v1990
      %v2007 = vpack.c.bf16 %v1991, %v1991
      %v2008 = vpack.c.bf16 %v1992, %v1992
      %v2009 = vpack.c.bf16 %v1993, %v1993
      %v2010 = vpack.c.bf16 %v1994, %v1994
      %vm2011 = vcmask 27648
      %2012 = vst.msk [vmem:[%s279] sm:$0xf] %vm2011, %v1995
      %2013 = vst.msk [vmem:[%s279 + $0x4] sm:$0xf] %vm2011, %v1996
      %2014 = vst.msk [vmem:[%s279 + $0x8] sm:$0xf] %vm2011, %v1997
      %2015 = vst.msk [vmem:[%s279 + $0xc] sm:$0xf] %vm2011, %v1998
      %2016 = vst.msk [vmem:[%s279 + $0x10] sm:$0xf] %vm2011, %v1999
      %2017 = vst.msk [vmem:[%s279 + $0x14] sm:$0xf] %vm2011, %v2000
      %2018 = vst.msk [vmem:[%s279 + $0x18] sm:$0xf] %vm2011, %v2001
      %2019 = vst.msk [vmem:[%s279 + $0x1c] sm:$0xf] %vm2011, %v2002
      %2020 = vst.msk [vmem:[%s279 + $0x20] sm:$0xf] %vm2011, %v2003
      %2021 = vst.msk [vmem:[%s279 + $0x24] sm:$0xf] %vm2011, %v2004
      %2022 = vst.msk [vmem:[%s279 + $0x28] sm:$0xf] %vm2011, %v2005
      %2023 = vst.msk [vmem:[%s279 + $0x2c] sm:$0xf] %vm2011, %v2006
      %2024 = vst.msk [vmem:[%s279 + $0x30] sm:$0xf] %vm2011, %v2007
      %2025 = vst.msk [vmem:[%s279 + $0x34] sm:$0xf] %vm2011, %v2008
      %2026 = vst.msk [vmem:[%s279 + $0x38] sm:$0xf] %vm2011, %v2009
      %2027 = vst.msk [vmem:[%s279 + $0x3c] sm:$0xf] %vm2011, %v2010
      %p2028 = scmp.lt.s32.totalorder %s21, 1
      %s2029 = scalar_select %p2028, %s21, 1
      %p2030 = scmp.lt.s32.totalorder %s22, 7
      %s2031 = scalar_select %p2030, %s22, 7
      %p2032 = scmp.lt.s32.totalorder %s20, 0
      %s2033 = scalar_select %p2032, %s20, 0
      %s2034 = smul.addr %s2031, 16
      %s2035 = sadd.s32 %s2033, %s2034
      %s2036 = smul.addr %s2029, 128
      %s2037 = sadd.s32 %s2035, %s2036
      %s2038 = smul.addr %s2037, 4
      %s2039 = scalar_lea.vmem %s4, %s2038
      // Predicated region
      $region37: #{ae_forward.12} parent=35 // pred_check
        %p2040 = pneg %p160
      $region38: #{ae_forward.12} parent=35 // pred_check_branch
        %2042 = sbr.rel (%p2040) target = $region40
      $region39: #{ae_forward.12} parent=35 // pred_region
        _
      $region40: #{ae_forward.12} parent=35 // pred_fallthru
        _
    $region36: #{ae_forward.12} parent=5 // pred_fallthru
      _
    %p2043 = scmp.le.s32.totalorder 2, %s10
    // Predicated region
    $region41: #{ae_forward.12} parent=5 // pred_check
      %p2044 = pneg %p2043
    $region42: #{ae_forward.12} parent=5 // pred_check_branch
      %2046 = sbr.rel (%p2044) target = $region44
    $region43: #{ae_forward.12} parent=5 // pred_region
      %s2047 = ssub.s32 %s10, 2
      // Predicated region
      $region45: #{ae_forward.12} parent=43 // pred_check
        %p2048 = pneg %p166
      $region46: #{ae_forward.12} parent=43 // pred_check_branch
        %2050 = sbr.rel (%p2048) target = $region48
      $region47: #{ae_forward.12} parent=43 // pred_region
        %p2051 = scmp.lt.s32.totalorder %s24, 1
        %s2052 = scalar_select %p2051, %s24, 1
        %p2053 = scmp.lt.s32.totalorder %s25, 7
        %s2054 = scalar_select %p2053, %s25, 7
        %p2055 = scmp.lt.s32.totalorder %s23, 0
        %s2056 = scalar_select %p2055, %s23, 0
        %s2057 = smul.addr %s2054, 16
        %s2058 = sadd.s32 %s2056, %s2057
        %s2059 = smul.addr %s2052, 128
        %s2060 = sadd.s32 %s2058, %s2059
        %s2061 = smul.addr %s2060, 4
        %s2062 = scalar_lea.vmem %s4, %s2061
      $region48: #{ae_forward.12} parent=43 // pred_fallthru
        _
    $region44: #{ae_forward.12} parent=5 // pred_fallthru
      _
  $region6: #{ae_forward.12} parent=0 // loop_footer
    %s14 = sadd.s32 1, %s10
  $region7: #{ae_forward.12} parent=0 // loop_footer_branch
    %9 = sbr.rel target = $region3
  $region8: #{ae_forward.12} parent=0 // loop_exit
    _

// kernel: ae_forward.15
$region0: #{ae_forward.15}
  #allocation0 [shape = 'u32[]', space=smem, size = 0x4, offset = 0x4, fixed_abs, tag = 'smem constant byte address 0x4 - core index']
  #allocation1 [shape = 'u32[72,128]{1,0:T(1,128)}', space=vmem, size = 0x9000, scoped, tag = 'internal scratch']
  %s0 = inlined_call_operand.vmem [shape: bf16[2,6,56,4], index: 0, kind: input, shape index: {}]
  %s1 = inlined_call_operand.vmem [shape: bf16[3,36,8], index: 1, kind: input, shape index: {}]
  %s2 = inlined_call_operand.vmem [shape: f32[1,8], index: 2, kind: input, shape index: {}]
  %s3 = inlined_call_operand.vmem [shape: f32[1,8], index: 3, kind: input, shape index: {}]
  %s4 = inlined_call_operand.vmem [shape: bf16[2,4,32,8], index: 4, kind: output, shape index: {}]
  %s5 = sld [smem:[#allocation0]]
  $region49: #{ae_forward.15} parent=0
    _
  %s7 = ssub.s32 1, %s5
  %s8 = scalar_select 0, %s7, %s5
  loop: start=0, step=1, limit=10
  $region2: #{ae_forward.15} parent=0 // loop_pre_header
    _
  $region3: #{ae_forward.15} parent=0 // loop_header
    %s10 = sphi 0, %s14
    %p11 = scmp.ge.s32.totalorder %s10, 10
    %s17 = sphi 0, %s36
    %s18 = sphi 0, %s32
    %s19 = sphi 0, %s28
    %s20 = sphi 0, %s17
    %s21 = sphi 0, %s18
    %s22 = sphi 0, %s19
    %s23 = sphi 0, %s20
    %s24 = sphi 0, %s21
    %s25 = sphi 0, %s22
    %s39 = sphi 0, %s41
    %s42 = sphi 0, %s39
    %s43 = sphi 0, %s42
    %s59 = sphi 0, %s43
    %s65 = sphi 0, %s67
    %s68 = sphi 0, %s65
    %s69 = sphi 0, %s68
    %s85 = sphi 0, %s69
    %s91 = sphi 0, %s93
    %s94 = sphi 0, %s91
    %s95 = sphi 0, %s94
    %s111 = sphi 0, %s95
    %s117 = sphi 0, %s119
    %s120 = sphi 0, %s117
    %s121 = sphi 0, %s120
    %s137 = sphi 0, %s121
    %s147 = sphi 0, %s149
    %s150 = sphi 0, %s147
    %s151 = sphi 0, %s150
    %s167 = sphi 0, %s151
  $region4: #{ae_forward.15} parent=0 // loop_header_branch
    %13 = sbr.rel (%p11) target = $region8
  $region5: #{ae_forward.15} parent=0 // loop_body
    %s15 = ssub.s32 %s10, 1
    %s16 = ssub.s32 %s10, 2
    %s26 = sadd.s32 1, %s19
    %p27 = scmp.ge.s32.totalorder %s26, 4
    %s28 = scalar_select %p27, 0, %s26
    %s29 = sadd.s32 1, %s18
    %s30 = scalar_select %p27, %s29, %s18
    %p31 = scmp.ge.s32.totalorder %s30, 2
    %s32 = scalar_select %p31, 0, %s30
    %s33 = sadd.s32 1, %s17
    %s34 = scalar_select %p31, %s33, %s17
    %p35 = scmp.ge.s32.totalorder %s34, 1
    %s36 = scalar_select %p35, 0, %s34
    %s37 = ssub.s32 %s18, %s32
    %p38 = scmp.eq.s32.totalorder %s37, 0
    %s40 = sadd.s32 %s39, 1
    %s41 = scalar_select %p38, %s39, %s40
    %p44 = pneg %p38
    %p45 = scmp.eq.s32.totalorder %s10, 7
    %p46 = por %p44, %p45
    %p47 = scmp.ne.s32.totalorder %s39, %s42
    %p48 = scmp.eq.s32.totalorder %s10, 0
    %p49 = por %p47, %p48
    %p50 = scmp.ne.s32.totalorder %s39, %s42
    %p51 = scmp.eq.s32.totalorder %s15, 7
    %p52 = por %p50, %p51
    %p53 = scmp.ne.s32.totalorder %s42, %s43
    %p54 = scmp.eq.s32.totalorder %s15, 0
    %p55 = por %p53, %p54
    %p56 = scmp.ne.s32.totalorder %s42, %s43
    %p57 = scmp.eq.s32.totalorder %s16, 7
    %p58 = por %p56, %p57
    %p60 = scmp.ne.s32.totalorder %s43, %s59
    %p61 = scmp.eq.s32.totalorder %s16, 0
    %p62 = por %p60, %p61
    %s63 = ssub.s32 %s17, %s36
    %p64 = scmp.eq.s32.totalorder %s63, 0
    %s66 = sadd.s32 %s65, 1
    %s67 = scalar_select %p64, %s65, %s66
    %p70 = pneg %p64
    %p71 = scmp.eq.s32.totalorder %s10, 7
    %p72 = por %p70, %p71
    %p73 = scmp.ne.s32.totalorder %s65, %s68
    %p74 = scmp.eq.s32.totalorder %s10, 0
    %p75 = por %p73, %p74
    %p76 = scmp.ne.s32.totalorder %s65, %s68
    %p77 = scmp.eq.s32.totalorder %s15, 7
    %p78 = por %p76, %p77
    %p79 = scmp.ne.s32.totalorder %s68, %s69
    %p80 = scmp.eq.s32.totalorder %s15, 0
    %p81 = por %p79, %p80
    %p82 = scmp.ne.s32.totalorder %s68, %s69
    %p83 = scmp.eq.s32.totalorder %s16, 7
    %p84 = por %p82, %p83
    %p86 = scmp.ne.s32.totalorder %s69, %s85
    %p87 = scmp.eq.s32.totalorder %s16, 0
    %p88 = por %p86, %p87
    %s89 = ssub.s32 %s17, %s36
    %p90 = scmp.eq.s32.totalorder %s89, 0
    %s92 = sadd.s32 %s91, 1
    %s93 = scalar_select %p90, %s91, %s92
    %p96 = pneg %p90
    %p97 = scmp.eq.s32.totalorder %s10, 7
    %p98 = por %p96, %p97
    %p99 = scmp.ne.s32.totalorder %s91, %s94
    %p100 = scmp.eq.s32.totalorder %s10, 0
    %p101 = por %p99, %p100
    %p102 = scmp.ne.s32.totalorder %s91, %s94
    %p103 = scmp.eq.s32.totalorder %s15, 7
    %p104 = por %p102, %p103
    %p105 = scmp.ne.s32.totalorder %s94, %s95
    %p106 = scmp.eq.s32.totalorder %s15, 0
    %p107 = por %p105, %p106
    %p108 = scmp.ne.s32.totalorder %s94, %s95
    %p109 = scmp.eq.s32.totalorder %s16, 7
    %p110 = por %p108, %p109
    %p112 = scmp.ne.s32.totalorder %s95, %s111
    %p113 = scmp.eq.s32.totalorder %s16, 0
    %p114 = por %p112, %p113
    %s115 = ssub.s32 %s17, %s36
    %p116 = scmp.eq.s32.totalorder %s115, 0
    %s118 = sadd.s32 %s117, 1
    %s119 = scalar_select %p116, %s117, %s118
    %p122 = pneg %p116
    %p123 = scmp.eq.s32.totalorder %s10, 7
    %p124 = por %p122, %p123
    %p125 = scmp.ne.s32.totalorder %s117, %s120
    %p126 = scmp.eq.s32.totalorder %s10, 0
    %p127 = por %p125, %p126
    %p128 = scmp.ne.s32.totalorder %s117, %s120
    %p129 = scmp.eq.s32.totalorder %s15, 7
    %p130 = por %p128, %p129
    %p131 = scmp.ne.s32.totalorder %s120, %s121
    %p132 = scmp.eq.s32.totalorder %s15, 0
    %p133 = por %p131, %p132
    %p134 = scmp.ne.s32.totalorder %s120, %s121
    %p135 = scmp.eq.s32.totalorder %s16, 7
    %p136 = por %p134, %p135
    %p138 = scmp.ne.s32.totalorder %s121, %s137
    %p139 = scmp.eq.s32.totalorder %s16, 0
    %p140 = por %p138, %p139
    %s141 = ssub.s32 %s18, %s32
    %s142 = ssub.s32 %s19, %s28
    %s143 = sor.u32 %s141, %s142
    %s144 = ssub.s32 %s17, %s36
    %s145 = sor.u32 %s143, %s144
    %p146 = scmp.eq.s32.totalorder %s145, 0
    %s148 = sadd.s32 %s147, 1
    %s149 = scalar_select %p146, %s147, %s148
    %p152 = pneg %p146
    %p153 = scmp.eq.s32.totalorder %s10, 7
    %p154 = por %p152, %p153
    %p155 = scmp.ne.s32.totalorder %s147, %s150
    %p156 = scmp.eq.s32.totalorder %s10, 0
    %p157 = por %p155, %p156
    %p158 = scmp.ne.s32.totalorder %s147, %s150
    %p159 = scmp.eq.s32.totalorder %s15, 7
    %p160 = por %p158, %p159
    %p161 = scmp.ne.s32.totalorder %s150, %s151
    %p162 = scmp.eq.s32.totalorder %s15, 0
    %p163 = por %p161, %p162
    %p164 = scmp.ne.s32.totalorder %s150, %s151
    %p165 = scmp.eq.s32.totalorder %s16, 7
    %p166 = por %p164, %p165
    %p168 = scmp.ne.s32.totalorder %s151, %s167
    %p169 = scmp.eq.s32.totalorder %s16, 0
    %p170 = por %p168, %p169
    %p171 = scmp.le.s32.totalorder 1, %s10
    %p172 = scmp.lt.s32.totalorder %s10, 9
    %p173 = pnand %p171, %p172
    %p174 = pneg %p173
    // Predicated region
    $region9: #{ae_forward.15} parent=5 // pred_check
      _
    $region10: #{ae_forward.15} parent=5 // pred_check_branch
      %176 = sbr.rel (%p173) target = $region12
    $region11: #{ae_forward.15} parent=5 // pred_region
      %s177 = ssub.s32 %s10, 1
      // Predicated region
      $region13: #{ae_forward.15} parent=11 // pred_check
        %p178 = pneg %p81
      $region14: #{ae_forward.15} parent=11 // pred_check_branch
        %180 = sbr.rel (%p178) target = $region16
      $region15: #{ae_forward.15} parent=11 // pred_region
        %p181 = scmp.lt.s32.totalorder %s20, 0
        %s182 = scalar_select %p181, %s20, 0
        %s183 = smul.addr %s182, 4
        %s184 = scalar_lea.vmem %s1, %s183
      $region16: #{ae_forward.15} parent=11 // pred_fallthru
        _
      // Predicated region
      $region17: #{ae_forward.15} parent=11 // pred_check
        %p185 = pneg %p107
      $region18: #{ae_forward.15} parent=11 // pred_check_branch
        %187 = sbr.rel (%p185) target = $region20
      $region19: #{ae_forward.15} parent=11 // pred_region
        %p188 = scmp.lt.s32.totalorder %s20, 0
        %s189 = scalar_select %p188, %s20, 0
        %s190 = scalar_lea.vmem %s2, %s189
      $region20: #{ae_forward.15} parent=11 // pred_fallthru
        _
      // Predicated region
      $region21: #{ae_forward.15} parent=11 // pred_check
        %p191 = pneg %p133
      $region22: #{ae_forward.15} parent=11 // pred_check_branch
        %193 = sbr.rel (%p191) target = $region24
      $region23: #{ae_forward.15} parent=11 // pred_region
        %p194 = scmp.lt.s32.totalorder %s20, 0
        %s195 = scalar_select %p194, %s20, 0
        %s196 = scalar_lea.vmem %s3, %s195
      $region24: #{ae_forward.15} parent=11 // pred_fallthru
        _
    $region12: #{ae_forward.15} parent=5 // pred_fallthru
      _
    %p197 = scmp.lt.s32.totalorder %s10, 8
    // Predicated region
    $region25: #{ae_forward.15} parent=5 // pred_check
      %p198 = pneg %p197
    $region26: #{ae_forward.15} parent=5 // pred_check_branch
      %200 = sbr.rel (%p198) target = $region28
    $region27: #{ae_forward.15} parent=5 // pred_region
      // Predicated region
      $region29: #{ae_forward.15} parent=27 // pred_check
        %p201 = pneg %p49
      $region30: #{ae_forward.15} parent=27 // pred_check_branch
        %203 = sbr.rel (%p201) target = $region32
      $region31: #{ae_forward.15} parent=27 // pred_region
        %p204 = scmp.lt.s32.totalorder %s18, 1
        %s205 = scalar_select %p204, %s18, 1
        %s206 = smul.addr %s205, 42
        %s207 = smul.addr %s206, 4
        %s208 = scalar_lea.vmem %s0, %s207
      $region32: #{ae_forward.15} parent=27 // pred_fallthru
        _
    $region28: #{ae_forward.15} parent=5 // pred_fallthru
      _
    %p209 = scmp.le.s32.totalorder 1, %s10
    %p210 = scmp.lt.s32.totalorder %s10, 9
    %p211 = pnand %p209, %p210
    %p212 = pneg %p211
    // Predicated region
    $region33: #{ae_forward.15} parent=5 // pred_check
      _
    $region34: #{ae_forward.15} parent=5 // pred_check_branch
      %214 = sbr.rel (%p211) target = $region36
    $region35: #{ae_forward.15} parent=5 // pred_region
      %s215 = ssub.s32 %s10, 1
      %p216 = scmp.lt.s32.totalorder %s21, 1
      %s217 = scalar_select %p216, %s21, 1
      %s218 = smul.addr %s217, 42
      %s219 = smul.addr %s218, 4
      %s220 = scalar_lea.vmem %s0, %s219
      %p221 = pneg %p55
      %p222 = pneg %p52
      %p223 = scmp.lt.s32.totalorder %s20, 0
      %s224 = scalar_select %p223, %s20, 0
      %s225 = smul.addr %s224, 4
      %s226 = scalar_lea.vmem %s1, %s225
      %p227 = pneg %p81
      %p228 = pneg %p78
      %p229 = scmp.lt.s32.totalorder %s20, 0
      %s230 = scalar_select %p229, %s20, 0
      %s231 = scalar_lea.vmem %s2, %s230
      %p232 = pneg %p107
      %p233 = pneg %p104
      %p234 = scmp.lt.s32.totalorder %s20, 0
      %s235 = scalar_select %p234, %s20, 0
      %s236 = scalar_lea.vmem %s3, %s235
      %p237 = pneg %p133
      %p238 = pneg %p130
      %p239 = pneg %p163
      %p240 = pneg %p160
      %p241 = scmp.lt.s32.totalorder %s21, 1
      %s242 = scalar_select %p241, %s21, 1
      %p243 = scmp.lt.s32.totalorder %s22, 3
      %s244 = scalar_select %p243, %s22, 3
      %p245 = scmp.lt.s32.totalorder %s20, 0
      %s246 = scalar_select %p245, %s20, 0
      %s247 = smul.addr %s244, 4
      %s248 = sadd.s32 %s246, %s247
      %s249 = smul.addr %s242, 16
      %s250 = sadd.s32 %s248, %s249
      %s251 = smul.addr %s250, 4
      %s252 = scalar_lea.vmem %s4, %s251
      %p253 = scmp.lt.s32.totalorder %s21, 1
      %s254 = scalar_select %p253, %s21, 1
      %s255 = smul.addr %s254, 42
      %s256 = smul.addr %s255, 4
      %s257 = scalar_lea.vmem %s0, %s256
      %p258 = scmp.lt.s32.totalorder %s20, 0
      %s259 = scalar_select %p258, %s20, 0
      %s260 = smul.addr %s259, 4
      %s261 = scalar_lea.vmem %s1, %s260
      %p262 = scmp.lt.s32.totalorder %s20, 0
      %s263 = scalar_select %p262, %s20, 0
      %s264 = scalar_lea.vmem %s2, %s263
      %p265 = scmp.lt.s32.totalorder %s20, 0
      %s266 = scalar_select %p265, %s20, 0
      %s267 = scalar_lea.vmem %s3, %s266
      %p268 = scmp.lt.s32.totalorder %s21, 1
      %s269 = scalar_select %p268, %s21, 1
      %p270 = scmp.lt.s32.totalorder %s22, 3
      %s271 = scalar_select %p270, %s22, 3
      %p272 = scmp.lt.s32.totalorder %s20, 0
      %s273 = scalar_select %p272, %s20, 0
      %s274 = smul.addr %s271, 4
      %s275 = sadd.s32 %s273, %s274
      %s276 = smul.addr %s269, 16
      %s277 = sadd.s32 %s275, %s276
      %s278 = smul.addr %s277, 4
      %s279 = scalar_lea.vmem %s4, %s278
      %s281 = smul.u32 %s22, 7
      %s282 = smul.addr %s281, 4
      %s283 = scalar_lea.vmem %s257, %s282
      %v284 = vld [vmem:[%s283] sm:$0xf]
      %v285 = vld [vmem:[%s283 + $0x4] sm:$0xf]
      %v286 = vld [vmem:[%s283 + $0x8] sm:$0xf]
      %v287 = vld [vmem:[%s283 + $0xc] sm:$0xf]
      %v288 = vld [vmem:[%s283 + $0x10] sm:$0xf]
      %v289 = vld [vmem:[%s283 + $0x14] sm:$0xf]
      %v290 = vld [vmem:[%s283 + $0x18] sm:$0xf]
      %v295 = vunpack.c.l.b16 %v284
      %v296 = vunpack.c.l.b16 %v285
      %v297 = vunpack.c.l.b16 %v286
      %v298 = vunpack.c.l.b16 %v287
      %v299 = vpack.c.b16 %v296, %v295
      %v300 = vpack.c.b16 %v298, %v297
      %v302 = vunpack.c.l.b16 %v288
      %v303 = vpack.c.b16 %v302, %v302
      %vm304 = vsmask.f32 7424
      %v306 = vshrl.u32 %v299, 16
      %v308 = vshll.u32 %v299, 16
      %v310 = vrot.slane %v308, 1
      %v311 = vor.u32 %v306, %v310
      %v313 = vshll.u32 %v300, 16
      %v315 = vrot.slane %v313, 1
      %v316 = vsel %vm304, %v311, %v315
      %v317 = vshrl.u32 %v300, 16
      %v319 = vor.u32 %v317, %v315
      %v321 = vshll.u32 %v303, 16
      %v323 = vrot.slane %v321, 1
      %v324 = vsel %vm304, %v319, %v323
      %325 = vrot.lane.b32.xlu0 %v316, 4
      %v326 = vpop.permute.xlu0 %325
      %327 = vrot.lane.b32.xlu0 %v324, 4
      %v328 = vpop.permute.xlu0 %327
      %vm329 = vcmask 1046528
      %v330 = vrot.slane %v299, 1
      %v331 = vrot.slane %v300, 1
      %v332 = vsel %vm329, %v330, %v331
      %v333 = vrot.slane %v303, 1
      %v334 = vsel %vm329, %v331, %v333
      %335 = vrot.lane.b32.xlu0 %v332, 8
      %v336 = vpop.permute.xlu0 %335
      %337 = vrot.lane.b32.xlu0 %v334, 8
      %v338 = vpop.permute.xlu0 %337
      %v339 = vpack.c.b16 %v297, %v296
      %v340 = vpack.c.b16 %v302, %v298
      %341 = vrot.lane.b32.xlu0 %v339, 12
      %v342 = vpop.permute.xlu0 %341
      %343 = vrot.lane.b32.xlu0 %v340, 12
      %v344 = vpop.permute.xlu0 %343
      %v346 = vunpack.c.l.b16 %v289
      %v347 = vpack.c.b16 %v346, %v346
      %v349 = vshrl.u32 %v339, 16
      %v351 = vshll.u32 %v339, 16
      %v353 = vrot.slane %v351, 1
      %v354 = vor.u32 %v349, %v353
      %v356 = vshll.u32 %v340, 16
      %v358 = vrot.slane %v356, 1
      %v359 = vsel %vm304, %v354, %v358
      %v360 = vshrl.u32 %v340, 16
      %v362 = vor.u32 %v360, %v358
      %v364 = vshll.u32 %v347, 16
      %v366 = vrot.slane %v364, 1
      %v367 = vsel %vm304, %v362, %v366
      %368 = vrot.lane.b32.xlu0 %v359, 16
      %v369 = vpop.permute.xlu0 %368
      %370 = vrot.lane.b32.xlu0 %v367, 16
      %v371 = vpop.permute.xlu0 %370
      %v372 = vrot.slane %v339, 1
      %v373 = vrot.slane %v340, 1
      %v374 = vsel %vm329, %v372, %v373
      %v375 = vrot.slane %v347, 1
      %v376 = vsel %vm329, %v373, %v375
      %377 = vrot.lane.b32.xlu0 %v374, 20
      %v378 = vpop.permute.xlu0 %377
      %379 = vrot.lane.b32.xlu0 %v376, 20
      %v380 = vpop.permute.xlu0 %379
      %v381 = vpack.c.b16 %v346, %v302
      %382 = vrot.lane.b32.xlu0 %v300, 24
      %v383 = vpop.permute.xlu0 %382
      %384 = vrot.lane.b32.xlu0 %v381, 24
      %v385 = vpop.permute.xlu0 %384
      %v387 = vunpack.c.l.b16 %v290
      %v388 = vpack.c.b16 %v387, %v387
      %v390 = vshll.u32 %v381, 16
      %v392 = vrot.slane %v390, 1
      %v393 = vsel %vm304, %v319, %v392
      %v394 = vshrl.u32 %v381, 16
      %v396 = vor.u32 %v394, %v392
      %v398 = vshll.u32 %v388, 16
      %v400 = vrot.slane %v398, 1
      %v401 = vsel %vm304, %v396, %v400
      %402 = vrot.lane.b32.xlu0 %v393, 28
      %v403 = vpop.permute.xlu0 %402
      %404 = vrot.lane.b32.xlu0 %v401, 28
      %v405 = vpop.permute.xlu0 %404
      %v406 = vrot.slane %v381, 1
      %v407 = vsel %vm329, %v331, %v406
      %v408 = vrot.slane %v388, 1
      %v409 = vsel %vm329, %v406, %v408
      %410 = vrot.lane.b32.xlu0 %v407, 32
      %v411 = vpop.permute.xlu0 %410
      %412 = vrot.lane.b32.xlu0 %v409, 32
      %v413 = vpop.permute.xlu0 %412
      %vm414 = vcmask 31744
      %v416 = vsel %vm414, %v299, %v326
      %v418 = vsel %vm414, %v300, %v328
      %vm419 = vcmask 64512
      %v421 = vsel %vm419, %v416, %v336
      %v423 = vsel %vm419, %v418, %v338
      %vm424 = vcmask 97280
      %v426 = vsel %vm424, %v421, %v342
      %v428 = vsel %vm424, %v423, %v344
      %vm429 = vcmask 130048
      %v431 = vsel %vm429, %v426, %v369
      %v433 = vsel %vm429, %v428, %v371
      %vm434 = vcmask 162816
      %v436 = vsel %vm434, %v431, %v378
      %v438 = vsel %vm434, %v433, %v380
      %vm439 = vcmask 195584
      %v441 = vsel %vm439, %v436, %v383
      %v443 = vsel %vm439, %v438, %v385
      %vm444 = vcmask 228352
      %v446 = vsel %vm444, %v441, %v403
      %v448 = vsel %vm444, %v443, %v405
      %vm449 = vcmask 261120
      %v451 = vsel %vm449, %v446, %v411
      %v453 = vsel %vm449, %v448, %v413
      %v454 = vld [vmem:[%s261] sm:$0xf]
      %v455 = vld [vmem:[%s261 + $0x4] sm:$0xf]
      %v456 = vld [vmem:[%s261 + $0x8] sm:$0xf]
      %v457 = vld [vmem:[%s261 + $0xc] sm:$0xf]
      %v458 = vld [vmem:[%s261 + $0x10] sm:$0x3]
      %s459 = sadd.s32 %s22, 1
      %s460 = smul.u32 %s459, 7
      %s461 = smul.addr %s460, 4
      %s462 = scalar_lea.vmem %s257, %s461
      %v463 = vld [vmem:[%s462] sm:$0xf]
      %v464 = vld [vmem:[%s462 + $0x4] sm:$0xf]
      %v465 = vld [vmem:[%s462 + $0x8] sm:$0xf]
      %v466 = vld [vmem:[%s462 + $0xc] sm:$0xf]
      %v467 = vld [vmem:[%s462 + $0x10] sm:$0xf]
      %v468 = vld [vmem:[%s462 + $0x14] sm:$0xf]
      %v469 = vld [vmem:[%s462 + $0x18] sm:$0xf]
      %v474 = vunpack.c.l.b16 %v463
      %v475 = vunpack.c.l.b16 %v464
      %v476 = vunpack.c.l.b16 %v465
      %v477 = vunpack.c.l.b16 %v466
      %v478 = vpack.c.b16 %v475, %v474
      %v479 = vpack.c.b16 %v477, %v476
      %v481 = vunpack.c.l.b16 %v467
      %v482 = vpack.c.b16 %v481, %v481
      %v484 = vshrl.u32 %v478, 16
      %v486 = vshll.u32 %v478, 16
      %v488 = vrot.slane %v486, 1
      %v489 = vor.u32 %v484, %v488
      %v491 = vshll.u32 %v479, 16
      %v493 = vrot.slane %v491, 1
      %v494 = vsel %vm304, %v489, %v493
      %v495 = vshrl.u32 %v479, 16
      %v497 = vor.u32 %v495, %v493
      %v499 = vshll.u32 %v482, 16
      %v501 = vrot.slane %v499, 1
      %v502 = vsel %vm304, %v497, %v501
      %503 = vrot.lane.b32.xlu0 %v494, 4
      %v504 = vpop.permute.xlu0 %503
      %505 = vrot.lane.b32.xlu0 %v502, 4
      %v506 = vpop.permute.xlu0 %505
      %v507 = vrot.slane %v478, 1
      %v508 = vrot.slane %v479, 1
      %v509 = vsel %vm329, %v507, %v508
      %v510 = vrot.slane %v482, 1
      %v511 = vsel %vm329, %v508, %v510
      %512 = vrot.lane.b32.xlu0 %v509, 8
      %v513 = vpop.permute.xlu0 %512
      %514 = vrot.lane.b32.xlu0 %v511, 8
      %v515 = vpop.permute.xlu0 %514
      %v516 = vpack.c.b16 %v476, %v475
      %v517 = vpack.c.b16 %v481, %v477
      %518 = vrot.lane.b32.xlu0 %v516, 12
      %v519 = vpop.permute.xlu0 %518
      %520 = vrot.lane.b32.xlu0 %v517, 12
      %v521 = vpop.permute.xlu0 %520
      %v523 = vunpack.c.l.b16 %v468
      %v524 = vpack.c.b16 %v523, %v523
      %v526 = vshrl.u32 %v516, 16
      %v528 = vshll.u32 %v516, 16
      %v530 = vrot.slane %v528, 1
      %v531 = vor.u32 %v526, %v530
      %v533 = vshll.u32 %v517, 16
      %v535 = vrot.slane %v533, 1
      %v536 = vsel %vm304, %v531, %v535
      %v537 = vshrl.u32 %v517, 16
      %v539 = vor.u32 %v537, %v535
      %v541 = vshll.u32 %v524, 16
      %v543 = vrot.slane %v541, 1
      %v544 = vsel %vm304, %v539, %v543
      %545 = vrot.lane.b32.xlu0 %v536, 16
      %v546 = vpop.permute.xlu0 %545
      %547 = vrot.lane.b32.xlu0 %v544, 16
      %v548 = vpop.permute.xlu0 %547
      %v549 = vrot.slane %v516, 1
      %v550 = vrot.slane %v517, 1
      %v551 = vsel %vm329, %v549, %v550
      %v552 = vrot.slane %v524, 1
      %v553 = vsel %vm329, %v550, %v552
      %554 = vrot.lane.b32.xlu0 %v551, 20
      %v555 = vpop.permute.xlu0 %554
      %556 = vrot.lane.b32.xlu0 %v553, 20
      %v557 = vpop.permute.xlu0 %556
      %v558 = vpack.c.b16 %v523, %v481
      %559 = vrot.lane.b32.xlu0 %v479, 24
      %v560 = vpop.permute.xlu0 %559
      %561 = vrot.lane.b32.xlu0 %v558, 24
      %v562 = vpop.permute.xlu0 %561
      %v564 = vunpack.c.l.b16 %v469
      %v565 = vpack.c.b16 %v564, %v564
      %v567 = vshll.u32 %v558, 16
      %v569 = vrot.slane %v567, 1
      %v570 = vsel %vm304, %v497, %v569
      %v571 = vshrl.u32 %v558, 16
      %v573 = vor.u32 %v571, %v569
      %v575 = vshll.u32 %v565, 16
      %v577 = vrot.slane %v575, 1
      %v578 = vsel %vm304, %v573, %v577
      %579 = vrot.lane.b32.xlu0 %v570, 28
      %v580 = vpop.permute.xlu0 %579
      %581 = vrot.lane.b32.xlu0 %v578, 28
      %v582 = vpop.permute.xlu0 %581
      %v583 = vrot.slane %v558, 1
      %v584 = vsel %vm329, %v508, %v583
      %v585 = vrot.slane %v565, 1
      %v586 = vsel %vm329, %v583, %v585
      %587 = vrot.lane.b32.xlu0 %v584, 32
      %v588 = vpop.permute.xlu0 %587
      %589 = vrot.lane.b32.xlu0 %v586, 32
      %v590 = vpop.permute.xlu0 %589
      %v592 = vsel %vm414, %v478, %v504
      %v594 = vsel %vm414, %v479, %v506
      %v596 = vsel %vm419, %v592, %v513
      %v598 = vsel %vm419, %v594, %v515
      %v600 = vsel %vm424, %v596, %v519
      %v602 = vsel %vm424, %v598, %v521
      %v604 = vsel %vm429, %v600, %v546
      %v606 = vsel %vm429, %v602, %v548
      %v608 = vsel %vm434, %v604, %v555
      %v610 = vsel %vm434, %v606, %v557
      %v612 = vsel %vm439, %v608, %v560
      %v614 = vsel %vm439, %v610, %v562
      %v616 = vsel %vm444, %v612, %v580
      %v618 = vsel %vm444, %v614, %v582
      %v620 = vsel %vm449, %v616, %v588
      %v622 = vsel %vm449, %v618, %v590
      %s623 = scalar_lea.vmem %s261, 20
      %v624 = vld [vmem:[%s623] sm:$0xf]
      %v625 = vld [vmem:[%s623 + $0x4] sm:$0xf]
      %v626 = vld [vmem:[%s623 + $0x8] sm:$0xf]
      %v627 = vld [vmem:[%s623 + $0xc] sm:$0xf]
      %v628 = vld [vmem:[%s623 + $0x10] sm:$0x3]
      %v634 = vunpack.c.l.b16 %v624
      %v635 = vunpack.c.l.b16 %v625
      %v636 = vunpack.c.l.b16 %v626
      %v637 = vunpack.c.l.b16 %v627
      %v638 = vunpack.c.l.b16 %v628
      %v639 = vpack.c.b16 %v635, %v634
      %v640 = vpack.c.b16 %v637, %v636
      %v641 = vpack.c.b16 %v638, %v638
      %vm644 = vcmask 293888
      %v645 = vsel %vm644, %v620, 0
      %v647 = vsel %vm644, %v622, 0
      %vm649 = vcmask 1041408
      %v651 = vsel %vm649, %v641, 0
      %653 = vmatpush.bf16.msra.mxu0 0
      %654 = vmatpush.bf16.msra.mxu0 0
      %655 = vmatpush.bf16.msra.mxu0 0
      %656 = vmatpush.bf16.msra.mxu0 0
      %657 = vmatpush.bf16.msra.mxu0 0
      %658 = vmatpush.bf16.msra.mxu0 %v651
      %659 = vmatpush.bf16.msra.mxu0 %v640
      %660 = vmatpush.bf16.msra.mxu0 %v639
      %661 = vmatmul.bf16.gmra.mxu0 %v645
      %v662 = vpop.f32.mrf.mxu0
      %v663 = vadd.f32 0.0, %v662
      %v664 = vpop.f32.mrf.mxu0
      %v665 = vadd.f32 0.0, %v664
      %666 = vmatmul.bf16.gmra.mxu0 %v647
      %v667 = vpop.f32.mrf.mxu0
      %v668 = vadd.f32 0.0, %v667
      %v669 = vpop.f32.mrf.mxu0
      %v670 = vadd.f32 0.0, %v669
      %671 = vdwg.mxu0
      %v677 = vunpack.c.l.b16 %v454
      %v678 = vunpack.c.l.b16 %v455
      %v679 = vunpack.c.l.b16 %v456
      %v680 = vunpack.c.l.b16 %v457
      %v681 = vunpack.c.l.b16 %v458
      %v682 = vpack.c.b16 %v678, %v677
      %v683 = vpack.c.b16 %v680, %v679
      %v684 = vpack.c.b16 %v681, %v681
      %v687 = vsel %vm644, %v451, 0
      %v689 = vsel %vm644, %v453, 0
      %v692 = vsel %vm649, %v684, 0
      %694 = vmatpush.bf16.msra.mxu0 0
      %695 = vmatpush.bf16.msra.mxu0 0
      %696 = vmatpush.bf16.msra.mxu0 0
      %697 = vmatpush.bf16.msra.mxu0 0
      %698 = vmatpush.bf16.msra.mxu0 0
      %699 = vmatpush.bf16.msra.mxu0 %v692
      %700 = vmatpush.bf16.msra.mxu0 %v683
      %701 = vmatpush.bf16.msra.mxu0 %v682
      %702 = vmatmul.bf16.gmra.mxu0 %v687
      %v703 = vpop.f32.mrf.mxu0
      %v704 = vadd.f32 %v663, %v703
      %v705 = vpop.f32.mrf.mxu0
      %v706 = vadd.f32 %v665, %v705
      %707 = vmatmul.bf16.gmra.mxu0 %v689
      %v708 = vpop.f32.mrf.mxu0
      %v709 = vadd.f32 %v668, %v708
      %v710 = vpop.f32.mrf.mxu0
      %v711 = vadd.f32 %v670, %v710
      %712 = vdwg.mxu0
      %s713 = sadd.s32 %s22, 2
      %s714 = smul.u32 %s713, 7
      %s715 = smul.addr %s714, 4
      %s716 = scalar_lea.vmem %s257, %s715
      %v717 = vld [vmem:[%s716] sm:$0xf]
      %v718 = vld [vmem:[%s716 + $0x4] sm:$0xf]
      %v719 = vld [vmem:[%s716 + $0x8] sm:$0xf]
      %v720 = vld [vmem:[%s716 + $0xc] sm:$0xf]
      %v721 = vld [vmem:[%s716 + $0x10] sm:$0xf]
      %v722 = vld [vmem:[%s716 + $0x14] sm:$0xf]
      %v723 = vld [vmem:[%s716 + $0x18] sm:$0xf]
      %v728 = vunpack.c.l.b16 %v717
      %v729 = vunpack.c.l.b16 %v718
      %v730 = vunpack.c.l.b16 %v719
      %v731 = vunpack.c.l.b16 %v720
      %v732 = vpack.c.b16 %v729, %v728
      %v733 = vpack.c.b16 %v731, %v730
      %v735 = vunpack.c.l.b16 %v721
      %v736 = vpack.c.b16 %v735, %v735
      %v738 = vshrl.u32 %v732, 16
      %v740 = vshll.u32 %v732, 16
      %v742 = vrot.slane %v740, 1
      %v743 = vor.u32 %v738, %v742
      %v745 = vshll.u32 %v733, 16
      %v747 = vrot.slane %v745, 1
      %v748 = vsel %vm304, %v743, %v747
      %v749 = vshrl.u32 %v733, 16
      %v751 = vor.u32 %v749, %v747
      %v753 = vshll.u32 %v736, 16
      %v755 = vrot.slane %v753, 1
      %v756 = vsel %vm304, %v751, %v755
      %757 = vrot.lane.b32.xlu0 %v748, 4
      %v758 = vpop.permute.xlu0 %757
      %759 = vrot.lane.b32.xlu0 %v756, 4
      %v760 = vpop.permute.xlu0 %759
      %v761 = vrot.slane %v732, 1
      %v762 = vrot.slane %v733, 1
      %v763 = vsel %vm329, %v761, %v762
      %v764 = vrot.slane %v736, 1
      %v765 = vsel %vm329, %v762, %v764
      %766 = vrot.lane.b32.xlu0 %v763, 8
      %v767 = vpop.permute.xlu0 %766
      %768 = vrot.lane.b32.xlu0 %v765, 8
      %v769 = vpop.permute.xlu0 %768
      %v770 = vpack.c.b16 %v730, %v729
      %v771 = vpack.c.b16 %v735, %v731
      %772 = vrot.lane.b32.xlu0 %v770, 12
      %v773 = vpop.permute.xlu0 %772
      %774 = vrot.lane.b32.xlu0 %v771, 12
      %v775 = vpop.permute.xlu0 %774
      %v777 = vunpack.c.l.b16 %v722
      %v778 = vpack.c.b16 %v777, %v777
      %v780 = vshrl.u32 %v770, 16
      %v782 = vshll.u32 %v770, 16
      %v784 = vrot.slane %v782, 1
      %v785 = vor.u32 %v780, %v784
      %v787 = vshll.u32 %v771, 16
      %v789 = vrot.slane %v787, 1
      %v790 = vsel %vm304, %v785, %v789
      %v791 = vshrl.u32 %v771, 16
      %v793 = vor.u32 %v791, %v789
      %v795 = vshll.u32 %v778, 16
      %v797 = vrot.slane %v795, 1
      %v798 = vsel %vm304, %v793, %v797
      %799 = vrot.lane.b32.xlu0 %v790, 16
      %v800 = vpop.permute.xlu0 %799
      %801 = vrot.lane.b32.xlu0 %v798, 16
      %v802 = vpop.permute.xlu0 %801
      %v803 = vrot.slane %v770, 1
      %v804 = vrot.slane %v771, 1
      %v805 = vsel %vm329, %v803, %v804
      %v806 = vrot.slane %v778, 1
      %v807 = vsel %vm329, %v804, %v806
      %808 = vrot.lane.b32.xlu0 %v805, 20
      %v809 = vpop.permute.xlu0 %808
      %810 = vrot.lane.b32.xlu0 %v807, 20
      %v811 = vpop.permute.xlu0 %810
      %v812 = vpack.c.b16 %v777, %v735
      %813 = vrot.lane.b32.xlu0 %v733, 24
      %v814 = vpop.permute.xlu0 %813
      %815 = vrot.lane.b32.xlu0 %v812, 24
      %v816 = vpop.permute.xlu0 %815
      %v818 = vunpack.c.l.b16 %v723
      %v819 = vpack.c.b16 %v818, %v818
      %v821 = vshll.u32 %v812, 16
      %v823 = vrot.slane %v821, 1
      %v824 = vsel %vm304, %v751, %v823
      %v825 = vshrl.u32 %v812, 16
      %v827 = vor.u32 %v825, %v823
      %v829 = vshll.u32 %v819, 16
      %v831 = vrot.slane %v829, 1
      %v832 = vsel %vm304, %v827, %v831
      %833 = vrot.lane.b32.xlu0 %v824, 28
      %v834 = vpop.permute.xlu0 %833
      %835 = vrot.lane.b32.xlu0 %v832, 28
      %v836 = vpop.permute.xlu0 %835
      %v837 = vrot.slane %v812, 1
      %v838 = vsel %vm329, %v762, %v837
      %v839 = vrot.slane %v819, 1
      %v840 = vsel %vm329, %v837, %v839
      %841 = vrot.lane.b32.xlu0 %v838, 32
      %v842 = vpop.permute.xlu0 %841
      %843 = vrot.lane.b32.xlu0 %v840, 32
      %v844 = vpop.permute.xlu0 %843
      %v846 = vsel %vm414, %v732, %v758
      %v848 = vsel %vm414, %v733, %v760
      %v850 = vsel %vm419, %v846, %v767
      %v852 = vsel %vm419, %v848, %v769
      %v854 = vsel %vm424, %v850, %v773
      %v856 = vsel %vm424, %v852, %v775
      %v858 = vsel %vm429, %v854, %v800
      %v860 = vsel %vm429, %v856, %v802
      %v862 = vsel %vm434, %v858, %v809
      %v864 = vsel %vm434, %v860, %v811
      %v866 = vsel %vm439, %v862, %v814
      %v868 = vsel %vm439, %v864, %v816
      %v870 = vsel %vm444, %v866, %v834
      %v872 = vsel %vm444, %v868, %v836
      %v874 = vsel %vm449, %v870, %v842
      %v876 = vsel %vm449, %v872, %v844
      %s877 = scalar_lea.vmem %s261, 40
      %v878 = vld [vmem:[%s877] sm:$0xf]
      %v879 = vld [vmem:[%s877 + $0x4] sm:$0xf]
      %v880 = vld [vmem:[%s877 + $0x8] sm:$0xf]
      %v881 = vld [vmem:[%s877 + $0xc] sm:$0xf]
      %v882 = vld [vmem:[%s877 + $0x10] sm:$0x3]
      %v888 = vunpack.c.l.b16 %v878
      %v889 = vunpack.c.l.b16 %v879
      %v890 = vunpack.c.l.b16 %v880
      %v891 = vunpack.c.l.b16 %v881
      %v892 = vunpack.c.l.b16 %v882
      %v893 = vpack.c.b16 %v889, %v888
      %v894 = vpack.c.b16 %v891, %v890
      %v895 = vpack.c.b16 %v892, %v892
      %v898 = vsel %vm644, %v874, 0
      %v900 = vsel %vm644, %v876, 0
      %v903 = vsel %vm649, %v895, 0
      %905 = vmatpush.bf16.msra.mxu0 0
      %906 = vmatpush.bf16.msra.mxu0 0
      %907 = vmatpush.bf16.msra.mxu0 0
      %908 = vmatpush.bf16.msra.mxu0 0
      %909 = vmatpush.bf16.msra.mxu0 0
      %910 = vmatpush.bf16.msra.mxu0 %v903
      %911 = vmatpush.bf16.msra.mxu0 %v894
      %912 = vmatpush.bf16.msra.mxu0 %v893
      %913 = vmatmul.bf16.gmra.mxu0 %v898
      %v914 = vpop.f32.mrf.mxu0
      %v915 = vadd.f32 0.0, %v914
      %v916 = vpop.f32.mrf.mxu0
      %v917 = vadd.f32 0.0, %v916
      %918 = vmatmul.bf16.gmra.mxu0 %v900
      %v919 = vpop.f32.mrf.mxu0
      %v920 = vadd.f32 0.0, %v919
      %v921 = vpop.f32.mrf.mxu0
      %v922 = vadd.f32 0.0, %v921
      %923 = vdwg.mxu0
      %v924 = vadd.f32 %v704, %v915
      %v925 = vadd.f32 %v706, %v917
      %v926 = vadd.f32 %v709, %v920
      %v927 = vadd.f32 %v711, %v922
      %v928 = vld [vmem:[%s264] sm:$0x1]
      %v930 = vperm.slane %v928, 0
      %v932 = vmul.f32 %v924, %v930
      %v933 = vmul.f32 %v925, %v930
      %v934 = vmul.f32 %v926, %v930
      %v935 = vmul.f32 %v927, %v930
      %v936 = vld [vmem:[%s267] sm:$0x1]
      %v938 = vperm.slane %v936, 0
      %v940 = vadd.f32 %v932, %v938
      %v941 = vadd.f32 %v933, %v938
      %v942 = vadd.f32 %v934, %v938
      %v943 = vadd.f32 %v935, %v938
      %v944 = vmax.f32 %v940, 0.0
      %v945 = vmax.f32 %v941, 0.0
      %v946 = vmax.f32 %v942, 0.0
      %v947 = vmax.f32 %v943, 0.0
      %v948 = vpack.c.bf16 %v944, %v944
      %v949 = vpack.c.bf16 %v945, %v945
      %v950 = vpack.c.bf16 %v946, %v946
      %v951 = vpack.c.bf16 %v947, %v947
      %vm952 = vcmask 60416
      %953 = vst.msk [vmem:[%s279] sm:$0xf] %vm952, %v948
      %954 = vst.msk [vmem:[%s279 + $0x4] sm:$0xf] %vm952, %v949
      %955 = vst.msk [vmem:[%s279 + $0x8] sm:$0xf] %vm952, %v950
      %956 = vst.msk [vmem:[%s279 + $0xc] sm:$0xf] %vm952, %v951
      %p957 = scmp.lt.s32.totalorder %s21, 1
      %s958 = scalar_select %p957, %s21, 1
      %p959 = scmp.lt.s32.totalorder %s22, 3
      %s960 = scalar_select %p959, %s22, 3
      %p961 = scmp.lt.s32.totalorder %s20, 0
      %s962 = scalar_select %p961, %s20, 0
      %s963 = smul.addr %s960, 4
      %s964 = sadd.s32 %s962, %s963
      %s965 = smul.addr %s958, 16
      %s966 = sadd.s32 %s964, %s965
      %s967 = smul.addr %s966, 4
      %s968 = scalar_lea.vmem %s4, %s967
      // Predicated region
      $region37: #{ae_forward.15} parent=35 // pred_check
        %p969 = pneg %p160
      $region38: #{ae_forward.15} parent=35 // pred_check_branch
        %971 = sbr.rel (%p969) target = $region40
      $region39: #{ae_forward.15} parent=35 // pred_region
        _
      $region40: #{ae_forward.15} parent=35 // pred_fallthru
        _
    $region36: #{ae_forward.15} parent=5 // pred_fallthru
      _
    %p972 = scmp.le.s32.totalorder 2, %s10
    // Predicated region
    $region41: #{ae_forward.15} parent=5 // pred_check
      %p973 = pneg %p972
    $region42: #{ae_forward.15} parent=5 // pred_check_branch
      %975 = sbr.rel (%p973) target = $region44
    $region43: #{ae_forward.15} parent=5 // pred_region
      %s976 = ssub.s32 %s10, 2
      // Predicated region
      $region45: #{ae_forward.15} parent=43 // pred_check
        %p977 = pneg %p166
      $region46: #{ae_forward.15} parent=43 // pred_check_branch
        %979 = sbr.rel (%p977) target = $region48
      $region47: #{ae_forward.15} parent=43 // pred_region
        %p980 = scmp.lt.s32.totalorder %s24, 1
        %s981 = scalar_select %p980, %s24, 1
        %p982 = scmp.lt.s32.totalorder %s25, 3
        %s983 = scalar_select %p982, %s25, 3
        %p984 = scmp.lt.s32.totalorder %s23, 0
        %s985 = scalar_select %p984, %s23, 0
        %s986 = smul.addr %s983, 4
        %s987 = sadd.s32 %s985, %s986
        %s988 = smul.addr %s981, 16
        %s989 = sadd.s32 %s987, %s988
        %s990 = smul.addr %s989, 4
        %s991 = scalar_lea.vmem %s4, %s990
      $region48: #{ae_forward.15} parent=43 // pred_fallthru
        _
    $region44: #{ae_forward.15} parent=5 // pred_fallthru
      _
  $region6: #{ae_forward.15} parent=0 // loop_footer
    %s14 = sadd.s32 1, %s10
  $region7: #{ae_forward.15} parent=0 // loop_footer_branch
    %9 = sbr.rel target = $region3
  $region8: #{ae_forward.15} parent=0 // loop_exit
    _

// kernel: ae_forward.17
$region0: #{ae_forward.17}
  #allocation0 [shape = 'u32[]', space=smem, size = 0x4, offset = 0x4, fixed_abs, tag = 'smem constant byte address 0x4 - core index']
  #allocation1 [shape = 'u32[72,128]{1,0:T(1,128)}', space=vmem, size = 0x9000, scoped, tag = 'internal scratch']
  %s0 = inlined_call_operand.vmem [shape: bf16[4,4,4,2,8], index: 0, kind: input, shape index: {}]
  %s1 = inlined_call_operand.vmem [shape: bf16[4,2,2,8], index: 1, kind: output, shape index: {}]
  %s2 = sld [smem:[#allocation0]]
  $region37: #{ae_forward.17} parent=0
    _
  %s4 = ssub.s32 1, %s2
  %s5 = scalar_select 0, %s4, %s2
  loop: start=0, step=1, limit=6
  $region2: #{ae_forward.17} parent=0 // loop_pre_header
    _
  $region3: #{ae_forward.17} parent=0 // loop_header
    %s7 = sphi 0, %s11
    %p8 = scmp.ge.s32.totalorder %s7, 6
    %s17 = sphi 0, %s19
    %s20 = sphi 0, %s17
    %s21 = sphi 0, %s20
    %s37 = sphi 0, %s21
    %s43 = sphi 0, %s45
    %s46 = sphi 0, %s43
    %s47 = sphi 0, %s46
    %s63 = sphi 0, %s47
  $region4: #{ae_forward.17} parent=0 // loop_header_branch
    %10 = sbr.rel (%p8) target = $region8
  $region5: #{ae_forward.17} parent=0 // loop_body
    %s12 = ssub.s32 %s7, 1
    %s13 = ssub.s32 %s7, 2
    %s14 = sadd.s32 %s7, 1
    %s15 = ssub.s32 %s7, %s14
    %p16 = scmp.eq.s32.totalorder %s15, 0
    %s18 = sadd.s32 %s17, 1
    %s19 = scalar_select %p16, %s17, %s18
    %p22 = pneg %p16
    %p23 = scmp.eq.s32.totalorder %s7, 3
    %p24 = por %p22, %p23
    %p25 = scmp.ne.s32.totalorder %s17, %s20
    %p26 = scmp.eq.s32.totalorder %s7, 0
    %p27 = por %p25, %p26
    %p28 = scmp.ne.s32.totalorder %s17, %s20
    %p29 = scmp.eq.s32.totalorder %s12, 3
    %p30 = por %p28, %p29
    %p31 = scmp.ne.s32.totalorder %s20, %s21
    %p32 = scmp.eq.s32.totalorder %s12, 0
    %p33 = por %p31, %p32
    %p34 = scmp.ne.s32.totalorder %s20, %s21
    %p35 = scmp.eq.s32.totalorder %s13, 3
    %p36 = por %p34, %p35
    %p38 = scmp.ne.s32.totalorder %s21, %s37
    %p39 = scmp.eq.s32.totalorder %s13, 0
    %p40 = por %p38, %p39
    %s41 = ssub.s32 %s7, %s14
    %p42 = scmp.eq.s32.totalorder %s41, 0
    %s44 = sadd.s32 %s43, 1
    %s45 = scalar_select %p42, %s43, %s44
    %p48 = pneg %p42
    %p49 = scmp.eq.s32.totalorder %s7, 3
    %p50 = por %p48, %p49
    %p51 = scmp.ne.s32.totalorder %s43, %s46
    %p52 = scmp.eq.s32.totalorder %s7, 0
    %p53 = por %p51, %p52
    %p54 = scmp.ne.s32.totalorder %s43, %s46
    %p55 = scmp.eq.s32.totalorder %s12, 3
    %p56 = por %p54, %p55
    %p57 = scmp.ne.s32.totalorder %s46, %s47
    %p58 = scmp.eq.s32.totalorder %s12, 0
    %p59 = por %p57, %p58
    %p60 = scmp.ne.s32.totalorder %s46, %s47
    %p61 = scmp.eq.s32.totalorder %s13, 3
    %p62 = por %p60, %p61
    %p64 = scmp.ne.s32.totalorder %s47, %s63
    %p65 = scmp.eq.s32.totalorder %s13, 0
    %p66 = por %p64, %p65
    %p67 = scmp.le.s32.totalorder 1, %s7
    %p68 = scmp.lt.s32.totalorder %s7, 5
    %p69 = pnand %p67, %p68
    %p70 = pneg %p69
    // Predicated region
    $region9: #{ae_forward.17} parent=5 // pred_check
      _
    $region10: #{ae_forward.17} parent=5 // pred_check_branch
      %72 = sbr.rel (%p69) target = $region12
    $region11: #{ae_forward.17} parent=5 // pred_region
      %s73 = ssub.s32 %s7, 1
    $region12: #{ae_forward.17} parent=5 // pred_fallthru
      _
    %p74 = scmp.lt.s32.totalorder %s7, 4
    // Predicated region
    $region13: #{ae_forward.17} parent=5 // pred_check
      %p75 = pneg %p74
    $region14: #{ae_forward.17} parent=5 // pred_check_branch
      %77 = sbr.rel (%p75) target = $region16
    $region15: #{ae_forward.17} parent=5 // pred_region
      // Predicated region
      $region17: #{ae_forward.17} parent=15 // pred_check
        %p78 = pneg %p27
      $region18: #{ae_forward.17} parent=15 // pred_check_branch
        %80 = sbr.rel (%p78) target = $region20
      $region19: #{ae_forward.17} parent=15 // pred_region
        %p81 = scmp.lt.s32.totalorder %s7, 3
        %s82 = scalar_select %p81, %s7, 3
        %s83 = smul.addr %s82, 16
        %s84 = scalar_lea.vmem %s0, %s83
      $region20: #{ae_forward.17} parent=15 // pred_fallthru
        _
    $region16: #{ae_forward.17} parent=5 // pred_fallthru
      _
    %p85 = scmp.le.s32.totalorder 1, %s7
    %p86 = scmp.lt.s32.totalorder %s7, 5
    %p87 = pnand %p85, %p86
    %p88 = pneg %p87
    // Predicated region
    $region21: #{ae_forward.17} parent=5 // pred_check
      _
    $region22: #{ae_forward.17} parent=5 // pred_check_branch
      %90 = sbr.rel (%p87) target = $region24
    $region23: #{ae_forward.17} parent=5 // pred_region
      %s91 = ssub.s32 %s7, 1
      %p92 = scmp.lt.s32.totalorder %s12, 3
      %s93 = scalar_select %p92, %s12, 3
      %s94 = smul.addr %s93, 16
      %s95 = scalar_lea.vmem %s0, %s94
      %p96 = pneg %p33
      %p97 = pneg %p30
      %p98 = pneg %p59
      %p99 = pneg %p56
      %p100 = scmp.lt.s32.totalorder %s12, 3
      %s101 = scalar_select %p100, %s12, 3
      %s102 = smul.addr %s101, 2
      %s103 = scalar_lea.vmem %s1, %s102
      %p104 = scmp.lt.s32.totalorder %s12, 3
      %s105 = scalar_select %p104, %s12, 3
      %s106 = smul.addr %s105, 16
      %s107 = scalar_lea.vmem %s0, %s106
      %p108 = scmp.lt.s32.totalorder %s12, 3
      %s109 = scalar_select %p108, %s12, 3
      %s110 = smul.addr %s109, 2
      %s111 = scalar_lea.vmem %s1, %s110
      %v112 = vld [vmem:[%s107] sm:$0x1]
      %v113 = vld [vmem:[%s107 + $0x1] sm:$0x1]
      %v114 = vld [vmem:[%s107 + $0x2] sm:$0x1]
      %v115 = vld [vmem:[%s107 + $0x3] sm:$0x1]
      %v116 = vld [vmem:[%s107 + $0x4] sm:$0x1]
      %v117 = vld [vmem:[%s107 + $0x5] sm:$0x1]
      %v118 = vld [vmem:[%s107 + $0x6] sm:$0x1]
      %v119 = vld [vmem:[%s107 + $0x7] sm:$0x1]
      %v120 = vld [vmem:[%s107 + $0x8] sm:$0x1]
      %v121 = vld [vmem:[%s107 + $0x9] sm:$0x1]
      %v122 = vld [vmem:[%s107 + $0xa] sm:$0x1]
      %v123 = vld [vmem:[%s107 + $0xb] sm:$0x1]
      %v124 = vld [vmem:[%s107 + $0xc] sm:$0x1]
      %v125 = vld [vmem:[%s107 + $0xd] sm:$0x1]
      %v126 = vld [vmem:[%s107 + $0xe] sm:$0x1]
      %v127 = vld [vmem:[%s107 + $0xf] sm:$0x1]
      %v128 = vunpack.c.l.bf16 %v112
      %v129 = vunpack.c.l.bf16 %v113
      %v130 = vunpack.c.l.bf16 %v114
      %v131 = vunpack.c.l.bf16 %v115
      %v132 = vunpack.c.l.bf16 %v116
      %v133 = vunpack.c.l.bf16 %v117
      %v134 = vunpack.c.l.bf16 %v118
      %v135 = vunpack.c.l.bf16 %v119
      %v136 = vunpack.c.l.bf16 %v120
      %v137 = vunpack.c.l.bf16 %v121
      %v138 = vunpack.c.l.bf16 %v122
      %v139 = vunpack.c.l.bf16 %v123
      %v140 = vunpack.c.l.bf16 %v124
      %v141 = vunpack.c.l.bf16 %v125
      %v142 = vunpack.c.l.bf16 %v126
      %v143 = vunpack.c.l.bf16 %v127
      %v160 = vrot.slane %v128, 7
      %v161 = vrot.slane %v160, 2
      %v162 = vrot.slane %v129, 7
      %v163 = vrot.slane %v162, 2
      %v164 = vrot.slane %v130, 7
      %v165 = vrot.slane %v164, 2
      %v166 = vrot.slane %v131, 7
      %v167 = vrot.slane %v166, 2
      %v168 = vrot.slane %v132, 7
      %v169 = vrot.slane %v168, 2
      %v170 = vrot.slane %v133, 7
      %v171 = vrot.slane %v170, 2
      %v172 = vrot.slane %v134, 7
      %v173 = vrot.slane %v172, 2
      %v174 = vrot.slane %v135, 7
      %v175 = vrot.slane %v174, 2
      %v176 = vrot.slane %v136, 7
      %v177 = vrot.slane %v176, 2
      %v178 = vrot.slane %v137, 7
      %v179 = vrot.slane %v178, 2
      %v180 = vrot.slane %v138, 7
      %v181 = vrot.slane %v180, 2
      %v182 = vrot.slane %v139, 7
      %v183 = vrot.slane %v182, 2
      %v184 = vrot.slane %v140, 7
      %v185 = vrot.slane %v184, 2
      %v186 = vrot.slane %v141, 7
      %v187 = vrot.slane %v186, 2
      %v188 = vrot.slane %v142, 7
      %v189 = vrot.slane %v188, 2
      %v190 = vrot.slane %v143, 7
      %v191 = vrot.slane %v190, 2
      %v208 = vmax.f32 %v128, %v161
      %v209 = vmax.f32 %v129, %v163
      %v210 = vmax.f32 %v130, %v165
      %v211 = vmax.f32 %v131, %v167
      %v212 = vmax.f32 %v132, %v169
      %v213 = vmax.f32 %v133, %v171
      %v214 = vmax.f32 %v134, %v173
      %v215 = vmax.f32 %v135, %v175
      %v216 = vmax.f32 %v136, %v177
      %v217 = vmax.f32 %v137, %v179
      %v218 = vmax.f32 %v138, %v181
      %v219 = vmax.f32 %v139, %v183
      %v220 = vmax.f32 %v140, %v185
      %v221 = vmax.f32 %v141, %v187
      %v222 = vmax.f32 %v142, %v189
      %v223 = vmax.f32 %v143, %v191
      %v224 = vpack.c.bf16 %v208, %v208
      %v225 = vpack.c.bf16 %v209, %v209
      %v226 = vpack.c.bf16 %v210, %v210
      %v227 = vpack.c.bf16 %v211, %v211
      %v228 = vpack.c.bf16 %v212, %v212
      %v229 = vpack.c.bf16 %v213, %v213
      %v230 = vpack.c.bf16 %v214, %v214
      %v231 = vpack.c.bf16 %v215, %v215
      %v232 = vpack.c.bf16 %v216, %v216
      %v233 = vpack.c.bf16 %v217, %v217
      %v234 = vpack.c.bf16 %v218, %v218
      %v235 = vpack.c.bf16 %v219, %v219
      %v236 = vpack.c.bf16 %v220, %v220
      %v237 = vpack.c.bf16 %v221, %v221
      %v238 = vpack.c.bf16 %v222, %v222
      %v239 = vpack.c.bf16 %v223, %v223
      %v240 = vunpack.c.l.bf16 %v224
      %v241 = vunpack.c.l.bf16 %v225
      %v242 = vunpack.c.l.bf16 %v228
      %v243 = vunpack.c.l.bf16 %v229
      %v244 = vunpack.c.l.bf16 %v232
      %v245 = vunpack.c.l.bf16 %v233
      %v246 = vunpack.c.l.bf16 %v236
      %v247 = vunpack.c.l.bf16 %v237
      %v248 = vunpack.c.l.bf16 %v226
      %v249 = vunpack.c.l.bf16 %v227
      %v250 = vunpack.c.l.bf16 %v230
      %v251 = vunpack.c.l.bf16 %v231
      %v252 = vunpack.c.l.bf16 %v234
      %v253 = vunpack.c.l.bf16 %v235
      %v254 = vunpack.c.l.bf16 %v238
      %v255 = vunpack.c.l.bf16 %v239
      %v256 = vmax.f32 %v240, %v248
      %v257 = vmax.f32 %v241, %v249
      %v258 = vmax.f32 %v242, %v250
      %v259 = vmax.f32 %v243, %v251
      %v260 = vmax.f32 %v244, %v252
      %v261 = vmax.f32 %v245, %v253
      %v262 = vmax.f32 %v246, %v254
      %v263 = vmax.f32 %v247, %v255
      %v264 = vpack.c.bf16 %v256, %v256
      %v265 = vpack.c.bf16 %v257, %v257
      %v266 = vpack.c.bf16 %v258, %v258
      %v267 = vpack.c.bf16 %v259, %v259
      %v268 = vpack.c.bf16 %v260, %v260
      %v269 = vpack.c.bf16 %v261, %v261
      %v270 = vpack.c.bf16 %v262, %v262
      %v271 = vpack.c.bf16 %v263, %v263
      %v272 = vunpack.c.l.bf16 %v264
      %v273 = vunpack.c.l.bf16 %v265
      %v274 = vunpack.c.l.bf16 %v266
      %v275 = vunpack.c.l.bf16 %v267
      %v276 = vunpack.c.l.bf16 %v268
      %v277 = vunpack.c.l.bf16 %v269
      %v278 = vunpack.c.l.bf16 %v270
      %v279 = vunpack.c.l.bf16 %v271
      %v280 = vmax.f32 %v272, %v276
      %v281 = vmax.f32 %v273, %v277
      %v282 = vmax.f32 %v274, %v278
      %v283 = vmax.f32 %v275, %v279
      %v284 = vpack.c.bf16 %v280, %v280
      %v285 = vpack.c.bf16 %v281, %v281
      %v286 = vpack.c.bf16 %v282, %v282
      %v287 = vpack.c.bf16 %v283, %v283
      %v292 = vrot.slane %v284, 3
      %v293 = vrot.slane %v285, 3
      %v294 = vrot.slane %v286, 3
      %v295 = vrot.slane %v287, 3
      %vm296 = vcmask 1040384
      %v299 = vsel %vm296, %v284, %v292
      %v302 = vsel %vm296, %v285, %v293
      %v305 = vsel %vm296, %v286, %v294
      %v308 = vsel %vm296, %v287, %v295
      %309 = vst [vmem:[#allocation1] ss:$4 sm:$0xff] %v299
      %v310 = vld [vmem:[#allocation1] sm:$0xff]
      %s312 = scalar_lea.vmem [#allocation1], 32
      %313 = vst [vmem:[%s312] ss:$4 sm:$0xff] %v302
      %v314 = vld [vmem:[#allocation1 + $0x20] sm:$0xff]
      %316 = vst [vmem:[#allocation1] ss:$4 sm:$0xff] %v305
      %v317 = vld [vmem:[#allocation1] sm:$0xff]
      %319 = vst [vmem:[%s312] ss:$4 sm:$0xff] %v308
      %v320 = vld [vmem:[#allocation1 + $0x20] sm:$0xff]
      %v322 = vunpack.c.l.b16 %v310
      %v323 = vunpack.c.l.b16 %v314
      %v324 = vunpack.c.l.b16 %v317
      %v325 = vunpack.c.l.b16 %v320
      %v326 = vrot.slane %v323, 7
      %vm327 = vcmask 1041409
      %v328 = vsel %vm327, %v326, %v322
      %v329 = vrot.slane %v325, 7
      %v330 = vsel %vm327, %v329, %v324
      %v331 = vpack.c.b16 %v328, %v328
      %v332 = vpack.c.b16 %v330, %v330
      %v333 = vrot.slane %v331, 3
      %v334 = vrot.slane %v332, 3
      %v337 = vsel %vm296, %v331, %v333
      %v340 = vsel %vm296, %v332, %v334
      %vm343 = vcmask 57344
      %344 = vst.msk [vmem:[%s111] sm:$0x1] %vm343, %v337
      %345 = vst.msk [vmem:[%s111 + $0x1] sm:$0x1] %vm343, %v340
      %p346 = scmp.lt.s32.totalorder %s12, 3
      %s347 = scalar_select %p346, %s12, 3
      %s348 = smul.addr %s347, 2
      %s349 = scalar_lea.vmem %s1, %s348
      // Predicated region
      $region25: #{ae_forward.17} parent=23 // pred_check
        %p350 = pneg %p56
      $region26: #{ae_forward.17} parent=23 // pred_check_branch
        %352 = sbr.rel (%p350) target = $region28
      $region27: #{ae_forward.17} parent=23 // pred_region
        _
      $region28: #{ae_forward.17} parent=23 // pred_fallthru
        _
    $region24: #{ae_forward.17} parent=5 // pred_fallthru
      _
    %p353 = scmp.le.s32.totalorder 2, %s7
    // Predicated region
    $region29: #{ae_forward.17} parent=5 // pred_check
      %p354 = pneg %p353
    $region30: #{ae_forward.17} parent=5 // pred_check_branch
      %356 = sbr.rel (%p354) target = $region32
    $region31: #{ae_forward.17} parent=5 // pred_region
      %s357 = ssub.s32 %s7, 2
      // Predicated region
      $region33: #{ae_forward.17} parent=31 // pred_check
        %p358 = pneg %p62
      $region34: #{ae_forward.17} parent=31 // pred_check_branch
        %360 = sbr.rel (%p358) target = $region36
      $region35: #{ae_forward.17} parent=31 // pred_region
        %p361 = scmp.lt.s32.totalorder %s13, 3
        %s362 = scalar_select %p361, %s13, 3
        %s363 = smul.addr %s362, 2
        %s364 = scalar_lea.vmem %s1, %s363
      $region36: #{ae_forward.17} parent=31 // pred_fallthru
        _
    $region32: #{ae_forward.17} parent=5 // pred_fallthru
      _
  $region6: #{ae_forward.17} parent=0 // loop_footer
    %s11 = sadd.s32 1, %s7
  $region7: #{ae_forward.17} parent=0 // loop_footer_branch
    %6 = sbr.rel target = $region3
  $region8: #{ae_forward.17} parent=0 // loop_exit
    _

// kernel: ae_forward.16
$region0: #{ae_forward.16}
  #allocation0 [shape = 'u32[]', space=smem, size = 0x4, offset = 0x4, fixed_abs, tag = 'smem constant byte address 0x4 - core index']
  #allocation1 [shape = 'u32[72,128]{1,0:T(1,128)}', space=vmem, size = 0x9000, scoped, tag = 'internal scratch']
  %s0 = inlined_call_operand.vmem [shape: bf16[2,6,56,8], index: 0, kind: input, shape index: {}]
  %s1 = inlined_call_operand.vmem [shape: bf16[3,72,8], index: 1, kind: input, shape index: {}]
  %s2 = inlined_call_operand.vmem [shape: f32[1,8], index: 2, kind: input, shape index: {}]
  %s3 = inlined_call_operand.vmem [shape: f32[1,8], index: 3, kind: input, shape index: {}]
  %s4 = inlined_call_operand.vmem [shape: bf16[2,4,32,8], index: 4, kind: output, shape index: {}]
  %s5 = sld [smem:[#allocation0]]
  $region49: #{ae_forward.16} parent=0
    _
  %s7 = ssub.s32 1, %s5
  %s8 = scalar_select 0, %s7, %s5
  loop: start=0, step=1, limit=10
  $region2: #{ae_forward.16} parent=0 // loop_pre_header
    _
  $region3: #{ae_forward.16} parent=0 // loop_header
    %s10 = sphi 0, %s14
    %p11 = scmp.ge.s32.totalorder %s10, 10
    %s17 = sphi 0, %s36
    %s18 = sphi 0, %s32
    %s19 = sphi 0, %s28
    %s20 = sphi 0, %s17
    %s21 = sphi 0, %s18
    %s22 = sphi 0, %s19
    %s23 = sphi 0, %s20
    %s24 = sphi 0, %s21
    %s25 = sphi 0, %s22
    %s39 = sphi 0, %s41
    %s42 = sphi 0, %s39
    %s43 = sphi 0, %s42
    %s59 = sphi 0, %s43
    %s65 = sphi 0, %s67
    %s68 = sphi 0, %s65
    %s69 = sphi 0, %s68
    %s85 = sphi 0, %s69
    %s91 = sphi 0, %s93
    %s94 = sphi 0, %s91
    %s95 = sphi 0, %s94
    %s111 = sphi 0, %s95
    %s117 = sphi 0, %s119
    %s120 = sphi 0, %s117
    %s121 = sphi 0, %s120
    %s137 = sphi 0, %s121
    %s147 = sphi 0, %s149
    %s150 = sphi 0, %s147
    %s151 = sphi 0, %s150
    %s167 = sphi 0, %s151
  $region4: #{ae_forward.16} parent=0 // loop_header_branch
    %13 = sbr.rel (%p11) target = $region8
  $region5: #{ae_forward.16} parent=0 // loop_body
    %s15 = ssub.s32 %s10, 1
    %s16 = ssub.s32 %s10, 2
    %s26 = sadd.s32 1, %s19
    %p27 = scmp.ge.s32.totalorder %s26, 4
    %s28 = scalar_select %p27, 0, %s26
    %s29 = sadd.s32 1, %s18
    %s30 = scalar_select %p27, %s29, %s18
    %p31 = scmp.ge.s32.totalorder %s30, 2
    %s32 = scalar_select %p31, 0, %s30
    %s33 = sadd.s32 1, %s17
    %s34 = scalar_select %p31, %s33, %s17
    %p35 = scmp.ge.s32.totalorder %s34, 1
    %s36 = scalar_select %p35, 0, %s34
    %s37 = ssub.s32 %s18, %s32
    %p38 = scmp.eq.s32.totalorder %s37, 0
    %s40 = sadd.s32 %s39, 1
    %s41 = scalar_select %p38, %s39, %s40
    %p44 = pneg %p38
    %p45 = scmp.eq.s32.totalorder %s10, 7
    %p46 = por %p44, %p45
    %p47 = scmp.ne.s32.totalorder %s39, %s42
    %p48 = scmp.eq.s32.totalorder %s10, 0
    %p49 = por %p47, %p48
    %p50 = scmp.ne.s32.totalorder %s39, %s42
    %p51 = scmp.eq.s32.totalorder %s15, 7
    %p52 = por %p50, %p51
    %p53 = scmp.ne.s32.totalorder %s42, %s43
    %p54 = scmp.eq.s32.totalorder %s15, 0
    %p55 = por %p53, %p54
    %p56 = scmp.ne.s32.totalorder %s42, %s43
    %p57 = scmp.eq.s32.totalorder %s16, 7
    %p58 = por %p56, %p57
    %p60 = scmp.ne.s32.totalorder %s43, %s59
    %p61 = scmp.eq.s32.totalorder %s16, 0
    %p62 = por %p60, %p61
    %s63 = ssub.s32 %s17, %s36
    %p64 = scmp.eq.s32.totalorder %s63, 0
    %s66 = sadd.s32 %s65, 1
    %s67 = scalar_select %p64, %s65, %s66
    %p70 = pneg %p64
    %p71 = scmp.eq.s32.totalorder %s10, 7
    %p72 = por %p70, %p71
    %p73 = scmp.ne.s32.totalorder %s65, %s68
    %p74 = scmp.eq.s32.totalorder %s10, 0
    %p75 = por %p73, %p74
    %p76 = scmp.ne.s32.totalorder %s65, %s68
    %p77 = scmp.eq.s32.totalorder %s15, 7
    %p78 = por %p76, %p77
    %p79 = scmp.ne.s32.totalorder %s68, %s69
    %p80 = scmp.eq.s32.totalorder %s15, 0
    %p81 = por %p79, %p80
    %p82 = scmp.ne.s32.totalorder %s68, %s69
    %p83 = scmp.eq.s32.totalorder %s16, 7
    %p84 = por %p82, %p83
    %p86 = scmp.ne.s32.totalorder %s69, %s85
    %p87 = scmp.eq.s32.totalorder %s16, 0
    %p88 = por %p86, %p87
    %s89 = ssub.s32 %s17, %s36
    %p90 = scmp.eq.s32.totalorder %s89, 0
    %s92 = sadd.s32 %s91, 1
    %s93 = scalar_select %p90, %s91, %s92
    %p96 = pneg %p90
    %p97 = scmp.eq.s32.totalorder %s10, 7
    %p98 = por %p96, %p97
    %p99 = scmp.ne.s32.totalorder %s91, %s94
    %p100 = scmp.eq.s32.totalorder %s10, 0
    %p101 = por %p99, %p100
    %p102 = scmp.ne.s32.totalorder %s91, %s94
    %p103 = scmp.eq.s32.totalorder %s15, 7
    %p104 = por %p102, %p103
    %p105 = scmp.ne.s32.totalorder %s94, %s95
    %p106 = scmp.eq.s32.totalorder %s15, 0
    %p107 = por %p105, %p106
    %p108 = scmp.ne.s32.totalorder %s94, %s95
    %p109 = scmp.eq.s32.totalorder %s16, 7
    %p110 = por %p108, %p109
    %p112 = scmp.ne.s32.totalorder %s95, %s111
    %p113 = scmp.eq.s32.totalorder %s16, 0
    %p114 = por %p112, %p113
    %s115 = ssub.s32 %s17, %s36
    %p116 = scmp.eq.s32.totalorder %s115, 0
    %s118 = sadd.s32 %s117, 1
    %s119 = scalar_select %p116, %s117, %s118
    %p122 = pneg %p116
    %p123 = scmp.eq.s32.totalorder %s10, 7
    %p124 = por %p122, %p123
    %p125 = scmp.ne.s32.totalorder %s117, %s120
    %p126 = scmp.eq.s32.totalorder %s10, 0
    %p127 = por %p125, %p126
    %p128 = scmp.ne.s32.totalorder %s117, %s120
    %p129 = scmp.eq.s32.totalorder %s15, 7
    %p130 = por %p128, %p129
    %p131 = scmp.ne.s32.totalorder %s120, %s121
    %p132 = scmp.eq.s32.totalorder %s15, 0
    %p133 = por %p131, %p132
    %p134 = scmp.ne.s32.totalorder %s120, %s121
    %p135 = scmp.eq.s32.totalorder %s16, 7
    %p136 = por %p134, %p135
    %p138 = scmp.ne.s32.totalorder %s121, %s137
    %p139 = scmp.eq.s32.totalorder %s16, 0
    %p140 = por %p138, %p139
    %s141 = ssub.s32 %s18, %s32
    %s142 = ssub.s32 %s19, %s28
    %s143 = sor.u32 %s141, %s142
    %s144 = ssub.s32 %s17, %s36
    %s145 = sor.u32 %s143, %s144
    %p146 = scmp.eq.s32.totalorder %s145, 0
    %s148 = sadd.s32 %s147, 1
    %s149 = scalar_select %p146, %s147, %s148
    %p152 = pneg %p146
    %p153 = scmp.eq.s32.totalorder %s10, 7
    %p154 = por %p152, %p153
    %p155 = scmp.ne.s32.totalorder %s147, %s150
    %p156 = scmp.eq.s32.totalorder %s10, 0
    %p157 = por %p155, %p156
    %p158 = scmp.ne.s32.totalorder %s147, %s150
    %p159 = scmp.eq.s32.totalorder %s15, 7
    %p160 = por %p158, %p159
    %p161 = scmp.ne.s32.totalorder %s150, %s151
    %p162 = scmp.eq.s32.totalorder %s15, 0
    %p163 = por %p161, %p162
    %p164 = scmp.ne.s32.totalorder %s150, %s151
    %p165 = scmp.eq.s32.totalorder %s16, 7
    %p166 = por %p164, %p165
    %p168 = scmp.ne.s32.totalorder %s151, %s167
    %p169 = scmp.eq.s32.totalorder %s16, 0
    %p170 = por %p168, %p169
    %p171 = scmp.le.s32.totalorder 1, %s10
    %p172 = scmp.lt.s32.totalorder %s10, 9
    %p173 = pnand %p171, %p172
    %p174 = pneg %p173
    // Predicated region
    $region9: #{ae_forward.16} parent=5 // pred_check
      _
    $region10: #{ae_forward.16} parent=5 // pred_check_branch
      %176 = sbr.rel (%p173) target = $region12
    $region11: #{ae_forward.16} parent=5 // pred_region
      %s177 = ssub.s32 %s10, 1
      // Predicated region
      $region13: #{ae_forward.16} parent=11 // pred_check
        %p178 = pneg %p81
      $region14: #{ae_forward.16} parent=11 // pred_check_branch
        %180 = sbr.rel (%p178) target = $region16
      $region15: #{ae_forward.16} parent=11 // pred_region
        %p181 = scmp.lt.s32.totalorder %s20, 0
        %s182 = scalar_select %p181, %s20, 0
        %s183 = smul.addr %s182, 4
        %s184 = scalar_lea.vmem %s1, %s183
      $region16: #{ae_forward.16} parent=11 // pred_fallthru
        _
      // Predicated region
      $region17: #{ae_forward.16} parent=11 // pred_check
        %p185 = pneg %p107
      $region18: #{ae_forward.16} parent=11 // pred_check_branch
        %187 = sbr.rel (%p185) target = $region20
      $region19: #{ae_forward.16} parent=11 // pred_region
        %p188 = scmp.lt.s32.totalorder %s20, 0
        %s189 = scalar_select %p188, %s20, 0
        %s190 = scalar_lea.vmem %s2, %s189
      $region20: #{ae_forward.16} parent=11 // pred_fallthru
        _
      // Predicated region
      $region21: #{ae_forward.16} parent=11 // pred_check
        %p191 = pneg %p133
      $region22: #{ae_forward.16} parent=11 // pred_check_branch
        %193 = sbr.rel (%p191) target = $region24
      $region23: #{ae_forward.16} parent=11 // pred_region
        %p194 = scmp.lt.s32.totalorder %s20, 0
        %s195 = scalar_select %p194, %s20, 0
        %s196 = scalar_lea.vmem %s3, %s195
      $region24: #{ae_forward.16} parent=11 // pred_fallthru
        _
    $region12: #{ae_forward.16} parent=5 // pred_fallthru
      _
    %p197 = scmp.lt.s32.totalorder %s10, 8
    // Predicated region
    $region25: #{ae_forward.16} parent=5 // pred_check
      %p198 = pneg %p197
    $region26: #{ae_forward.16} parent=5 // pred_check_branch
      %200 = sbr.rel (%p198) target = $region28
    $region27: #{ae_forward.16} parent=5 // pred_region
      // Predicated region
      $region29: #{ae_forward.16} parent=27 // pred_check
        %p201 = pneg %p49
      $region30: #{ae_forward.16} parent=27 // pred_check_branch
        %203 = sbr.rel (%p201) target = $region32
      $region31: #{ae_forward.16} parent=27 // pred_region
        %p204 = scmp.lt.s32.totalorder %s18, 1
        %s205 = scalar_select %p204, %s18, 1
        %s206 = smul.addr %s205, 42
        %s207 = smul.addr %s206, 4
        %s208 = scalar_lea.vmem %s0, %s207
      $region32: #{ae_forward.16} parent=27 // pred_fallthru
        _
    $region28: #{ae_forward.16} parent=5 // pred_fallthru
      _
    %p209 = scmp.le.s32.totalorder 1, %s10
    %p210 = scmp.lt.s32.totalorder %s10, 9
    %p211 = pnand %p209, %p210
    %p212 = pneg %p211
    // Predicated region
    $region33: #{ae_forward.16} parent=5 // pred_check
      _
    $region34: #{ae_forward.16} parent=5 // pred_check_branch
      %214 = sbr.rel (%p211) target = $region36
    $region35: #{ae_forward.16} parent=5 // pred_region
      %s215 = ssub.s32 %s10, 1
      %p216 = scmp.lt.s32.totalorder %s21, 1
      %s217 = scalar_select %p216, %s21, 1
      %s218 = smul.addr %s217, 42
      %s219 = smul.addr %s218, 4
      %s220 = scalar_lea.vmem %s0, %s219
      %p221 = pneg %p55
      %p222 = pneg %p52
      %p223 = scmp.lt.s32.totalorder %s20, 0
      %s224 = scalar_select %p223, %s20, 0
      %s225 = smul.addr %s224, 4
      %s226 = scalar_lea.vmem %s1, %s225
      %p227 = pneg %p81
      %p228 = pneg %p78
      %p229 = scmp.lt.s32.totalorder %s20, 0
      %s230 = scalar_select %p229, %s20, 0
      %s231 = scalar_lea.vmem %s2, %s230
      %p232 = pneg %p107
      %p233 = pneg %p104
      %p234 = scmp.lt.s32.totalorder %s20, 0
      %s235 = scalar_select %p234, %s20, 0
      %s236 = scalar_lea.vmem %s3, %s235
      %p237 = pneg %p133
      %p238 = pneg %p130
      %p239 = pneg %p163
      %p240 = pneg %p160
      %p241 = scmp.lt.s32.totalorder %s21, 1
      %s242 = scalar_select %p241, %s21, 1
      %p243 = scmp.lt.s32.totalorder %s22, 3
      %s244 = scalar_select %p243, %s22, 3
      %p245 = scmp.lt.s32.totalorder %s20, 0
      %s246 = scalar_select %p245, %s20, 0
      %s247 = smul.addr %s244, 4
      %s248 = sadd.s32 %s246, %s247
      %s249 = smul.addr %s242, 16
      %s250 = sadd.s32 %s248, %s249
      %s251 = smul.addr %s250, 4
      %s252 = scalar_lea.vmem %s4, %s251
      %p253 = scmp.lt.s32.totalorder %s21, 1
      %s254 = scalar_select %p253, %s21, 1
      %s255 = smul.addr %s254, 42
      %s256 = smul.addr %s255, 4
      %s257 = scalar_lea.vmem %s0, %s256
      %p258 = scmp.lt.s32.totalorder %s20, 0
      %s259 = scalar_select %p258, %s20, 0
      %s260 = smul.addr %s259, 4
      %s261 = scalar_lea.vmem %s1, %s260
      %p262 = scmp.lt.s32.totalorder %s20, 0
      %s263 = scalar_select %p262, %s20, 0
      %s264 = scalar_lea.vmem %s2, %s263
      %p265 = scmp.lt.s32.totalorder %s20, 0
      %s266 = scalar_select %p265, %s20, 0
      %s267 = scalar_lea.vmem %s3, %s266
      %p268 = scmp.lt.s32.totalorder %s21, 1
      %s269 = scalar_select %p268, %s21, 1
      %p270 = scmp.lt.s32.totalorder %s22, 3
      %s271 = scalar_select %p270, %s22, 3
      %p272 = scmp.lt.s32.totalorder %s20, 0
      %s273 = scalar_select %p272, %s20, 0
      %s274 = smul.addr %s271, 4
      %s275 = sadd.s32 %s273, %s274
      %s276 = smul.addr %s269, 16
      %s277 = sadd.s32 %s275, %s276
      %s278 = smul.addr %s277, 4
      %s279 = scalar_lea.vmem %s4, %s278
      %s281 = smul.u32 %s22, 7
      %s282 = smul.addr %s281, 4
      %s283 = scalar_lea.vmem %s257, %s282
      %v284 = vld [vmem:[%s283] sm:$0xf]
      %v285 = vld [vmem:[%s283 + $0x4] sm:$0xf]
      %v286 = vld [vmem:[%s283 + $0x8] sm:$0xf]
      %v287 = vld [vmem:[%s283 + $0xc] sm:$0xf]
      %v288 = vld [vmem:[%s283 + $0x10] sm:$0xf]
      %v289 = vld [vmem:[%s283 + $0x14] sm:$0xf]
      %v290 = vld [vmem:[%s283 + $0x18] sm:$0xf]
      %v295 = vunpack.c.l.b16 %v284
      %v296 = vunpack.c.l.b16 %v285
      %v297 = vunpack.c.l.b16 %v286
      %v298 = vunpack.c.l.b16 %v287
      %v299 = vpack.c.b16 %v296, %v295
      %v300 = vpack.c.b16 %v298, %v297
      %v302 = vunpack.c.l.b16 %v288
      %v303 = vpack.c.b16 %v302, %v302
      %vm304 = vsmask.f32 7424
      %v306 = vshrl.u32 %v299, 16
      %v308 = vshll.u32 %v299, 16
      %v310 = vrot.slane %v308, 1
      %v311 = vor.u32 %v306, %v310
      %v313 = vshll.u32 %v300, 16
      %v315 = vrot.slane %v313, 1
      %v316 = vsel %vm304, %v311, %v315
      %v317 = vshrl.u32 %v300, 16
      %v319 = vor.u32 %v317, %v315
      %v321 = vshll.u32 %v303, 16
      %v323 = vrot.slane %v321, 1
      %v324 = vsel %vm304, %v319, %v323
      %325 = vrot.lane.b32.xlu0 %v316, 8
      %v326 = vpop.permute.xlu0 %325
      %327 = vrot.lane.b32.xlu0 %v324, 8
      %v328 = vpop.permute.xlu0 %327
      %vm329 = vcmask 1046528
      %v330 = vrot.slane %v299, 1
      %v331 = vrot.slane %v300, 1
      %v332 = vsel %vm329, %v330, %v331
      %v333 = vrot.slane %v303, 1
      %v334 = vsel %vm329, %v331, %v333
      %335 = vrot.lane.b32.xlu0 %v332, 16
      %v336 = vpop.permute.xlu0 %335
      %337 = vrot.lane.b32.xlu0 %v334, 16
      %v338 = vpop.permute.xlu0 %337
      %v339 = vpack.c.b16 %v297, %v296
      %v340 = vpack.c.b16 %v302, %v298
      %341 = vrot.lane.b32.xlu0 %v339, 24
      %v342 = vpop.permute.xlu0 %341
      %343 = vrot.lane.b32.xlu0 %v340, 24
      %v344 = vpop.permute.xlu0 %343
      %v346 = vunpack.c.l.b16 %v289
      %v347 = vpack.c.b16 %v346, %v346
      %v349 = vshrl.u32 %v339, 16
      %v351 = vshll.u32 %v339, 16
      %v353 = vrot.slane %v351, 1
      %v354 = vor.u32 %v349, %v353
      %v356 = vshll.u32 %v340, 16
      %v358 = vrot.slane %v356, 1
      %v359 = vsel %vm304, %v354, %v358
      %v360 = vshrl.u32 %v340, 16
      %v362 = vor.u32 %v360, %v358
      %v364 = vshll.u32 %v347, 16
      %v366 = vrot.slane %v364, 1
      %v367 = vsel %vm304, %v362, %v366
      %368 = vrot.lane.b32.xlu0 %v359, 32
      %v369 = vpop.permute.xlu0 %368
      %370 = vrot.lane.b32.xlu0 %v367, 32
      %v371 = vpop.permute.xlu0 %370
      %v372 = vrot.slane %v339, 1
      %v373 = vrot.slane %v340, 1
      %v374 = vsel %vm329, %v372, %v373
      %v375 = vrot.slane %v347, 1
      %v376 = vsel %vm329, %v373, %v375
      %377 = vrot.lane.b32.xlu0 %v374, 40
      %v378 = vpop.permute.xlu0 %377
      %379 = vrot.lane.b32.xlu0 %v376, 40
      %v380 = vpop.permute.xlu0 %379
      %v381 = vpack.c.b16 %v346, %v302
      %382 = vrot.lane.b32.xlu0 %v300, 48
      %v383 = vpop.permute.xlu0 %382
      %384 = vrot.lane.b32.xlu0 %v381, 48
      %v385 = vpop.permute.xlu0 %384
      %v387 = vunpack.c.l.b16 %v290
      %v388 = vpack.c.b16 %v387, %v387
      %v390 = vshll.u32 %v381, 16
      %v392 = vrot.slane %v390, 1
      %v393 = vsel %vm304, %v319, %v392
      %v394 = vshrl.u32 %v381, 16
      %v396 = vor.u32 %v394, %v392
      %v398 = vshll.u32 %v388, 16
      %v400 = vrot.slane %v398, 1
      %v401 = vsel %vm304, %v396, %v400
      %402 = vrot.lane.b32.xlu0 %v393, 56
      %v403 = vpop.permute.xlu0 %402
      %404 = vrot.lane.b32.xlu0 %v401, 56
      %v405 = vpop.permute.xlu0 %404
      %v406 = vrot.slane %v381, 1
      %v407 = vsel %vm329, %v331, %v406
      %v408 = vrot.slane %v388, 1
      %v409 = vsel %vm329, %v406, %v408
      %410 = vrot.lane.b32.xlu0 %v407, 64
      %v411 = vpop.permute.xlu0 %410
      %412 = vrot.lane.b32.xlu0 %v409, 64
      %v413 = vpop.permute.xlu0 %412
      %vm414 = vcmask 64512
      %v416 = vsel %vm414, %v299, %v326
      %v418 = vsel %vm414, %v300, %v328
      %vm419 = vcmask 130048
      %v421 = vsel %vm419, %v416, %v336
      %v423 = vsel %vm419, %v418, %v338
      %vm424 = vcmask 195584
      %v426 = vsel %vm424, %v421, %v342
      %v428 = vsel %vm424, %v423, %v344
      %vm429 = vcmask 261120
      %v431 = vsel %vm429, %v426, %v369
      %v433 = vsel %vm429, %v428, %v371
      %vm434 = vcmask 326656
      %v436 = vsel %vm434, %v431, %v378
      %v438 = vsel %vm434, %v433, %v380
      %vm439 = vcmask 392192
      %v441 = vsel %vm439, %v436, %v383
      %v443 = vsel %vm439, %v438, %v385
      %vm444 = vcmask 457728
      %v446 = vsel %vm444, %v441, %v403
      %v448 = vsel %vm444, %v443, %v405
      %vm449 = vcmask 523264
      %v451 = vsel %vm449, %v446, %v411
      %v453 = vsel %vm449, %v448, %v413
      %v454 = vld [vmem:[%s261] sm:$0xf]
      %v455 = vld [vmem:[%s261 + $0x4] sm:$0xf]
      %v456 = vld [vmem:[%s261 + $0x8] sm:$0xf]
      %v457 = vld [vmem:[%s261 + $0xc] sm:$0xf]
      %v458 = vld [vmem:[%s261 + $0x10] sm:$0xf]
      %v459 = vld [vmem:[%s261 + $0x14] sm:$0xf]
      %v460 = vld [vmem:[%s261 + $0x18] sm:$0xf]
      %v461 = vld [vmem:[%s261 + $0x1c] sm:$0xf]
      %v462 = vld [vmem:[%s261 + $0x20] sm:$0xf]
      %s463 = sadd.s32 %s22, 1
      %s464 = smul.u32 %s463, 7
      %s465 = smul.addr %s464, 4
      %s466 = scalar_lea.vmem %s257, %s465
      %v467 = vld [vmem:[%s466] sm:$0xf]
      %v468 = vld [vmem:[%s466 + $0x4] sm:$0xf]
      %v469 = vld [vmem:[%s466 + $0x8] sm:$0xf]
      %v470 = vld [vmem:[%s466 + $0xc] sm:$0xf]
      %v471 = vld [vmem:[%s466 + $0x10] sm:$0xf]
      %v472 = vld [vmem:[%s466 + $0x14] sm:$0xf]
      %v473 = vld [vmem:[%s466 + $0x18] sm:$0xf]
      %v478 = vunpack.c.l.b16 %v467
      %v479 = vunpack.c.l.b16 %v468
      %v480 = vunpack.c.l.b16 %v469
      %v481 = vunpack.c.l.b16 %v470
      %v482 = vpack.c.b16 %v479, %v478
      %v483 = vpack.c.b16 %v481, %v480
      %v485 = vunpack.c.l.b16 %v471
      %v486 = vpack.c.b16 %v485, %v485
      %v488 = vshrl.u32 %v482, 16
      %v490 = vshll.u32 %v482, 16
      %v492 = vrot.slane %v490, 1
      %v493 = vor.u32 %v488, %v492
      %v495 = vshll.u32 %v483, 16
      %v497 = vrot.slane %v495, 1
      %v498 = vsel %vm304, %v493, %v497
      %v499 = vshrl.u32 %v483, 16
      %v501 = vor.u32 %v499, %v497
      %v503 = vshll.u32 %v486, 16
      %v505 = vrot.slane %v503, 1
      %v506 = vsel %vm304, %v501, %v505
      %507 = vrot.lane.b32.xlu0 %v498, 8
      %v508 = vpop.permute.xlu0 %507
      %509 = vrot.lane.b32.xlu0 %v506, 8
      %v510 = vpop.permute.xlu0 %509
      %v511 = vrot.slane %v482, 1
      %v512 = vrot.slane %v483, 1
      %v513 = vsel %vm329, %v511, %v512
      %v514 = vrot.slane %v486, 1
      %v515 = vsel %vm329, %v512, %v514
      %516 = vrot.lane.b32.xlu0 %v513, 16
      %v517 = vpop.permute.xlu0 %516
      %518 = vrot.lane.b32.xlu0 %v515, 16
      %v519 = vpop.permute.xlu0 %518
      %v520 = vpack.c.b16 %v480, %v479
      %v521 = vpack.c.b16 %v485, %v481
      %522 = vrot.lane.b32.xlu0 %v520, 24
      %v523 = vpop.permute.xlu0 %522
      %524 = vrot.lane.b32.xlu0 %v521, 24
      %v525 = vpop.permute.xlu0 %524
      %v527 = vunpack.c.l.b16 %v472
      %v528 = vpack.c.b16 %v527, %v527
      %v530 = vshrl.u32 %v520, 16
      %v532 = vshll.u32 %v520, 16
      %v534 = vrot.slane %v532, 1
      %v535 = vor.u32 %v530, %v534
      %v537 = vshll.u32 %v521, 16
      %v539 = vrot.slane %v537, 1
      %v540 = vsel %vm304, %v535, %v539
      %v541 = vshrl.u32 %v521, 16
      %v543 = vor.u32 %v541, %v539
      %v545 = vshll.u32 %v528, 16
      %v547 = vrot.slane %v545, 1
      %v548 = vsel %vm304, %v543, %v547
      %549 = vrot.lane.b32.xlu0 %v540, 32
      %v550 = vpop.permute.xlu0 %549
      %551 = vrot.lane.b32.xlu0 %v548, 32
      %v552 = vpop.permute.xlu0 %551
      %v553 = vrot.slane %v520, 1
      %v554 = vrot.slane %v521, 1
      %v555 = vsel %vm329, %v553, %v554
      %v556 = vrot.slane %v528, 1
      %v557 = vsel %vm329, %v554, %v556
      %558 = vrot.lane.b32.xlu0 %v555, 40
      %v559 = vpop.permute.xlu0 %558
      %560 = vrot.lane.b32.xlu0 %v557, 40
      %v561 = vpop.permute.xlu0 %560
      %v562 = vpack.c.b16 %v527, %v485
      %563 = vrot.lane.b32.xlu0 %v483, 48
      %v564 = vpop.permute.xlu0 %563
      %565 = vrot.lane.b32.xlu0 %v562, 48
      %v566 = vpop.permute.xlu0 %565
      %v568 = vunpack.c.l.b16 %v473
      %v569 = vpack.c.b16 %v568, %v568
      %v571 = vshll.u32 %v562, 16
      %v573 = vrot.slane %v571, 1
      %v574 = vsel %vm304, %v501, %v573
      %v575 = vshrl.u32 %v562, 16
      %v577 = vor.u32 %v575, %v573
      %v579 = vshll.u32 %v569, 16
      %v581 = vrot.slane %v579, 1
      %v582 = vsel %vm304, %v577, %v581
      %583 = vrot.lane.b32.xlu0 %v574, 56
      %v584 = vpop.permute.xlu0 %583
      %585 = vrot.lane.b32.xlu0 %v582, 56
      %v586 = vpop.permute.xlu0 %585
      %v587 = vrot.slane %v562, 1
      %v588 = vsel %vm329, %v512, %v587
      %v589 = vrot.slane %v569, 1
      %v590 = vsel %vm329, %v587, %v589
      %591 = vrot.lane.b32.xlu0 %v588, 64
      %v592 = vpop.permute.xlu0 %591
      %593 = vrot.lane.b32.xlu0 %v590, 64
      %v594 = vpop.permute.xlu0 %593
      %v596 = vsel %vm414, %v482, %v508
      %v598 = vsel %vm414, %v483, %v510
      %v600 = vsel %vm419, %v596, %v517
      %v602 = vsel %vm419, %v598, %v519
      %v604 = vsel %vm424, %v600, %v523
      %v606 = vsel %vm424, %v602, %v525
      %v608 = vsel %vm429, %v604, %v550
      %v610 = vsel %vm429, %v606, %v552
      %v612 = vsel %vm434, %v608, %v559
      %v614 = vsel %vm434, %v610, %v561
      %v616 = vsel %vm439, %v612, %v564
      %v618 = vsel %vm439, %v614, %v566
      %v620 = vsel %vm444, %v616, %v584
      %v622 = vsel %vm444, %v618, %v586
      %v624 = vsel %vm449, %v620, %v592
      %v626 = vsel %vm449, %v622, %v594
      %s627 = scalar_lea.vmem %s261, 36
      %v628 = vld [vmem:[%s627] sm:$0xf]
      %v629 = vld [vmem:[%s627 + $0x4] sm:$0xf]
      %v630 = vld [vmem:[%s627 + $0x8] sm:$0xf]
      %v631 = vld [vmem:[%s627 + $0xc] sm:$0xf]
      %v632 = vld [vmem:[%s627 + $0x10] sm:$0xf]
      %v633 = vld [vmem:[%s627 + $0x14] sm:$0xf]
      %v634 = vld [vmem:[%s627 + $0x18] sm:$0xf]
      %v635 = vld [vmem:[%s627 + $0x1c] sm:$0xf]
      %v636 = vld [vmem:[%s627 + $0x20] sm:$0xf]
      %v646 = vunpack.c.l.b16 %v628
      %v647 = vunpack.c.l.b16 %v629
      %v648 = vunpack.c.l.b16 %v630
      %v649 = vunpack.c.l.b16 %v631
      %v650 = vunpack.c.l.b16 %v632
      %v651 = vunpack.c.l.b16 %v633
      %v652 = vunpack.c.l.b16 %v634
      %v653 = vunpack.c.l.b16 %v635
      %v654 = vunpack.c.l.b16 %v636
      %v655 = vpack.c.b16 %v647, %v646
      %v656 = vpack.c.b16 %v649, %v648
      %v657 = vpack.c.b16 %v651, %v650
      %v658 = vpack.c.b16 %v653, %v652
      %v659 = vpack.c.b16 %v654, %v654
      %vm664 = vcmask 588800
      %v665 = vsel %vm664, %v624, 0
      %v667 = vsel %vm664, %v626, 0
      %vm669 = vcmask 1043456
      %v671 = vsel %vm669, %v659, 0
      %673 = vmatpush.bf16.msra.mxu0 0
      %674 = vmatpush.bf16.msra.mxu0 0
      %675 = vmatpush.bf16.msra.mxu0 0
      %676 = vmatpush.bf16.msra.mxu0 %v671
      %677 = vmatpush.bf16.msra.mxu0 %v658
      %678 = vmatpush.bf16.msra.mxu0 %v657
      %679 = vmatpush.bf16.msra.mxu0 %v656
      %680 = vmatpush.bf16.msra.mxu0 %v655
      %681 = vmatmul.bf16.gmra.mxu0 %v665
      %v682 = vpop.f32.mrf.mxu0
      %v683 = vadd.f32 0.0, %v682
      %v684 = vpop.f32.mrf.mxu0
      %v685 = vadd.f32 0.0, %v684
      %686 = vmatmul.bf16.gmra.mxu0 %v667
      %v687 = vpop.f32.mrf.mxu0
      %v688 = vadd.f32 0.0, %v687
      %v689 = vpop.f32.mrf.mxu0
      %v690 = vadd.f32 0.0, %v689
      %691 = vdwg.mxu0
      %v701 = vunpack.c.l.b16 %v454
      %v702 = vunpack.c.l.b16 %v455
      %v703 = vunpack.c.l.b16 %v456
      %v704 = vunpack.c.l.b16 %v457
      %v705 = vunpack.c.l.b16 %v458
      %v706 = vunpack.c.l.b16 %v459
      %v707 = vunpack.c.l.b16 %v460
      %v708 = vunpack.c.l.b16 %v461
      %v709 = vunpack.c.l.b16 %v462
      %v710 = vpack.c.b16 %v702, %v701
      %v711 = vpack.c.b16 %v704, %v703
      %v712 = vpack.c.b16 %v706, %v705
      %v713 = vpack.c.b16 %v708, %v707
      %v714 = vpack.c.b16 %v709, %v709
      %v719 = vsel %vm664, %v451, 0
      %v721 = vsel %vm664, %v453, 0
      %v724 = vsel %vm669, %v714, 0
      %726 = vmatpush.bf16.msra.mxu0 0
      %727 = vmatpush.bf16.msra.mxu0 0
      %728 = vmatpush.bf16.msra.mxu0 0
      %729 = vmatpush.bf16.msra.mxu0 %v724
      %730 = vmatpush.bf16.msra.mxu0 %v713
      %731 = vmatpush.bf16.msra.mxu0 %v712
      %732 = vmatpush.bf16.msra.mxu0 %v711
      %733 = vmatpush.bf16.msra.mxu0 %v710
      %734 = vmatmul.bf16.gmra.mxu0 %v719
      %v735 = vpop.f32.mrf.mxu0
      %v736 = vadd.f32 %v683, %v735
      %v737 = vpop.f32.mrf.mxu0
      %v738 = vadd.f32 %v685, %v737
      %739 = vmatmul.bf16.gmra.mxu0 %v721
      %v740 = vpop.f32.mrf.mxu0
      %v741 = vadd.f32 %v688, %v740
      %v742 = vpop.f32.mrf.mxu0
      %v743 = vadd.f32 %v690, %v742
      %744 = vdwg.mxu0
      %s745 = sadd.s32 %s22, 2
      %s746 = smul.u32 %s745, 7
      %s747 = smul.addr %s746, 4
      %s748 = scalar_lea.vmem %s257, %s747
      %v749 = vld [vmem:[%s748] sm:$0xf]
      %v750 = vld [vmem:[%s748 + $0x4] sm:$0xf]
      %v751 = vld [vmem:[%s748 + $0x8] sm:$0xf]
      %v752 = vld [vmem:[%s748 + $0xc] sm:$0xf]
      %v753 = vld [vmem:[%s748 + $0x10] sm:$0xf]
      %v754 = vld [vmem:[%s748 + $0x14] sm:$0xf]
      %v755 = vld [vmem:[%s748 + $0x18] sm:$0xf]
      %v760 = vunpack.c.l.b16 %v749
      %v761 = vunpack.c.l.b16 %v750
      %v762 = vunpack.c.l.b16 %v751
      %v763 = vunpack.c.l.b16 %v752
      %v764 = vpack.c.b16 %v761, %v760
      %v765 = vpack.c.b16 %v763, %v762
      %v767 = vunpack.c.l.b16 %v753
      %v768 = vpack.c.b16 %v767, %v767
      %v770 = vshrl.u32 %v764, 16
      %v772 = vshll.u32 %v764, 16
      %v774 = vrot.slane %v772, 1
      %v775 = vor.u32 %v770, %v774
      %v777 = vshll.u32 %v765, 16
      %v779 = vrot.slane %v777, 1
      %v780 = vsel %vm304, %v775, %v779
      %v781 = vshrl.u32 %v765, 16
      %v783 = vor.u32 %v781, %v779
      %v785 = vshll.u32 %v768, 16
      %v787 = vrot.slane %v785, 1
      %v788 = vsel %vm304, %v783, %v787
      %789 = vrot.lane.b32.xlu0 %v780, 8
      %v790 = vpop.permute.xlu0 %789
      %791 = vrot.lane.b32.xlu0 %v788, 8
      %v792 = vpop.permute.xlu0 %791
      %v793 = vrot.slane %v764, 1
      %v794 = vrot.slane %v765, 1
      %v795 = vsel %vm329, %v793, %v794
      %v796 = vrot.slane %v768, 1
      %v797 = vsel %vm329, %v794, %v796
      %798 = vrot.lane.b32.xlu0 %v795, 16
      %v799 = vpop.permute.xlu0 %798
      %800 = vrot.lane.b32.xlu0 %v797, 16
      %v801 = vpop.permute.xlu0 %800
      %v802 = vpack.c.b16 %v762, %v761
      %v803 = vpack.c.b16 %v767, %v763
      %804 = vrot.lane.b32.xlu0 %v802, 24
      %v805 = vpop.permute.xlu0 %804
      %806 = vrot.lane.b32.xlu0 %v803, 24
      %v807 = vpop.permute.xlu0 %806
      %v809 = vunpack.c.l.b16 %v754
      %v810 = vpack.c.b16 %v809, %v809
      %v812 = vshrl.u32 %v802, 16
      %v814 = vshll.u32 %v802, 16
      %v816 = vrot.slane %v814, 1
      %v817 = vor.u32 %v812, %v816
      %v819 = vshll.u32 %v803, 16
      %v821 = vrot.slane %v819, 1
      %v822 = vsel %vm304, %v817, %v821
      %v823 = vshrl.u32 %v803, 16
      %v825 = vor.u32 %v823, %v821
      %v827 = vshll.u32 %v810, 16
      %v829 = vrot.slane %v827, 1
      %v830 = vsel %vm304, %v825, %v829
      %831 = vrot.lane.b32.xlu0 %v822, 32
      %v832 = vpop.permute.xlu0 %831
      %833 = vrot.lane.b32.xlu0 %v830, 32
      %v834 = vpop.permute.xlu0 %833
      %v835 = vrot.slane %v802, 1
      %v836 = vrot.slane %v803, 1
      %v837 = vsel %vm329, %v835, %v836
      %v838 = vrot.slane %v810, 1
      %v839 = vsel %vm329, %v836, %v838
      %840 = vrot.lane.b32.xlu0 %v837, 40
      %v841 = vpop.permute.xlu0 %840
      %842 = vrot.lane.b32.xlu0 %v839, 40
      %v843 = vpop.permute.xlu0 %842
      %v844 = vpack.c.b16 %v809, %v767
      %845 = vrot.lane.b32.xlu0 %v765, 48
      %v846 = vpop.permute.xlu0 %845
      %847 = vrot.lane.b32.xlu0 %v844, 48
      %v848 = vpop.permute.xlu0 %847
      %v850 = vunpack.c.l.b16 %v755
      %v851 = vpack.c.b16 %v850, %v850
      %v853 = vshll.u32 %v844, 16
      %v855 = vrot.slane %v853, 1
      %v856 = vsel %vm304, %v783, %v855
      %v857 = vshrl.u32 %v844, 16
      %v859 = vor.u32 %v857, %v855
      %v861 = vshll.u32 %v851, 16
      %v863 = vrot.slane %v861, 1
      %v864 = vsel %vm304, %v859, %v863
      %865 = vrot.lane.b32.xlu0 %v856, 56
      %v866 = vpop.permute.xlu0 %865
      %867 = vrot.lane.b32.xlu0 %v864, 56
      %v868 = vpop.permute.xlu0 %867
      %v869 = vrot.slane %v844, 1
      %v870 = vsel %vm329, %v794, %v869
      %v871 = vrot.slane %v851, 1
      %v872 = vsel %vm329, %v869, %v871
      %873 = vrot.lane.b32.xlu0 %v870, 64
      %v874 = vpop.permute.xlu0 %873
      %875 = vrot.lane.b32.xlu0 %v872, 64
      %v876 = vpop.permute.xlu0 %875
      %v878 = vsel %vm414, %v764, %v790
      %v880 = vsel %vm414, %v765, %v792
      %v882 = vsel %vm419, %v878, %v799
      %v884 = vsel %vm419, %v880, %v801
      %v886 = vsel %vm424, %v882, %v805
      %v888 = vsel %vm424, %v884, %v807
      %v890 = vsel %vm429, %v886, %v832
      %v892 = vsel %vm429, %v888, %v834
      %v894 = vsel %vm434, %v890, %v841
      %v896 = vsel %vm434, %v892, %v843
      %v898 = vsel %vm439, %v894, %v846
      %v900 = vsel %vm439, %v896, %v848
      %v902 = vsel %vm444, %v898, %v866
      %v904 = vsel %vm444, %v900, %v868
      %v906 = vsel %vm449, %v902, %v874
      %v908 = vsel %vm449, %v904, %v876
      %s909 = scalar_lea.vmem %s261, 72
      %v910 = vld [vmem:[%s909] sm:$0xf]
      %v911 = vld [vmem:[%s909 + $0x4] sm:$0xf]
      %v912 = vld [vmem:[%s909 + $0x8] sm:$0xf]
      %v913 = vld [vmem:[%s909 + $0xc] sm:$0xf]
      %v914 = vld [vmem:[%s909 + $0x10] sm:$0xf]
      %v915 = vld [vmem:[%s909 + $0x14] sm:$0xf]
      %v916 = vld [vmem:[%s909 + $0x18] sm:$0xf]
      %v917 = vld [vmem:[%s909 + $0x1c] sm:$0xf]
      %v918 = vld [vmem:[%s909 + $0x20] sm:$0xf]
      %v928 = vunpack.c.l.b16 %v910
      %v929 = vunpack.c.l.b16 %v911
      %v930 = vunpack.c.l.b16 %v912
      %v931 = vunpack.c.l.b16 %v913
      %v932 = vunpack.c.l.b16 %v914
      %v933 = vunpack.c.l.b16 %v915
      %v934 = vunpack.c.l.b16 %v916
      %v935 = vunpack.c.l.b16 %v917
      %v936 = vunpack.c.l.b16 %v918
      %v937 = vpack.c.b16 %v929, %v928
      %v938 = vpack.c.b16 %v931, %v930
      %v939 = vpack.c.b16 %v933, %v932
      %v940 = vpack.c.b16 %v935, %v934
      %v941 = vpack.c.b16 %v936, %v936
      %v946 = vsel %vm664, %v906, 0
      %v948 = vsel %vm664, %v908, 0
      %v951 = vsel %vm669, %v941, 0
      %953 = vmatpush.bf16.msra.mxu0 0
      %954 = vmatpush.bf16.msra.mxu0 0
      %955 = vmatpush.bf16.msra.mxu0 0
      %956 = vmatpush.bf16.msra.mxu0 %v951
      %957 = vmatpush.bf16.msra.mxu0 %v940
      %958 = vmatpush.bf16.msra.mxu0 %v939
      %959 = vmatpush.bf16.msra.mxu0 %v938
      %960 = vmatpush.bf16.msra.mxu0 %v937
      %961 = vmatmul.bf16.gmra.mxu0 %v946
      %v962 = vpop.f32.mrf.mxu0
      %v963 = vadd.f32 0.0, %v962
      %v964 = vpop.f32.mrf.mxu0
      %v965 = vadd.f32 0.0, %v964
      %966 = vmatmul.bf16.gmra.mxu0 %v948
      %v967 = vpop.f32.mrf.mxu0
      %v968 = vadd.f32 0.0, %v967
      %v969 = vpop.f32.mrf.mxu0
      %v970 = vadd.f32 0.0, %v969
      %971 = vdwg.mxu0
      %v972 = vadd.f32 %v736, %v963
      %v973 = vadd.f32 %v738, %v965
      %v974 = vadd.f32 %v741, %v968
      %v975 = vadd.f32 %v743, %v970
      %v976 = vld [vmem:[%s264] sm:$0x1]
      %v978 = vperm.slane %v976, 0
      %v980 = vmul.f32 %v972, %v978
      %v981 = vmul.f32 %v973, %v978
      %v982 = vmul.f32 %v974, %v978
      %v983 = vmul.f32 %v975, %v978
      %v984 = vld [vmem:[%s267] sm:$0x1]
      %v986 = vperm.slane %v984, 0
      %v988 = vadd.f32 %v980, %v986
      %v989 = vadd.f32 %v981, %v986
      %v990 = vadd.f32 %v982, %v986
      %v991 = vadd.f32 %v983, %v986
      %v992 = vmax.f32 %v988, 0.0
      %v993 = vmax.f32 %v989, 0.0
      %v994 = vmax.f32 %v990, 0.0
      %v995 = vmax.f32 %v991, 0.0
      %v996 = vpack.c.bf16 %v992, %v992
      %v997 = vpack.c.bf16 %v993, %v993
      %v998 = vpack.c.bf16 %v994, %v994
      %v999 = vpack.c.bf16 %v995, %v995
      %vm1000 = vcmask 60416
      %1001 = vst.msk [vmem:[%s279] sm:$0xf] %vm1000, %v996
      %1002 = vst.msk [vmem:[%s279 + $0x4] sm:$0xf] %vm1000, %v997
      %1003 = vst.msk [vmem:[%s279 + $0x8] sm:$0xf] %vm1000, %v998
      %1004 = vst.msk [vmem:[%s279 + $0xc] sm:$0xf] %vm1000, %v999
      %p1005 = scmp.lt.s32.totalorder %s21, 1
      %s1006 = scalar_select %p1005, %s21, 1
      %p1007 = scmp.lt.s32.totalorder %s22, 3
      %s1008 = scalar_select %p1007, %s22, 3
      %p1009 = scmp.lt.s32.totalorder %s20, 0
      %s1010 = scalar_select %p1009, %s20, 0
      %s1011 = smul.addr %s1008, 4
      %s1012 = sadd.s32 %s1010, %s1011
      %s1013 = smul.addr %s1006, 16
      %s1014 = sadd.s32 %s1012, %s1013
      %s1015 = smul.addr %s1014, 4
      %s1016 = scalar_lea.vmem %s4, %s1015
      // Predicated region
      $region37: #{ae_forward.16} parent=35 // pred_check
        %p1017 = pneg %p160
      $region38: #{ae_forward.16} parent=35 // pred_check_branch
        %1019 = sbr.rel (%p1017) target = $region40
      $region39: #{ae_forward.16} parent=35 // pred_region
        _
      $region40: #{ae_forward.16} parent=35 // pred_fallthru
        _
    $region36: #{ae_forward.16} parent=5 // pred_fallthru
      _
    %p1020 = scmp.le.s32.totalorder 2, %s10
    // Predicated region
    $region41: #{ae_forward.16} parent=5 // pred_check
      %p1021 = pneg %p1020
    $region42: #{ae_forward.16} parent=5 // pred_check_branch
      %1023 = sbr.rel (%p1021) target = $region44
    $region43: #{ae_forward.16} parent=5 // pred_region
      %s1024 = ssub.s32 %s10, 2
      // Predicated region
      $region45: #{ae_forward.16} parent=43 // pred_check
        %p1025 = pneg %p166
      $region46: #{ae_forward.16} parent=43 // pred_check_branch
        %1027 = sbr.rel (%p1025) target = $region48
      $region47: #{ae_forward.16} parent=43 // pred_region
        %p1028 = scmp.lt.s32.totalorder %s24, 1
        %s1029 = scalar_select %p1028, %s24, 1
        %p1030 = scmp.lt.s32.totalorder %s25, 3
        %s1031 = scalar_select %p1030, %s25, 3
        %p1032 = scmp.lt.s32.totalorder %s23, 0
        %s1033 = scalar_select %p1032, %s23, 0
        %s1034 = smul.addr %s1031, 4
        %s1035 = sadd.s32 %s1033, %s1034
        %s1036 = smul.addr %s1029, 16
        %s1037 = sadd.s32 %s1035, %s1036
        %s1038 = smul.addr %s1037, 4
        %s1039 = scalar_lea.vmem %s4, %s1038
      $region48: #{ae_forward.16} parent=43 // pred_fallthru
        _
    $region44: #{ae_forward.16} parent=5 // pred_fallthru
      _
  $region6: #{ae_forward.16} parent=0 // loop_footer
    %s14 = sadd.s32 1, %s10
  $region7: #{ae_forward.16} parent=0 // loop_footer_branch
    %9 = sbr.rel target = $region3
  $region8: #{ae_forward.16} parent=0 // loop_exit
    _

// kernel: tile.23
$region0: #{tile.23}
  #allocation0 [shape = 's32[1]{0}', space=sflag, size = 0x4, scoped, tag = 'scoped memory for tile.23']
  %s0 = inlined_call_operand.vmem [shape: f32[8], index: 0, kind: input, shape index: {}]
  %s1 = inlined_call_operand.vmem [shape: f32[8,8], index: 1, kind: output, shape index: {}]
  // Predicated region
  $region2: #{tile.23} parent=0 // pred_check
    _
  $region3: #{tile.23} parent=0 // pred_check_branch
    %3 = sbr.rel (0) target = $region5
  $region4: #{tile.23} parent=0 // pred_region
    _
  $region5: #{tile.23} parent=0 // pred_fallthru
    _
  %v4 = vld [vmem:[%s0] ss:$0 sm:$0xff]
  %5 = vst [vmem:[%s1] sm:$0xff] %v4

// kernel: tile.28
$region0: #{tile.28}
  %s0 = inlined_call_operand.vmem [shape: f32[8,8], index: 0, kind: input, shape index: {}]
  %s1 = inlined_call_operand.vmem [shape: f32[1,64], index: 1, kind: output, shape index: {}]
  $region1: #{tile.28} parent=0
    #allocation0 [shape = 'u8[4096]{0}', space=vmem, size = 0x1000, scoped, tag = 'scoped mem for output reshape']
    %v2 = vld [vmem:[%s0] sm:$0x1]
    %vm3 = vcmask 64512
    %4 = vst.msk [vmem:[#allocation0] sm:$0x1] %vm3, %v2
    %s5 = scalar_lea.vmem %s0, 7
    %v6 = vld [vmem:[%s5] sm:$0x1]
    %7 = vrot.lane.b32.xlu0 %v6, 56
    %v8 = vpop.permute.xlu0 %7
    %vm9 = vcmask 523712
    %10 = vst.msk [vmem:[#allocation0] sm:$0x1] %vm9, %v8
    %s11 = scalar_lea.vmem %s0, 6
    %v12 = vld [vmem:[%s11] sm:$0x1]
    %13 = vrot.lane.b32.xlu0 %v12, 48
    %v14 = vpop.permute.xlu0 %13
    %vm15 = vcmask 458112
    %16 = vst.msk [vmem:[#allocation0] sm:$0x1] %vm15, %v14
    %s17 = scalar_lea.vmem %s0, 5
    %v18 = vld [vmem:[%s17] sm:$0x1]
    %19 = vrot.lane.b32.xlu0 %v18, 40
    %v20 = vpop.permute.xlu0 %19
    %vm21 = vcmask 392512
    %22 = vst.msk [vmem:[#allocation0] sm:$0x1] %vm21, %v20
    %s23 = scalar_lea.vmem %s0, 4
    %v24 = vld [vmem:[%s23] sm:$0x1]
    %25 = vrot.lane.b32.xlu0 %v24, 32
    %v26 = vpop.permute.xlu0 %25
    %vm27 = vcmask 326912
    %28 = vst.msk [vmem:[#allocation0] sm:$0x1] %vm27, %v26
    %s29 = scalar_lea.vmem %s0, 3
    %v30 = vld [vmem:[%s29] sm:$0x1]
    %31 = vrot.lane.b32.xlu0 %v30, 24
    %v32 = vpop.permute.xlu0 %31
    %vm33 = vcmask 261312
    %34 = vst.msk [vmem:[#allocation0] sm:$0x1] %vm33, %v32
    %s35 = scalar_lea.vmem %s0, 2
    %v36 = vld [vmem:[%s35] sm:$0x1]
    %37 = vrot.lane.b32.xlu0 %v36, 16
    %v38 = vpop.permute.xlu0 %37
    %vm39 = vcmask 195712
    %40 = vst.msk [vmem:[#allocation0] sm:$0x1] %vm39, %v38
    %s41 = scalar_lea.vmem %s0, 1
    %v42 = vld [vmem:[%s41] sm:$0x1]
    %43 = vrot.lane.b32.xlu0 %v42, 8
    %v44 = vpop.permute.xlu0 %43
    %vm45 = vcmask 130112
    %46 = vst.msk [vmem:[#allocation0] sm:$0x1] %vm45, %v44
    %s48 = ssub.s32 2, 1
    %v49 = vld [vmem:[#allocation0] sm:%s48]
    %s51 = ssub.s32 2, 1
    %52 = vst [vmem:[%s1] sm:%s51] %v49

// kernel: ae_forward.18
$region0: #{ae_forward.18}
  #allocation0 [shape = 'u32[]', space=smem, size = 0x4, offset = 0x4, fixed_abs, tag = 'smem constant byte address 0x4 - core index']
  #allocation1 [shape = 'u32[72,128]{1,0:T(1,128)}', space=vmem, size = 0x9000, scoped, tag = 'internal scratch']
  %s0 = inlined_call_operand.vmem [shape: bf16[2,4,40,8], index: 0, kind: input, shape index: {}]
  %s1 = inlined_call_operand.vmem [shape: bf16[3,72,16], index: 1, kind: input, shape index: {}]
  %s2 = inlined_call_operand.vmem [shape: f32[1,16], index: 2, kind: input, shape index: {}]
  %s3 = inlined_call_operand.vmem [shape: f32[1,16], index: 3, kind: input, shape index: {}]
  %s4 = inlined_call_operand.vmem [shape: bf16[2,2,16,16], index: 4, kind: output, shape index: {}]
  %s5 = sld [smem:[#allocation0]]
  $region49: #{ae_forward.18} parent=0
    _
  %s7 = ssub.s32 1, %s5
  %s8 = scalar_select 0, %s7, %s5
  loop: start=0, step=1, limit=6
  $region2: #{ae_forward.18} parent=0 // loop_pre_header
    _
  $region3: #{ae_forward.18} parent=0 // loop_header
    %s10 = sphi 0, %s14
    %p11 = scmp.ge.s32.totalorder %s10, 6
    %s17 = sphi 0, %s36
    %s18 = sphi 0, %s32
    %s19 = sphi 0, %s28
    %s20 = sphi 0, %s17
    %s21 = sphi 0, %s18
    %s22 = sphi 0, %s19
    %s23 = sphi 0, %s20
    %s24 = sphi 0, %s21
    %s25 = sphi 0, %s22
    %s39 = sphi 0, %s41
    %s42 = sphi 0, %s39
    %s43 = sphi 0, %s42
    %s59 = sphi 0, %s43
    %s65 = sphi 0, %s67
    %s68 = sphi 0, %s65
    %s69 = sphi 0, %s68
    %s85 = sphi 0, %s69
    %s91 = sphi 0, %s93
    %s94 = sphi 0, %s91
    %s95 = sphi 0, %s94
    %s111 = sphi 0, %s95
    %s117 = sphi 0, %s119
    %s120 = sphi 0, %s117
    %s121 = sphi 0, %s120
    %s137 = sphi 0, %s121
    %s147 = sphi 0, %s149
    %s150 = sphi 0, %s147
    %s151 = sphi 0, %s150
    %s167 = sphi 0, %s151
  $region4: #{ae_forward.18} parent=0 // loop_header_branch
    %13 = sbr.rel (%p11) target = $region8
  $region5: #{ae_forward.18} parent=0 // loop_body
    %s15 = ssub.s32 %s10, 1
    %s16 = ssub.s32 %s10, 2
    %s26 = sadd.s32 1, %s19
    %p27 = scmp.ge.s32.totalorder %s26, 2
    %s28 = scalar_select %p27, 0, %s26
    %s29 = sadd.s32 1, %s18
    %s30 = scalar_select %p27, %s29, %s18
    %p31 = scmp.ge.s32.totalorder %s30, 2
    %s32 = scalar_select %p31, 0, %s30
    %s33 = sadd.s32 1, %s17
    %s34 = scalar_select %p31, %s33, %s17
    %p35 = scmp.ge.s32.totalorder %s34, 1
    %s36 = scalar_select %p35, 0, %s34
    %s37 = ssub.s32 %s18, %s32
    %p38 = scmp.eq.s32.totalorder %s37, 0
    %s40 = sadd.s32 %s39, 1
    %s41 = scalar_select %p38, %s39, %s40
    %p44 = pneg %p38
    %p45 = scmp.eq.s32.totalorder %s10, 3
    %p46 = por %p44, %p45
    %p47 = scmp.ne.s32.totalorder %s39, %s42
    %p48 = scmp.eq.s32.totalorder %s10, 0
    %p49 = por %p47, %p48
    %p50 = scmp.ne.s32.totalorder %s39, %s42
    %p51 = scmp.eq.s32.totalorder %s15, 3
    %p52 = por %p50, %p51
    %p53 = scmp.ne.s32.totalorder %s42, %s43
    %p54 = scmp.eq.s32.totalorder %s15, 0
    %p55 = por %p53, %p54
    %p56 = scmp.ne.s32.totalorder %s42, %s43
    %p57 = scmp.eq.s32.totalorder %s16, 3
    %p58 = por %p56, %p57
    %p60 = scmp.ne.s32.totalorder %s43, %s59
    %p61 = scmp.eq.s32.totalorder %s16, 0
    %p62 = por %p60, %p61
    %s63 = ssub.s32 %s17, %s36
    %p64 = scmp.eq.s32.totalorder %s63, 0
    %s66 = sadd.s32 %s65, 1
    %s67 = scalar_select %p64, %s65, %s66
    %p70 = pneg %p64
    %p71 = scmp.eq.s32.totalorder %s10, 3
    %p72 = por %p70, %p71
    %p73 = scmp.ne.s32.totalorder %s65, %s68
    %p74 = scmp.eq.s32.totalorder %s10, 0
    %p75 = por %p73, %p74
    %p76 = scmp.ne.s32.totalorder %s65, %s68
    %p77 = scmp.eq.s32.totalorder %s15, 3
    %p78 = por %p76, %p77
    %p79 = scmp.ne.s32.totalorder %s68, %s69
    %p80 = scmp.eq.s32.totalorder %s15, 0
    %p81 = por %p79, %p80
    %p82 = scmp.ne.s32.totalorder %s68, %s69
    %p83 = scmp.eq.s32.totalorder %s16, 3
    %p84 = por %p82, %p83
    %p86 = scmp.ne.s32.totalorder %s69, %s85
    %p87 = scmp.eq.s32.totalorder %s16, 0
    %p88 = por %p86, %p87
    %s89 = ssub.s32 %s17, %s36
    %p90 = scmp.eq.s32.totalorder %s89, 0
    %s92 = sadd.s32 %s91, 1
    %s93 = scalar_select %p90, %s91, %s92
    %p96 = pneg %p90
    %p97 = scmp.eq.s32.totalorder %s10, 3
    %p98 = por %p96, %p97
    %p99 = scmp.ne.s32.totalorder %s91, %s94
    %p100 = scmp.eq.s32.totalorder %s10, 0
    %p101 = por %p99, %p100
    %p102 = scmp.ne.s32.totalorder %s91, %s94
    %p103 = scmp.eq.s32.totalorder %s15, 3
    %p104 = por %p102, %p103
    %p105 = scmp.ne.s32.totalorder %s94, %s95
    %p106 = scmp.eq.s32.totalorder %s15, 0
    %p107 = por %p105, %p106
    %p108 = scmp.ne.s32.totalorder %s94, %s95
    %p109 = scmp.eq.s32.totalorder %s16, 3
    %p110 = por %p108, %p109
    %p112 = scmp.ne.s32.totalorder %s95, %s111
    %p113 = scmp.eq.s32.totalorder %s16, 0
    %p114 = por %p112, %p113
    %s115 = ssub.s32 %s17, %s36
    %p116 = scmp.eq.s32.totalorder %s115, 0
    %s118 = sadd.s32 %s117, 1
    %s119 = scalar_select %p116, %s117, %s118
    %p122 = pneg %p116
    %p123 = scmp.eq.s32.totalorder %s10, 3
    %p124 = por %p122, %p123
    %p125 = scmp.ne.s32.totalorder %s117, %s120
    %p126 = scmp.eq.s32.totalorder %s10, 0
    %p127 = por %p125, %p126
    %p128 = scmp.ne.s32.totalorder %s117, %s120
    %p129 = scmp.eq.s32.totalorder %s15, 3
    %p130 = por %p128, %p129
    %p131 = scmp.ne.s32.totalorder %s120, %s121
    %p132 = scmp.eq.s32.totalorder %s15, 0
    %p133 = por %p131, %p132
    %p134 = scmp.ne.s32.totalorder %s120, %s121
    %p135 = scmp.eq.s32.totalorder %s16, 3
    %p136 = por %p134, %p135
    %p138 = scmp.ne.s32.totalorder %s121, %s137
    %p139 = scmp.eq.s32.totalorder %s16, 0
    %p140 = por %p138, %p139
    %s141 = ssub.s32 %s18, %s32
    %s142 = ssub.s32 %s19, %s28
    %s143 = sor.u32 %s141, %s142
    %s144 = ssub.s32 %s17, %s36
    %s145 = sor.u32 %s143, %s144
    %p146 = scmp.eq.s32.totalorder %s145, 0
    %s148 = sadd.s32 %s147, 1
    %s149 = scalar_select %p146, %s147, %s148
    %p152 = pneg %p146
    %p153 = scmp.eq.s32.totalorder %s10, 3
    %p154 = por %p152, %p153
    %p155 = scmp.ne.s32.totalorder %s147, %s150
    %p156 = scmp.eq.s32.totalorder %s10, 0
    %p157 = por %p155, %p156
    %p158 = scmp.ne.s32.totalorder %s147, %s150
    %p159 = scmp.eq.s32.totalorder %s15, 3
    %p160 = por %p158, %p159
    %p161 = scmp.ne.s32.totalorder %s150, %s151
    %p162 = scmp.eq.s32.totalorder %s15, 0
    %p163 = por %p161, %p162
    %p164 = scmp.ne.s32.totalorder %s150, %s151
    %p165 = scmp.eq.s32.totalorder %s16, 3
    %p166 = por %p164, %p165
    %p168 = scmp.ne.s32.totalorder %s151, %s167
    %p169 = scmp.eq.s32.totalorder %s16, 0
    %p170 = por %p168, %p169
    %p171 = scmp.le.s32.totalorder 1, %s10
    %p172 = scmp.lt.s32.totalorder %s10, 5
    %p173 = pnand %p171, %p172
    %p174 = pneg %p173
    // Predicated region
    $region9: #{ae_forward.18} parent=5 // pred_check
      _
    $region10: #{ae_forward.18} parent=5 // pred_check_branch
      %176 = sbr.rel (%p173) target = $region12
    $region11: #{ae_forward.18} parent=5 // pred_region
      %s177 = ssub.s32 %s10, 1
      // Predicated region
      $region13: #{ae_forward.18} parent=11 // pred_check
        %p178 = pneg %p81
      $region14: #{ae_forward.18} parent=11 // pred_check_branch
        %180 = sbr.rel (%p178) target = $region16
      $region15: #{ae_forward.18} parent=11 // pred_region
        %p181 = scmp.lt.s32.totalorder %s20, 0
        %s182 = scalar_select %p181, %s20, 0
        %s183 = smul.addr %s182, 4
        %s184 = scalar_lea.vmem %s1, %s183
      $region16: #{ae_forward.18} parent=11 // pred_fallthru
        _
      // Predicated region
      $region17: #{ae_forward.18} parent=11 // pred_check
        %p185 = pneg %p107
      $region18: #{ae_forward.18} parent=11 // pred_check_branch
        %187 = sbr.rel (%p185) target = $region20
      $region19: #{ae_forward.18} parent=11 // pred_region
        %p188 = scmp.lt.s32.totalorder %s20, 0
        %s189 = scalar_select %p188, %s20, 0
        %s190 = scalar_lea.vmem %s2, %s189
      $region20: #{ae_forward.18} parent=11 // pred_fallthru
        _
      // Predicated region
      $region21: #{ae_forward.18} parent=11 // pred_check
        %p191 = pneg %p133
      $region22: #{ae_forward.18} parent=11 // pred_check_branch
        %193 = sbr.rel (%p191) target = $region24
      $region23: #{ae_forward.18} parent=11 // pred_region
        %p194 = scmp.lt.s32.totalorder %s20, 0
        %s195 = scalar_select %p194, %s20, 0
        %s196 = scalar_lea.vmem %s3, %s195
      $region24: #{ae_forward.18} parent=11 // pred_fallthru
        _
    $region12: #{ae_forward.18} parent=5 // pred_fallthru
      _
    %p197 = scmp.lt.s32.totalorder %s10, 4
    // Predicated region
    $region25: #{ae_forward.18} parent=5 // pred_check
      %p198 = pneg %p197
    $region26: #{ae_forward.18} parent=5 // pred_check_branch
      %200 = sbr.rel (%p198) target = $region28
    $region27: #{ae_forward.18} parent=5 // pred_region
      // Predicated region
      $region29: #{ae_forward.18} parent=27 // pred_check
        %p201 = pneg %p49
      $region30: #{ae_forward.18} parent=27 // pred_check_branch
        %203 = sbr.rel (%p201) target = $region32
      $region31: #{ae_forward.18} parent=27 // pred_region
        %p204 = scmp.lt.s32.totalorder %s18, 1
        %s205 = scalar_select %p204, %s18, 1
        %s206 = smul.addr %s205, 20
        %s207 = smul.addr %s206, 4
        %s208 = scalar_lea.vmem %s0, %s207
      $region32: #{ae_forward.18} parent=27 // pred_fallthru
        _
    $region28: #{ae_forward.18} parent=5 // pred_fallthru
      _
    %p209 = scmp.le.s32.totalorder 1, %s10
    %p210 = scmp.lt.s32.totalorder %s10, 5
    %p211 = pnand %p209, %p210
    %p212 = pneg %p211
    // Predicated region
    $region33: #{ae_forward.18} parent=5 // pred_check
      _
    $region34: #{ae_forward.18} parent=5 // pred_check_branch
      %214 = sbr.rel (%p211) target = $region36
    $region35: #{ae_forward.18} parent=5 // pred_region
      %s215 = ssub.s32 %s10, 1
      %p216 = scmp.lt.s32.totalorder %s21, 1
      %s217 = scalar_select %p216, %s21, 1
      %s218 = smul.addr %s217, 20
      %s219 = smul.addr %s218, 4
      %s220 = scalar_lea.vmem %s0, %s219
      %p221 = pneg %p55
      %p222 = pneg %p52
      %p223 = scmp.lt.s32.totalorder %s20, 0
      %s224 = scalar_select %p223, %s20, 0
      %s225 = smul.addr %s224, 4
      %s226 = scalar_lea.vmem %s1, %s225
      %p227 = pneg %p81
      %p228 = pneg %p78
      %p229 = scmp.lt.s32.totalorder %s20, 0
      %s230 = scalar_select %p229, %s20, 0
      %s231 = scalar_lea.vmem %s2, %s230
      %p232 = pneg %p107
      %p233 = pneg %p104
      %p234 = scmp.lt.s32.totalorder %s20, 0
      %s235 = scalar_select %p234, %s20, 0
      %s236 = scalar_lea.vmem %s3, %s235
      %p237 = pneg %p133
      %p238 = pneg %p130
      %p239 = pneg %p163
      %p240 = pneg %p160
      %p241 = scmp.lt.s32.totalorder %s21, 1
      %s242 = scalar_select %p241, %s21, 1
      %p243 = scmp.lt.s32.totalorder %s22, 1
      %s244 = scalar_select %p243, %s22, 1
      %p245 = scmp.lt.s32.totalorder %s20, 0
      %s246 = scalar_select %p245, %s20, 0
      %s247 = smul.addr %s244, 2
      %s248 = sadd.s32 %s246, %s247
      %s249 = smul.addr %s242, 4
      %s250 = sadd.s32 %s248, %s249
      %s251 = smul.addr %s250, 4
      %s252 = scalar_lea.vmem %s4, %s251
      %p253 = scmp.lt.s32.totalorder %s21, 1
      %s254 = scalar_select %p253, %s21, 1
      %s255 = smul.addr %s254, 20
      %s256 = smul.addr %s255, 4
      %s257 = scalar_lea.vmem %s0, %s256
      %p258 = scmp.lt.s32.totalorder %s20, 0
      %s259 = scalar_select %p258, %s20, 0
      %s260 = smul.addr %s259, 4
      %s261 = scalar_lea.vmem %s1, %s260
      %p262 = scmp.lt.s32.totalorder %s20, 0
      %s263 = scalar_select %p262, %s20, 0
      %s264 = scalar_lea.vmem %s2, %s263
      %p265 = scmp.lt.s32.totalorder %s20, 0
      %s266 = scalar_select %p265, %s20, 0
      %s267 = scalar_lea.vmem %s3, %s266
      %p268 = scmp.lt.s32.totalorder %s21, 1
      %s269 = scalar_select %p268, %s21, 1
      %p270 = scmp.lt.s32.totalorder %s22, 1
      %s271 = scalar_select %p270, %s22, 1
      %p272 = scmp.lt.s32.totalorder %s20, 0
      %s273 = scalar_select %p272, %s20, 0
      %s274 = smul.addr %s271, 2
      %s275 = sadd.s32 %s273, %s274
      %s276 = smul.addr %s269, 4
      %s277 = sadd.s32 %s275, %s276
      %s278 = smul.addr %s277, 4
      %s279 = scalar_lea.vmem %s4, %s278
      %s281 = smul.u32 %s22, 5
      %s282 = smul.addr %s281, 4
      %s283 = scalar_lea.vmem %s257, %s282
      %v284 = vld [vmem:[%s283] sm:$0xf]
      %v285 = vld [vmem:[%s283 + $0x4] sm:$0xf]
      %v286 = vld [vmem:[%s283 + $0x8] sm:$0xf]
      %v287 = vld [vmem:[%s283 + $0xc] sm:$0xf]
      %v288 = vld [vmem:[%s283 + $0x10] sm:$0xf]
      %v291 = vunpack.c.l.b16 %v284
      %v292 = vunpack.c.l.b16 %v285
      %v293 = vpack.c.b16 %v292, %v291
      %v295 = vunpack.c.l.b16 %v286
      %v296 = vpack.c.b16 %v295, %v295
      %vm297 = vsmask.f32 7424
      %v299 = vshrl.u32 %v293, 16
      %v301 = vshll.u32 %v293, 16
      %v303 = vrot.slane %v301, 1
      %v304 = vor.u32 %v299, %v303
      %v306 = vshll.u32 %v296, 16
      %v308 = vrot.slane %v306, 1
      %v309 = vsel %vm297, %v304, %v308
      %310 = vrot.lane.b32.xlu0 %v309, 8
      %v311 = vpop.permute.xlu0 %310
      %vm312 = vcmask 1046528
      %v313 = vrot.slane %v293, 1
      %v314 = vrot.slane %v296, 1
      %v315 = vsel %vm312, %v313, %v314
      %316 = vrot.lane.b32.xlu0 %v315, 16
      %v317 = vpop.permute.xlu0 %316
      %v318 = vpack.c.b16 %v295, %v292
      %319 = vrot.lane.b32.xlu0 %v318, 24
      %v320 = vpop.permute.xlu0 %319
      %v322 = vunpack.c.l.b16 %v287
      %v323 = vpack.c.b16 %v322, %v322
      %v325 = vshrl.u32 %v318, 16
      %v327 = vshll.u32 %v318, 16
      %v329 = vrot.slane %v327, 1
      %v330 = vor.u32 %v325, %v329
      %v332 = vshll.u32 %v323, 16
      %v334 = vrot.slane %v332, 1
      %v335 = vsel %vm297, %v330, %v334
      %336 = vrot.lane.b32.xlu0 %v335, 32
      %v337 = vpop.permute.xlu0 %336
      %v338 = vrot.slane %v318, 1
      %v339 = vrot.slane %v323, 1
      %v340 = vsel %vm312, %v338, %v339
      %341 = vrot.lane.b32.xlu0 %v340, 40
      %v342 = vpop.permute.xlu0 %341
      %v343 = vpack.c.b16 %v322, %v295
      %344 = vrot.lane.b32.xlu0 %v343, 48
      %v345 = vpop.permute.xlu0 %344
      %v347 = vunpack.c.l.b16 %v288
      %v348 = vpack.c.b16 %v347, %v347
      %v350 = vshrl.u32 %v343, 16
      %v352 = vshll.u32 %v343, 16
      %v354 = vrot.slane %v352, 1
      %v355 = vor.u32 %v350, %v354
      %v357 = vshll.u32 %v348, 16
      %v359 = vrot.slane %v357, 1
      %v360 = vsel %vm297, %v355, %v359
      %361 = vrot.lane.b32.xlu0 %v360, 56
      %v362 = vpop.permute.xlu0 %361
      %v363 = vrot.slane %v343, 1
      %v364 = vrot.slane %v348, 1
      %v365 = vsel %vm312, %v363, %v364
      %366 = vrot.lane.b32.xlu0 %v365, 64
      %v367 = vpop.permute.xlu0 %366
      %vm368 = vcmask 64512
      %v370 = vsel %vm368, %v293, %v311
      %vm371 = vcmask 130048
      %v373 = vsel %vm371, %v370, %v317
      %vm374 = vcmask 195584
      %v376 = vsel %vm374, %v373, %v320
      %vm377 = vcmask 261120
      %v379 = vsel %vm377, %v376, %v337
      %vm380 = vcmask 326656
      %v382 = vsel %vm380, %v379, %v342
      %vm383 = vcmask 392192
      %v385 = vsel %vm383, %v382, %v345
      %vm386 = vcmask 457728
      %v388 = vsel %vm386, %v385, %v362
      %vm389 = vcmask 523264
      %v391 = vsel %vm389, %v388, %v367
      %v392 = vld [vmem:[%s261] sm:$0xf]
      %v393 = vld [vmem:[%s261 + $0x4] sm:$0xf]
      %v394 = vld [vmem:[%s261 + $0x8] sm:$0xf]
      %v395 = vld [vmem:[%s261 + $0xc] sm:$0xf]
      %v396 = vld [vmem:[%s261 + $0x10] sm:$0xf]
      %v397 = vld [vmem:[%s261 + $0x14] sm:$0xf]
      %v398 = vld [vmem:[%s261 + $0x18] sm:$0xf]
      %v399 = vld [vmem:[%s261 + $0x1c] sm:$0xf]
      %v400 = vld [vmem:[%s261 + $0x20] sm:$0xf]
      %s401 = sadd.s32 %s22, 1
      %s402 = smul.u32 %s401, 5
      %s403 = smul.addr %s402, 4
      %s404 = scalar_lea.vmem %s257, %s403
      %v405 = vld [vmem:[%s404] sm:$0xf]
      %v406 = vld [vmem:[%s404 + $0x4] sm:$0xf]
      %v407 = vld [vmem:[%s404 + $0x8] sm:$0xf]
      %v408 = vld [vmem:[%s404 + $0xc] sm:$0xf]
      %v409 = vld [vmem:[%s404 + $0x10] sm:$0xf]
      %v412 = vunpack.c.l.b16 %v405
      %v413 = vunpack.c.l.b16 %v406
      %v414 = vpack.c.b16 %v413, %v412
      %v416 = vunpack.c.l.b16 %v407
      %v417 = vpack.c.b16 %v416, %v416
      %v419 = vshrl.u32 %v414, 16
      %v421 = vshll.u32 %v414, 16
      %v423 = vrot.slane %v421, 1
      %v424 = vor.u32 %v419, %v423
      %v426 = vshll.u32 %v417, 16
      %v428 = vrot.slane %v426, 1
      %v429 = vsel %vm297, %v424, %v428
      %430 = vrot.lane.b32.xlu0 %v429, 8
      %v431 = vpop.permute.xlu0 %430
      %v432 = vrot.slane %v414, 1
      %v433 = vrot.slane %v417, 1
      %v434 = vsel %vm312, %v432, %v433
      %435 = vrot.lane.b32.xlu0 %v434, 16
      %v436 = vpop.permute.xlu0 %435
      %v437 = vpack.c.b16 %v416, %v413
      %438 = vrot.lane.b32.xlu0 %v437, 24
      %v439 = vpop.permute.xlu0 %438
      %v441 = vunpack.c.l.b16 %v408
      %v442 = vpack.c.b16 %v441, %v441
      %v444 = vshrl.u32 %v437, 16
      %v446 = vshll.u32 %v437, 16
      %v448 = vrot.slane %v446, 1
      %v449 = vor.u32 %v444, %v448
      %v451 = vshll.u32 %v442, 16
      %v453 = vrot.slane %v451, 1
      %v454 = vsel %vm297, %v449, %v453
      %455 = vrot.lane.b32.xlu0 %v454, 32
      %v456 = vpop.permute.xlu0 %455
      %v457 = vrot.slane %v437, 1
      %v458 = vrot.slane %v442, 1
      %v459 = vsel %vm312, %v457, %v458
      %460 = vrot.lane.b32.xlu0 %v459, 40
      %v461 = vpop.permute.xlu0 %460
      %v462 = vpack.c.b16 %v441, %v416
      %463 = vrot.lane.b32.xlu0 %v462, 48
      %v464 = vpop.permute.xlu0 %463
      %v466 = vunpack.c.l.b16 %v409
      %v467 = vpack.c.b16 %v466, %v466
      %v469 = vshrl.u32 %v462, 16
      %v471 = vshll.u32 %v462, 16
      %v473 = vrot.slane %v471, 1
      %v474 = vor.u32 %v469, %v473
      %v476 = vshll.u32 %v467, 16
      %v478 = vrot.slane %v476, 1
      %v479 = vsel %vm297, %v474, %v478
      %480 = vrot.lane.b32.xlu0 %v479, 56
      %v481 = vpop.permute.xlu0 %480
      %v482 = vrot.slane %v462, 1
      %v483 = vrot.slane %v467, 1
      %v484 = vsel %vm312, %v482, %v483
      %485 = vrot.lane.b32.xlu0 %v484, 64
      %v486 = vpop.permute.xlu0 %485
      %v488 = vsel %vm368, %v414, %v431
      %v490 = vsel %vm371, %v488, %v436
      %v492 = vsel %vm374, %v490, %v439
      %v494 = vsel %vm377, %v492, %v456
      %v496 = vsel %vm380, %v494, %v461
      %v498 = vsel %vm383, %v496, %v464
      %v500 = vsel %vm386, %v498, %v481
      %v502 = vsel %vm389, %v500, %v486
      %s503 = scalar_lea.vmem %s261, 36
      %v504 = vld [vmem:[%s503] sm:$0xf]
      %v505 = vld [vmem:[%s503 + $0x4] sm:$0xf]
      %v506 = vld [vmem:[%s503 + $0x8] sm:$0xf]
      %v507 = vld [vmem:[%s503 + $0xc] sm:$0xf]
      %v508 = vld [vmem:[%s503 + $0x10] sm:$0xf]
      %v509 = vld [vmem:[%s503 + $0x14] sm:$0xf]
      %v510 = vld [vmem:[%s503 + $0x18] sm:$0xf]
      %v511 = vld [vmem:[%s503 + $0x1c] sm:$0xf]
      %v512 = vld [vmem:[%s503 + $0x20] sm:$0xf]
      %v522 = vunpack.c.l.b16 %v504
      %v523 = vunpack.c.l.b16 %v505
      %v524 = vunpack.c.l.b16 %v506
      %v525 = vunpack.c.l.b16 %v507
      %v526 = vunpack.c.l.b16 %v508
      %v527 = vunpack.c.l.b16 %v509
      %v528 = vunpack.c.l.b16 %v510
      %v529 = vunpack.c.l.b16 %v511
      %v530 = vunpack.c.l.b16 %v512
      %v531 = vpack.c.b16 %v523, %v522
      %v532 = vpack.c.b16 %v525, %v524
      %v533 = vpack.c.b16 %v527, %v526
      %v534 = vpack.c.b16 %v529, %v528
      %v535 = vpack.c.b16 %v530, %v530
      %vm540 = vcmask 588800
      %v541 = vsel %vm540, %v502, 0
      %vm543 = vcmask 1043456
      %v545 = vsel %vm543, %v535, 0
      %547 = vmatpush.bf16.msra.mxu0 0
      %548 = vmatpush.bf16.msra.mxu0 0
      %549 = vmatpush.bf16.msra.mxu0 0
      %550 = vmatpush.bf16.msra.mxu0 %v545
      %551 = vmatpush.bf16.msra.mxu0 %v534
      %552 = vmatpush.bf16.msra.mxu0 %v533
      %553 = vmatpush.bf16.msra.mxu0 %v532
      %554 = vmatpush.bf16.msra.mxu0 %v531
      %555 = vmatmul.bf16.gmra.mxu0 %v541
      %v556 = vpop.f32.mrf.mxu0
      %v557 = vadd.f32 0.0, %v556
      %v558 = vpop.f32.mrf.mxu0
      %v559 = vadd.f32 0.0, %v558
      %560 = vdwg.mxu0
      %v570 = vunpack.c.l.b16 %v392
      %v571 = vunpack.c.l.b16 %v393
      %v572 = vunpack.c.l.b16 %v394
      %v573 = vunpack.c.l.b16 %v395
      %v574 = vunpack.c.l.b16 %v396
      %v575 = vunpack.c.l.b16 %v397
      %v576 = vunpack.c.l.b16 %v398
      %v577 = vunpack.c.l.b16 %v399
      %v578 = vunpack.c.l.b16 %v400
      %v579 = vpack.c.b16 %v571, %v570
      %v580 = vpack.c.b16 %v573, %v572
      %v581 = vpack.c.b16 %v575, %v574
      %v582 = vpack.c.b16 %v577, %v576
      %v583 = vpack.c.b16 %v578, %v578
      %v588 = vsel %vm540, %v391, 0
      %v591 = vsel %vm543, %v583, 0
      %593 = vmatpush.bf16.msra.mxu0 0
      %594 = vmatpush.bf16.msra.mxu0 0
      %595 = vmatpush.bf16.msra.mxu0 0
      %596 = vmatpush.bf16.msra.mxu0 %v591
      %597 = vmatpush.bf16.msra.mxu0 %v582
      %598 = vmatpush.bf16.msra.mxu0 %v581
      %599 = vmatpush.bf16.msra.mxu0 %v580
      %600 = vmatpush.bf16.msra.mxu0 %v579
      %601 = vmatmul.bf16.gmra.mxu0 %v588
      %v602 = vpop.f32.mrf.mxu0
      %v603 = vadd.f32 %v557, %v602
      %v604 = vpop.f32.mrf.mxu0
      %v605 = vadd.f32 %v559, %v604
      %606 = vdwg.mxu0
      %s607 = sadd.s32 %s22, 2
      %s608 = smul.u32 %s607, 5
      %s609 = smul.addr %s608, 4
      %s610 = scalar_lea.vmem %s257, %s609
      %v611 = vld [vmem:[%s610] sm:$0xf]
      %v612 = vld [vmem:[%s610 + $0x4] sm:$0xf]
      %v613 = vld [vmem:[%s610 + $0x8] sm:$0xf]
      %v614 = vld [vmem:[%s610 + $0xc] sm:$0xf]
      %v615 = vld [vmem:[%s610 + $0x10] sm:$0xf]
      %v618 = vunpack.c.l.b16 %v611
      %v619 = vunpack.c.l.b16 %v612
      %v620 = vpack.c.b16 %v619, %v618
      %v622 = vunpack.c.l.b16 %v613
      %v623 = vpack.c.b16 %v622, %v622
      %v625 = vshrl.u32 %v620, 16
      %v627 = vshll.u32 %v620, 16
      %v629 = vrot.slane %v627, 1
      %v630 = vor.u32 %v625, %v629
      %v632 = vshll.u32 %v623, 16
      %v634 = vrot.slane %v632, 1
      %v635 = vsel %vm297, %v630, %v634
      %636 = vrot.lane.b32.xlu0 %v635, 8
      %v637 = vpop.permute.xlu0 %636
      %v638 = vrot.slane %v620, 1
      %v639 = vrot.slane %v623, 1
      %v640 = vsel %vm312, %v638, %v639
      %641 = vrot.lane.b32.xlu0 %v640, 16
      %v642 = vpop.permute.xlu0 %641
      %v643 = vpack.c.b16 %v622, %v619
      %644 = vrot.lane.b32.xlu0 %v643, 24
      %v645 = vpop.permute.xlu0 %644
      %v647 = vunpack.c.l.b16 %v614
      %v648 = vpack.c.b16 %v647, %v647
      %v650 = vshrl.u32 %v643, 16
      %v652 = vshll.u32 %v643, 16
      %v654 = vrot.slane %v652, 1
      %v655 = vor.u32 %v650, %v654
      %v657 = vshll.u32 %v648, 16
      %v659 = vrot.slane %v657, 1
      %v660 = vsel %vm297, %v655, %v659
      %661 = vrot.lane.b32.xlu0 %v660, 32
      %v662 = vpop.permute.xlu0 %661
      %v663 = vrot.slane %v643, 1
      %v664 = vrot.slane %v648, 1
      %v665 = vsel %vm312, %v663, %v664
      %666 = vrot.lane.b32.xlu0 %v665, 40
      %v667 = vpop.permute.xlu0 %666
      %v668 = vpack.c.b16 %v647, %v622
      %669 = vrot.lane.b32.xlu0 %v668, 48
      %v670 = vpop.permute.xlu0 %669
      %v672 = vunpack.c.l.b16 %v615
      %v673 = vpack.c.b16 %v672, %v672
      %v675 = vshrl.u32 %v668, 16
      %v677 = vshll.u32 %v668, 16
      %v679 = vrot.slane %v677, 1
      %v680 = vor.u32 %v675, %v679
      %v682 = vshll.u32 %v673, 16
      %v684 = vrot.slane %v682, 1
      %v685 = vsel %vm297, %v680, %v684
      %686 = vrot.lane.b32.xlu0 %v685, 56
      %v687 = vpop.permute.xlu0 %686
      %v688 = vrot.slane %v668, 1
      %v689 = vrot.slane %v673, 1
      %v690 = vsel %vm312, %v688, %v689
      %691 = vrot.lane.b32.xlu0 %v690, 64
      %v692 = vpop.permute.xlu0 %691
      %v694 = vsel %vm368, %v620, %v637
      %v696 = vsel %vm371, %v694, %v642
      %v698 = vsel %vm374, %v696, %v645
      %v700 = vsel %vm377, %v698, %v662
      %v702 = vsel %vm380, %v700, %v667
      %v704 = vsel %vm383, %v702, %v670
      %v706 = vsel %vm386, %v704, %v687
      %v708 = vsel %vm389, %v706, %v692
      %s709 = scalar_lea.vmem %s261, 72
      %v710 = vld [vmem:[%s709] sm:$0xf]
      %v711 = vld [vmem:[%s709 + $0x4] sm:$0xf]
      %v712 = vld [vmem:[%s709 + $0x8] sm:$0xf]
      %v713 = vld [vmem:[%s709 + $0xc] sm:$0xf]
      %v714 = vld [vmem:[%s709 + $0x10] sm:$0xf]
      %v715 = vld [vmem:[%s709 + $0x14] sm:$0xf]
      %v716 = vld [vmem:[%s709 + $0x18] sm:$0xf]
      %v717 = vld [vmem:[%s709 + $0x1c] sm:$0xf]
      %v718 = vld [vmem:[%s709 + $0x20] sm:$0xf]
      %v728 = vunpack.c.l.b16 %v710
      %v729 = vunpack.c.l.b16 %v711
      %v730 = vunpack.c.l.b16 %v712
      %v731 = vunpack.c.l.b16 %v713
      %v732 = vunpack.c.l.b16 %v714
      %v733 = vunpack.c.l.b16 %v715
      %v734 = vunpack.c.l.b16 %v716
      %v735 = vunpack.c.l.b16 %v717
      %v736 = vunpack.c.l.b16 %v718
      %v737 = vpack.c.b16 %v729, %v728
      %v738 = vpack.c.b16 %v731, %v730
      %v739 = vpack.c.b16 %v733, %v732
      %v740 = vpack.c.b16 %v735, %v734
      %v741 = vpack.c.b16 %v736, %v736
      %v746 = vsel %vm540, %v708, 0
      %v749 = vsel %vm543, %v741, 0
      %751 = vmatpush.bf16.msra.mxu0 0
      %752 = vmatpush.bf16.msra.mxu0 0
      %753 = vmatpush.bf16.msra.mxu0 0
      %754 = vmatpush.bf16.msra.mxu0 %v749
      %755 = vmatpush.bf16.msra.mxu0 %v740
      %756 = vmatpush.bf16.msra.mxu0 %v739
      %757 = vmatpush.bf16.msra.mxu0 %v738
      %758 = vmatpush.bf16.msra.mxu0 %v737
      %759 = vmatmul.bf16.gmra.mxu0 %v746
      %v760 = vpop.f32.mrf.mxu0
      %v761 = vadd.f32 0.0, %v760
      %v762 = vpop.f32.mrf.mxu0
      %v763 = vadd.f32 0.0, %v762
      %764 = vdwg.mxu0
      %v765 = vadd.f32 %v603, %v761
      %v766 = vadd.f32 %v605, %v763
      %v767 = vld [vmem:[%s264] sm:$0x1]
      %v769 = vperm.slane %v767, 0
      %v771 = vmul.f32 %v765, %v769
      %v772 = vmul.f32 %v766, %v769
      %v773 = vld [vmem:[%s267] sm:$0x1]
      %v775 = vperm.slane %v773, 0
      %v777 = vadd.f32 %v771, %v775
      %v778 = vadd.f32 %v772, %v775
      %v779 = vmax.f32 %v777, 0.0
      %v780 = vmax.f32 %v778, 0.0
      %v781 = vpack.c.bf16 %v779, %v779
      %v782 = vpack.c.bf16 %v780, %v780
      %vm783 = vcmask 125952
      %784 = vst.msk [vmem:[%s279] sm:$0xf] %vm783, %v781
      %785 = vst.msk [vmem:[%s279 + $0x4] sm:$0xf] %vm783, %v782
      %p786 = scmp.lt.s32.totalorder %s21, 1
      %s787 = scalar_select %p786, %s21, 1
      %p788 = scmp.lt.s32.totalorder %s22, 1
      %s789 = scalar_select %p788, %s22, 1
      %p790 = scmp.lt.s32.totalorder %s20, 0
      %s791 = scalar_select %p790, %s20, 0
      %s792 = smul.addr %s789, 2
      %s793 = sadd.s32 %s791, %s792
      %s794 = smul.addr %s787, 4
      %s795 = sadd.s32 %s793, %s794
      %s796 = smul.addr %s795, 4
      %s797 = scalar_lea.vmem %s4, %s796
      // Predicated region
      $region37: #{ae_forward.18} parent=35 // pred_check
        %p798 = pneg %p160
      $region38: #{ae_forward.18} parent=35 // pred_check_branch
        %800 = sbr.rel (%p798) target = $region40
      $region39: #{ae_forward.18} parent=35 // pred_region
        _
      $region40: #{ae_forward.18} parent=35 // pred_fallthru
        _
    $region36: #{ae_forward.18} parent=5 // pred_fallthru
      _
    %p801 = scmp.le.s32.totalorder 2, %s10
    // Predicated region
    $region41: #{ae_forward.18} parent=5 // pred_check
      %p802 = pneg %p801
    $region42: #{ae_forward.18} parent=5 // pred_check_branch
      %804 = sbr.rel (%p802) target = $region44
    $region43: #{ae_forward.18} parent=5 // pred_region
      %s805 = ssub.s32 %s10, 2
      // Predicated region
      $region45: #{ae_forward.18} parent=43 // pred_check
        %p806 = pneg %p166
      $region46: #{ae_forward.18} parent=43 // pred_check_branch
        %808 = sbr.rel (%p806) target = $region48
      $region47: #{ae_forward.18} parent=43 // pred_region
        %p809 = scmp.lt.s32.totalorder %s24, 1
        %s810 = scalar_select %p809, %s24, 1
        %p811 = scmp.lt.s32.totalorder %s25, 1
        %s812 = scalar_select %p811, %s25, 1
        %p813 = scmp.lt.s32.totalorder %s23, 0
        %s814 = scalar_select %p813, %s23, 0
        %s815 = smul.addr %s812, 2
        %s816 = sadd.s32 %s814, %s815
        %s817 = smul.addr %s810, 4
        %s818 = sadd.s32 %s816, %s817
        %s819 = smul.addr %s818, 4
        %s820 = scalar_lea.vmem %s4, %s819
      $region48: #{ae_forward.18} parent=43 // pred_fallthru
        _
    $region44: #{ae_forward.18} parent=5 // pred_fallthru
      _
  $region6: #{ae_forward.18} parent=0 // loop_footer
    %s14 = sadd.s32 1, %s10
  $region7: #{ae_forward.18} parent=0 // loop_footer_branch
    %9 = sbr.rel target = $region3
  $region8: #{ae_forward.18} parent=0 // loop_exit
    _

// kernel: ae_forward.19
$region0: #{ae_forward.19}
  #allocation0 [shape = 'u32[]', space=smem, size = 0x4, offset = 0x4, fixed_abs, tag = 'smem constant byte address 0x4 - core index']
  #allocation1 [shape = 'u32[72,128]{1,0:T(1,128)}', space=vmem, size = 0x9000, scoped, tag = 'internal scratch']
  %s0 = inlined_call_operand.vmem [shape: bf16[2,4,40,16], index: 0, kind: input, shape index: {}]
  %s1 = inlined_call_operand.vmem [shape: bf16[3,144,16], index: 1, kind: input, shape index: {}]
  %s2 = inlined_call_operand.vmem [shape: f32[1,16], index: 2, kind: input, shape index: {}]
  %s3 = inlined_call_operand.vmem [shape: f32[1,16], index: 3, kind: input, shape index: {}]
  %s4 = inlined_call_operand.vmem [shape: bf16[2,2,16,16], index: 4, kind: output, shape index: {}]
  %s5 = sld [smem:[#allocation0]]
  $region49: #{ae_forward.19} parent=0
    _
  %s7 = ssub.s32 1, %s5
  %s8 = scalar_select 0, %s7, %s5
  loop: start=0, step=1, limit=6
  $region2: #{ae_forward.19} parent=0 // loop_pre_header
    _
  $region3: #{ae_forward.19} parent=0 // loop_header
    %s10 = sphi 0, %s14
    %p11 = scmp.ge.s32.totalorder %s10, 6
    %s17 = sphi 0, %s36
    %s18 = sphi 0, %s32
    %s19 = sphi 0, %s28
    %s20 = sphi 0, %s17
    %s21 = sphi 0, %s18
    %s22 = sphi 0, %s19
    %s23 = sphi 0, %s20
    %s24 = sphi 0, %s21
    %s25 = sphi 0, %s22
    %s39 = sphi 0, %s41
    %s42 = sphi 0, %s39
    %s43 = sphi 0, %s42
    %s59 = sphi 0, %s43
    %s65 = sphi 0, %s67
    %s68 = sphi 0, %s65
    %s69 = sphi 0, %s68
    %s85 = sphi 0, %s69
    %s91 = sphi 0, %s93
    %s94 = sphi 0, %s91
    %s95 = sphi 0, %s94
    %s111 = sphi 0, %s95
    %s117 = sphi 0, %s119
    %s120 = sphi 0, %s117
    %s121 = sphi 0, %s120
    %s137 = sphi 0, %s121
    %s147 = sphi 0, %s149
    %s150 = sphi 0, %s147
    %s151 = sphi 0, %s150
    %s167 = sphi 0, %s151
  $region4: #{ae_forward.19} parent=0 // loop_header_branch
    %13 = sbr.rel (%p11) target = $region8
  $region5: #{ae_forward.19} parent=0 // loop_body
    %s15 = ssub.s32 %s10, 1
    %s16 = ssub.s32 %s10, 2
    %s26 = sadd.s32 1, %s19
    %p27 = scmp.ge.s32.totalorder %s26, 2
    %s28 = scalar_select %p27, 0, %s26
    %s29 = sadd.s32 1, %s18
    %s30 = scalar_select %p27, %s29, %s18
    %p31 = scmp.ge.s32.totalorder %s30, 2
    %s32 = scalar_select %p31, 0, %s30
    %s33 = sadd.s32 1, %s17
    %s34 = scalar_select %p31, %s33, %s17
    %p35 = scmp.ge.s32.totalorder %s34, 1
    %s36 = scalar_select %p35, 0, %s34
    %s37 = ssub.s32 %s18, %s32
    %p38 = scmp.eq.s32.totalorder %s37, 0
    %s40 = sadd.s32 %s39, 1
    %s41 = scalar_select %p38, %s39, %s40
    %p44 = pneg %p38
    %p45 = scmp.eq.s32.totalorder %s10, 3
    %p46 = por %p44, %p45
    %p47 = scmp.ne.s32.totalorder %s39, %s42
    %p48 = scmp.eq.s32.totalorder %s10, 0
    %p49 = por %p47, %p48
    %p50 = scmp.ne.s32.totalorder %s39, %s42
    %p51 = scmp.eq.s32.totalorder %s15, 3
    %p52 = por %p50, %p51
    %p53 = scmp.ne.s32.totalorder %s42, %s43
    %p54 = scmp.eq.s32.totalorder %s15, 0
    %p55 = por %p53, %p54
    %p56 = scmp.ne.s32.totalorder %s42, %s43
    %p57 = scmp.eq.s32.totalorder %s16, 3
    %p58 = por %p56, %p57
    %p60 = scmp.ne.s32.totalorder %s43, %s59
    %p61 = scmp.eq.s32.totalorder %s16, 0
    %p62 = por %p60, %p61
    %s63 = ssub.s32 %s17, %s36
    %p64 = scmp.eq.s32.totalorder %s63, 0
    %s66 = sadd.s32 %s65, 1
    %s67 = scalar_select %p64, %s65, %s66
    %p70 = pneg %p64
    %p71 = scmp.eq.s32.totalorder %s10, 3
    %p72 = por %p70, %p71
    %p73 = scmp.ne.s32.totalorder %s65, %s68
    %p74 = scmp.eq.s32.totalorder %s10, 0
    %p75 = por %p73, %p74
    %p76 = scmp.ne.s32.totalorder %s65, %s68
    %p77 = scmp.eq.s32.totalorder %s15, 3
    %p78 = por %p76, %p77
    %p79 = scmp.ne.s32.totalorder %s68, %s69
    %p80 = scmp.eq.s32.totalorder %s15, 0
    %p81 = por %p79, %p80
    %p82 = scmp.ne.s32.totalorder %s68, %s69
    %p83 = scmp.eq.s32.totalorder %s16, 3
    %p84 = por %p82, %p83
    %p86 = scmp.ne.s32.totalorder %s69, %s85
    %p87 = scmp.eq.s32.totalorder %s16, 0
    %p88 = por %p86, %p87
    %s89 = ssub.s32 %s17, %s36
    %p90 = scmp.eq.s32.totalorder %s89, 0
    %s92 = sadd.s32 %s91, 1
    %s93 = scalar_select %p90, %s91, %s92
    %p96 = pneg %p90
    %p97 = scmp.eq.s32.totalorder %s10, 3
    %p98 = por %p96, %p97
    %p99 = scmp.ne.s32.totalorder %s91, %s94
    %p100 = scmp.eq.s32.totalorder %s10, 0
    %p101 = por %p99, %p100
    %p102 = scmp.ne.s32.totalorder %s91, %s94
    %p103 = scmp.eq.s32.totalorder %s15, 3
    %p104 = por %p102, %p103
    %p105 = scmp.ne.s32.totalorder %s94, %s95
    %p106 = scmp.eq.s32.totalorder %s15, 0
    %p107 = por %p105, %p106
    %p108 = scmp.ne.s32.totalorder %s94, %s95
    %p109 = scmp.eq.s32.totalorder %s16, 3
    %p110 = por %p108, %p109
    %p112 = scmp.ne.s32.totalorder %s95, %s111
    %p113 = scmp.eq.s32.totalorder %s16, 0
    %p114 = por %p112, %p113
    %s115 = ssub.s32 %s17, %s36
    %p116 = scmp.eq.s32.totalorder %s115, 0
    %s118 = sadd.s32 %s117, 1
    %s119 = scalar_select %p116, %s117, %s118
    %p122 = pneg %p116
    %p123 = scmp.eq.s32.totalorder %s10, 3
    %p124 = por %p122, %p123
    %p125 = scmp.ne.s32.totalorder %s117, %s120
    %p126 = scmp.eq.s32.totalorder %s10, 0
    %p127 = por %p125, %p126
    %p128 = scmp.ne.s32.totalorder %s117, %s120
    %p129 = scmp.eq.s32.totalorder %s15, 3
    %p130 = por %p128, %p129
    %p131 = scmp.ne.s32.totalorder %s120, %s121
    %p132 = scmp.eq.s32.totalorder %s15, 0
    %p133 = por %p131, %p132
    %p134 = scmp.ne.s32.totalorder %s120, %s121
    %p135 = scmp.eq.s32.totalorder %s16, 3
    %p136 = por %p134, %p135
    %p138 = scmp.ne.s32.totalorder %s121, %s137
    %p139 = scmp.eq.s32.totalorder %s16, 0
    %p140 = por %p138, %p139
    %s141 = ssub.s32 %s18, %s32
    %s142 = ssub.s32 %s19, %s28
    %s143 = sor.u32 %s141, %s142
    %s144 = ssub.s32 %s17, %s36
    %s145 = sor.u32 %s143, %s144
    %p146 = scmp.eq.s32.totalorder %s145, 0
    %s148 = sadd.s32 %s147, 1
    %s149 = scalar_select %p146, %s147, %s148
    %p152 = pneg %p146
    %p153 = scmp.eq.s32.totalorder %s10, 3
    %p154 = por %p152, %p153
    %p155 = scmp.ne.s32.totalorder %s147, %s150
    %p156 = scmp.eq.s32.totalorder %s10, 0
    %p157 = por %p155, %p156
    %p158 = scmp.ne.s32.totalorder %s147, %s150
    %p159 = scmp.eq.s32.totalorder %s15, 3
    %p160 = por %p158, %p159
    %p161 = scmp.ne.s32.totalorder %s150, %s151
    %p162 = scmp.eq.s32.totalorder %s15, 0
    %p163 = por %p161, %p162
    %p164 = scmp.ne.s32.totalorder %s150, %s151
    %p165 = scmp.eq.s32.totalorder %s16, 3
    %p166 = por %p164, %p165
    %p168 = scmp.ne.s32.totalorder %s151, %s167
    %p169 = scmp.eq.s32.totalorder %s16, 0
    %p170 = por %p168, %p169
    %p171 = scmp.le.s32.totalorder 1, %s10
    %p172 = scmp.lt.s32.totalorder %s10, 5
    %p173 = pnand %p171, %p172
    %p174 = pneg %p173
    // Predicated region
    $region9: #{ae_forward.19} parent=5 // pred_check
      _
    $region10: #{ae_forward.19} parent=5 // pred_check_branch
      %176 = sbr.rel (%p173) target = $region12
    $region11: #{ae_forward.19} parent=5 // pred_region
      %s177 = ssub.s32 %s10, 1
      // Predicated region
      $region13: #{ae_forward.19} parent=11 // pred_check
        %p178 = pneg %p81
      $region14: #{ae_forward.19} parent=11 // pred_check_branch
        %180 = sbr.rel (%p178) target = $region16
      $region15: #{ae_forward.19} parent=11 // pred_region
        %p181 = scmp.lt.s32.totalorder %s20, 0
        %s182 = scalar_select %p181, %s20, 0
        %s183 = smul.addr %s182, 4
        %s184 = scalar_lea.vmem %s1, %s183
      $region16: #{ae_forward.19} parent=11 // pred_fallthru
        _
      // Predicated region
      $region17: #{ae_forward.19} parent=11 // pred_check
        %p185 = pneg %p107
      $region18: #{ae_forward.19} parent=11 // pred_check_branch
        %187 = sbr.rel (%p185) target = $region20
      $region19: #{ae_forward.19} parent=11 // pred_region
        %p188 = scmp.lt.s32.totalorder %s20, 0
        %s189 = scalar_select %p188, %s20, 0
        %s190 = scalar_lea.vmem %s2, %s189
      $region20: #{ae_forward.19} parent=11 // pred_fallthru
        _
      // Predicated region
      $region21: #{ae_forward.19} parent=11 // pred_check
        %p191 = pneg %p133
      $region22: #{ae_forward.19} parent=11 // pred_check_branch
        %193 = sbr.rel (%p191) target = $region24
      $region23: #{ae_forward.19} parent=11 // pred_region
        %p194 = scmp.lt.s32.totalorder %s20, 0
        %s195 = scalar_select %p194, %s20, 0
        %s196 = scalar_lea.vmem %s3, %s195
      $region24: #{ae_forward.19} parent=11 // pred_fallthru
        _
    $region12: #{ae_forward.19} parent=5 // pred_fallthru
      _
    %p197 = scmp.lt.s32.totalorder %s10, 4
    // Predicated region
    $region25: #{ae_forward.19} parent=5 // pred_check
      %p198 = pneg %p197
    $region26: #{ae_forward.19} parent=5 // pred_check_branch
      %200 = sbr.rel (%p198) target = $region28
    $region27: #{ae_forward.19} parent=5 // pred_region
      // Predicated region
      $region29: #{ae_forward.19} parent=27 // pred_check
        %p201 = pneg %p49
      $region30: #{ae_forward.19} parent=27 // pred_check_branch
        %203 = sbr.rel (%p201) target = $region32
      $region31: #{ae_forward.19} parent=27 // pred_region
        %p204 = scmp.lt.s32.totalorder %s18, 1
        %s205 = scalar_select %p204, %s18, 1
        %s206 = smul.addr %s205, 20
        %s207 = smul.addr %s206, 4
        %s208 = scalar_lea.vmem %s0, %s207
      $region32: #{ae_forward.19} parent=27 // pred_fallthru
        _
    $region28: #{ae_forward.19} parent=5 // pred_fallthru
      _
    %p209 = scmp.le.s32.totalorder 1, %s10
    %p210 = scmp.lt.s32.totalorder %s10, 5
    %p211 = pnand %p209, %p210
    %p212 = pneg %p211
    // Predicated region
    $region33: #{ae_forward.19} parent=5 // pred_check
      _
    $region34: #{ae_forward.19} parent=5 // pred_check_branch
      %214 = sbr.rel (%p211) target = $region36
    $region35: #{ae_forward.19} parent=5 // pred_region
      %s215 = ssub.s32 %s10, 1
      %p216 = scmp.lt.s32.totalorder %s21, 1
      %s217 = scalar_select %p216, %s21, 1
      %s218 = smul.addr %s217, 20
      %s219 = smul.addr %s218, 4
      %s220 = scalar_lea.vmem %s0, %s219
      %p221 = pneg %p55
      %p222 = pneg %p52
      %p223 = scmp.lt.s32.totalorder %s20, 0
      %s224 = scalar_select %p223, %s20, 0
      %s225 = smul.addr %s224, 4
      %s226 = scalar_lea.vmem %s1, %s225
      %p227 = pneg %p81
      %p228 = pneg %p78
      %p229 = scmp.lt.s32.totalorder %s20, 0
      %s230 = scalar_select %p229, %s20, 0
      %s231 = scalar_lea.vmem %s2, %s230
      %p232 = pneg %p107
      %p233 = pneg %p104
      %p234 = scmp.lt.s32.totalorder %s20, 0
      %s235 = scalar_select %p234, %s20, 0
      %s236 = scalar_lea.vmem %s3, %s235
      %p237 = pneg %p133
      %p238 = pneg %p130
      %p239 = pneg %p163
      %p240 = pneg %p160
      %p241 = scmp.lt.s32.totalorder %s21, 1
      %s242 = scalar_select %p241, %s21, 1
      %p243 = scmp.lt.s32.totalorder %s22, 1
      %s244 = scalar_select %p243, %s22, 1
      %p245 = scmp.lt.s32.totalorder %s20, 0
      %s246 = scalar_select %p245, %s20, 0
      %s247 = smul.addr %s244, 2
      %s248 = sadd.s32 %s246, %s247
      %s249 = smul.addr %s242, 4
      %s250 = sadd.s32 %s248, %s249
      %s251 = smul.addr %s250, 4
      %s252 = scalar_lea.vmem %s4, %s251
      %p253 = scmp.lt.s32.totalorder %s21, 1
      %s254 = scalar_select %p253, %s21, 1
      %s255 = smul.addr %s254, 20
      %s256 = smul.addr %s255, 4
      %s257 = scalar_lea.vmem %s0, %s256
      %p258 = scmp.lt.s32.totalorder %s20, 0
      %s259 = scalar_select %p258, %s20, 0
      %s260 = smul.addr %s259, 4
      %s261 = scalar_lea.vmem %s1, %s260
      %p262 = scmp.lt.s32.totalorder %s20, 0
      %s263 = scalar_select %p262, %s20, 0
      %s264 = scalar_lea.vmem %s2, %s263
      %p265 = scmp.lt.s32.totalorder %s20, 0
      %s266 = scalar_select %p265, %s20, 0
      %s267 = scalar_lea.vmem %s3, %s266
      %p268 = scmp.lt.s32.totalorder %s21, 1
      %s269 = scalar_select %p268, %s21, 1
      %p270 = scmp.lt.s32.totalorder %s22, 1
      %s271 = scalar_select %p270, %s22, 1
      %p272 = scmp.lt.s32.totalorder %s20, 0
      %s273 = scalar_select %p272, %s20, 0
      %s274 = smul.addr %s271, 2
      %s275 = sadd.s32 %s273, %s274
      %s276 = smul.addr %s269, 4
      %s277 = sadd.s32 %s275, %s276
      %s278 = smul.addr %s277, 4
      %s279 = scalar_lea.vmem %s4, %s278
      %s281 = smul.u32 %s22, 5
      %s282 = smul.addr %s281, 4
      %s283 = scalar_lea.vmem %s257, %s282
      %v284 = vld [vmem:[%s283] sm:$0xf]
      %v285 = vld [vmem:[%s283 + $0x4] sm:$0xf]
      %v286 = vld [vmem:[%s283 + $0x8] sm:$0xf]
      %v287 = vld [vmem:[%s283 + $0xc] sm:$0xf]
      %v288 = vld [vmem:[%s283 + $0x10] sm:$0xf]
      %v291 = vunpack.c.l.b16 %v284
      %v292 = vunpack.c.l.b16 %v285
      %v293 = vpack.c.b16 %v292, %v291
      %v295 = vunpack.c.l.b16 %v286
      %v296 = vpack.c.b16 %v295, %v295
      %vm297 = vsmask.f32 7424
      %v299 = vshrl.u32 %v293, 16
      %v301 = vshll.u32 %v293, 16
      %v303 = vrot.slane %v301, 1
      %v304 = vor.u32 %v299, %v303
      %v306 = vshll.u32 %v296, 16
      %v308 = vrot.slane %v306, 1
      %v309 = vsel %vm297, %v304, %v308
      %310 = vrot.lane.b32.xlu0 %v309, 16
      %v311 = vpop.permute.xlu0 %310
      %vm312 = vcmask 1046528
      %v313 = vrot.slane %v293, 1
      %v314 = vrot.slane %v296, 1
      %v315 = vsel %vm312, %v313, %v314
      %316 = vrot.lane.b32.xlu0 %v315, 32
      %v317 = vpop.permute.xlu0 %316
      %v318 = vpack.c.b16 %v295, %v292
      %319 = vrot.lane.b32.xlu0 %v318, 48
      %v320 = vpop.permute.xlu0 %319
      %v322 = vunpack.c.l.b16 %v287
      %v323 = vpack.c.b16 %v322, %v322
      %v325 = vshrl.u32 %v318, 16
      %v327 = vshll.u32 %v318, 16
      %v329 = vrot.slane %v327, 1
      %v330 = vor.u32 %v325, %v329
      %v332 = vshll.u32 %v323, 16
      %v334 = vrot.slane %v332, 1
      %v335 = vsel %vm297, %v330, %v334
      %336 = vrot.lane.b32.xlu0 %v335, 64
      %v337 = vpop.permute.xlu0 %336
      %v338 = vrot.slane %v318, 1
      %v339 = vrot.slane %v323, 1
      %v340 = vsel %vm312, %v338, %v339
      %341 = vrot.lane.b32.xlu0 %v340, 80
      %v342 = vpop.permute.xlu0 %341
      %v343 = vpack.c.b16 %v322, %v295
      %344 = vrot.lane.b32.xlu0 %v343, 96
      %v345 = vpop.permute.xlu0 %344
      %v347 = vunpack.c.l.b16 %v288
      %v348 = vpack.c.b16 %v347, %v347
      %v350 = vshrl.u32 %v343, 16
      %v352 = vshll.u32 %v343, 16
      %v354 = vrot.slane %v352, 1
      %v355 = vor.u32 %v350, %v354
      %v357 = vshll.u32 %v348, 16
      %v359 = vrot.slane %v357, 1
      %v360 = vsel %vm297, %v355, %v359
      %361 = vrot.lane.b32.xlu0 %v360, 112
      %v362 = vpop.permute.xlu0 %361
      %v363 = vrot.slane %v343, 1
      %v364 = vrot.slane %v348, 1
      %v365 = vsel %vm312, %v363, %v364
      %vm366 = vcmask 130048
      %v368 = vsel %vm366, %v293, %v311
      %vm369 = vcmask 261120
      %v371 = vsel %vm369, %v368, %v317
      %vm372 = vcmask 392192
      %v374 = vsel %vm372, %v371, %v320
      %vm375 = vcmask 523264
      %v377 = vsel %vm375, %v374, %v337
      %vm378 = vcmask 654336
      %v380 = vsel %vm378, %v377, %v342
      %vm381 = vcmask 785408
      %v383 = vsel %vm381, %v380, %v345
      %vm384 = vcmask 916480
      %v386 = vsel %vm384, %v383, %v362
      %v388 = vld [vmem:[%s261] sm:$0xf]
      %v389 = vld [vmem:[%s261 + $0x4] sm:$0xf]
      %v390 = vld [vmem:[%s261 + $0x8] sm:$0xf]
      %v391 = vld [vmem:[%s261 + $0xc] sm:$0xf]
      %v392 = vld [vmem:[%s261 + $0x10] sm:$0xf]
      %v393 = vld [vmem:[%s261 + $0x14] sm:$0xf]
      %v394 = vld [vmem:[%s261 + $0x18] sm:$0xf]
      %v395 = vld [vmem:[%s261 + $0x1c] sm:$0xf]
      %v396 = vld [vmem:[%s261 + $0x20] sm:$0xf]
      %v397 = vld [vmem:[%s261 + $0x24] sm:$0xf]
      %v398 = vld [vmem:[%s261 + $0x28] sm:$0xf]
      %v399 = vld [vmem:[%s261 + $0x2c] sm:$0xf]
      %v400 = vld [vmem:[%s261 + $0x30] sm:$0xf]
      %v401 = vld [vmem:[%s261 + $0x34] sm:$0xf]
      %v402 = vld [vmem:[%s261 + $0x38] sm:$0xf]
      %v403 = vld [vmem:[%s261 + $0x3c] sm:$0xf]
      %v404 = vld [vmem:[%s261 + $0x40] sm:$0xf]
      %v405 = vld [vmem:[%s261 + $0x44] sm:$0xf]
      %s406 = sadd.s32 %s22, 1
      %s407 = smul.u32 %s406, 5
      %s408 = smul.addr %s407, 4
      %s409 = scalar_lea.vmem %s257, %s408
      %v410 = vld [vmem:[%s409] sm:$0xf]
      %v411 = vld [vmem:[%s409 + $0x4] sm:$0xf]
      %v412 = vld [vmem:[%s409 + $0x8] sm:$0xf]
      %v413 = vld [vmem:[%s409 + $0xc] sm:$0xf]
      %v414 = vld [vmem:[%s409 + $0x10] sm:$0xf]
      %v417 = vunpack.c.l.b16 %v410
      %v418 = vunpack.c.l.b16 %v411
      %v419 = vpack.c.b16 %v418, %v417
      %v421 = vunpack.c.l.b16 %v412
      %v422 = vpack.c.b16 %v421, %v421
      %v424 = vshrl.u32 %v419, 16
      %v426 = vshll.u32 %v419, 16
      %v428 = vrot.slane %v426, 1
      %v429 = vor.u32 %v424, %v428
      %v431 = vshll.u32 %v422, 16
      %v433 = vrot.slane %v431, 1
      %v434 = vsel %vm297, %v429, %v433
      %435 = vrot.lane.b32.xlu0 %v434, 16
      %v436 = vpop.permute.xlu0 %435
      %v437 = vrot.slane %v419, 1
      %v438 = vrot.slane %v422, 1
      %v439 = vsel %vm312, %v437, %v438
      %440 = vrot.lane.b32.xlu0 %v439, 32
      %v441 = vpop.permute.xlu0 %440
      %v442 = vpack.c.b16 %v421, %v418
      %443 = vrot.lane.b32.xlu0 %v442, 48
      %v444 = vpop.permute.xlu0 %443
      %v446 = vunpack.c.l.b16 %v413
      %v447 = vpack.c.b16 %v446, %v446
      %v449 = vshrl.u32 %v442, 16
      %v451 = vshll.u32 %v442, 16
      %v453 = vrot.slane %v451, 1
      %v454 = vor.u32 %v449, %v453
      %v456 = vshll.u32 %v447, 16
      %v458 = vrot.slane %v456, 1
      %v459 = vsel %vm297, %v454, %v458
      %460 = vrot.lane.b32.xlu0 %v459, 64
      %v461 = vpop.permute.xlu0 %460
      %v462 = vrot.slane %v442, 1
      %v463 = vrot.slane %v447, 1
      %v464 = vsel %vm312, %v462, %v463
      %465 = vrot.lane.b32.xlu0 %v464, 80
      %v466 = vpop.permute.xlu0 %465
      %v467 = vpack.c.b16 %v446, %v421
      %468 = vrot.lane.b32.xlu0 %v467, 96
      %v469 = vpop.permute.xlu0 %468
      %v471 = vunpack.c.l.b16 %v414
      %v472 = vpack.c.b16 %v471, %v471
      %v474 = vshrl.u32 %v467, 16
      %v476 = vshll.u32 %v467, 16
      %v478 = vrot.slane %v476, 1
      %v479 = vor.u32 %v474, %v478
      %v481 = vshll.u32 %v472, 16
      %v483 = vrot.slane %v481, 1
      %v484 = vsel %vm297, %v479, %v483
      %485 = vrot.lane.b32.xlu0 %v484, 112
      %v486 = vpop.permute.xlu0 %485
      %v487 = vrot.slane %v467, 1
      %v488 = vrot.slane %v472, 1
      %v489 = vsel %vm312, %v487, %v488
      %v491 = vsel %vm366, %v419, %v436
      %v493 = vsel %vm369, %v491, %v441
      %v495 = vsel %vm372, %v493, %v444
      %v497 = vsel %vm375, %v495, %v461
      %v499 = vsel %vm378, %v497, %v466
      %v501 = vsel %vm381, %v499, %v469
      %v503 = vsel %vm384, %v501, %v486
      %s505 = scalar_lea.vmem %s261, 72
      %v506 = vld [vmem:[%s505] sm:$0xf]
      %v507 = vld [vmem:[%s505 + $0x4] sm:$0xf]
      %v508 = vld [vmem:[%s505 + $0x8] sm:$0xf]
      %v509 = vld [vmem:[%s505 + $0xc] sm:$0xf]
      %v510 = vld [vmem:[%s505 + $0x10] sm:$0xf]
      %v511 = vld [vmem:[%s505 + $0x14] sm:$0xf]
      %v512 = vld [vmem:[%s505 + $0x18] sm:$0xf]
      %v513 = vld [vmem:[%s505 + $0x1c] sm:$0xf]
      %v514 = vld [vmem:[%s505 + $0x20] sm:$0xf]
      %v515 = vld [vmem:[%s505 + $0x24] sm:$0xf]
      %v516 = vld [vmem:[%s505 + $0x28] sm:$0xf]
      %v517 = vld [vmem:[%s505 + $0x2c] sm:$0xf]
      %v518 = vld [vmem:[%s505 + $0x30] sm:$0xf]
      %v519 = vld [vmem:[%s505 + $0x34] sm:$0xf]
      %v520 = vld [vmem:[%s505 + $0x38] sm:$0xf]
      %v521 = vld [vmem:[%s505 + $0x3c] sm:$0xf]
      %v522 = vld [vmem:[%s505 + $0x40] sm:$0xf]
      %v523 = vld [vmem:[%s505 + $0x44] sm:$0xf]
      %v542 = vunpack.c.l.b16 %v506
      %v543 = vunpack.c.l.b16 %v507
      %v544 = vunpack.c.l.b16 %v508
      %v545 = vunpack.c.l.b16 %v509
      %v546 = vunpack.c.l.b16 %v510
      %v547 = vunpack.c.l.b16 %v511
      %v548 = vunpack.c.l.b16 %v512
      %v549 = vunpack.c.l.b16 %v513
      %v550 = vunpack.c.l.b16 %v514
      %v551 = vunpack.c.l.b16 %v515
      %v552 = vunpack.c.l.b16 %v516
      %v553 = vunpack.c.l.b16 %v517
      %v554 = vunpack.c.l.b16 %v518
      %v555 = vunpack.c.l.b16 %v519
      %v556 = vunpack.c.l.b16 %v520
      %v557 = vunpack.c.l.b16 %v521
      %v558 = vunpack.c.l.b16 %v522
      %v559 = vunpack.c.l.b16 %v523
      %v560 = vpack.c.b16 %v543, %v542
      %v561 = vpack.c.b16 %v545, %v544
      %v562 = vpack.c.b16 %v547, %v546
      %v563 = vpack.c.b16 %v549, %v548
      %v564 = vpack.c.b16 %v551, %v550
      %v565 = vpack.c.b16 %v553, %v552
      %v566 = vpack.c.b16 %v555, %v554
      %v567 = vpack.c.b16 %v557, %v556
      %v568 = vpack.c.b16 %v559, %v558
      %v579 = vsel %vm366, %v489, 0
      %581 = vmatpush.bf16.msra.mxu0 %v567
      %582 = vmatpush.bf16.msra.mxu0 %v566
      %583 = vmatpush.bf16.msra.mxu0 %v565
      %584 = vmatpush.bf16.msra.mxu0 %v564
      %585 = vmatpush.bf16.msra.mxu0 %v563
      %586 = vmatpush.bf16.msra.mxu0 %v562
      %587 = vmatpush.bf16.msra.mxu0 %v561
      %588 = vmatpush.bf16.msra.mxu0 %v560
      %589 = vmatmul.bf16.gmra.mxu0 %v503
      %v590 = vpop.f32.mrf.mxu0
      %v591 = vadd.f32 0.0, %v590
      %v592 = vpop.f32.mrf.mxu0
      %v593 = vadd.f32 0.0, %v592
      %594 = vdwg.mxu0
      %595 = vmatpush.bf16.msra.mxu0 0
      %596 = vmatpush.bf16.msra.mxu0 0
      %597 = vmatpush.bf16.msra.mxu0 0
      %598 = vmatpush.bf16.msra.mxu0 0
      %599 = vmatpush.bf16.msra.mxu0 0
      %600 = vmatpush.bf16.msra.mxu0 0
      %601 = vmatpush.bf16.msra.mxu0 0
      %602 = vmatpush.bf16.msra.mxu0 %v568
      %603 = vmatmul.bf16.gmra.mxu0 %v579
      %v604 = vpop.f32.mrf.mxu0
      %v605 = vadd.f32 %v591, %v604
      %v606 = vpop.f32.mrf.mxu0
      %v607 = vadd.f32 %v593, %v606
      %608 = vdwg.mxu0
      %v627 = vunpack.c.l.b16 %v388
      %v628 = vunpack.c.l.b16 %v389
      %v629 = vunpack.c.l.b16 %v390
      %v630 = vunpack.c.l.b16 %v391
      %v631 = vunpack.c.l.b16 %v392
      %v632 = vunpack.c.l.b16 %v393
      %v633 = vunpack.c.l.b16 %v394
      %v634 = vunpack.c.l.b16 %v395
      %v635 = vunpack.c.l.b16 %v396
      %v636 = vunpack.c.l.b16 %v397
      %v637 = vunpack.c.l.b16 %v398
      %v638 = vunpack.c.l.b16 %v399
      %v639 = vunpack.c.l.b16 %v400
      %v640 = vunpack.c.l.b16 %v401
      %v641 = vunpack.c.l.b16 %v402
      %v642 = vunpack.c.l.b16 %v403
      %v643 = vunpack.c.l.b16 %v404
      %v644 = vunpack.c.l.b16 %v405
      %v645 = vpack.c.b16 %v628, %v627
      %v646 = vpack.c.b16 %v630, %v629
      %v647 = vpack.c.b16 %v632, %v631
      %v648 = vpack.c.b16 %v634, %v633
      %v649 = vpack.c.b16 %v636, %v635
      %v650 = vpack.c.b16 %v638, %v637
      %v651 = vpack.c.b16 %v640, %v639
      %v652 = vpack.c.b16 %v642, %v641
      %v653 = vpack.c.b16 %v644, %v643
      %v664 = vsel %vm366, %v365, 0
      %666 = vmatpush.bf16.msra.mxu0 %v652
      %667 = vmatpush.bf16.msra.mxu0 %v651
      %668 = vmatpush.bf16.msra.mxu0 %v650
      %669 = vmatpush.bf16.msra.mxu0 %v649
      %670 = vmatpush.bf16.msra.mxu0 %v648
      %671 = vmatpush.bf16.msra.mxu0 %v647
      %672 = vmatpush.bf16.msra.mxu0 %v646
      %673 = vmatpush.bf16.msra.mxu0 %v645
      %674 = vmatmul.bf16.gmra.mxu0 %v386
      %v675 = vpop.f32.mrf.mxu0
      %v676 = vadd.f32 %v605, %v675
      %v677 = vpop.f32.mrf.mxu0
      %v678 = vadd.f32 %v607, %v677
      %679 = vdwg.mxu0
      %680 = vmatpush.bf16.msra.mxu0 0
      %681 = vmatpush.bf16.msra.mxu0 0
      %682 = vmatpush.bf16.msra.mxu0 0
      %683 = vmatpush.bf16.msra.mxu0 0
      %684 = vmatpush.bf16.msra.mxu0 0
      %685 = vmatpush.bf16.msra.mxu0 0
      %686 = vmatpush.bf16.msra.mxu0 0
      %687 = vmatpush.bf16.msra.mxu0 %v653
      %688 = vmatmul.bf16.gmra.mxu0 %v664
      %v689 = vpop.f32.mrf.mxu0
      %v690 = vadd.f32 %v676, %v689
      %v691 = vpop.f32.mrf.mxu0
      %v692 = vadd.f32 %v678, %v691
      %693 = vdwg.mxu0
      %s694 = sadd.s32 %s22, 2
      %s695 = smul.u32 %s694, 5
      %s696 = smul.addr %s695, 4
      %s697 = scalar_lea.vmem %s257, %s696
      %v698 = vld [vmem:[%s697] sm:$0xf]
      %v699 = vld [vmem:[%s697 + $0x4] sm:$0xf]
      %v700 = vld [vmem:[%s697 + $0x8] sm:$0xf]
      %v701 = vld [vmem:[%s697 + $0xc] sm:$0xf]
      %v702 = vld [vmem:[%s697 + $0x10] sm:$0xf]
      %v705 = vunpack.c.l.b16 %v698
      %v706 = vunpack.c.l.b16 %v699
      %v707 = vpack.c.b16 %v706, %v705
      %v709 = vunpack.c.l.b16 %v700
      %v710 = vpack.c.b16 %v709, %v709
      %v712 = vshrl.u32 %v707, 16
      %v714 = vshll.u32 %v707, 16
      %v716 = vrot.slane %v714, 1
      %v717 = vor.u32 %v712, %v716
      %v719 = vshll.u32 %v710, 16
      %v721 = vrot.slane %v719, 1
      %v722 = vsel %vm297, %v717, %v721
      %723 = vrot.lane.b32.xlu0 %v722, 16
      %v724 = vpop.permute.xlu0 %723
      %v725 = vrot.slane %v707, 1
      %v726 = vrot.slane %v710, 1
      %v727 = vsel %vm312, %v725, %v726
      %728 = vrot.lane.b32.xlu0 %v727, 32
      %v729 = vpop.permute.xlu0 %728
      %v730 = vpack.c.b16 %v709, %v706
      %731 = vrot.lane.b32.xlu0 %v730, 48
      %v732 = vpop.permute.xlu0 %731
      %v734 = vunpack.c.l.b16 %v701
      %v735 = vpack.c.b16 %v734, %v734
      %v737 = vshrl.u32 %v730, 16
      %v739 = vshll.u32 %v730, 16
      %v741 = vrot.slane %v739, 1
      %v742 = vor.u32 %v737, %v741
      %v744 = vshll.u32 %v735, 16
      %v746 = vrot.slane %v744, 1
      %v747 = vsel %vm297, %v742, %v746
      %748 = vrot.lane.b32.xlu0 %v747, 64
      %v749 = vpop.permute.xlu0 %748
      %v750 = vrot.slane %v730, 1
      %v751 = vrot.slane %v735, 1
      %v752 = vsel %vm312, %v750, %v751
      %753 = vrot.lane.b32.xlu0 %v752, 80
      %v754 = vpop.permute.xlu0 %753
      %v755 = vpack.c.b16 %v734, %v709
      %756 = vrot.lane.b32.xlu0 %v755, 96
      %v757 = vpop.permute.xlu0 %756
      %v759 = vunpack.c.l.b16 %v702
      %v760 = vpack.c.b16 %v759, %v759
      %v762 = vshrl.u32 %v755, 16
      %v764 = vshll.u32 %v755, 16
      %v766 = vrot.slane %v764, 1
      %v767 = vor.u32 %v762, %v766
      %v769 = vshll.u32 %v760, 16
      %v771 = vrot.slane %v769, 1
      %v772 = vsel %vm297, %v767, %v771
      %773 = vrot.lane.b32.xlu0 %v772, 112
      %v774 = vpop.permute.xlu0 %773
      %v775 = vrot.slane %v755, 1
      %v776 = vrot.slane %v760, 1
      %v777 = vsel %vm312, %v775, %v776
      %v779 = vsel %vm366, %v707, %v724
      %v781 = vsel %vm369, %v779, %v729
      %v783 = vsel %vm372, %v781, %v732
      %v785 = vsel %vm375, %v783, %v749
      %v787 = vsel %vm378, %v785, %v754
      %v789 = vsel %vm381, %v787, %v757
      %v791 = vsel %vm384, %v789, %v774
      %s793 = scalar_lea.vmem %s261, 144
      %v794 = vld [vmem:[%s793] sm:$0xf]
      %v795 = vld [vmem:[%s793 + $0x4] sm:$0xf]
      %v796 = vld [vmem:[%s793 + $0x8] sm:$0xf]
      %v797 = vld [vmem:[%s793 + $0xc] sm:$0xf]
      %v798 = vld [vmem:[%s793 + $0x10] sm:$0xf]
      %v799 = vld [vmem:[%s793 + $0x14] sm:$0xf]
      %v800 = vld [vmem:[%s793 + $0x18] sm:$0xf]
      %v801 = vld [vmem:[%s793 + $0x1c] sm:$0xf]
      %v802 = vld [vmem:[%s793 + $0x20] sm:$0xf]
      %v803 = vld [vmem:[%s793 + $0x24] sm:$0xf]
      %v804 = vld [vmem:[%s793 + $0x28] sm:$0xf]
      %v805 = vld [vmem:[%s793 + $0x2c] sm:$0xf]
      %v806 = vld [vmem:[%s793 + $0x30] sm:$0xf]
      %v807 = vld [vmem:[%s793 + $0x34] sm:$0xf]
      %v808 = vld [vmem:[%s793 + $0x38] sm:$0xf]
      %v809 = vld [vmem:[%s793 + $0x3c] sm:$0xf]
      %v810 = vld [vmem:[%s793 + $0x40] sm:$0xf]
      %v811 = vld [vmem:[%s793 + $0x44] sm:$0xf]
      %v830 = vunpack.c.l.b16 %v794
      %v831 = vunpack.c.l.b16 %v795
      %v832 = vunpack.c.l.b16 %v796
      %v833 = vunpack.c.l.b16 %v797
      %v834 = vunpack.c.l.b16 %v798
      %v835 = vunpack.c.l.b16 %v799
      %v836 = vunpack.c.l.b16 %v800
      %v837 = vunpack.c.l.b16 %v801
      %v838 = vunpack.c.l.b16 %v802
      %v839 = vunpack.c.l.b16 %v803
      %v840 = vunpack.c.l.b16 %v804
      %v841 = vunpack.c.l.b16 %v805
      %v842 = vunpack.c.l.b16 %v806
      %v843 = vunpack.c.l.b16 %v807
      %v844 = vunpack.c.l.b16 %v808
      %v845 = vunpack.c.l.b16 %v809
      %v846 = vunpack.c.l.b16 %v810
      %v847 = vunpack.c.l.b16 %v811
      %v848 = vpack.c.b16 %v831, %v830
      %v849 = vpack.c.b16 %v833, %v832
      %v850 = vpack.c.b16 %v835, %v834
      %v851 = vpack.c.b16 %v837, %v836
      %v852 = vpack.c.b16 %v839, %v838
      %v853 = vpack.c.b16 %v841, %v840
      %v854 = vpack.c.b16 %v843, %v842
      %v855 = vpack.c.b16 %v845, %v844
      %v856 = vpack.c.b16 %v847, %v846
      %v867 = vsel %vm366, %v777, 0
      %869 = vmatpush.bf16.msra.mxu0 %v855
      %870 = vmatpush.bf16.msra.mxu0 %v854
      %871 = vmatpush.bf16.msra.mxu0 %v853
      %872 = vmatpush.bf16.msra.mxu0 %v852
      %873 = vmatpush.bf16.msra.mxu0 %v851
      %874 = vmatpush.bf16.msra.mxu0 %v850
      %875 = vmatpush.bf16.msra.mxu0 %v849
      %876 = vmatpush.bf16.msra.mxu0 %v848
      %877 = vmatmul.bf16.gmra.mxu0 %v791
      %v878 = vpop.f32.mrf.mxu0
      %v879 = vadd.f32 0.0, %v878
      %v880 = vpop.f32.mrf.mxu0
      %v881 = vadd.f32 0.0, %v880
      %882 = vdwg.mxu0
      %883 = vmatpush.bf16.msra.mxu0 0
      %884 = vmatpush.bf16.msra.mxu0 0
      %885 = vmatpush.bf16.msra.mxu0 0
      %886 = vmatpush.bf16.msra.mxu0 0
      %887 = vmatpush.bf16.msra.mxu0 0
      %888 = vmatpush.bf16.msra.mxu0 0
      %889 = vmatpush.bf16.msra.mxu0 0
      %890 = vmatpush.bf16.msra.mxu0 %v856
      %891 = vmatmul.bf16.gmra.mxu0 %v867
      %v892 = vpop.f32.mrf.mxu0
      %v893 = vadd.f32 %v879, %v892
      %v894 = vpop.f32.mrf.mxu0
      %v895 = vadd.f32 %v881, %v894
      %896 = vdwg.mxu0
      %v897 = vadd.f32 %v690, %v893
      %v898 = vadd.f32 %v692, %v895
      %v899 = vld [vmem:[%s264] sm:$0x1]
      %v901 = vperm.slane %v899, 0
      %v903 = vmul.f32 %v897, %v901
      %v904 = vmul.f32 %v898, %v901
      %v905 = vld [vmem:[%s267] sm:$0x1]
      %v907 = vperm.slane %v905, 0
      %v909 = vadd.f32 %v903, %v907
      %v910 = vadd.f32 %v904, %v907
      %v911 = vmax.f32 %v909, 0.0
      %v912 = vmax.f32 %v910, 0.0
      %v913 = vpack.c.bf16 %v911, %v911
      %v914 = vpack.c.bf16 %v912, %v912
      %vm915 = vcmask 125952
      %916 = vst.msk [vmem:[%s279] sm:$0xf] %vm915, %v913
      %917 = vst.msk [vmem:[%s279 + $0x4] sm:$0xf] %vm915, %v914
      %p918 = scmp.lt.s32.totalorder %s21, 1
      %s919 = scalar_select %p918, %s21, 1
      %p920 = scmp.lt.s32.totalorder %s22, 1
      %s921 = scalar_select %p920, %s22, 1
      %p922 = scmp.lt.s32.totalorder %s20, 0
      %s923 = scalar_select %p922, %s20, 0
      %s924 = smul.addr %s921, 2
      %s925 = sadd.s32 %s923, %s924
      %s926 = smul.addr %s919, 4
      %s927 = sadd.s32 %s925, %s926
      %s928 = smul.addr %s927, 4
      %s929 = scalar_lea.vmem %s4, %s928
      // Predicated region
      $region37: #{ae_forward.19} parent=35 // pred_check
        %p930 = pneg %p160
      $region38: #{ae_forward.19} parent=35 // pred_check_branch
        %932 = sbr.rel (%p930) target = $region40
      $region39: #{ae_forward.19} parent=35 // pred_region
        _
      $region40: #{ae_forward.19} parent=35 // pred_fallthru
        _
    $region36: #{ae_forward.19} parent=5 // pred_fallthru
      _
    %p933 = scmp.le.s32.totalorder 2, %s10
    // Predicated region
    $region41: #{ae_forward.19} parent=5 // pred_check
      %p934 = pneg %p933
    $region42: #{ae_forward.19} parent=5 // pred_check_branch
      %936 = sbr.rel (%p934) target = $region44
    $region43: #{ae_forward.19} parent=5 // pred_region
      %s937 = ssub.s32 %s10, 2
      // Predicated region
      $region45: #{ae_forward.19} parent=43 // pred_check
        %p938 = pneg %p166
      $region46: #{ae_forward.19} parent=43 // pred_check_branch
        %940 = sbr.rel (%p938) target = $region48
      $region47: #{ae_forward.19} parent=43 // pred_region
        %p941 = scmp.lt.s32.totalorder %s24, 1
        %s942 = scalar_select %p941, %s24, 1
        %p943 = scmp.lt.s32.totalorder %s25, 1
        %s944 = scalar_select %p943, %s25, 1
        %p945 = scmp.lt.s32.totalorder %s23, 0
        %s946 = scalar_select %p945, %s23, 0
        %s947 = smul.addr %s944, 2
        %s948 = sadd.s32 %s946, %s947
        %s949 = smul.addr %s942, 4
        %s950 = sadd.s32 %s948, %s949
        %s951 = smul.addr %s950, 4
        %s952 = scalar_lea.vmem %s4, %s951
      $region48: #{ae_forward.19} parent=43 // pred_fallthru
        _
    $region44: #{ae_forward.19} parent=5 // pred_fallthru
      _
  $region6: #{ae_forward.19} parent=0 // loop_footer
    %s14 = sadd.s32 1, %s10
  $region7: #{ae_forward.19} parent=0 // loop_footer_branch
    %9 = sbr.rel target = $region3
  $region8: #{ae_forward.19} parent=0 // loop_exit
    _

// kernel: ae_forward.20
$region0: #{ae_forward.20}
  #allocation0 [shape = 'u32[]', space=smem, size = 0x4, offset = 0x4, fixed_abs, tag = 'smem constant byte address 0x4 - core index']
  #allocation1 [shape = 'u32[72,128]{1,0:T(1,128)}', space=vmem, size = 0x9000, scoped, tag = 'internal scratch']
  #allocation2 [shape = 'f32[8,64]{1,0:T(8,128)}', space=vmem, size = 0x1000, scoped, tag = 'scratch operand']
  %s0 = inlined_call_operand.vmem [shape: bf16[16,16], index: 0, kind: input, shape index: {}]
  %s1 = inlined_call_operand.vmem [shape: bf16[16,64], index: 1, kind: input, shape index: {}]
  %s2 = inlined_call_operand.vmem [shape: f32[1,64], index: 2, kind: input, shape index: {}]
  %s3 = inlined_call_operand.vmem [shape: f32[1,64], index: 3, kind: input, shape index: {}]
  %s4 = inlined_call_operand.vmem [shape: bf16[16,64], index: 4, kind: output, shape index: {}]
  %s5 = sld [smem:[#allocation0]]
  $region57: #{ae_forward.20} parent=0
    _
  %s7 = ssub.s32 1, %s5
  %s8 = scalar_select 0, %s7, %s5
  loop: start=0, step=1, limit=4
  $region2: #{ae_forward.20} parent=0 // loop_pre_header
    _
  $region3: #{ae_forward.20} parent=0 // loop_header
    %s10 = sphi 0, %s14
    %p11 = scmp.ge.s32.totalorder %s10, 4
    %s17 = sphi 0, %s36
    %s18 = sphi 0, %s32
    %s19 = sphi 0, %s28
    %s20 = sphi 0, %s17
    %s21 = sphi 0, %s18
    %s22 = sphi 0, %s19
    %s23 = sphi 0, %s20
    %s24 = sphi 0, %s21
    %s25 = sphi 0, %s22
    %s41 = sphi 0, %s43
    %s44 = sphi 0, %s41
    %s45 = sphi 0, %s44
    %s61 = sphi 0, %s45
    %s69 = sphi 0, %s71
    %s72 = sphi 0, %s69
    %s73 = sphi 0, %s72
    %s89 = sphi 0, %s73
    %s95 = sphi 0, %s97
    %s98 = sphi 0, %s95
    %s99 = sphi 0, %s98
    %s115 = sphi 0, %s99
    %s121 = sphi 0, %s123
    %s124 = sphi 0, %s121
    %s125 = sphi 0, %s124
    %s141 = sphi 0, %s125
    %s149 = sphi 0, %s151
    %s152 = sphi 0, %s149
    %s153 = sphi 0, %s152
    %s169 = sphi 0, %s153
  $region4: #{ae_forward.20} parent=0 // loop_header_branch
    %13 = sbr.rel (%p11) target = $region8
  $region5: #{ae_forward.20} parent=0 // loop_body
    %s15 = ssub.s32 %s10, 1
    %s16 = ssub.s32 %s10, 2
    %s26 = sadd.s32 1, %s19
    %p27 = scmp.ge.s32.totalorder %s26, 1
    %s28 = scalar_select %p27, 0, %s26
    %s29 = sadd.s32 1, %s18
    %s30 = scalar_select %p27, %s29, %s18
    %p31 = scmp.ge.s32.totalorder %s30, 1
    %s32 = scalar_select %p31, 0, %s30
    %s33 = sadd.s32 1, %s17
    %s34 = scalar_select %p31, %s33, %s17
    %p35 = scmp.ge.s32.totalorder %s34, 2
    %s36 = scalar_select %p35, 0, %s34
    %s37 = ssub.s32 %s17, %s36
    %s38 = ssub.s32 %s19, %s28
    %s39 = sor.u32 %s37, %s38
    %p40 = scmp.eq.s32.totalorder %s39, 0
    %s42 = sadd.s32 %s41, 1
    %s43 = scalar_select %p40, %s41, %s42
    %p46 = pneg %p40
    %p47 = scmp.eq.s32.totalorder %s10, 1
    %p48 = por %p46, %p47
    %p49 = scmp.ne.s32.totalorder %s41, %s44
    %p50 = scmp.eq.s32.totalorder %s10, 0
    %p51 = por %p49, %p50
    %p52 = scmp.ne.s32.totalorder %s41, %s44
    %p53 = scmp.eq.s32.totalorder %s15, 1
    %p54 = por %p52, %p53
    %p55 = scmp.ne.s32.totalorder %s44, %s45
    %p56 = scmp.eq.s32.totalorder %s15, 0
    %p57 = por %p55, %p56
    %p58 = scmp.ne.s32.totalorder %s44, %s45
    %p59 = scmp.eq.s32.totalorder %s16, 1
    %p60 = por %p58, %p59
    %p62 = scmp.ne.s32.totalorder %s45, %s61
    %p63 = scmp.eq.s32.totalorder %s16, 0
    %p64 = por %p62, %p63
    %s65 = ssub.s32 %s19, %s28
    %s66 = ssub.s32 %s18, %s32
    %s67 = sor.u32 %s65, %s66
    %p68 = scmp.eq.s32.totalorder %s67, 0
    %s70 = sadd.s32 %s69, 1
    %s71 = scalar_select %p68, %s69, %s70
    %p74 = pneg %p68
    %p75 = scmp.eq.s32.totalorder %s10, 1
    %p76 = por %p74, %p75
    %p77 = scmp.ne.s32.totalorder %s69, %s72
    %p78 = scmp.eq.s32.totalorder %s10, 0
    %p79 = por %p77, %p78
    %p80 = scmp.ne.s32.totalorder %s69, %s72
    %p81 = scmp.eq.s32.totalorder %s15, 1
    %p82 = por %p80, %p81
    %p83 = scmp.ne.s32.totalorder %s72, %s73
    %p84 = scmp.eq.s32.totalorder %s15, 0
    %p85 = por %p83, %p84
    %p86 = scmp.ne.s32.totalorder %s72, %s73
    %p87 = scmp.eq.s32.totalorder %s16, 1
    %p88 = por %p86, %p87
    %p90 = scmp.ne.s32.totalorder %s73, %s89
    %p91 = scmp.eq.s32.totalorder %s16, 0
    %p92 = por %p90, %p91
    %s93 = ssub.s32 %s18, %s32
    %p94 = scmp.eq.s32.totalorder %s93, 0
    %s96 = sadd.s32 %s95, 1
    %s97 = scalar_select %p94, %s95, %s96
    %p100 = pneg %p94
    %p101 = scmp.eq.s32.totalorder %s10, 1
    %p102 = por %p100, %p101
    %p103 = scmp.ne.s32.totalorder %s95, %s98
    %p104 = scmp.eq.s32.totalorder %s10, 0
    %p105 = por %p103, %p104
    %p106 = scmp.ne.s32.totalorder %s95, %s98
    %p107 = scmp.eq.s32.totalorder %s15, 1
    %p108 = por %p106, %p107
    %p109 = scmp.ne.s32.totalorder %s98, %s99
    %p110 = scmp.eq.s32.totalorder %s15, 0
    %p111 = por %p109, %p110
    %p112 = scmp.ne.s32.totalorder %s98, %s99
    %p113 = scmp.eq.s32.totalorder %s16, 1
    %p114 = por %p112, %p113
    %p116 = scmp.ne.s32.totalorder %s99, %s115
    %p117 = scmp.eq.s32.totalorder %s16, 0
    %p118 = por %p116, %p117
    %s119 = ssub.s32 %s18, %s32
    %p120 = scmp.eq.s32.totalorder %s119, 0
    %s122 = sadd.s32 %s121, 1
    %s123 = scalar_select %p120, %s121, %s122
    %p126 = pneg %p120
    %p127 = scmp.eq.s32.totalorder %s10, 1
    %p128 = por %p126, %p127
    %p129 = scmp.ne.s32.totalorder %s121, %s124
    %p130 = scmp.eq.s32.totalorder %s10, 0
    %p131 = por %p129, %p130
    %p132 = scmp.ne.s32.totalorder %s121, %s124
    %p133 = scmp.eq.s32.totalorder %s15, 1
    %p134 = por %p132, %p133
    %p135 = scmp.ne.s32.totalorder %s124, %s125
    %p136 = scmp.eq.s32.totalorder %s15, 0
    %p137 = por %p135, %p136
    %p138 = scmp.ne.s32.totalorder %s124, %s125
    %p139 = scmp.eq.s32.totalorder %s16, 1
    %p140 = por %p138, %p139
    %p142 = scmp.ne.s32.totalorder %s125, %s141
    %p143 = scmp.eq.s32.totalorder %s16, 0
    %p144 = por %p142, %p143
    %s145 = ssub.s32 %s17, %s36
    %s146 = ssub.s32 %s18, %s32
    %s147 = sor.u32 %s145, %s146
    %p148 = scmp.eq.s32.totalorder %s147, 0
    %s150 = sadd.s32 %s149, 1
    %s151 = scalar_select %p148, %s149, %s150
    %p154 = pneg %p148
    %p155 = scmp.eq.s32.totalorder %s10, 1
    %p156 = por %p154, %p155
    %p157 = scmp.ne.s32.totalorder %s149, %s152
    %p158 = scmp.eq.s32.totalorder %s10, 0
    %p159 = por %p157, %p158
    %p160 = scmp.ne.s32.totalorder %s149, %s152
    %p161 = scmp.eq.s32.totalorder %s15, 1
    %p162 = por %p160, %p161
    %p163 = scmp.ne.s32.totalorder %s152, %s153
    %p164 = scmp.eq.s32.totalorder %s15, 0
    %p165 = por %p163, %p164
    %p166 = scmp.ne.s32.totalorder %s152, %s153
    %p167 = scmp.eq.s32.totalorder %s16, 1
    %p168 = por %p166, %p167
    %p170 = scmp.ne.s32.totalorder %s153, %s169
    %p171 = scmp.eq.s32.totalorder %s16, 0
    %p172 = por %p170, %p171
    %p173 = scmp.le.s32.totalorder 1, %s10
    %p174 = scmp.lt.s32.totalorder %s10, 3
    %p175 = pnand %p173, %p174
    %p176 = pneg %p175
    // Predicated region
    $region9: #{ae_forward.20} parent=5 // pred_check
      _
    $region10: #{ae_forward.20} parent=5 // pred_check_branch
      %178 = sbr.rel (%p175) target = $region12
    $region11: #{ae_forward.20} parent=5 // pred_region
      %s179 = ssub.s32 %s10, 1
      // Predicated region
      $region13: #{ae_forward.20} parent=11 // pred_check
        %p180 = pneg %p85
      $region14: #{ae_forward.20} parent=11 // pred_check_branch
        %182 = sbr.rel (%p180) target = $region16
      $region15: #{ae_forward.20} parent=11 // pred_region
        %s183 = smul.u32 2, %s22
        %p184 = scmp.lt.s32.totalorder %s183, 1
        %s185 = scalar_select %p184, %s183, 1
        %p186 = scmp.lt.s32.totalorder %s21, 0
        %s187 = scalar_select %p186, %s21, 0
        %s188 = sadd.s32 %s187, %s185
        %s189 = smul.addr %s188, 4
        %s190 = scalar_lea.vmem %s1, %s189
        %s191 = smul.u32 2, %s22
      $region16: #{ae_forward.20} parent=11 // pred_fallthru
        _
      // Predicated region
      $region17: #{ae_forward.20} parent=11 // pred_check
        %p192 = pneg %p111
      $region18: #{ae_forward.20} parent=11 // pred_check_branch
        %194 = sbr.rel (%p192) target = $region20
      $region19: #{ae_forward.20} parent=11 // pred_region
        %p195 = scmp.lt.s32.totalorder %s21, 0
        %s196 = scalar_select %p195, %s21, 0
        %s197 = scalar_lea.vmem %s2, %s196
      $region20: #{ae_forward.20} parent=11 // pred_fallthru
        _
      // Predicated region
      $region21: #{ae_forward.20} parent=11 // pred_check
        %p198 = pneg %p137
      $region22: #{ae_forward.20} parent=11 // pred_check_branch
        %200 = sbr.rel (%p198) target = $region24
      $region23: #{ae_forward.20} parent=11 // pred_region
        %p201 = scmp.lt.s32.totalorder %s21, 0
        %s202 = scalar_select %p201, %s21, 0
        %s203 = scalar_lea.vmem %s3, %s202
      $region24: #{ae_forward.20} parent=11 // pred_fallthru
        _
    $region12: #{ae_forward.20} parent=5 // pred_fallthru
      _
    %p204 = scmp.lt.s32.totalorder %s10, 2
    // Predicated region
    $region25: #{ae_forward.20} parent=5 // pred_check
      %p205 = pneg %p204
    $region26: #{ae_forward.20} parent=5 // pred_check_branch
      %207 = sbr.rel (%p205) target = $region28
    $region27: #{ae_forward.20} parent=5 // pred_region
      // Predicated region
      $region29: #{ae_forward.20} parent=27 // pred_check
        %p208 = pneg %p51
      $region30: #{ae_forward.20} parent=27 // pred_check_branch
        %210 = sbr.rel (%p208) target = $region32
      $region31: #{ae_forward.20} parent=27 // pred_region
        %p211 = scmp.lt.s32.totalorder %s17, 1
        %s212 = scalar_select %p211, %s17, 1
        %p213 = scmp.lt.s32.totalorder %s19, 0
        %s214 = scalar_select %p213, %s19, 0
        %s215 = sadd.s32 %s214, %s212
        %s216 = smul.addr %s215, 4
        %s217 = scalar_lea.vmem %s0, %s216
      $region32: #{ae_forward.20} parent=27 // pred_fallthru
        _
    $region28: #{ae_forward.20} parent=5 // pred_fallthru
      _
    %p218 = scmp.le.s32.totalorder 1, %s10
    %p219 = scmp.lt.s32.totalorder %s10, 3
    %p220 = pnand %p218, %p219
    %p221 = pneg %p220
    // Predicated region
    $region33: #{ae_forward.20} parent=5 // pred_check
      _
    $region34: #{ae_forward.20} parent=5 // pred_check_branch
      %223 = sbr.rel (%p220) target = $region36
    $region35: #{ae_forward.20} parent=5 // pred_region
      %s224 = ssub.s32 %s10, 1
      %p225 = scmp.lt.s32.totalorder %s20, 1
      %s226 = scalar_select %p225, %s20, 1
      %p227 = scmp.lt.s32.totalorder %s22, 0
      %s228 = scalar_select %p227, %s22, 0
      %s229 = sadd.s32 %s228, %s226
      %s230 = smul.addr %s229, 4
      %s231 = scalar_lea.vmem %s0, %s230
      %p232 = pneg %p57
      %p233 = pneg %p54
      %s234 = smul.u32 2, %s22
      %p235 = scmp.lt.s32.totalorder %s234, 1
      %s236 = scalar_select %p235, %s234, 1
      %p237 = scmp.lt.s32.totalorder %s21, 0
      %s238 = scalar_select %p237, %s21, 0
      %s239 = sadd.s32 %s238, %s236
      %s240 = smul.addr %s239, 4
      %s241 = scalar_lea.vmem %s1, %s240
      %p242 = pneg %p85
      %p243 = pneg %p82
      %p244 = scmp.lt.s32.totalorder %s21, 0
      %s245 = scalar_select %p244, %s21, 0
      %s246 = scalar_lea.vmem %s2, %s245
      %p247 = pneg %p111
      %p248 = pneg %p108
      %p249 = scmp.lt.s32.totalorder %s21, 0
      %s250 = scalar_select %p249, %s21, 0
      %s251 = scalar_lea.vmem %s3, %s250
      %p252 = pneg %p137
      %p253 = pneg %p134
      %p254 = pneg %p165
      %p255 = pneg %p162
      %p256 = scmp.lt.s32.totalorder %s20, 1
      %s257 = scalar_select %p256, %s20, 1
      %p258 = scmp.lt.s32.totalorder %s21, 0
      %s259 = scalar_select %p258, %s21, 0
      %s260 = sadd.s32 %s259, %s257
      %s261 = smul.addr %s260, 4
      %s262 = scalar_lea.vmem %s4, %s261
      %p263 = scmp.lt.s32.totalorder %s20, 1
      %s264 = scalar_select %p263, %s20, 1
      %p265 = scmp.lt.s32.totalorder %s22, 0
      %s266 = scalar_select %p265, %s22, 0
      %s267 = sadd.s32 %s266, %s264
      %s268 = smul.addr %s267, 4
      %s269 = scalar_lea.vmem %s0, %s268
      %s270 = smul.u32 2, %s22
      %p271 = scmp.lt.s32.totalorder %s270, 1
      %s272 = scalar_select %p271, %s270, 1
      %p273 = scmp.lt.s32.totalorder %s21, 0
      %s274 = scalar_select %p273, %s21, 0
      %s275 = sadd.s32 %s274, %s272
      %s276 = smul.addr %s275, 4
      %s277 = scalar_lea.vmem %s1, %s276
      %s278 = smul.u32 2, %s22
      %p279 = scmp.lt.s32.totalorder %s21, 0
      %s280 = scalar_select %p279, %s21, 0
      %s281 = scalar_lea.vmem %s2, %s280
      %p282 = scmp.lt.s32.totalorder %s21, 0
      %s283 = scalar_select %p282, %s21, 0
      %s284 = scalar_lea.vmem %s3, %s283
      %p285 = scmp.lt.s32.totalorder %s20, 1
      %s286 = scalar_select %p285, %s20, 1
      %p287 = scmp.lt.s32.totalorder %s21, 0
      %s288 = scalar_select %p287, %s21, 0
      %s289 = sadd.s32 %s288, %s286
      %s290 = smul.addr %s289, 4
      %s291 = scalar_lea.vmem %s4, %s290
      %p293 = scmp.eq.s32.totalorder %s22, 0
      // Predicated region
      $region37: #{ae_forward.20} parent=35 // pred_check
        %p294 = pneg %p293
      $region38: #{ae_forward.20} parent=35 // pred_check_branch
        %296 = sbr.rel (%p294) target = $region40
      $region39: #{ae_forward.20} parent=35 // pred_region
        %vm297 = vcmask 523264
        %298 = vst.msk [vmem:[#allocation2] sm:$0xff] %vm297, 0.0
      $region40: #{ae_forward.20} parent=35 // pred_fallthru
        _
      %v299 = vld [vmem:[#allocation2] sm:$0xff]
      %v300 = vld [vmem:[%s269] sm:$0xf]
      %v301 = vld [vmem:[%s277] sm:$0xf]
      %v302 = vld [vmem:[%s277 + $0x4] sm:$0xf]
      %v305 = vunpack.c.l.b16 %v301
      %v306 = vunpack.c.l.b16 %v302
      %v307 = vpack.c.b16 %v306, %v305
      %vm309 = vcmask 130048
      %v311 = vsel %vm309, %v300, 0
      %313 = vmatpush.bf16.msra.mxu0 0
      %314 = vmatpush.bf16.msra.mxu0 0
      %315 = vmatpush.bf16.msra.mxu0 0
      %316 = vmatpush.bf16.msra.mxu0 0
      %317 = vmatpush.bf16.msra.mxu0 0
      %318 = vmatpush.bf16.msra.mxu0 0
      %319 = vmatpush.bf16.msra.mxu0 0
      %320 = vmatpush.bf16.msra.mxu0 %v307
      %321 = vmatmul.bf16.gmra.mxu0 %v311
      %v322 = vpop.f32.mrf.mxu0
      %v323 = vadd.f32 0.0, %v322
      %v324 = vpop.f32.mrf.mxu0
      %325 = vdwg.mxu0
      %v326 = vadd.f32 %v299, %v323
      %vm327 = vcmask 523264
      %328 = vst.msk [vmem:[#allocation2] sm:$0xff] %vm327, %v326
      // Predicated region
      $region41: #{ae_forward.20} parent=35 // pred_check
        %p329 = pneg %p293
      $region42: #{ae_forward.20} parent=35 // pred_check_branch
        %331 = sbr.rel (%p329) target = $region44
      $region43: #{ae_forward.20} parent=35 // pred_region
        %v332 = vld [vmem:[#allocation2] sm:$0xff]
        %v333 = vld [vmem:[%s281] sm:$0x1]
        %v335 = vperm.slane %v333, 0
        %v337 = vmul.f32 %v332, %v335
        %v338 = vld [vmem:[%s284] sm:$0x1]
        %v340 = vperm.slane %v338, 0
        %v342 = vadd.f32 %v337, %v340
        %v343 = vmax.f32 %v342, 0.0
        %v344 = vpack.c.bf16 %v343, %v343
        %vm345 = vcmask 519168
        %346 = vst.msk [vmem:[%s291] sm:$0xf] %vm345, %v344
      $region44: #{ae_forward.20} parent=35 // pred_fallthru
        _
      %p347 = scmp.lt.s32.totalorder %s20, 1
      %s348 = scalar_select %p347, %s20, 1
      %p349 = scmp.lt.s32.totalorder %s21, 0
      %s350 = scalar_select %p349, %s21, 0
      %s351 = sadd.s32 %s350, %s348
      %s352 = smul.addr %s351, 4
      %s353 = scalar_lea.vmem %s4, %s352
      // Predicated region
      $region45: #{ae_forward.20} parent=35 // pred_check
        %p354 = pneg %p162
      $region46: #{ae_forward.20} parent=35 // pred_check_branch
        %356 = sbr.rel (%p354) target = $region48
      $region47: #{ae_forward.20} parent=35 // pred_region
        _
      $region48: #{ae_forward.20} parent=35 // pred_fallthru
        _
    $region36: #{ae_forward.20} parent=5 // pred_fallthru
      _
    %p357 = scmp.le.s32.totalorder 2, %s10
    // Predicated region
    $region49: #{ae_forward.20} parent=5 // pred_check
      %p358 = pneg %p357
    $region50: #{ae_forward.20} parent=5 // pred_check_branch
      %360 = sbr.rel (%p358) target = $region52
    $region51: #{ae_forward.20} parent=5 // pred_region
      %s361 = ssub.s32 %s10, 2
      // Predicated region
      $region53: #{ae_forward.20} parent=51 // pred_check
        %p362 = pneg %p168
      $region54: #{ae_forward.20} parent=51 // pred_check_branch
        %364 = sbr.rel (%p362) target = $region56
      $region55: #{ae_forward.20} parent=51 // pred_region
        %p365 = scmp.lt.s32.totalorder %s23, 1
        %s366 = scalar_select %p365, %s23, 1
        %p367 = scmp.lt.s32.totalorder %s24, 0
        %s368 = scalar_select %p367, %s24, 0
        %s369 = sadd.s32 %s368, %s366
        %s370 = smul.addr %s369, 4
        %s371 = scalar_lea.vmem %s4, %s370
      $region56: #{ae_forward.20} parent=51 // pred_fallthru
        _
    $region52: #{ae_forward.20} parent=5 // pred_fallthru
      _
  $region6: #{ae_forward.20} parent=0 // loop_footer
    %s14 = sadd.s32 1, %s10
  $region7: #{ae_forward.20} parent=0 // loop_footer_branch
    %9 = sbr.rel target = $region3
  $region8: #{ae_forward.20} parent=0 // loop_exit
    _

// kernel: tile.33
$region0: #{tile.33}
  #allocation0 [shape = 's32[1]{0}', space=sflag, size = 0x4, scoped, tag = 'scoped memory for tile.33']
  %s0 = inlined_call_operand.vmem [shape: f32[4], index: 0, kind: input, shape index: {}]
  %s1 = inlined_call_operand.vmem [shape: f32[8,4], index: 1, kind: output, shape index: {}]
  // Predicated region
  $region2: #{tile.33} parent=0 // pred_check
    _
  $region3: #{tile.33} parent=0 // pred_check_branch
    %3 = sbr.rel (0) target = $region5
  $region4: #{tile.33} parent=0 // pred_region
    _
  $region5: #{tile.33} parent=0 // pred_fallthru
    _
  %v4 = vld [vmem:[%s0] ss:$0 sm:$0xff]
  %5 = vst [vmem:[%s1] sm:$0xff] %v4

// kernel: tile.38
$region0: #{tile.38}
  %s0 = inlined_call_operand.vmem [shape: f32[8,4], index: 0, kind: input, shape index: {}]
  %s1 = inlined_call_operand.vmem [shape: f32[1,32], index: 1, kind: output, shape index: {}]
  $region1: #{tile.38} parent=0
    #allocation0 [shape = 'u8[4096]{0}', space=vmem, size = 0x1000, scoped, tag = 'scoped mem for output reshape']
    %v2 = vld [vmem:[%s0] sm:$0x1]
    %vm3 = vcmask 31744
    %4 = vst.msk [vmem:[#allocation0] sm:$0x1] %vm3, %v2
    %s5 = scalar_lea.vmem %s0, 7
    %v6 = vld [vmem:[%s5] sm:$0x1]
    %7 = vrot.lane.b32.xlu0 %v6, 28
    %v8 = vpop.permute.xlu0 %7
    %vm9 = vcmask 261344
    %10 = vst.msk [vmem:[#allocation0] sm:$0x1] %vm9, %v8
    %s11 = scalar_lea.vmem %s0, 6
    %v12 = vld [vmem:[%s11] sm:$0x1]
    %13 = vrot.lane.b32.xlu0 %v12, 24
    %v14 = vpop.permute.xlu0 %13
    %vm15 = vcmask 228544
    %16 = vst.msk [vmem:[#allocation0] sm:$0x1] %vm15, %v14
    %s17 = scalar_lea.vmem %s0, 5
    %v18 = vld [vmem:[%s17] sm:$0x1]
    %19 = vrot.lane.b32.xlu0 %v18, 20
    %v20 = vpop.permute.xlu0 %19
    %vm21 = vcmask 195744
    %22 = vst.msk [vmem:[#allocation0] sm:$0x1] %vm21, %v20
    %s23 = scalar_lea.vmem %s0, 4
    %v24 = vld [vmem:[%s23] sm:$0x1]
    %25 = vrot.lane.b32.xlu0 %v24, 16
    %v26 = vpop.permute.xlu0 %25
    %vm27 = vcmask 162944
    %28 = vst.msk [vmem:[#allocation0] sm:$0x1] %vm27, %v26
    %s29 = scalar_lea.vmem %s0, 3
    %v30 = vld [vmem:[%s29] sm:$0x1]
    %31 = vrot.lane.b32.xlu0 %v30, 12
    %v32 = vpop.permute.xlu0 %31
    %vm33 = vcmask 130144
    %34 = vst.msk [vmem:[#allocation0] sm:$0x1] %vm33, %v32
    %s35 = scalar_lea.vmem %s0, 2
    %v36 = vld [vmem:[%s35] sm:$0x1]
    %37 = vrot.lane.b32.xlu0 %v36, 8
    %v38 = vpop.permute.xlu0 %37
    %vm39 = vcmask 97344
    %40 = vst.msk [vmem:[#allocation0] sm:$0x1] %vm39, %v38
    %s41 = scalar_lea.vmem %s0, 1
    %v42 = vld [vmem:[%s41] sm:$0x1]
    %43 = vrot.lane.b32.xlu0 %v42, 4
    %v44 = vpop.permute.xlu0 %43
    %vm45 = vcmask 64544
    %46 = vst.msk [vmem:[#allocation0] sm:$0x1] %vm45, %v44
    %s48 = ssub.s32 2, 1
    %v49 = vld [vmem:[#allocation0] sm:%s48]
    %s51 = ssub.s32 2, 1
    %52 = vst [vmem:[%s1] sm:%s51] %v49

// kernel: ae_forward.21
$region0: #{ae_forward.21}
  #allocation0 [shape = 'u32[]', space=smem, size = 0x4, offset = 0x4, fixed_abs, tag = 'smem constant byte address 0x4 - core index']
  #allocation1 [shape = 'u32[72,128]{1,0:T(1,128)}', space=vmem, size = 0x9000, scoped, tag = 'internal scratch']
  #allocation2 [shape = 'f32[64,8]{1,0:T(8,128)}', space=vmem, size = 0x8000, scoped, tag = 'scratch operand']
  %s0 = inlined_call_operand.vmem [shape: bf16[128,8], index: 0, kind: input, shape index: {}]
  %s1 = inlined_call_operand.vmem [shape: bf16[8,8], index: 1, kind: input, shape index: {}]
  %s2 = inlined_call_operand.vmem [shape: f32[1,8], index: 2, kind: input, shape index: {}]
  %s3 = inlined_call_operand.vmem [shape: f32[1,8], index: 3, kind: input, shape index: {}]
  %s4 = inlined_call_operand.vmem [shape: bf16[128,8], index: 4, kind: output, shape index: {}]
  %s5 = sld [smem:[#allocation0]]
  $region57: #{ae_forward.21} parent=0
    _
  %s7 = ssub.s32 1, %s5
  %s8 = scalar_select 0, %s7, %s5
  loop: start=0, step=1, limit=4
  $region2: #{ae_forward.21} parent=0 // loop_pre_header
    _
  $region3: #{ae_forward.21} parent=0 // loop_header
    %s10 = sphi 0, %s14
    %p11 = scmp.ge.s32.totalorder %s10, 4
    %s17 = sphi 0, %s36
    %s18 = sphi 0, %s32
    %s19 = sphi 0, %s28
    %s20 = sphi 0, %s17
    %s21 = sphi 0, %s18
    %s22 = sphi 0, %s19
    %s23 = sphi 0, %s20
    %s24 = sphi 0, %s21
    %s25 = sphi 0, %s22
    %s41 = sphi 0, %s43
    %s44 = sphi 0, %s41
    %s45 = sphi 0, %s44
    %s61 = sphi 0, %s45
    %s69 = sphi 0, %s71
    %s72 = sphi 0, %s69
    %s73 = sphi 0, %s72
    %s89 = sphi 0, %s73
    %s95 = sphi 0, %s97
    %s98 = sphi 0, %s95
    %s99 = sphi 0, %s98
    %s115 = sphi 0, %s99
    %s121 = sphi 0, %s123
    %s124 = sphi 0, %s121
    %s125 = sphi 0, %s124
    %s141 = sphi 0, %s125
    %s149 = sphi 0, %s151
    %s152 = sphi 0, %s149
    %s153 = sphi 0, %s152
    %s169 = sphi 0, %s153
  $region4: #{ae_forward.21} parent=0 // loop_header_branch
    %13 = sbr.rel (%p11) target = $region8
  $region5: #{ae_forward.21} parent=0 // loop_body
    %s15 = ssub.s32 %s10, 1
    %s16 = ssub.s32 %s10, 2
    %s26 = sadd.s32 1, %s19
    %p27 = scmp.ge.s32.totalorder %s26, 1
    %s28 = scalar_select %p27, 0, %s26
    %s29 = sadd.s32 1, %s18
    %s30 = scalar_select %p27, %s29, %s18
    %p31 = scmp.ge.s32.totalorder %s30, 1
    %s32 = scalar_select %p31, 0, %s30
    %s33 = sadd.s32 1, %s17
    %s34 = scalar_select %p31, %s33, %s17
    %p35 = scmp.ge.s32.totalorder %s34, 2
    %s36 = scalar_select %p35, 0, %s34
    %s37 = ssub.s32 %s17, %s36
    %s38 = ssub.s32 %s19, %s28
    %s39 = sor.u32 %s37, %s38
    %p40 = scmp.eq.s32.totalorder %s39, 0
    %s42 = sadd.s32 %s41, 1
    %s43 = scalar_select %p40, %s41, %s42
    %p46 = pneg %p40
    %p47 = scmp.eq.s32.totalorder %s10, 1
    %p48 = por %p46, %p47
    %p49 = scmp.ne.s32.totalorder %s41, %s44
    %p50 = scmp.eq.s32.totalorder %s10, 0
    %p51 = por %p49, %p50
    %p52 = scmp.ne.s32.totalorder %s41, %s44
    %p53 = scmp.eq.s32.totalorder %s15, 1
    %p54 = por %p52, %p53
    %p55 = scmp.ne.s32.totalorder %s44, %s45
    %p56 = scmp.eq.s32.totalorder %s15, 0
    %p57 = por %p55, %p56
    %p58 = scmp.ne.s32.totalorder %s44, %s45
    %p59 = scmp.eq.s32.totalorder %s16, 1
    %p60 = por %p58, %p59
    %p62 = scmp.ne.s32.totalorder %s45, %s61
    %p63 = scmp.eq.s32.totalorder %s16, 0
    %p64 = por %p62, %p63
    %s65 = ssub.s32 %s19, %s28
    %s66 = ssub.s32 %s18, %s32
    %s67 = sor.u32 %s65, %s66
    %p68 = scmp.eq.s32.totalorder %s67, 0
    %s70 = sadd.s32 %s69, 1
    %s71 = scalar_select %p68, %s69, %s70
    %p74 = pneg %p68
    %p75 = scmp.eq.s32.totalorder %s10, 1
    %p76 = por %p74, %p75
    %p77 = scmp.ne.s32.totalorder %s69, %s72
    %p78 = scmp.eq.s32.totalorder %s10, 0
    %p79 = por %p77, %p78
    %p80 = scmp.ne.s32.totalorder %s69, %s72
    %p81 = scmp.eq.s32.totalorder %s15, 1
    %p82 = por %p80, %p81
    %p83 = scmp.ne.s32.totalorder %s72, %s73
    %p84 = scmp.eq.s32.totalorder %s15, 0
    %p85 = por %p83, %p84
    %p86 = scmp.ne.s32.totalorder %s72, %s73
    %p87 = scmp.eq.s32.totalorder %s16, 1
    %p88 = por %p86, %p87
    %p90 = scmp.ne.s32.totalorder %s73, %s89
    %p91 = scmp.eq.s32.totalorder %s16, 0
    %p92 = por %p90, %p91
    %s93 = ssub.s32 %s18, %s32
    %p94 = scmp.eq.s32.totalorder %s93, 0
    %s96 = sadd.s32 %s95, 1
    %s97 = scalar_select %p94, %s95, %s96
    %p100 = pneg %p94
    %p101 = scmp.eq.s32.totalorder %s10, 1
    %p102 = por %p100, %p101
    %p103 = scmp.ne.s32.totalorder %s95, %s98
    %p104 = scmp.eq.s32.totalorder %s10, 0
    %p105 = por %p103, %p104
    %p106 = scmp.ne.s32.totalorder %s95, %s98
    %p107 = scmp.eq.s32.totalorder %s15, 1
    %p108 = por %p106, %p107
    %p109 = scmp.ne.s32.totalorder %s98, %s99
    %p110 = scmp.eq.s32.totalorder %s15, 0
    %p111 = por %p109, %p110
    %p112 = scmp.ne.s32.totalorder %s98, %s99
    %p113 = scmp.eq.s32.totalorder %s16, 1
    %p114 = por %p112, %p113
    %p116 = scmp.ne.s32.totalorder %s99, %s115
    %p117 = scmp.eq.s32.totalorder %s16, 0
    %p118 = por %p116, %p117
    %s119 = ssub.s32 %s18, %s32
    %p120 = scmp.eq.s32.totalorder %s119, 0
    %s122 = sadd.s32 %s121, 1
    %s123 = scalar_select %p120, %s121, %s122
    %p126 = pneg %p120
    %p127 = scmp.eq.s32.totalorder %s10, 1
    %p128 = por %p126, %p127
    %p129 = scmp.ne.s32.totalorder %s121, %s124
    %p130 = scmp.eq.s32.totalorder %s10, 0
    %p131 = por %p129, %p130
    %p132 = scmp.ne.s32.totalorder %s121, %s124
    %p133 = scmp.eq.s32.totalorder %s15, 1
    %p134 = por %p132, %p133
    %p135 = scmp.ne.s32.totalorder %s124, %s125
    %p136 = scmp.eq.s32.totalorder %s15, 0
    %p137 = por %p135, %p136
    %p138 = scmp.ne.s32.totalorder %s124, %s125
    %p139 = scmp.eq.s32.totalorder %s16, 1
    %p140 = por %p138, %p139
    %p142 = scmp.ne.s32.totalorder %s125, %s141
    %p143 = scmp.eq.s32.totalorder %s16, 0
    %p144 = por %p142, %p143
    %s145 = ssub.s32 %s17, %s36
    %s146 = ssub.s32 %s18, %s32
    %s147 = sor.u32 %s145, %s146
    %p148 = scmp.eq.s32.totalorder %s147, 0
    %s150 = sadd.s32 %s149, 1
    %s151 = scalar_select %p148, %s149, %s150
    %p154 = pneg %p148
    %p155 = scmp.eq.s32.totalorder %s10, 1
    %p156 = por %p154, %p155
    %p157 = scmp.ne.s32.totalorder %s149, %s152
    %p158 = scmp.eq.s32.totalorder %s10, 0
    %p159 = por %p157, %p158
    %p160 = scmp.ne.s32.totalorder %s149, %s152
    %p161 = scmp.eq.s32.totalorder %s15, 1
    %p162 = por %p160, %p161
    %p163 = scmp.ne.s32.totalorder %s152, %s153
    %p164 = scmp.eq.s32.totalorder %s15, 0
    %p165 = por %p163, %p164
    %p166 = scmp.ne.s32.totalorder %s152, %s153
    %p167 = scmp.eq.s32.totalorder %s16, 1
    %p168 = por %p166, %p167
    %p170 = scmp.ne.s32.totalorder %s153, %s169
    %p171 = scmp.eq.s32.totalorder %s16, 0
    %p172 = por %p170, %p171
    %p173 = scmp.le.s32.totalorder 1, %s10
    %p174 = scmp.lt.s32.totalorder %s10, 3
    %p175 = pnand %p173, %p174
    %p176 = pneg %p175
    // Predicated region
    $region9: #{ae_forward.21} parent=5 // pred_check
      _
    $region10: #{ae_forward.21} parent=5 // pred_check_branch
      %178 = sbr.rel (%p175) target = $region12
    $region11: #{ae_forward.21} parent=5 // pred_region
      %s179 = ssub.s32 %s10, 1
      // Predicated region
      $region13: #{ae_forward.21} parent=11 // pred_check
        %p180 = pneg %p85
      $region14: #{ae_forward.21} parent=11 // pred_check_branch
        %182 = sbr.rel (%p180) target = $region16
      $region15: #{ae_forward.21} parent=11 // pred_region
        %p183 = scmp.lt.s32.totalorder %s22, 0
        %s184 = scalar_select %p183, %s22, 0
        %p185 = scmp.lt.s32.totalorder %s21, 0
        %s186 = scalar_select %p185, %s21, 0
        %s187 = sadd.s32 %s186, %s184
        %s188 = smul.addr %s187, 4
        %s189 = scalar_lea.vmem %s1, %s188
      $region16: #{ae_forward.21} parent=11 // pred_fallthru
        _
      // Predicated region
      $region17: #{ae_forward.21} parent=11 // pred_check
        %p190 = pneg %p111
      $region18: #{ae_forward.21} parent=11 // pred_check_branch
        %192 = sbr.rel (%p190) target = $region20
      $region19: #{ae_forward.21} parent=11 // pred_region
        %p193 = scmp.lt.s32.totalorder %s21, 0
        %s194 = scalar_select %p193, %s21, 0
        %s195 = scalar_lea.vmem %s2, %s194
      $region20: #{ae_forward.21} parent=11 // pred_fallthru
        _
      // Predicated region
      $region21: #{ae_forward.21} parent=11 // pred_check
        %p196 = pneg %p137
      $region22: #{ae_forward.21} parent=11 // pred_check_branch
        %198 = sbr.rel (%p196) target = $region24
      $region23: #{ae_forward.21} parent=11 // pred_region
        %p199 = scmp.lt.s32.totalorder %s21, 0
        %s200 = scalar_select %p199, %s21, 0
        %s201 = scalar_lea.vmem %s3, %s200
      $region24: #{ae_forward.21} parent=11 // pred_fallthru
        _
    $region12: #{ae_forward.21} parent=5 // pred_fallthru
      _
    %p202 = scmp.lt.s32.totalorder %s10, 2
    // Predicated region
    $region25: #{ae_forward.21} parent=5 // pred_check
      %p203 = pneg %p202
    $region26: #{ae_forward.21} parent=5 // pred_check_branch
      %205 = sbr.rel (%p203) target = $region28
    $region27: #{ae_forward.21} parent=5 // pred_region
      // Predicated region
      $region29: #{ae_forward.21} parent=27 // pred_check
        %p206 = pneg %p51
      $region30: #{ae_forward.21} parent=27 // pred_check_branch
        %208 = sbr.rel (%p206) target = $region32
      $region31: #{ae_forward.21} parent=27 // pred_region
        %s209 = smul.u32 8, %s17
        %p210 = scmp.lt.s32.totalorder %s209, 15
        %s211 = scalar_select %p210, %s209, 15
        %p212 = scmp.lt.s32.totalorder %s19, 0
        %s213 = scalar_select %p212, %s19, 0
        %s214 = sadd.s32 %s213, %s211
        %s215 = smul.addr %s214, 4
        %s216 = scalar_lea.vmem %s0, %s215
        %s217 = smul.u32 8, %s17
      $region32: #{ae_forward.21} parent=27 // pred_fallthru
        _
    $region28: #{ae_forward.21} parent=5 // pred_fallthru
      _
    %p218 = scmp.le.s32.totalorder 1, %s10
    %p219 = scmp.lt.s32.totalorder %s10, 3
    %p220 = pnand %p218, %p219
    %p221 = pneg %p220
    // Predicated region
    $region33: #{ae_forward.21} parent=5 // pred_check
      _
    $region34: #{ae_forward.21} parent=5 // pred_check_branch
      %223 = sbr.rel (%p220) target = $region36
    $region35: #{ae_forward.21} parent=5 // pred_region
      %s224 = ssub.s32 %s10, 1
      %s225 = smul.u32 8, %s20
      %p226 = scmp.lt.s32.totalorder %s225, 15
      %s227 = scalar_select %p226, %s225, 15
      %p228 = scmp.lt.s32.totalorder %s22, 0
      %s229 = scalar_select %p228, %s22, 0
      %s230 = sadd.s32 %s229, %s227
      %s231 = smul.addr %s230, 4
      %s232 = scalar_lea.vmem %s0, %s231
      %p233 = pneg %p57
      %p234 = pneg %p54
      %p235 = scmp.lt.s32.totalorder %s22, 0
      %s236 = scalar_select %p235, %s22, 0
      %p237 = scmp.lt.s32.totalorder %s21, 0
      %s238 = scalar_select %p237, %s21, 0
      %s239 = sadd.s32 %s238, %s236
      %s240 = smul.addr %s239, 4
      %s241 = scalar_lea.vmem %s1, %s240
      %p242 = pneg %p85
      %p243 = pneg %p82
      %p244 = scmp.lt.s32.totalorder %s21, 0
      %s245 = scalar_select %p244, %s21, 0
      %s246 = scalar_lea.vmem %s2, %s245
      %p247 = pneg %p111
      %p248 = pneg %p108
      %p249 = scmp.lt.s32.totalorder %s21, 0
      %s250 = scalar_select %p249, %s21, 0
      %s251 = scalar_lea.vmem %s3, %s250
      %p252 = pneg %p137
      %p253 = pneg %p134
      %p254 = pneg %p165
      %p255 = pneg %p162
      %s256 = smul.u32 8, %s20
      %p257 = scmp.lt.s32.totalorder %s256, 15
      %s258 = scalar_select %p257, %s256, 15
      %p259 = scmp.lt.s32.totalorder %s21, 0
      %s260 = scalar_select %p259, %s21, 0
      %s261 = sadd.s32 %s260, %s258
      %s262 = smul.addr %s261, 4
      %s263 = scalar_lea.vmem %s4, %s262
      %s264 = smul.u32 8, %s20
      %p265 = scmp.lt.s32.totalorder %s264, 15
      %s266 = scalar_select %p265, %s264, 15
      %p267 = scmp.lt.s32.totalorder %s22, 0
      %s268 = scalar_select %p267, %s22, 0
      %s269 = sadd.s32 %s268, %s266
      %s270 = smul.addr %s269, 4
      %s271 = scalar_lea.vmem %s0, %s270
      %s272 = smul.u32 8, %s20
      %p273 = scmp.lt.s32.totalorder %s22, 0
      %s274 = scalar_select %p273, %s22, 0
      %p275 = scmp.lt.s32.totalorder %s21, 0
      %s276 = scalar_select %p275, %s21, 0
      %s277 = sadd.s32 %s276, %s274
      %s278 = smul.addr %s277, 4
      %s279 = scalar_lea.vmem %s1, %s278
      %p280 = scmp.lt.s32.totalorder %s21, 0
      %s281 = scalar_select %p280, %s21, 0
      %s282 = scalar_lea.vmem %s2, %s281
      %p283 = scmp.lt.s32.totalorder %s21, 0
      %s284 = scalar_select %p283, %s21, 0
      %s285 = scalar_lea.vmem %s3, %s284
      %s286 = smul.u32 8, %s20
      %p287 = scmp.lt.s32.totalorder %s286, 15
      %s288 = scalar_select %p287, %s286, 15
      %p289 = scmp.lt.s32.totalorder %s21, 0
      %s290 = scalar_select %p289, %s21, 0
      %s291 = sadd.s32 %s290, %s288
      %s292 = smul.addr %s291, 4
      %s293 = scalar_lea.vmem %s4, %s292
      %s294 = smul.u32 8, %s20
      %p296 = scmp.eq.s32.totalorder %s22, 0
      // Predicated region
      $region37: #{ae_forward.21} parent=35 // pred_check
        %p297 = pneg %p296
      $region38: #{ae_forward.21} parent=35 // pred_check_branch
        %299 = sbr.rel (%p297) target = $region40
      $region39: #{ae_forward.21} parent=35 // pred_region
        %vm300 = vcmask 64512
        %301 = vst.msk [vmem:[#allocation2] sm:$0xff] %vm300, 0.0
        %302 = vst.msk [vmem:[#allocation2 + $0x8] sm:$0xff] %vm300, 0.0
        %303 = vst.msk [vmem:[#allocation2 + $0x10] sm:$0xff] %vm300, 0.0
        %304 = vst.msk [vmem:[#allocation2 + $0x18] sm:$0xff] %vm300, 0.0
        %305 = vst.msk [vmem:[#allocation2 + $0x20] sm:$0xff] %vm300, 0.0
        %306 = vst.msk [vmem:[#allocation2 + $0x28] sm:$0xff] %vm300, 0.0
        %307 = vst.msk [vmem:[#allocation2 + $0x30] sm:$0xff] %vm300, 0.0
        %308 = vst.msk [vmem:[#allocation2 + $0x38] sm:$0xff] %vm300, 0.0
      $region40: #{ae_forward.21} parent=35 // pred_fallthru
        _
      %v309 = vld [vmem:[#allocation2] sm:$0xff]
      %v310 = vld [vmem:[#allocation2 + $0x8] sm:$0xff]
      %v311 = vld [vmem:[#allocation2 + $0x10] sm:$0xff]
      %v312 = vld [vmem:[#allocation2 + $0x18] sm:$0xff]
      %v313 = vld [vmem:[#allocation2 + $0x20] sm:$0xff]
      %v314 = vld [vmem:[#allocation2 + $0x28] sm:$0xff]
      %v315 = vld [vmem:[#allocation2 + $0x30] sm:$0xff]
      %v316 = vld [vmem:[#allocation2 + $0x38] sm:$0xff]
      %v317 = vld [vmem:[%s271] sm:$0xf]
      %v318 = vld [vmem:[%s271 + $0x4] sm:$0xf]
      %v319 = vld [vmem:[%s271 + $0x8] sm:$0xf]
      %v320 = vld [vmem:[%s271 + $0xc] sm:$0xf]
      %v321 = vld [vmem:[%s271 + $0x10] sm:$0xf]
      %v322 = vld [vmem:[%s271 + $0x14] sm:$0xf]
      %v323 = vld [vmem:[%s271 + $0x18] sm:$0xf]
      %v324 = vld [vmem:[%s271 + $0x1c] sm:$0xf]
      %v325 = vld [vmem:[%s279] sm:$0xf]
      %v334 = vunpack.c.l.b16 %v317
      %v335 = vunpack.c.l.b16 %v318
      %v336 = vunpack.c.l.b16 %v319
      %v337 = vunpack.c.l.b16 %v320
      %v338 = vunpack.c.l.b16 %v321
      %v339 = vunpack.c.l.b16 %v322
      %v340 = vunpack.c.l.b16 %v323
      %v341 = vunpack.c.l.b16 %v324
      %v342 = vpack.c.b16 %v335, %v334
      %v343 = vpack.c.b16 %v337, %v336
      %v344 = vpack.c.b16 %v339, %v338
      %v345 = vpack.c.b16 %v341, %v340
      %vm346 = vcmask 64512
      %v348 = vsel %vm346, %v342, 0
      %v351 = vsel %vm346, %v343, 0
      %v354 = vsel %vm346, %v344, 0
      %v357 = vsel %vm346, %v345, 0
      %vm359 = vcmask 1043456
      %v361 = vsel %vm359, %v325, 0
      %363 = vmatpush.bf16.msra.mxu0 0
      %364 = vmatpush.bf16.msra.mxu0 0
      %365 = vmatpush.bf16.msra.mxu0 0
      %366 = vmatpush.bf16.msra.mxu0 0
      %367 = vmatpush.bf16.msra.mxu0 0
      %368 = vmatpush.bf16.msra.mxu0 0
      %369 = vmatpush.bf16.msra.mxu0 0
      %370 = vmatpush.bf16.msra.mxu0 %v361
      %371 = vmatmul.bf16.gmra.mxu0 %v348
      %v372 = vpop.f32.mrf.mxu0
      %v373 = vadd.f32 0.0, %v372
      %v374 = vpop.f32.mrf.mxu0
      %v375 = vadd.f32 0.0, %v374
      %376 = vmatmul.bf16.gmra.mxu0 %v351
      %v377 = vpop.f32.mrf.mxu0
      %v378 = vadd.f32 0.0, %v377
      %v379 = vpop.f32.mrf.mxu0
      %v380 = vadd.f32 0.0, %v379
      %381 = vmatmul.bf16.gmra.mxu0 %v354
      %v382 = vpop.f32.mrf.mxu0
      %v383 = vadd.f32 0.0, %v382
      %v384 = vpop.f32.mrf.mxu0
      %v385 = vadd.f32 0.0, %v384
      %386 = vmatmul.bf16.gmra.mxu0 %v357
      %v387 = vpop.f32.mrf.mxu0
      %v388 = vadd.f32 0.0, %v387
      %v389 = vpop.f32.mrf.mxu0
      %v390 = vadd.f32 0.0, %v389
      %391 = vdwg.mxu0
      %v392 = vadd.f32 %v309, %v373
      %v393 = vadd.f32 %v310, %v375
      %v394 = vadd.f32 %v311, %v378
      %v395 = vadd.f32 %v312, %v380
      %v396 = vadd.f32 %v313, %v383
      %v397 = vadd.f32 %v314, %v385
      %v398 = vadd.f32 %v315, %v388
      %v399 = vadd.f32 %v316, %v390
      %400 = vst.msk [vmem:[#allocation2] sm:$0xff] %vm346, %v392
      %401 = vst.msk [vmem:[#allocation2 + $0x8] sm:$0xff] %vm346, %v393
      %402 = vst.msk [vmem:[#allocation2 + $0x10] sm:$0xff] %vm346, %v394
      %403 = vst.msk [vmem:[#allocation2 + $0x18] sm:$0xff] %vm346, %v395
      %404 = vst.msk [vmem:[#allocation2 + $0x20] sm:$0xff] %vm346, %v396
      %405 = vst.msk [vmem:[#allocation2 + $0x28] sm:$0xff] %vm346, %v397
      %406 = vst.msk [vmem:[#allocation2 + $0x30] sm:$0xff] %vm346, %v398
      %407 = vst.msk [vmem:[#allocation2 + $0x38] sm:$0xff] %vm346, %v399
      // Predicated region
      $region41: #{ae_forward.21} parent=35 // pred_check
        %p408 = pneg %p296
      $region42: #{ae_forward.21} parent=35 // pred_check_branch
        %410 = sbr.rel (%p408) target = $region44
      $region43: #{ae_forward.21} parent=35 // pred_region
        %v411 = vld [vmem:[#allocation2] sm:$0xff]
        %v412 = vld [vmem:[#allocation2 + $0x8] sm:$0xff]
        %v413 = vld [vmem:[#allocation2 + $0x10] sm:$0xff]
        %v414 = vld [vmem:[#allocation2 + $0x18] sm:$0xff]
        %v415 = vld [vmem:[#allocation2 + $0x20] sm:$0xff]
        %v416 = vld [vmem:[#allocation2 + $0x28] sm:$0xff]
        %v417 = vld [vmem:[#allocation2 + $0x30] sm:$0xff]
        %v418 = vld [vmem:[#allocation2 + $0x38] sm:$0xff]
        %v419 = vld [vmem:[%s282] sm:$0x1]
        %v421 = vperm.slane %v419, 0
        %v423 = vmul.f32 %v411, %v421
        %v424 = vmul.f32 %v412, %v421
        %v425 = vmul.f32 %v413, %v421
        %v426 = vmul.f32 %v414, %v421
        %v427 = vmul.f32 %v415, %v421
        %v428 = vmul.f32 %v416, %v421
        %v429 = vmul.f32 %v417, %v421
        %v430 = vmul.f32 %v418, %v421
        %v431 = vld [vmem:[%s285] sm:$0x1]
        %v433 = vperm.slane %v431, 0
        %v435 = vadd.f32 %v423, %v433
        %v436 = vadd.f32 %v424, %v433
        %v437 = vadd.f32 %v425, %v433
        %v438 = vadd.f32 %v426, %v433
        %v439 = vadd.f32 %v427, %v433
        %v440 = vadd.f32 %v428, %v433
        %v441 = vadd.f32 %v429, %v433
        %v442 = vadd.f32 %v430, %v433
        %v443 = vmax.f32 %v435, 0.0
        %v444 = vmax.f32 %v436, 0.0
        %v445 = vmax.f32 %v437, 0.0
        %v446 = vmax.f32 %v438, 0.0
        %v447 = vmax.f32 %v439, 0.0
        %v448 = vmax.f32 %v440, 0.0
        %v449 = vmax.f32 %v441, 0.0
        %v450 = vmax.f32 %v442, 0.0
        %v451 = vpack.c.bf16 %v443, %v443
        %v452 = vpack.c.bf16 %v444, %v444
        %v453 = vpack.c.bf16 %v445, %v445
        %v454 = vpack.c.bf16 %v446, %v446
        %v455 = vpack.c.bf16 %v447, %v447
        %v456 = vpack.c.bf16 %v448, %v448
        %v457 = vpack.c.bf16 %v449, %v449
        %v458 = vpack.c.bf16 %v450, %v450
        %vm459 = vcmask 60416
        %460 = vst.msk [vmem:[%s293] sm:$0xf] %vm459, %v451
        %461 = vst.msk [vmem:[%s293 + $0x4] sm:$0xf] %vm459, %v452
        %462 = vst.msk [vmem:[%s293 + $0x8] sm:$0xf] %vm459, %v453
        %463 = vst.msk [vmem:[%s293 + $0xc] sm:$0xf] %vm459, %v454
        %464 = vst.msk [vmem:[%s293 + $0x10] sm:$0xf] %vm459, %v455
        %465 = vst.msk [vmem:[%s293 + $0x14] sm:$0xf] %vm459, %v456
        %466 = vst.msk [vmem:[%s293 + $0x18] sm:$0xf] %vm459, %v457
        %467 = vst.msk [vmem:[%s293 + $0x1c] sm:$0xf] %vm459, %v458
      $region44: #{ae_forward.21} parent=35 // pred_fallthru
        _
      %s468 = smul.u32 8, %s20
      %p469 = scmp.lt.s32.totalorder %s468, 15
      %s470 = scalar_select %p469, %s468, 15
      %p471 = scmp.lt.s32.totalorder %s21, 0
      %s472 = scalar_select %p471, %s21, 0
      %s473 = sadd.s32 %s472, %s470
      %s474 = smul.addr %s473, 4
      %s475 = scalar_lea.vmem %s4, %s474
      // Predicated region
      $region45: #{ae_forward.21} parent=35 // pred_check
        %p476 = pneg %p162
      $region46: #{ae_forward.21} parent=35 // pred_check_branch
        %478 = sbr.rel (%p476) target = $region48
      $region47: #{ae_forward.21} parent=35 // pred_region
        %s479 = smul.u32 8, %s20
      $region48: #{ae_forward.21} parent=35 // pred_fallthru
        _
    $region36: #{ae_forward.21} parent=5 // pred_fallthru
      _
    %p480 = scmp.le.s32.totalorder 2, %s10
    // Predicated region
    $region49: #{ae_forward.21} parent=5 // pred_check
      %p481 = pneg %p480
    $region50: #{ae_forward.21} parent=5 // pred_check_branch
      %483 = sbr.rel (%p481) target = $region52
    $region51: #{ae_forward.21} parent=5 // pred_region
      %s484 = ssub.s32 %s10, 2
      // Predicated region
      $region53: #{ae_forward.21} parent=51 // pred_check
        %p485 = pneg %p168
      $region54: #{ae_forward.21} parent=51 // pred_check_branch
        %487 = sbr.rel (%p485) target = $region56
      $region55: #{ae_forward.21} parent=51 // pred_region
        %s488 = smul.u32 8, %s23
        %p489 = scmp.lt.s32.totalorder %s488, 15
        %s490 = scalar_select %p489, %s488, 15
        %p491 = scmp.lt.s32.totalorder %s24, 0
        %s492 = scalar_select %p491, %s24, 0
        %s493 = sadd.s32 %s492, %s490
        %s494 = smul.addr %s493, 4
        %s495 = scalar_lea.vmem %s4, %s494
      $region56: #{ae_forward.21} parent=51 // pred_fallthru
        _
    $region52: #{ae_forward.21} parent=5 // pred_fallthru
      _
  $region6: #{ae_forward.21} parent=0 // loop_footer
    %s14 = sadd.s32 1, %s10
  $region7: #{ae_forward.21} parent=0 // loop_footer_branch
    %9 = sbr.rel target = $region3
  $region8: #{ae_forward.21} parent=0 // loop_exit
    _

// kernel: ae_forward.22
$region0: #{ae_forward.22}
  #allocation0 [shape = 'u32[]', space=smem, size = 0x4, offset = 0x4, fixed_abs, tag = 'smem constant byte address 0x4 - core index']
  #allocation1 [shape = 'u32[72,128]{1,0:T(1,128)}', space=vmem, size = 0x9000, scoped, tag = 'internal scratch']
  #allocation2 [shape = 'f32[64,32]{1,0:T(8,128)}', space=vmem, size = 0x8000, scoped, tag = 'scratch operand']
  %s0 = inlined_call_operand.vmem [shape: bf16[128,8], index: 0, kind: input, shape index: {}]
  %s1 = inlined_call_operand.vmem [shape: bf16[8,32], index: 1, kind: input, shape index: {}]
  %s2 = inlined_call_operand.vmem [shape: f32[1,32], index: 2, kind: input, shape index: {}]
  %s3 = inlined_call_operand.vmem [shape: f32[1,32], index: 3, kind: input, shape index: {}]
  %s4 = inlined_call_operand.vmem [shape: bf16[128,32], index: 4, kind: output, shape index: {}]
  %s5 = sld [smem:[#allocation0]]
  $region57: #{ae_forward.22} parent=0
    _
  %s7 = ssub.s32 1, %s5
  %s8 = scalar_select 0, %s7, %s5
  loop: start=0, step=1, limit=4
  $region2: #{ae_forward.22} parent=0 // loop_pre_header
    _
  $region3: #{ae_forward.22} parent=0 // loop_header
    %s10 = sphi 0, %s14
    %p11 = scmp.ge.s32.totalorder %s10, 4
    %s17 = sphi 0, %s36
    %s18 = sphi 0, %s32
    %s19 = sphi 0, %s28
    %s20 = sphi 0, %s17
    %s21 = sphi 0, %s18
    %s22 = sphi 0, %s19
    %s23 = sphi 0, %s20
    %s24 = sphi 0, %s21
    %s25 = sphi 0, %s22
    %s41 = sphi 0, %s43
    %s44 = sphi 0, %s41
    %s45 = sphi 0, %s44
    %s61 = sphi 0, %s45
    %s69 = sphi 0, %s71
    %s72 = sphi 0, %s69
    %s73 = sphi 0, %s72
    %s89 = sphi 0, %s73
    %s95 = sphi 0, %s97
    %s98 = sphi 0, %s95
    %s99 = sphi 0, %s98
    %s115 = sphi 0, %s99
    %s121 = sphi 0, %s123
    %s124 = sphi 0, %s121
    %s125 = sphi 0, %s124
    %s141 = sphi 0, %s125
    %s149 = sphi 0, %s151
    %s152 = sphi 0, %s149
    %s153 = sphi 0, %s152
    %s169 = sphi 0, %s153
  $region4: #{ae_forward.22} parent=0 // loop_header_branch
    %13 = sbr.rel (%p11) target = $region8
  $region5: #{ae_forward.22} parent=0 // loop_body
    %s15 = ssub.s32 %s10, 1
    %s16 = ssub.s32 %s10, 2
    %s26 = sadd.s32 1, %s19
    %p27 = scmp.ge.s32.totalorder %s26, 1
    %s28 = scalar_select %p27, 0, %s26
    %s29 = sadd.s32 1, %s18
    %s30 = scalar_select %p27, %s29, %s18
    %p31 = scmp.ge.s32.totalorder %s30, 1
    %s32 = scalar_select %p31, 0, %s30
    %s33 = sadd.s32 1, %s17
    %s34 = scalar_select %p31, %s33, %s17
    %p35 = scmp.ge.s32.totalorder %s34, 2
    %s36 = scalar_select %p35, 0, %s34
    %s37 = ssub.s32 %s17, %s36
    %s38 = ssub.s32 %s19, %s28
    %s39 = sor.u32 %s37, %s38
    %p40 = scmp.eq.s32.totalorder %s39, 0
    %s42 = sadd.s32 %s41, 1
    %s43 = scalar_select %p40, %s41, %s42
    %p46 = pneg %p40
    %p47 = scmp.eq.s32.totalorder %s10, 1
    %p48 = por %p46, %p47
    %p49 = scmp.ne.s32.totalorder %s41, %s44
    %p50 = scmp.eq.s32.totalorder %s10, 0
    %p51 = por %p49, %p50
    %p52 = scmp.ne.s32.totalorder %s41, %s44
    %p53 = scmp.eq.s32.totalorder %s15, 1
    %p54 = por %p52, %p53
    %p55 = scmp.ne.s32.totalorder %s44, %s45
    %p56 = scmp.eq.s32.totalorder %s15, 0
    %p57 = por %p55, %p56
    %p58 = scmp.ne.s32.totalorder %s44, %s45
    %p59 = scmp.eq.s32.totalorder %s16, 1
    %p60 = por %p58, %p59
    %p62 = scmp.ne.s32.totalorder %s45, %s61
    %p63 = scmp.eq.s32.totalorder %s16, 0
    %p64 = por %p62, %p63
    %s65 = ssub.s32 %s19, %s28
    %s66 = ssub.s32 %s18, %s32
    %s67 = sor.u32 %s65, %s66
    %p68 = scmp.eq.s32.totalorder %s67, 0
    %s70 = sadd.s32 %s69, 1
    %s71 = scalar_select %p68, %s69, %s70
    %p74 = pneg %p68
    %p75 = scmp.eq.s32.totalorder %s10, 1
    %p76 = por %p74, %p75
    %p77 = scmp.ne.s32.totalorder %s69, %s72
    %p78 = scmp.eq.s32.totalorder %s10, 0
    %p79 = por %p77, %p78
    %p80 = scmp.ne.s32.totalorder %s69, %s72
    %p81 = scmp.eq.s32.totalorder %s15, 1
    %p82 = por %p80, %p81
    %p83 = scmp.ne.s32.totalorder %s72, %s73
    %p84 = scmp.eq.s32.totalorder %s15, 0
    %p85 = por %p83, %p84
    %p86 = scmp.ne.s32.totalorder %s72, %s73
    %p87 = scmp.eq.s32.totalorder %s16, 1
    %p88 = por %p86, %p87
    %p90 = scmp.ne.s32.totalorder %s73, %s89
    %p91 = scmp.eq.s32.totalorder %s16, 0
    %p92 = por %p90, %p91
    %s93 = ssub.s32 %s18, %s32
    %p94 = scmp.eq.s32.totalorder %s93, 0
    %s96 = sadd.s32 %s95, 1
    %s97 = scalar_select %p94, %s95, %s96
    %p100 = pneg %p94
    %p101 = scmp.eq.s32.totalorder %s10, 1
    %p102 = por %p100, %p101
    %p103 = scmp.ne.s32.totalorder %s95, %s98
    %p104 = scmp.eq.s32.totalorder %s10, 0
    %p105 = por %p103, %p104
    %p106 = scmp.ne.s32.totalorder %s95, %s98
    %p107 = scmp.eq.s32.totalorder %s15, 1
    %p108 = por %p106, %p107
    %p109 = scmp.ne.s32.totalorder %s98, %s99
    %p110 = scmp.eq.s32.totalorder %s15, 0
    %p111 = por %p109, %p110
    %p112 = scmp.ne.s32.totalorder %s98, %s99
    %p113 = scmp.eq.s32.totalorder %s16, 1
    %p114 = por %p112, %p113
    %p116 = scmp.ne.s32.totalorder %s99, %s115
    %p117 = scmp.eq.s32.totalorder %s16, 0
    %p118 = por %p116, %p117
    %s119 = ssub.s32 %s18, %s32
    %p120 = scmp.eq.s32.totalorder %s119, 0
    %s122 = sadd.s32 %s121, 1
    %s123 = scalar_select %p120, %s121, %s122
    %p126 = pneg %p120
    %p127 = scmp.eq.s32.totalorder %s10, 1
    %p128 = por %p126, %p127
    %p129 = scmp.ne.s32.totalorder %s121, %s124
    %p130 = scmp.eq.s32.totalorder %s10, 0
    %p131 = por %p129, %p130
    %p132 = scmp.ne.s32.totalorder %s121, %s124
    %p133 = scmp.eq.s32.totalorder %s15, 1
    %p134 = por %p132, %p133
    %p135 = scmp.ne.s32.totalorder %s124, %s125
    %p136 = scmp.eq.s32.totalorder %s15, 0
    %p137 = por %p135, %p136
    %p138 = scmp.ne.s32.totalorder %s124, %s125
    %p139 = scmp.eq.s32.totalorder %s16, 1
    %p140 = por %p138, %p139
    %p142 = scmp.ne.s32.totalorder %s125, %s141
    %p143 = scmp.eq.s32.totalorder %s16, 0
    %p144 = por %p142, %p143
    %s145 = ssub.s32 %s17, %s36
    %s146 = ssub.s32 %s18, %s32
    %s147 = sor.u32 %s145, %s146
    %p148 = scmp.eq.s32.totalorder %s147, 0
    %s150 = sadd.s32 %s149, 1
    %s151 = scalar_select %p148, %s149, %s150
    %p154 = pneg %p148
    %p155 = scmp.eq.s32.totalorder %s10, 1
    %p156 = por %p154, %p155
    %p157 = scmp.ne.s32.totalorder %s149, %s152
    %p158 = scmp.eq.s32.totalorder %s10, 0
    %p159 = por %p157, %p158
    %p160 = scmp.ne.s32.totalorder %s149, %s152
    %p161 = scmp.eq.s32.totalorder %s15, 1
    %p162 = por %p160, %p161
    %p163 = scmp.ne.s32.totalorder %s152, %s153
    %p164 = scmp.eq.s32.totalorder %s15, 0
    %p165 = por %p163, %p164
    %p166 = scmp.ne.s32.totalorder %s152, %s153
    %p167 = scmp.eq.s32.totalorder %s16, 1
    %p168 = por %p166, %p167
    %p170 = scmp.ne.s32.totalorder %s153, %s169
    %p171 = scmp.eq.s32.totalorder %s16, 0
    %p172 = por %p170, %p171
    %p173 = scmp.le.s32.totalorder 1, %s10
    %p174 = scmp.lt.s32.totalorder %s10, 3
    %p175 = pnand %p173, %p174
    %p176 = pneg %p175
    // Predicated region
    $region9: #{ae_forward.22} parent=5 // pred_check
      _
    $region10: #{ae_forward.22} parent=5 // pred_check_branch
      %178 = sbr.rel (%p175) target = $region12
    $region11: #{ae_forward.22} parent=5 // pred_region
      %s179 = ssub.s32 %s10, 1
      // Predicated region
      $region13: #{ae_forward.22} parent=11 // pred_check
        %p180 = pneg %p85
      $region14: #{ae_forward.22} parent=11 // pred_check_branch
        %182 = sbr.rel (%p180) target = $region16
      $region15: #{ae_forward.22} parent=11 // pred_region
        %p183 = scmp.lt.s32.totalorder %s22, 0
        %s184 = scalar_select %p183, %s22, 0
        %p185 = scmp.lt.s32.totalorder %s21, 0
        %s186 = scalar_select %p185, %s21, 0
        %s187 = sadd.s32 %s186, %s184
        %s188 = smul.addr %s187, 4
        %s189 = scalar_lea.vmem %s1, %s188
      $region16: #{ae_forward.22} parent=11 // pred_fallthru
        _
      // Predicated region
      $region17: #{ae_forward.22} parent=11 // pred_check
        %p190 = pneg %p111
      $region18: #{ae_forward.22} parent=11 // pred_check_branch
        %192 = sbr.rel (%p190) target = $region20
      $region19: #{ae_forward.22} parent=11 // pred_region
        %p193 = scmp.lt.s32.totalorder %s21, 0
        %s194 = scalar_select %p193, %s21, 0
        %s195 = scalar_lea.vmem %s2, %s194
      $region20: #{ae_forward.22} parent=11 // pred_fallthru
        _
      // Predicated region
      $region21: #{ae_forward.22} parent=11 // pred_check
        %p196 = pneg %p137
      $region22: #{ae_forward.22} parent=11 // pred_check_branch
        %198 = sbr.rel (%p196) target = $region24
      $region23: #{ae_forward.22} parent=11 // pred_region
        %p199 = scmp.lt.s32.totalorder %s21, 0
        %s200 = scalar_select %p199, %s21, 0
        %s201 = scalar_lea.vmem %s3, %s200
      $region24: #{ae_forward.22} parent=11 // pred_fallthru
        _
    $region12: #{ae_forward.22} parent=5 // pred_fallthru
      _
    %p202 = scmp.lt.s32.totalorder %s10, 2
    // Predicated region
    $region25: #{ae_forward.22} parent=5 // pred_check
      %p203 = pneg %p202
    $region26: #{ae_forward.22} parent=5 // pred_check_branch
      %205 = sbr.rel (%p203) target = $region28
    $region27: #{ae_forward.22} parent=5 // pred_region
      // Predicated region
      $region29: #{ae_forward.22} parent=27 // pred_check
        %p206 = pneg %p51
      $region30: #{ae_forward.22} parent=27 // pred_check_branch
        %208 = sbr.rel (%p206) target = $region32
      $region31: #{ae_forward.22} parent=27 // pred_region
        %s209 = smul.u32 8, %s17
        %p210 = scmp.lt.s32.totalorder %s209, 15
        %s211 = scalar_select %p210, %s209, 15
        %p212 = scmp.lt.s32.totalorder %s19, 0
        %s213 = scalar_select %p212, %s19, 0
        %s214 = sadd.s32 %s213, %s211
        %s215 = smul.addr %s214, 4
        %s216 = scalar_lea.vmem %s0, %s215
        %s217 = smul.u32 8, %s17
      $region32: #{ae_forward.22} parent=27 // pred_fallthru
        _
    $region28: #{ae_forward.22} parent=5 // pred_fallthru
      _
    %p218 = scmp.le.s32.totalorder 1, %s10
    %p219 = scmp.lt.s32.totalorder %s10, 3
    %p220 = pnand %p218, %p219
    %p221 = pneg %p220
    // Predicated region
    $region33: #{ae_forward.22} parent=5 // pred_check
      _
    $region34: #{ae_forward.22} parent=5 // pred_check_branch
      %223 = sbr.rel (%p220) target = $region36
    $region35: #{ae_forward.22} parent=5 // pred_region
      %s224 = ssub.s32 %s10, 1
      %s225 = smul.u32 8, %s20
      %p226 = scmp.lt.s32.totalorder %s225, 15
      %s227 = scalar_select %p226, %s225, 15
      %p228 = scmp.lt.s32.totalorder %s22, 0
      %s229 = scalar_select %p228, %s22, 0
      %s230 = sadd.s32 %s229, %s227
      %s231 = smul.addr %s230, 4
      %s232 = scalar_lea.vmem %s0, %s231
      %p233 = pneg %p57
      %p234 = pneg %p54
      %p235 = scmp.lt.s32.totalorder %s22, 0
      %s236 = scalar_select %p235, %s22, 0
      %p237 = scmp.lt.s32.totalorder %s21, 0
      %s238 = scalar_select %p237, %s21, 0
      %s239 = sadd.s32 %s238, %s236
      %s240 = smul.addr %s239, 4
      %s241 = scalar_lea.vmem %s1, %s240
      %p242 = pneg %p85
      %p243 = pneg %p82
      %p244 = scmp.lt.s32.totalorder %s21, 0
      %s245 = scalar_select %p244, %s21, 0
      %s246 = scalar_lea.vmem %s2, %s245
      %p247 = pneg %p111
      %p248 = pneg %p108
      %p249 = scmp.lt.s32.totalorder %s21, 0
      %s250 = scalar_select %p249, %s21, 0
      %s251 = scalar_lea.vmem %s3, %s250
      %p252 = pneg %p137
      %p253 = pneg %p134
      %p254 = pneg %p165
      %p255 = pneg %p162
      %s256 = smul.u32 8, %s20
      %p257 = scmp.lt.s32.totalorder %s256, 15
      %s258 = scalar_select %p257, %s256, 15
      %p259 = scmp.lt.s32.totalorder %s21, 0
      %s260 = scalar_select %p259, %s21, 0
      %s261 = sadd.s32 %s260, %s258
      %s262 = smul.addr %s261, 4
      %s263 = scalar_lea.vmem %s4, %s262
      %s264 = smul.u32 8, %s20
      %p265 = scmp.lt.s32.totalorder %s264, 15
      %s266 = scalar_select %p265, %s264, 15
      %p267 = scmp.lt.s32.totalorder %s22, 0
      %s268 = scalar_select %p267, %s22, 0
      %s269 = sadd.s32 %s268, %s266
      %s270 = smul.addr %s269, 4
      %s271 = scalar_lea.vmem %s0, %s270
      %s272 = smul.u32 8, %s20
      %p273 = scmp.lt.s32.totalorder %s22, 0
      %s274 = scalar_select %p273, %s22, 0
      %p275 = scmp.lt.s32.totalorder %s21, 0
      %s276 = scalar_select %p275, %s21, 0
      %s277 = sadd.s32 %s276, %s274
      %s278 = smul.addr %s277, 4
      %s279 = scalar_lea.vmem %s1, %s278
      %p280 = scmp.lt.s32.totalorder %s21, 0
      %s281 = scalar_select %p280, %s21, 0
      %s282 = scalar_lea.vmem %s2, %s281
      %p283 = scmp.lt.s32.totalorder %s21, 0
      %s284 = scalar_select %p283, %s21, 0
      %s285 = scalar_lea.vmem %s3, %s284
      %s286 = smul.u32 8, %s20
      %p287 = scmp.lt.s32.totalorder %s286, 15
      %s288 = scalar_select %p287, %s286, 15
      %p289 = scmp.lt.s32.totalorder %s21, 0
      %s290 = scalar_select %p289, %s21, 0
      %s291 = sadd.s32 %s290, %s288
      %s292 = smul.addr %s291, 4
      %s293 = scalar_lea.vmem %s4, %s292
      %s294 = smul.u32 8, %s20
      %p296 = scmp.eq.s32.totalorder %s22, 0
      // Predicated region
      $region37: #{ae_forward.22} parent=35 // pred_check
        %p297 = pneg %p296
      $region38: #{ae_forward.22} parent=35 // pred_check_branch
        %299 = sbr.rel (%p297) target = $region40
      $region39: #{ae_forward.22} parent=35 // pred_region
        %vm300 = vcmask 261120
        %301 = vst.msk [vmem:[#allocation2] sm:$0xff] %vm300, 0.0
        %302 = vst.msk [vmem:[#allocation2 + $0x8] sm:$0xff] %vm300, 0.0
        %303 = vst.msk [vmem:[#allocation2 + $0x10] sm:$0xff] %vm300, 0.0
        %304 = vst.msk [vmem:[#allocation2 + $0x18] sm:$0xff] %vm300, 0.0
        %305 = vst.msk [vmem:[#allocation2 + $0x20] sm:$0xff] %vm300, 0.0
        %306 = vst.msk [vmem:[#allocation2 + $0x28] sm:$0xff] %vm300, 0.0
        %307 = vst.msk [vmem:[#allocation2 + $0x30] sm:$0xff] %vm300, 0.0
        %308 = vst.msk [vmem:[#allocation2 + $0x38] sm:$0xff] %vm300, 0.0
      $region40: #{ae_forward.22} parent=35 // pred_fallthru
        _
      %v309 = vld [vmem:[#allocation2] sm:$0xff]
      %v310 = vld [vmem:[#allocation2 + $0x8] sm:$0xff]
      %v311 = vld [vmem:[#allocation2 + $0x10] sm:$0xff]
      %v312 = vld [vmem:[#allocation2 + $0x18] sm:$0xff]
      %v313 = vld [vmem:[#allocation2 + $0x20] sm:$0xff]
      %v314 = vld [vmem:[#allocation2 + $0x28] sm:$0xff]
      %v315 = vld [vmem:[#allocation2 + $0x30] sm:$0xff]
      %v316 = vld [vmem:[#allocation2 + $0x38] sm:$0xff]
      %v317 = vld [vmem:[%s271] sm:$0xf]
      %v318 = vld [vmem:[%s271 + $0x4] sm:$0xf]
      %v319 = vld [vmem:[%s271 + $0x8] sm:$0xf]
      %v320 = vld [vmem:[%s271 + $0xc] sm:$0xf]
      %v321 = vld [vmem:[%s271 + $0x10] sm:$0xf]
      %v322 = vld [vmem:[%s271 + $0x14] sm:$0xf]
      %v323 = vld [vmem:[%s271 + $0x18] sm:$0xf]
      %v324 = vld [vmem:[%s271 + $0x1c] sm:$0xf]
      %v325 = vld [vmem:[%s279] sm:$0xf]
      %v334 = vunpack.c.l.b16 %v317
      %v335 = vunpack.c.l.b16 %v318
      %v336 = vunpack.c.l.b16 %v319
      %v337 = vunpack.c.l.b16 %v320
      %v338 = vunpack.c.l.b16 %v321
      %v339 = vunpack.c.l.b16 %v322
      %v340 = vunpack.c.l.b16 %v323
      %v341 = vunpack.c.l.b16 %v324
      %v342 = vpack.c.b16 %v335, %v334
      %v343 = vpack.c.b16 %v337, %v336
      %v344 = vpack.c.b16 %v339, %v338
      %v345 = vpack.c.b16 %v341, %v340
      %vm346 = vcmask 64512
      %v348 = vsel %vm346, %v342, 0
      %v351 = vsel %vm346, %v343, 0
      %v354 = vsel %vm346, %v344, 0
      %v357 = vsel %vm346, %v345, 0
      %vm359 = vcmask 1043456
      %v361 = vsel %vm359, %v325, 0
      %363 = vmatpush.bf16.msra.mxu0 0
      %364 = vmatpush.bf16.msra.mxu0 0
      %365 = vmatpush.bf16.msra.mxu0 0
      %366 = vmatpush.bf16.msra.mxu0 0
      %367 = vmatpush.bf16.msra.mxu0 0
      %368 = vmatpush.bf16.msra.mxu0 0
      %369 = vmatpush.bf16.msra.mxu0 0
      %370 = vmatpush.bf16.msra.mxu0 %v361
      %371 = vmatmul.bf16.gmra.mxu0 %v348
      %v372 = vpop.f32.mrf.mxu0
      %v373 = vadd.f32 0.0, %v372
      %v374 = vpop.f32.mrf.mxu0
      %v375 = vadd.f32 0.0, %v374
      %376 = vmatmul.bf16.gmra.mxu0 %v351
      %v377 = vpop.f32.mrf.mxu0
      %v378 = vadd.f32 0.0, %v377
      %v379 = vpop.f32.mrf.mxu0
      %v380 = vadd.f32 0.0, %v379
      %381 = vmatmul.bf16.gmra.mxu0 %v354
      %v382 = vpop.f32.mrf.mxu0
      %v383 = vadd.f32 0.0, %v382
      %v384 = vpop.f32.mrf.mxu0
      %v385 = vadd.f32 0.0, %v384
      %386 = vmatmul.bf16.gmra.mxu0 %v357
      %v387 = vpop.f32.mrf.mxu0
      %v388 = vadd.f32 0.0, %v387
      %v389 = vpop.f32.mrf.mxu0
      %v390 = vadd.f32 0.0, %v389
      %391 = vdwg.mxu0
      %v392 = vadd.f32 %v309, %v373
      %v393 = vadd.f32 %v310, %v375
      %v394 = vadd.f32 %v311, %v378
      %v395 = vadd.f32 %v312, %v380
      %v396 = vadd.f32 %v313, %v383
      %v397 = vadd.f32 %v314, %v385
      %v398 = vadd.f32 %v315, %v388
      %v399 = vadd.f32 %v316, %v390
      %vm400 = vcmask 261120
      %401 = vst.msk [vmem:[#allocation2] sm:$0xff] %vm400, %v392
      %402 = vst.msk [vmem:[#allocation2 + $0x8] sm:$0xff] %vm400, %v393
      %403 = vst.msk [vmem:[#allocation2 + $0x10] sm:$0xff] %vm400, %v394
      %404 = vst.msk [vmem:[#allocation2 + $0x18] sm:$0xff] %vm400, %v395
      %405 = vst.msk [vmem:[#allocation2 + $0x20] sm:$0xff] %vm400, %v396
      %406 = vst.msk [vmem:[#allocation2 + $0x28] sm:$0xff] %vm400, %v397
      %407 = vst.msk [vmem:[#allocation2 + $0x30] sm:$0xff] %vm400, %v398
      %408 = vst.msk [vmem:[#allocation2 + $0x38] sm:$0xff] %vm400, %v399
      // Predicated region
      $region41: #{ae_forward.22} parent=35 // pred_check
        %p409 = pneg %p296
      $region42: #{ae_forward.22} parent=35 // pred_check_branch
        %411 = sbr.rel (%p409) target = $region44
      $region43: #{ae_forward.22} parent=35 // pred_region
        %v412 = vld [vmem:[#allocation2] sm:$0xff]
        %v413 = vld [vmem:[#allocation2 + $0x8] sm:$0xff]
        %v414 = vld [vmem:[#allocation2 + $0x10] sm:$0xff]
        %v415 = vld [vmem:[#allocation2 + $0x18] sm:$0xff]
        %v416 = vld [vmem:[#allocation2 + $0x20] sm:$0xff]
        %v417 = vld [vmem:[#allocation2 + $0x28] sm:$0xff]
        %v418 = vld [vmem:[#allocation2 + $0x30] sm:$0xff]
        %v419 = vld [vmem:[#allocation2 + $0x38] sm:$0xff]
        %v420 = vld [vmem:[%s282] sm:$0x1]
        %v422 = vperm.slane %v420, 0
        %v424 = vmul.f32 %v412, %v422
        %v425 = vmul.f32 %v413, %v422
        %v426 = vmul.f32 %v414, %v422
        %v427 = vmul.f32 %v415, %v422
        %v428 = vmul.f32 %v416, %v422
        %v429 = vmul.f32 %v417, %v422
        %v430 = vmul.f32 %v418, %v422
        %v431 = vmul.f32 %v419, %v422
        %v432 = vld [vmem:[%s285] sm:$0x1]
        %v434 = vperm.slane %v432, 0
        %v436 = vadd.f32 %v424, %v434
        %v437 = vadd.f32 %v425, %v434
        %v438 = vadd.f32 %v426, %v434
        %v439 = vadd.f32 %v427, %v434
        %v440 = vadd.f32 %v428, %v434
        %v441 = vadd.f32 %v429, %v434
        %v442 = vadd.f32 %v430, %v434
        %v443 = vadd.f32 %v431, %v434
        %v444 = vmax.f32 %v436, 0.0
        %v445 = vmax.f32 %v437, 0.0
        %v446 = vmax.f32 %v438, 0.0
        %v447 = vmax.f32 %v439, 0.0
        %v448 = vmax.f32 %v440, 0.0
        %v449 = vmax.f32 %v441, 0.0
        %v450 = vmax.f32 %v442, 0.0
        %v451 = vmax.f32 %v443, 0.0
        %v452 = vpack.c.bf16 %v444, %v444
        %v453 = vpack.c.bf16 %v445, %v445
        %v454 = vpack.c.bf16 %v446, %v446
        %v455 = vpack.c.bf16 %v447, %v447
        %v456 = vpack.c.bf16 %v448, %v448
        %v457 = vpack.c.bf16 %v449, %v449
        %v458 = vpack.c.bf16 %v450, %v450
        %v459 = vpack.c.bf16 %v451, %v451
        %vm460 = vcmask 257024
        %461 = vst.msk [vmem:[%s293] sm:$0xf] %vm460, %v452
        %462 = vst.msk [vmem:[%s293 + $0x4] sm:$0xf] %vm460, %v453
        %463 = vst.msk [vmem:[%s293 + $0x8] sm:$0xf] %vm460, %v454
        %464 = vst.msk [vmem:[%s293 + $0xc] sm:$0xf] %vm460, %v455
        %465 = vst.msk [vmem:[%s293 + $0x10] sm:$0xf] %vm460, %v456
        %466 = vst.msk [vmem:[%s293 + $0x14] sm:$0xf] %vm460, %v457
        %467 = vst.msk [vmem:[%s293 + $0x18] sm:$0xf] %vm460, %v458
        %468 = vst.msk [vmem:[%s293 + $0x1c] sm:$0xf] %vm460, %v459
      $region44: #{ae_forward.22} parent=35 // pred_fallthru
        _
      %s469 = smul.u32 8, %s20
      %p470 = scmp.lt.s32.totalorder %s469, 15
      %s471 = scalar_select %p470, %s469, 15
      %p472 = scmp.lt.s32.totalorder %s21, 0
      %s473 = scalar_select %p472, %s21, 0
      %s474 = sadd.s32 %s473, %s471
      %s475 = smul.addr %s474, 4
      %s476 = scalar_lea.vmem %s4, %s475
      // Predicated region
      $region45: #{ae_forward.22} parent=35 // pred_check
        %p477 = pneg %p162
      $region46: #{ae_forward.22} parent=35 // pred_check_branch
        %479 = sbr.rel (%p477) target = $region48
      $region47: #{ae_forward.22} parent=35 // pred_region
        %s480 = smul.u32 8, %s20
      $region48: #{ae_forward.22} parent=35 // pred_fallthru
        _
    $region36: #{ae_forward.22} parent=5 // pred_fallthru
      _
    %p481 = scmp.le.s32.totalorder 2, %s10
    // Predicated region
    $region49: #{ae_forward.22} parent=5 // pred_check
      %p482 = pneg %p481
    $region50: #{ae_forward.22} parent=5 // pred_check_branch
      %484 = sbr.rel (%p482) target = $region52
    $region51: #{ae_forward.22} parent=5 // pred_region
      %s485 = ssub.s32 %s10, 2
      // Predicated region
      $region53: #{ae_forward.22} parent=51 // pred_check
        %p486 = pneg %p168
      $region54: #{ae_forward.22} parent=51 // pred_check_branch
        %488 = sbr.rel (%p486) target = $region56
      $region55: #{ae_forward.22} parent=51 // pred_region
        %s489 = smul.u32 8, %s23
        %p490 = scmp.lt.s32.totalorder %s489, 15
        %s491 = scalar_select %p490, %s489, 15
        %p492 = scmp.lt.s32.totalorder %s24, 0
        %s493 = scalar_select %p492, %s24, 0
        %s494 = sadd.s32 %s493, %s491
        %s495 = smul.addr %s494, 4
        %s496 = scalar_lea.vmem %s4, %s495
      $region56: #{ae_forward.22} parent=51 // pred_fallthru
        _
    $region52: #{ae_forward.22} parent=5 // pred_fallthru
      _
  $region6: #{ae_forward.22} parent=0 // loop_footer
    %s14 = sadd.s32 1, %s10
  $region7: #{ae_forward.22} parent=0 // loop_footer_branch
    %9 = sbr.rel target = $region3
  $region8: #{ae_forward.22} parent=0 // loop_exit
    _

// kernel: ae_forward.23
$region0: #{ae_forward.23}
  #allocation0 [shape = 'u32[]', space=smem, size = 0x4, offset = 0x4, fixed_abs, tag = 'smem constant byte address 0x4 - core index']
  #allocation1 [shape = 'u32[72,128]{1,0:T(1,128)}', space=vmem, size = 0x9000, scoped, tag = 'internal scratch']
  #allocation2 [shape = 'f32[512,4]{1,0:T(8,128)}', space=vmem, size = 0x40000, scoped, tag = 'scratch operand']
  %s0 = inlined_call_operand.vmem [shape: bf16[1024,4], index: 0, kind: input, shape index: {}]
  %s1 = inlined_call_operand.vmem [shape: bf16[4,4], index: 1, kind: input, shape index: {}]
  %s2 = inlined_call_operand.vmem [shape: f32[1,4], index: 2, kind: input, shape index: {}]
  %s3 = inlined_call_operand.vmem [shape: f32[1,4], index: 3, kind: input, shape index: {}]
  %s4 = inlined_call_operand.vmem [shape: bf16[4,2], index: 4, kind: input, shape index: {}]
  %s5 = inlined_call_operand.vmem [shape: f32[1,2], index: 5, kind: input, shape index: {}]
  %s6 = inlined_call_operand.vmem [shape: f32[1024,2], index: 6, kind: output, shape index: {}]
  %s7 = sld [smem:[#allocation0]]
  $region65: #{ae_forward.23} parent=0
    _
  %s9 = ssub.s32 1, %s7
  %s10 = scalar_select 0, %s9, %s7
  loop: start=0, step=1, limit=4
  $region2: #{ae_forward.23} parent=0 // loop_pre_header
    _
  $region3: #{ae_forward.23} parent=0 // loop_header
    %s12 = sphi 0, %s16
    %p13 = scmp.ge.s32.totalorder %s12, 4
    %s19 = sphi 0, %s31
    %s20 = sphi 0, %s27
    %s21 = sphi 0, %s19
    %s22 = sphi 0, %s20
    %s23 = sphi 0, %s21
    %s24 = sphi 0, %s22
    %s36 = sphi 0, %s38
    %s39 = sphi 0, %s36
    %s40 = sphi 0, %s39
    %s56 = sphi 0, %s40
    %s62 = sphi 0, %s64
    %s65 = sphi 0, %s62
    %s66 = sphi 0, %s65
    %s82 = sphi 0, %s66
    %s86 = sphi 0, %s86
    %s88 = sphi 0, %s86
    %s89 = sphi 0, %s88
    %s103 = sphi 0, %s89
    %s107 = sphi 0, %s107
    %s109 = sphi 0, %s107
    %s110 = sphi 0, %s109
    %s124 = sphi 0, %s110
    %s128 = sphi 0, %s128
    %s130 = sphi 0, %s128
    %s131 = sphi 0, %s130
    %s145 = sphi 0, %s131
    %s149 = sphi 0, %s149
    %s151 = sphi 0, %s149
    %s152 = sphi 0, %s151
    %s166 = sphi 0, %s152
    %s172 = sphi 0, %s174
    %s175 = sphi 0, %s172
    %s176 = sphi 0, %s175
    %s192 = sphi 0, %s176
  $region4: #{ae_forward.23} parent=0 // loop_header_branch
    %15 = sbr.rel (%p13) target = $region8
  $region5: #{ae_forward.23} parent=0 // loop_body
    %s17 = ssub.s32 %s12, 1
    %s18 = ssub.s32 %s12, 2
    %s25 = sadd.s32 1, %s20
    %p26 = scmp.ge.s32.totalorder %s25, 1
    %s27 = scalar_select %p26, 0, %s25
    %s28 = sadd.s32 1, %s19
    %s29 = scalar_select %p26, %s28, %s19
    %p30 = scmp.ge.s32.totalorder %s29, 2
    %s31 = scalar_select %p30, 0, %s29
    %s32 = ssub.s32 %s19, %s31
    %s33 = ssub.s32 %s20, %s27
    %s34 = sor.u32 %s32, %s33
    %p35 = scmp.eq.s32.totalorder %s34, 0
    %s37 = sadd.s32 %s36, 1
    %s38 = scalar_select %p35, %s36, %s37
    %p41 = pneg %p35
    %p42 = scmp.eq.s32.totalorder %s12, 1
    %p43 = por %p41, %p42
    %p44 = scmp.ne.s32.totalorder %s36, %s39
    %p45 = scmp.eq.s32.totalorder %s12, 0
    %p46 = por %p44, %p45
    %p47 = scmp.ne.s32.totalorder %s36, %s39
    %p48 = scmp.eq.s32.totalorder %s17, 1
    %p49 = por %p47, %p48
    %p50 = scmp.ne.s32.totalorder %s39, %s40
    %p51 = scmp.eq.s32.totalorder %s17, 0
    %p52 = por %p50, %p51
    %p53 = scmp.ne.s32.totalorder %s39, %s40
    %p54 = scmp.eq.s32.totalorder %s18, 1
    %p55 = por %p53, %p54
    %p57 = scmp.ne.s32.totalorder %s40, %s56
    %p58 = scmp.eq.s32.totalorder %s18, 0
    %p59 = por %p57, %p58
    %s60 = ssub.s32 %s20, %s27
    %p61 = scmp.eq.s32.totalorder %s60, 0
    %s63 = sadd.s32 %s62, 1
    %s64 = scalar_select %p61, %s62, %s63
    %p67 = pneg %p61
    %p68 = scmp.eq.s32.totalorder %s12, 1
    %p69 = por %p67, %p68
    %p70 = scmp.ne.s32.totalorder %s62, %s65
    %p71 = scmp.eq.s32.totalorder %s12, 0
    %p72 = por %p70, %p71
    %p73 = scmp.ne.s32.totalorder %s62, %s65
    %p74 = scmp.eq.s32.totalorder %s17, 1
    %p75 = por %p73, %p74
    %p76 = scmp.ne.s32.totalorder %s65, %s66
    %p77 = scmp.eq.s32.totalorder %s17, 0
    %p78 = por %p76, %p77
    %p79 = scmp.ne.s32.totalorder %s65, %s66
    %p80 = scmp.eq.s32.totalorder %s18, 1
    %p81 = por %p79, %p80
    %p83 = scmp.ne.s32.totalorder %s66, %s82
    %p84 = scmp.eq.s32.totalorder %s18, 0
    %p85 = por %p83, %p84
    %s87 = sadd.s32 %s86, 1
    %p90 = scmp.eq.s32.totalorder %s12, 1
    %p91 = scmp.ne.s32.totalorder %s86, %s88
    %p92 = scmp.eq.s32.totalorder %s12, 0
    %p93 = por %p91, %p92
    %p94 = scmp.ne.s32.totalorder %s86, %s88
    %p95 = scmp.eq.s32.totalorder %s17, 1
    %p96 = por %p94, %p95
    %p97 = scmp.ne.s32.totalorder %s88, %s89
    %p98 = scmp.eq.s32.totalorder %s17, 0
    %p99 = por %p97, %p98
    %p100 = scmp.ne.s32.totalorder %s88, %s89
    %p101 = scmp.eq.s32.totalorder %s18, 1
    %p102 = por %p100, %p101
    %p104 = scmp.ne.s32.totalorder %s89, %s103
    %p105 = scmp.eq.s32.totalorder %s18, 0
    %p106 = por %p104, %p105
    %s108 = sadd.s32 %s107, 1
    %p111 = scmp.eq.s32.totalorder %s12, 1
    %p112 = scmp.ne.s32.totalorder %s107, %s109
    %p113 = scmp.eq.s32.totalorder %s12, 0
    %p114 = por %p112, %p113
    %p115 = scmp.ne.s32.totalorder %s107, %s109
    %p116 = scmp.eq.s32.totalorder %s17, 1
    %p117 = por %p115, %p116
    %p118 = scmp.ne.s32.totalorder %s109, %s110
    %p119 = scmp.eq.s32.totalorder %s17, 0
    %p120 = por %p118, %p119
    %p121 = scmp.ne.s32.totalorder %s109, %s110
    %p122 = scmp.eq.s32.totalorder %s18, 1
    %p123 = por %p121, %p122
    %p125 = scmp.ne.s32.totalorder %s110, %s124
    %p126 = scmp.eq.s32.totalorder %s18, 0
    %p127 = por %p125, %p126
    %s129 = sadd.s32 %s128, 1
    %p132 = scmp.eq.s32.totalorder %s12, 1
    %p133 = scmp.ne.s32.totalorder %s128, %s130
    %p134 = scmp.eq.s32.totalorder %s12, 0
    %p135 = por %p133, %p134
    %p136 = scmp.ne.s32.totalorder %s128, %s130
    %p137 = scmp.eq.s32.totalorder %s17, 1
    %p138 = por %p136, %p137
    %p139 = scmp.ne.s32.totalorder %s130, %s131
    %p140 = scmp.eq.s32.totalorder %s17, 0
    %p141 = por %p139, %p140
    %p142 = scmp.ne.s32.totalorder %s130, %s131
    %p143 = scmp.eq.s32.totalorder %s18, 1
    %p144 = por %p142, %p143
    %p146 = scmp.ne.s32.totalorder %s131, %s145
    %p147 = scmp.eq.s32.totalorder %s18, 0
    %p148 = por %p146, %p147
    %s150 = sadd.s32 %s149, 1
    %p153 = scmp.eq.s32.totalorder %s12, 1
    %p154 = scmp.ne.s32.totalorder %s149, %s151
    %p155 = scmp.eq.s32.totalorder %s12, 0
    %p156 = por %p154, %p155
    %p157 = scmp.ne.s32.totalorder %s149, %s151
    %p158 = scmp.eq.s32.totalorder %s17, 1
    %p159 = por %p157, %p158
    %p160 = scmp.ne.s32.totalorder %s151, %s152
    %p161 = scmp.eq.s32.totalorder %s17, 0
    %p162 = por %p160, %p161
    %p163 = scmp.ne.s32.totalorder %s151, %s152
    %p164 = scmp.eq.s32.totalorder %s18, 1
    %p165 = por %p163, %p164
    %p167 = scmp.ne.s32.totalorder %s152, %s166
    %p168 = scmp.eq.s32.totalorder %s18, 0
    %p169 = por %p167, %p168
    %s170 = ssub.s32 %s19, %s31
    %p171 = scmp.eq.s32.totalorder %s170, 0
    %s173 = sadd.s32 %s172, 1
    %s174 = scalar_select %p171, %s172, %s173
    %p177 = pneg %p171
    %p178 = scmp.eq.s32.totalorder %s12, 1
    %p179 = por %p177, %p178
    %p180 = scmp.ne.s32.totalorder %s172, %s175
    %p181 = scmp.eq.s32.totalorder %s12, 0
    %p182 = por %p180, %p181
    %p183 = scmp.ne.s32.totalorder %s172, %s175
    %p184 = scmp.eq.s32.totalorder %s17, 1
    %p185 = por %p183, %p184
    %p186 = scmp.ne.s32.totalorder %s175, %s176
    %p187 = scmp.eq.s32.totalorder %s17, 0
    %p188 = por %p186, %p187
    %p189 = scmp.ne.s32.totalorder %s175, %s176
    %p190 = scmp.eq.s32.totalorder %s18, 1
    %p191 = por %p189, %p190
    %p193 = scmp.ne.s32.totalorder %s176, %s192
    %p194 = scmp.eq.s32.totalorder %s18, 0
    %p195 = por %p193, %p194
    %p196 = scmp.le.s32.totalorder 1, %s12
    %p197 = scmp.lt.s32.totalorder %s12, 3
    %p198 = pnand %p196, %p197
    %p199 = pneg %p198
    // Predicated region
    $region9: #{ae_forward.23} parent=5 // pred_check
      _
    $region10: #{ae_forward.23} parent=5 // pred_check_branch
      %201 = sbr.rel (%p198) target = $region12
    $region11: #{ae_forward.23} parent=5 // pred_region
      %s202 = ssub.s32 %s12, 1
      // Predicated region
      $region13: #{ae_forward.23} parent=11 // pred_check
        %p203 = pneg %p78
      $region14: #{ae_forward.23} parent=11 // pred_check_branch
        %205 = sbr.rel (%p203) target = $region16
      $region15: #{ae_forward.23} parent=11 // pred_region
        %p206 = scmp.lt.s32.totalorder %s22, 0
        %s207 = scalar_select %p206, %s22, 0
        %s208 = smul.addr %s207, 2
        %s209 = scalar_lea.vmem %s1, %s208
      $region16: #{ae_forward.23} parent=11 // pred_fallthru
        _
      // Predicated region
      $region17: #{ae_forward.23} parent=11 // pred_check
        %p210 = pneg %p99
      $region18: #{ae_forward.23} parent=11 // pred_check_branch
        %212 = sbr.rel (%p210) target = $region20
      $region19: #{ae_forward.23} parent=11 // pred_region
        _
      $region20: #{ae_forward.23} parent=11 // pred_fallthru
        _
      // Predicated region
      $region21: #{ae_forward.23} parent=11 // pred_check
        %p213 = pneg %p120
      $region22: #{ae_forward.23} parent=11 // pred_check_branch
        %215 = sbr.rel (%p213) target = $region24
      $region23: #{ae_forward.23} parent=11 // pred_region
        _
      $region24: #{ae_forward.23} parent=11 // pred_fallthru
        _
      // Predicated region
      $region25: #{ae_forward.23} parent=11 // pred_check
        %p216 = pneg %p141
      $region26: #{ae_forward.23} parent=11 // pred_check_branch
        %218 = sbr.rel (%p216) target = $region28
      $region27: #{ae_forward.23} parent=11 // pred_region
        _
      $region28: #{ae_forward.23} parent=11 // pred_fallthru
        _
      // Predicated region
      $region29: #{ae_forward.23} parent=11 // pred_check
        %p219 = pneg %p162
      $region30: #{ae_forward.23} parent=11 // pred_check_branch
        %221 = sbr.rel (%p219) target = $region32
      $region31: #{ae_forward.23} parent=11 // pred_region
        _
      $region32: #{ae_forward.23} parent=11 // pred_fallthru
        _
    $region12: #{ae_forward.23} parent=5 // pred_fallthru
      _
    %p222 = scmp.lt.s32.totalorder %s12, 2
    // Predicated region
    $region33: #{ae_forward.23} parent=5 // pred_check
      %p223 = pneg %p222
    $region34: #{ae_forward.23} parent=5 // pred_check_branch
      %225 = sbr.rel (%p223) target = $region36
    $region35: #{ae_forward.23} parent=5 // pred_region
      // Predicated region
      $region37: #{ae_forward.23} parent=35 // pred_check
        %p226 = pneg %p46
      $region38: #{ae_forward.23} parent=35 // pred_check_branch
        %228 = sbr.rel (%p226) target = $region40
      $region39: #{ae_forward.23} parent=35 // pred_region
        %s229 = smul.u32 64, %s19
        %p230 = scmp.lt.s32.totalorder %s229, 127
        %s231 = scalar_select %p230, %s229, 127
        %p232 = scmp.lt.s32.totalorder %s20, 0
        %s233 = scalar_select %p232, %s20, 0
        %s234 = sadd.s32 %s233, %s231
        %s235 = smul.addr %s234, 4
        %s236 = scalar_lea.vmem %s0, %s235
        %s237 = smul.u32 64, %s19
      $region40: #{ae_forward.23} parent=35 // pred_fallthru
        _
    $region36: #{ae_forward.23} parent=5 // pred_fallthru
      _
    %p238 = scmp.le.s32.totalorder 1, %s12
    %p239 = scmp.lt.s32.totalorder %s12, 3
    %p240 = pnand %p238, %p239
    %p241 = pneg %p240
    // Predicated region
    $region41: #{ae_forward.23} parent=5 // pred_check
      _
    $region42: #{ae_forward.23} parent=5 // pred_check_branch
      %243 = sbr.rel (%p240) target = $region44
    $region43: #{ae_forward.23} parent=5 // pred_region
      %s244 = ssub.s32 %s12, 1
      %s245 = smul.u32 64, %s21
      %p246 = scmp.lt.s32.totalorder %s245, 127
      %s247 = scalar_select %p246, %s245, 127
      %p248 = scmp.lt.s32.totalorder %s22, 0
      %s249 = scalar_select %p248, %s22, 0
      %s250 = sadd.s32 %s249, %s247
      %s251 = smul.addr %s250, 4
      %s252 = scalar_lea.vmem %s0, %s251
      %p253 = pneg %p52
      %p254 = pneg %p49
      %p255 = scmp.lt.s32.totalorder %s22, 0
      %s256 = scalar_select %p255, %s22, 0
      %s257 = smul.addr %s256, 2
      %s258 = scalar_lea.vmem %s1, %s257
      %p259 = pneg %p78
      %p260 = pneg %p75
      %p261 = pneg %p99
      %p262 = pneg %p96
      %p263 = pneg %p120
      %p264 = pneg %p117
      %p265 = pneg %p141
      %p266 = pneg %p138
      %p267 = pneg %p162
      %p268 = pneg %p159
      %p269 = pneg %p188
      %p270 = pneg %p185
      %s271 = smul.u32 64, %s21
      %p272 = scmp.lt.s32.totalorder %s271, 127
      %s273 = scalar_select %p272, %s271, 127
      %s274 = smul.addr %s273, 8
      %s275 = scalar_lea.vmem %s6, %s274
      %s276 = smul.u32 64, %s21
      %p277 = scmp.lt.s32.totalorder %s276, 127
      %s278 = scalar_select %p277, %s276, 127
      %p279 = scmp.lt.s32.totalorder %s22, 0
      %s280 = scalar_select %p279, %s22, 0
      %s281 = sadd.s32 %s280, %s278
      %s282 = smul.addr %s281, 4
      %s283 = scalar_lea.vmem %s0, %s282
      %s284 = smul.u32 64, %s21
      %p285 = scmp.lt.s32.totalorder %s22, 0
      %s286 = scalar_select %p285, %s22, 0
      %s287 = smul.addr %s286, 2
      %s288 = scalar_lea.vmem %s1, %s287
      %s289 = smul.u32 64, %s21
      %p290 = scmp.lt.s32.totalorder %s289, 127
      %s291 = scalar_select %p290, %s289, 127
      %s292 = smul.addr %s291, 8
      %s293 = scalar_lea.vmem %s6, %s292
      %s294 = smul.u32 64, %s21
      %p296 = scmp.eq.s32.totalorder %s22, 0
      // Predicated region
      $region45: #{ae_forward.23} parent=43 // pred_check
        %p297 = pneg %p296
      $region46: #{ae_forward.23} parent=43 // pred_check_branch
        %299 = sbr.rel (%p297) target = $region48
      $region47: #{ae_forward.23} parent=43 // pred_region
        %vm300 = vcmask 31744
        %301 = vst.msk [vmem:[#allocation2] sm:$0xff] %vm300, 0.0
        %302 = vst.msk [vmem:[#allocation2 + $0x8] sm:$0xff] %vm300, 0.0
        %303 = vst.msk [vmem:[#allocation2 + $0x10] sm:$0xff] %vm300, 0.0
        %304 = vst.msk [vmem:[#allocation2 + $0x18] sm:$0xff] %vm300, 0.0
        %305 = vst.msk [vmem:[#allocation2 + $0x20] sm:$0xff] %vm300, 0.0
        %306 = vst.msk [vmem:[#allocation2 + $0x28] sm:$0xff] %vm300, 0.0
        %307 = vst.msk [vmem:[#allocation2 + $0x30] sm:$0xff] %vm300, 0.0
        %308 = vst.msk [vmem:[#allocation2 + $0x38] sm:$0xff] %vm300, 0.0
        %309 = vst.msk [vmem:[#allocation2 + $0x40] sm:$0xff] %vm300, 0.0
        %310 = vst.msk [vmem:[#allocation2 + $0x48] sm:$0xff] %vm300, 0.0
        %311 = vst.msk [vmem:[#allocation2 + $0x50] sm:$0xff] %vm300, 0.0
        %312 = vst.msk [vmem:[#allocation2 + $0x58] sm:$0xff] %vm300, 0.0
        %313 = vst.msk [vmem:[#allocation2 + $0x60] sm:$0xff] %vm300, 0.0
        %314 = vst.msk [vmem:[#allocation2 + $0x68] sm:$0xff] %vm300, 0.0
        %315 = vst.msk [vmem:[#allocation2 + $0x70] sm:$0xff] %vm300, 0.0
        %316 = vst.msk [vmem:[#allocation2 + $0x78] sm:$0xff] %vm300, 0.0
        %317 = vst.msk [vmem:[#allocation2 + $0x80] sm:$0xff] %vm300, 0.0
        %318 = vst.msk [vmem:[#allocation2 + $0x88] sm:$0xff] %vm300, 0.0
        %319 = vst.msk [vmem:[#allocation2 + $0x90] sm:$0xff] %vm300, 0.0
        %320 = vst.msk [vmem:[#allocation2 + $0x98] sm:$0xff] %vm300, 0.0
        %321 = vst.msk [vmem:[#allocation2 + $0xa0] sm:$0xff] %vm300, 0.0
        %322 = vst.msk [vmem:[#allocation2 + $0xa8] sm:$0xff] %vm300, 0.0
        %323 = vst.msk [vmem:[#allocation2 + $0xb0] sm:$0xff] %vm300, 0.0
        %324 = vst.msk [vmem:[#allocation2 + $0xb8] sm:$0xff] %vm300, 0.0
        %325 = vst.msk [vmem:[#allocation2 + $0xc0] sm:$0xff] %vm300, 0.0
        %326 = vst.msk [vmem:[#allocation2 + $0xc8] sm:$0xff] %vm300, 0.0
        %327 = vst.msk [vmem:[#allocation2 + $0xd0] sm:$0xff] %vm300, 0.0
        %328 = vst.msk [vmem:[#allocation2 + $0xd8] sm:$0xff] %vm300, 0.0
        %329 = vst.msk [vmem:[#allocation2 + $0xe0] sm:$0xff] %vm300, 0.0
        %330 = vst.msk [vmem:[#allocation2 + $0xe8] sm:$0xff] %vm300, 0.0
        %331 = vst.msk [vmem:[#allocation2 + $0xf0] sm:$0xff] %vm300, 0.0
        %332 = vst.msk [vmem:[#allocation2 + $0xf8] sm:$0xff] %vm300, 0.0
        %333 = vst.msk [vmem:[#allocation2 + $0x100] sm:$0xff] %vm300, 0.0
        %334 = vst.msk [vmem:[#allocation2 + $0x108] sm:$0xff] %vm300, 0.0
        %335 = vst.msk [vmem:[#allocation2 + $0x110] sm:$0xff] %vm300, 0.0
        %336 = vst.msk [vmem:[#allocation2 + $0x118] sm:$0xff] %vm300, 0.0
        %337 = vst.msk [vmem:[#allocation2 + $0x120] sm:$0xff] %vm300, 0.0
        %338 = vst.msk [vmem:[#allocation2 + $0x128] sm:$0xff] %vm300, 0.0
        %339 = vst.msk [vmem:[#allocation2 + $0x130] sm:$0xff] %vm300, 0.0
        %340 = vst.msk [vmem:[#allocation2 + $0x138] sm:$0xff] %vm300, 0.0
        %341 = vst.msk [vmem:[#allocation2 + $0x140] sm:$0xff] %vm300, 0.0
        %342 = vst.msk [vmem:[#allocation2 + $0x148] sm:$0xff] %vm300, 0.0
        %343 = vst.msk [vmem:[#allocation2 + $0x150] sm:$0xff] %vm300, 0.0
        %344 = vst.msk [vmem:[#allocation2 + $0x158] sm:$0xff] %vm300, 0.0
        %345 = vst.msk [vmem:[#allocation2 + $0x160] sm:$0xff] %vm300, 0.0
        %346 = vst.msk [vmem:[#allocation2 + $0x168] sm:$0xff] %vm300, 0.0
        %347 = vst.msk [vmem:[#allocation2 + $0x170] sm:$0xff] %vm300, 0.0
        %348 = vst.msk [vmem:[#allocation2 + $0x178] sm:$0xff] %vm300, 0.0
        %349 = vst.msk [vmem:[#allocation2 + $0x180] sm:$0xff] %vm300, 0.0
        %350 = vst.msk [vmem:[#allocation2 + $0x188] sm:$0xff] %vm300, 0.0
        %351 = vst.msk [vmem:[#allocation2 + $0x190] sm:$0xff] %vm300, 0.0
        %352 = vst.msk [vmem:[#allocation2 + $0x198] sm:$0xff] %vm300, 0.0
        %353 = vst.msk [vmem:[#allocation2 + $0x1a0] sm:$0xff] %vm300, 0.0
        %354 = vst.msk [vmem:[#allocation2 + $0x1a8] sm:$0xff] %vm300, 0.0
        %355 = vst.msk [vmem:[#allocation2 + $0x1b0] sm:$0xff] %vm300, 0.0
        %356 = vst.msk [vmem:[#allocation2 + $0x1b8] sm:$0xff] %vm300, 0.0
        %357 = vst.msk [vmem:[#allocation2 + $0x1c0] sm:$0xff] %vm300, 0.0
        %358 = vst.msk [vmem:[#allocation2 + $0x1c8] sm:$0xff] %vm300, 0.0
        %359 = vst.msk [vmem:[#allocation2 + $0x1d0] sm:$0xff] %vm300, 0.0
        %360 = vst.msk [vmem:[#allocation2 + $0x1d8] sm:$0xff] %vm300, 0.0
        %361 = vst.msk [vmem:[#allocation2 + $0x1e0] sm:$0xff] %vm300, 0.0
        %362 = vst.msk [vmem:[#allocation2 + $0x1e8] sm:$0xff] %vm300, 0.0
        %363 = vst.msk [vmem:[#allocation2 + $0x1f0] sm:$0xff] %vm300, 0.0
        %364 = vst.msk [vmem:[#allocation2 + $0x1f8] sm:$0xff] %vm300, 0.0
      $region48: #{ae_forward.23} parent=43 // pred_fallthru
        _
      %v365 = vld [vmem:[#allocation2] sm:$0xff]
      %v366 = vld [vmem:[#allocation2 + $0x8] sm:$0xff]
      %v367 = vld [vmem:[#allocation2 + $0x10] sm:$0xff]
      %v368 = vld [vmem:[#allocation2 + $0x18] sm:$0xff]
      %v369 = vld [vmem:[#allocation2 + $0x20] sm:$0xff]
      %v370 = vld [vmem:[#allocation2 + $0x28] sm:$0xff]
      %v371 = vld [vmem:[#allocation2 + $0x30] sm:$0xff]
      %v372 = vld [vmem:[#allocation2 + $0x38] sm:$0xff]
      %v373 = vld [vmem:[#allocation2 + $0x40] sm:$0xff]
      %v374 = vld [vmem:[#allocation2 + $0x48] sm:$0xff]
      %v375 = vld [vmem:[#allocation2 + $0x50] sm:$0xff]
      %v376 = vld [vmem:[#allocation2 + $0x58] sm:$0xff]
      %v377 = vld [vmem:[#allocation2 + $0x60] sm:$0xff]
      %v378 = vld [vmem:[#allocation2 + $0x68] sm:$0xff]
      %v379 = vld [vmem:[#allocation2 + $0x70] sm:$0xff]
      %v380 = vld [vmem:[#allocation2 + $0x78] sm:$0xff]
      %v381 = vld [vmem:[#allocation2 + $0x80] sm:$0xff]
      %v382 = vld [vmem:[#allocation2 + $0x88] sm:$0xff]
      %v383 = vld [vmem:[#allocation2 + $0x90] sm:$0xff]
      %v384 = vld [vmem:[#allocation2 + $0x98] sm:$0xff]
      %v385 = vld [vmem:[#allocation2 + $0xa0] sm:$0xff]
      %v386 = vld [vmem:[#allocation2 + $0xa8] sm:$0xff]
      %v387 = vld [vmem:[#allocation2 + $0xb0] sm:$0xff]
      %v388 = vld [vmem:[#allocation2 + $0xb8] sm:$0xff]
      %v389 = vld [vmem:[#allocation2 + $0xc0] sm:$0xff]
      %v390 = vld [vmem:[#allocation2 + $0xc8] sm:$0xff]
      %v391 = vld [vmem:[#allocation2 + $0xd0] sm:$0xff]
      %v392 = vld [vmem:[#allocation2 + $0xd8] sm:$0xff]
      %v393 = vld [vmem:[#allocation2 + $0xe0] sm:$0xff]
      %v394 = vld [vmem:[#allocation2 + $0xe8] sm:$0xff]
      %v395 = vld [vmem:[#allocation2 + $0xf0] sm:$0xff]
      %v396 = vld [vmem:[#allocation2 + $0xf8] sm:$0xff]
      %v397 = vld [vmem:[#allocation2 + $0x100] sm:$0xff]
      %v398 = vld [vmem:[#allocation2 + $0x108] sm:$0xff]
      %v399 = vld [vmem:[#allocation2 + $0x110] sm:$0xff]
      %v400 = vld [vmem:[#allocation2 + $0x118] sm:$0xff]
      %v401 = vld [vmem:[#allocation2 + $0x120] sm:$0xff]
      %v402 = vld [vmem:[#allocation2 + $0x128] sm:$0xff]
      %v403 = vld [vmem:[#allocation2 + $0x130] sm:$0xff]
      %v404 = vld [vmem:[#allocation2 + $0x138] sm:$0xff]
      %v405 = vld [vmem:[#allocation2 + $0x140] sm:$0xff]
      %v406 = vld [vmem:[#allocation2 + $0x148] sm:$0xff]
      %v407 = vld [vmem:[#allocation2 + $0x150] sm:$0xff]
      %v408 = vld [vmem:[#allocation2 + $0x158] sm:$0xff]
      %v409 = vld [vmem:[#allocation2 + $0x160] sm:$0xff]
      %v410 = vld [vmem:[#allocation2 + $0x168] sm:$0xff]
      %v411 = vld [vmem:[#allocation2 + $0x170] sm:$0xff]
      %v412 = vld [vmem:[#allocation2 + $0x178] sm:$0xff]
      %v413 = vld [vmem:[#allocation2 + $0x180] sm:$0xff]
      %v414 = vld [vmem:[#allocation2 + $0x188] sm:$0xff]
      %v415 = vld [vmem:[#allocation2 + $0x190] sm:$0xff]
      %v416 = vld [vmem:[#allocation2 + $0x198] sm:$0xff]
      %v417 = vld [vmem:[#allocation2 + $0x1a0] sm:$0xff]
      %v418 = vld [vmem:[#allocation2 + $0x1a8] sm:$0xff]
      %v419 = vld [vmem:[#allocation2 + $0x1b0] sm:$0xff]
      %v420 = vld [vmem:[#allocation2 + $0x1b8] sm:$0xff]
      %v421 = vld [vmem:[#allocation2 + $0x1c0] sm:$0xff]
      %v422 = vld [vmem:[#allocation2 + $0x1c8] sm:$0xff]
      %v423 = vld [vmem:[#allocation2 + $0x1d0] sm:$0xff]
      %v424 = vld [vmem:[#allocation2 + $0x1d8] sm:$0xff]
      %v425 = vld [vmem:[#allocation2 + $0x1e0] sm:$0xff]
      %v426 = vld [vmem:[#allocation2 + $0x1e8] sm:$0xff]
      %v427 = vld [vmem:[#allocation2 + $0x1f0] sm:$0xff]
      %v428 = vld [vmem:[#allocation2 + $0x1f8] sm:$0xff]
      %v429 = vld [vmem:[%s283] sm:$0xf]
      %v430 = vld [vmem:[%s283 + $0x4] sm:$0xf]
      %v431 = vld [vmem:[%s283 + $0x8] sm:$0xf]
      %v432 = vld [vmem:[%s283 + $0xc] sm:$0xf]
      %v433 = vld [vmem:[%s283 + $0x10] sm:$0xf]
      %v434 = vld [vmem:[%s283 + $0x14] sm:$0xf]
      %v435 = vld [vmem:[%s283 + $0x18] sm:$0xf]
      %v436 = vld [vmem:[%s283 + $0x1c] sm:$0xf]
      %v437 = vld [vmem:[%s283 + $0x20] sm:$0xf]
      %v438 = vld [vmem:[%s283 + $0x24] sm:$0xf]
      %v439 = vld [vmem:[%s283 + $0x28] sm:$0xf]
      %v440 = vld [vmem:[%s283 + $0x2c] sm:$0xf]
      %v441 = vld [vmem:[%s283 + $0x30] sm:$0xf]
      %v442 = vld [vmem:[%s283 + $0x34] sm:$0xf]
      %v443 = vld [vmem:[%s283 + $0x38] sm:$0xf]
      %v444 = vld [vmem:[%s283 + $0x3c] sm:$0xf]
      %v445 = vld [vmem:[%s283 + $0x40] sm:$0xf]
      %v446 = vld [vmem:[%s283 + $0x44] sm:$0xf]
      %v447 = vld [vmem:[%s283 + $0x48] sm:$0xf]
      %v448 = vld [vmem:[%s283 + $0x4c] sm:$0xf]
      %v449 = vld [vmem:[%s283 + $0x50] sm:$0xf]
      %v450 = vld [vmem:[%s283 + $0x54] sm:$0xf]
      %v451 = vld [vmem:[%s283 + $0x58] sm:$0xf]
      %v452 = vld [vmem:[%s283 + $0x5c] sm:$0xf]
      %v453 = vld [vmem:[%s283 + $0x60] sm:$0xf]
      %v454 = vld [vmem:[%s283 + $0x64] sm:$0xf]
      %v455 = vld [vmem:[%s283 + $0x68] sm:$0xf]
      %v456 = vld [vmem:[%s283 + $0x6c] sm:$0xf]
      %v457 = vld [vmem:[%s283 + $0x70] sm:$0xf]
      %v458 = vld [vmem:[%s283 + $0x74] sm:$0xf]
      %v459 = vld [vmem:[%s283 + $0x78] sm:$0xf]
      %v460 = vld [vmem:[%s283 + $0x7c] sm:$0xf]
      %v461 = vld [vmem:[%s283 + $0x80] sm:$0xf]
      %v462 = vld [vmem:[%s283 + $0x84] sm:$0xf]
      %v463 = vld [vmem:[%s283 + $0x88] sm:$0xf]
      %v464 = vld [vmem:[%s283 + $0x8c] sm:$0xf]
      %v465 = vld [vmem:[%s283 + $0x90] sm:$0xf]
      %v466 = vld [vmem:[%s283 + $0x94] sm:$0xf]
      %v467 = vld [vmem:[%s283 + $0x98] sm:$0xf]
      %v468 = vld [vmem:[%s283 + $0x9c] sm:$0xf]
      %v469 = vld [vmem:[%s283 + $0xa0] sm:$0xf]
      %v470 = vld [vmem:[%s283 + $0xa4] sm:$0xf]
      %v471 = vld [vmem:[%s283 + $0xa8] sm:$0xf]
      %v472 = vld [vmem:[%s283 + $0xac] sm:$0xf]
      %v473 = vld [vmem:[%s283 + $0xb0] sm:$0xf]
      %v474 = vld [vmem:[%s283 + $0xb4] sm:$0xf]
      %v475 = vld [vmem:[%s283 + $0xb8] sm:$0xf]
      %v476 = vld [vmem:[%s283 + $0xbc] sm:$0xf]
      %v477 = vld [vmem:[%s283 + $0xc0] sm:$0xf]
      %v478 = vld [vmem:[%s283 + $0xc4] sm:$0xf]
      %v479 = vld [vmem:[%s283 + $0xc8] sm:$0xf]
      %v480 = vld [vmem:[%s283 + $0xcc] sm:$0xf]
      %v481 = vld [vmem:[%s283 + $0xd0] sm:$0xf]
      %v482 = vld [vmem:[%s283 + $0xd4] sm:$0xf]
      %v483 = vld [vmem:[%s283 + $0xd8] sm:$0xf]
      %v484 = vld [vmem:[%s283 + $0xdc] sm:$0xf]
      %v485 = vld [vmem:[%s283 + $0xe0] sm:$0xf]
      %v486 = vld [vmem:[%s283 + $0xe4] sm:$0xf]
      %v487 = vld [vmem:[%s283 + $0xe8] sm:$0xf]
      %v488 = vld [vmem:[%s283 + $0xec] sm:$0xf]
      %v489 = vld [vmem:[%s283 + $0xf0] sm:$0xf]
      %v490 = vld [vmem:[%s283 + $0xf4] sm:$0xf]
      %v491 = vld [vmem:[%s283 + $0xf8] sm:$0xf]
      %v492 = vld [vmem:[%s283 + $0xfc] sm:$0xf]
      %v493 = vld [vmem:[%s288] sm:$0x3]
      %v558 = vunpack.c.l.b16 %v429
      %v559 = vunpack.c.l.b16 %v430
      %v560 = vunpack.c.l.b16 %v431
      %v561 = vunpack.c.l.b16 %v432
      %v562 = vunpack.c.l.b16 %v433
      %v563 = vunpack.c.l.b16 %v434
      %v564 = vunpack.c.l.b16 %v435
      %v565 = vunpack.c.l.b16 %v436
      %v566 = vunpack.c.l.b16 %v437
      %v567 = vunpack.c.l.b16 %v438
      %v568 = vunpack.c.l.b16 %v439
      %v569 = vunpack.c.l.b16 %v440
      %v570 = vunpack.c.l.b16 %v441
      %v571 = vunpack.c.l.b16 %v442
      %v572 = vunpack.c.l.b16 %v443
      %v573 = vunpack.c.l.b16 %v444
      %v574 = vunpack.c.l.b16 %v445
      %v575 = vunpack.c.l.b16 %v446
      %v576 = vunpack.c.l.b16 %v447
      %v577 = vunpack.c.l.b16 %v448
      %v578 = vunpack.c.l.b16 %v449
      %v579 = vunpack.c.l.b16 %v450
      %v580 = vunpack.c.l.b16 %v451
      %v581 = vunpack.c.l.b16 %v452
      %v582 = vunpack.c.l.b16 %v453
      %v583 = vunpack.c.l.b16 %v454
      %v584 = vunpack.c.l.b16 %v455
      %v585 = vunpack.c.l.b16 %v456
      %v586 = vunpack.c.l.b16 %v457
      %v587 = vunpack.c.l.b16 %v458
      %v588 = vunpack.c.l.b16 %v459
      %v589 = vunpack.c.l.b16 %v460
      %v590 = vunpack.c.l.b16 %v461
      %v591 = vunpack.c.l.b16 %v462
      %v592 = vunpack.c.l.b16 %v463
      %v593 = vunpack.c.l.b16 %v464
      %v594 = vunpack.c.l.b16 %v465
      %v595 = vunpack.c.l.b16 %v466
      %v596 = vunpack.c.l.b16 %v467
      %v597 = vunpack.c.l.b16 %v468
      %v598 = vunpack.c.l.b16 %v469
      %v599 = vunpack.c.l.b16 %v470
      %v600 = vunpack.c.l.b16 %v471
      %v601 = vunpack.c.l.b16 %v472
      %v602 = vunpack.c.l.b16 %v473
      %v603 = vunpack.c.l.b16 %v474
      %v604 = vunpack.c.l.b16 %v475
      %v605 = vunpack.c.l.b16 %v476
      %v606 = vunpack.c.l.b16 %v477
      %v607 = vunpack.c.l.b16 %v478
      %v608 = vunpack.c.l.b16 %v479
      %v609 = vunpack.c.l.b16 %v480
      %v610 = vunpack.c.l.b16 %v481
      %v611 = vunpack.c.l.b16 %v482
      %v612 = vunpack.c.l.b16 %v483
      %v613 = vunpack.c.l.b16 %v484
      %v614 = vunpack.c.l.b16 %v485
      %v615 = vunpack.c.l.b16 %v486
      %v616 = vunpack.c.l.b16 %v487
      %v617 = vunpack.c.l.b16 %v488
      %v618 = vunpack.c.l.b16 %v489
      %v619 = vunpack.c.l.b16 %v490
      %v620 = vunpack.c.l.b16 %v491
      %v621 = vunpack.c.l.b16 %v492
      %v622 = vpack.c.b16 %v559, %v558
      %v623 = vpack.c.b16 %v561, %v560
      %v624 = vpack.c.b16 %v563, %v562
      %v625 = vpack.c.b16 %v565, %v564
      %v626 = vpack.c.b16 %v567, %v566
      %v627 = vpack.c.b16 %v569, %v568
      %v628 = vpack.c.b16 %v571, %v570
      %v629 = vpack.c.b16 %v573, %v572
      %v630 = vpack.c.b16 %v575, %v574
      %v631 = vpack.c.b16 %v577, %v576
      %v632 = vpack.c.b16 %v579, %v578
      %v633 = vpack.c.b16 %v581, %v580
      %v634 = vpack.c.b16 %v583, %v582
      %v635 = vpack.c.b16 %v585, %v584
      %v636 = vpack.c.b16 %v587, %v586
      %v637 = vpack.c.b16 %v589, %v588
      %v638 = vpack.c.b16 %v591, %v590
      %v639 = vpack.c.b16 %v593, %v592
      %v640 = vpack.c.b16 %v595, %v594
      %v641 = vpack.c.b16 %v597, %v596
      %v642 = vpack.c.b16 %v599, %v598
      %v643 = vpack.c.b16 %v601, %v600
      %v644 = vpack.c.b16 %v603, %v602
      %v645 = vpack.c.b16 %v605, %v604
      %v646 = vpack.c.b16 %v607, %v606
      %v647 = vpack.c.b16 %v609, %v608
      %v648 = vpack.c.b16 %v611, %v610
      %v649 = vpack.c.b16 %v613, %v612
      %v650 = vpack.c.b16 %v615, %v614
      %v651 = vpack.c.b16 %v617, %v616
      %v652 = vpack.c.b16 %v619, %v618
      %v653 = vpack.c.b16 %v621, %v620
      %vm654 = vcmask 31744
      %v656 = vsel %vm654, %v622, 0
      %v659 = vsel %vm654, %v623, 0
      %v662 = vsel %vm654, %v624, 0
      %v665 = vsel %vm654, %v625, 0
      %v668 = vsel %vm654, %v626, 0
      %v671 = vsel %vm654, %v627, 0
      %v674 = vsel %vm654, %v628, 0
      %v677 = vsel %vm654, %v629, 0
      %v680 = vsel %vm654, %v630, 0
      %v683 = vsel %vm654, %v631, 0
      %v686 = vsel %vm654, %v632, 0
      %v689 = vsel %vm654, %v633, 0
      %v692 = vsel %vm654, %v634, 0
      %v695 = vsel %vm654, %v635, 0
      %v698 = vsel %vm654, %v636, 0
      %v701 = vsel %vm654, %v637, 0
      %v704 = vsel %vm654, %v638, 0
      %v707 = vsel %vm654, %v639, 0
      %v710 = vsel %vm654, %v640, 0
      %v713 = vsel %vm654, %v641, 0
      %v716 = vsel %vm654, %v642, 0
      %v719 = vsel %vm654, %v643, 0
      %v722 = vsel %vm654, %v644, 0
      %v725 = vsel %vm654, %v645, 0
      %v728 = vsel %vm654, %v646, 0
      %v731 = vsel %vm654, %v647, 0
      %v734 = vsel %vm654, %v648, 0
      %v737 = vsel %vm654, %v649, 0
      %v740 = vsel %vm654, %v650, 0
      %v743 = vsel %vm654, %v651, 0
      %v746 = vsel %vm654, %v652, 0
      %v749 = vsel %vm654, %v653, 0
      %vm751 = vcmask 1041408
      %v753 = vsel %vm751, %v493, 0
      %755 = vmatpush.bf16.msra.mxu0 0
      %756 = vmatpush.bf16.msra.mxu0 0
      %757 = vmatpush.bf16.msra.mxu0 0
      %758 = vmatpush.bf16.msra.mxu0 0
      %759 = vmatpush.bf16.msra.mxu0 0
      %760 = vmatpush.bf16.msra.mxu0 0
      %761 = vmatpush.bf16.msra.mxu0 0
      %762 = vmatpush.bf16.msra.mxu0 %v753
      %763 = vmatmul.bf16.gmra.mxu0 %v656
      %v764 = vpop.f32.mrf.mxu0
      %v765 = vadd.f32 0.0, %v764
      %v766 = vpop.f32.mrf.mxu0
      %v767 = vadd.f32 0.0, %v766
      %768 = vmatmul.bf16.gmra.mxu0 %v659
      %v769 = vpop.f32.mrf.mxu0
      %v770 = vadd.f32 0.0, %v769
      %v771 = vpop.f32.mrf.mxu0
      %v772 = vadd.f32 0.0, %v771
      %773 = vmatmul.bf16.gmra.mxu0 %v662
      %v774 = vpop.f32.mrf.mxu0
      %v775 = vadd.f32 0.0, %v774
      %v776 = vpop.f32.mrf.mxu0
      %v777 = vadd.f32 0.0, %v776
      %778 = vmatmul.bf16.gmra.mxu0 %v665
      %v779 = vpop.f32.mrf.mxu0
      %v780 = vadd.f32 0.0, %v779
      %v781 = vpop.f32.mrf.mxu0
      %v782 = vadd.f32 0.0, %v781
      %783 = vmatmul.bf16.gmra.mxu0 %v668
      %v784 = vpop.f32.mrf.mxu0
      %v785 = vadd.f32 0.0, %v784
      %v786 = vpop.f32.mrf.mxu0
      %v787 = vadd.f32 0.0, %v786
      %788 = vmatmul.bf16.gmra.mxu0 %v671
      %v789 = vpop.f32.mrf.mxu0
      %v790 = vadd.f32 0.0, %v789
      %v791 = vpop.f32.mrf.mxu0
      %v792 = vadd.f32 0.0, %v791
      %793 = vmatmul.bf16.gmra.mxu0 %v674
      %v794 = vpop.f32.mrf.mxu0
      %v795 = vadd.f32 0.0, %v794
      %v796 = vpop.f32.mrf.mxu0
      %v797 = vadd.f32 0.0, %v796
      %798 = vmatmul.bf16.gmra.mxu0 %v677
      %v799 = vpop.f32.mrf.mxu0
      %v800 = vadd.f32 0.0, %v799
      %v801 = vpop.f32.mrf.mxu0
      %v802 = vadd.f32 0.0, %v801
      %803 = vmatmul.bf16.gmra.mxu0 %v680
      %v804 = vpop.f32.mrf.mxu0
      %v805 = vadd.f32 0.0, %v804
      %v806 = vpop.f32.mrf.mxu0
      %v807 = vadd.f32 0.0, %v806
      %808 = vmatmul.bf16.gmra.mxu0 %v683
      %v809 = vpop.f32.mrf.mxu0
      %v810 = vadd.f32 0.0, %v809
      %v811 = vpop.f32.mrf.mxu0
      %v812 = vadd.f32 0.0, %v811
      %813 = vmatmul.bf16.gmra.mxu0 %v686
      %v814 = vpop.f32.mrf.mxu0
      %v815 = vadd.f32 0.0, %v814
      %v816 = vpop.f32.mrf.mxu0
      %v817 = vadd.f32 0.0, %v816
      %818 = vmatmul.bf16.gmra.mxu0 %v689
      %v819 = vpop.f32.mrf.mxu0
      %v820 = vadd.f32 0.0, %v819
      %v821 = vpop.f32.mrf.mxu0
      %v822 = vadd.f32 0.0, %v821
      %823 = vmatmul.bf16.gmra.mxu0 %v692
      %v824 = vpop.f32.mrf.mxu0
      %v825 = vadd.f32 0.0, %v824
      %v826 = vpop.f32.mrf.mxu0
      %v827 = vadd.f32 0.0, %v826
      %828 = vmatmul.bf16.gmra.mxu0 %v695
      %v829 = vpop.f32.mrf.mxu0
      %v830 = vadd.f32 0.0, %v829
      %v831 = vpop.f32.mrf.mxu0
      %v832 = vadd.f32 0.0, %v831
      %833 = vmatmul.bf16.gmra.mxu0 %v698
      %v834 = vpop.f32.mrf.mxu0
      %v835 = vadd.f32 0.0, %v834
      %v836 = vpop.f32.mrf.mxu0
      %v837 = vadd.f32 0.0, %v836
      %838 = vmatmul.bf16.gmra.mxu0 %v701
      %v839 = vpop.f32.mrf.mxu0
      %v840 = vadd.f32 0.0, %v839
      %v841 = vpop.f32.mrf.mxu0
      %v842 = vadd.f32 0.0, %v841
      %843 = vmatmul.bf16.gmra.mxu0 %v704
      %v844 = vpop.f32.mrf.mxu0
      %v845 = vadd.f32 0.0, %v844
      %v846 = vpop.f32.mrf.mxu0
      %v847 = vadd.f32 0.0, %v846
      %848 = vmatmul.bf16.gmra.mxu0 %v707
      %v849 = vpop.f32.mrf.mxu0
      %v850 = vadd.f32 0.0, %v849
      %v851 = vpop.f32.mrf.mxu0
      %v852 = vadd.f32 0.0, %v851
      %853 = vmatmul.bf16.gmra.mxu0 %v710
      %v854 = vpop.f32.mrf.mxu0
      %v855 = vadd.f32 0.0, %v854
      %v856 = vpop.f32.mrf.mxu0
      %v857 = vadd.f32 0.0, %v856
      %858 = vmatmul.bf16.gmra.mxu0 %v713
      %v859 = vpop.f32.mrf.mxu0
      %v860 = vadd.f32 0.0, %v859
      %v861 = vpop.f32.mrf.mxu0
      %v862 = vadd.f32 0.0, %v861
      %863 = vmatmul.bf16.gmra.mxu0 %v716
      %v864 = vpop.f32.mrf.mxu0
      %v865 = vadd.f32 0.0, %v864
      %v866 = vpop.f32.mrf.mxu0
      %v867 = vadd.f32 0.0, %v866
      %868 = vmatmul.bf16.gmra.mxu0 %v719
      %v869 = vpop.f32.mrf.mxu0
      %v870 = vadd.f32 0.0, %v869
      %v871 = vpop.f32.mrf.mxu0
      %v872 = vadd.f32 0.0, %v871
      %873 = vmatmul.bf16.gmra.mxu0 %v722
      %v874 = vpop.f32.mrf.mxu0
      %v875 = vadd.f32 0.0, %v874
      %v876 = vpop.f32.mrf.mxu0
      %v877 = vadd.f32 0.0, %v876
      %878 = vmatmul.bf16.gmra.mxu0 %v725
      %v879 = vpop.f32.mrf.mxu0
      %v880 = vadd.f32 0.0, %v879
      %v881 = vpop.f32.mrf.mxu0
      %v882 = vadd.f32 0.0, %v881
      %883 = vmatmul.bf16.gmra.mxu0 %v728
      %v884 = vpop.f32.mrf.mxu0
      %v885 = vadd.f32 0.0, %v884
      %v886 = vpop.f32.mrf.mxu0
      %v887 = vadd.f32 0.0, %v886
      %888 = vmatmul.bf16.gmra.mxu0 %v731
      %v889 = vpop.f32.mrf.mxu0
      %v890 = vadd.f32 0.0, %v889
      %v891 = vpop.f32.mrf.mxu0
      %v892 = vadd.f32 0.0, %v891
      %893 = vmatmul.bf16.gmra.mxu0 %v734
      %v894 = vpop.f32.mrf.mxu0
      %v895 = vadd.f32 0.0, %v894
      %v896 = vpop.f32.mrf.mxu0
      %v897 = vadd.f32 0.0, %v896
      %898 = vmatmul.bf16.gmra.mxu0 %v737
      %v899 = vpop.f32.mrf.mxu0
      %v900 = vadd.f32 0.0, %v899
      %v901 = vpop.f32.mrf.mxu0
      %v902 = vadd.f32 0.0, %v901
      %903 = vmatmul.bf16.gmra.mxu0 %v740
      %v904 = vpop.f32.mrf.mxu0
      %v905 = vadd.f32 0.0, %v904
      %v906 = vpop.f32.mrf.mxu0
      %v907 = vadd.f32 0.0, %v906
      %908 = vmatmul.bf16.gmra.mxu0 %v743
      %v909 = vpop.f32.mrf.mxu0
      %v910 = vadd.f32 0.0, %v909
      %v911 = vpop.f32.mrf.mxu0
      %v912 = vadd.f32 0.0, %v911
      %913 = vmatmul.bf16.gmra.mxu0 %v746
      %v914 = vpop.f32.mrf.mxu0
      %v915 = vadd.f32 0.0, %v914
      %v916 = vpop.f32.mrf.mxu0
      %v917 = vadd.f32 0.0, %v916
      %918 = vmatmul.bf16.gmra.mxu0 %v749
      %v919 = vpop.f32.mrf.mxu0
      %v920 = vadd.f32 0.0, %v919
      %v921 = vpop.f32.mrf.mxu0
      %v922 = vadd.f32 0.0, %v921
      %923 = vdwg.mxu0
      %v924 = vadd.f32 %v365, %v765
      %v925 = vadd.f32 %v366, %v767
      %v926 = vadd.f32 %v367, %v770
      %v927 = vadd.f32 %v368, %v772
      %v928 = vadd.f32 %v369, %v775
      %v929 = vadd.f32 %v370, %v777
      %v930 = vadd.f32 %v371, %v780
      %v931 = vadd.f32 %v372, %v782
      %v932 = vadd.f32 %v373, %v785
      %v933 = vadd.f32 %v374, %v787
      %v934 = vadd.f32 %v375, %v790
      %v935 = vadd.f32 %v376, %v792
      %v936 = vadd.f32 %v377, %v795
      %v937 = vadd.f32 %v378, %v797
      %v938 = vadd.f32 %v379, %v800
      %v939 = vadd.f32 %v380, %v802
      %v940 = vadd.f32 %v381, %v805
      %v941 = vadd.f32 %v382, %v807
      %v942 = vadd.f32 %v383, %v810
      %v943 = vadd.f32 %v384, %v812
      %v944 = vadd.f32 %v385, %v815
      %v945 = vadd.f32 %v386, %v817
      %v946 = vadd.f32 %v387, %v820
      %v947 = vadd.f32 %v388, %v822
      %v948 = vadd.f32 %v389, %v825
      %v949 = vadd.f32 %v390, %v827
      %v950 = vadd.f32 %v391, %v830
      %v951 = vadd.f32 %v392, %v832
      %v952 = vadd.f32 %v393, %v835
      %v953 = vadd.f32 %v394, %v837
      %v954 = vadd.f32 %v395, %v840
      %v955 = vadd.f32 %v396, %v842
      %v956 = vadd.f32 %v397, %v845
      %v957 = vadd.f32 %v398, %v847
      %v958 = vadd.f32 %v399, %v850
      %v959 = vadd.f32 %v400, %v852
      %v960 = vadd.f32 %v401, %v855
      %v961 = vadd.f32 %v402, %v857
      %v962 = vadd.f32 %v403, %v860
      %v963 = vadd.f32 %v404, %v862
      %v964 = vadd.f32 %v405, %v865
      %v965 = vadd.f32 %v406, %v867
      %v966 = vadd.f32 %v407, %v870
      %v967 = vadd.f32 %v408, %v872
      %v968 = vadd.f32 %v409, %v875
      %v969 = vadd.f32 %v410, %v877
      %v970 = vadd.f32 %v411, %v880
      %v971 = vadd.f32 %v412, %v882
      %v972 = vadd.f32 %v413, %v885
      %v973 = vadd.f32 %v414, %v887
      %v974 = vadd.f32 %v415, %v890
      %v975 = vadd.f32 %v416, %v892
      %v976 = vadd.f32 %v417, %v895
      %v977 = vadd.f32 %v418, %v897
      %v978 = vadd.f32 %v419, %v900
      %v979 = vadd.f32 %v420, %v902
      %v980 = vadd.f32 %v421, %v905
      %v981 = vadd.f32 %v422, %v907
      %v982 = vadd.f32 %v423, %v910
      %v983 = vadd.f32 %v424, %v912
      %v984 = vadd.f32 %v425, %v915
      %v985 = vadd.f32 %v426, %v917
      %v986 = vadd.f32 %v427, %v920
      %v987 = vadd.f32 %v428, %v922
      %988 = vst.msk [vmem:[#allocation2] sm:$0xff] %vm654, %v924
      %989 = vst.msk [vmem:[#allocation2 + $0x8] sm:$0xff] %vm654, %v925
      %990 = vst.msk [vmem:[#allocation2 + $0x10] sm:$0xff] %vm654, %v926
      %991 = vst.msk [vmem:[#allocation2 + $0x18] sm:$0xff] %vm654, %v927
      %992 = vst.msk [vmem:[#allocation2 + $0x20] sm:$0xff] %vm654, %v928
      %993 = vst.msk [vmem:[#allocation2 + $0x28] sm:$0xff] %vm654, %v929
      %994 = vst.msk [vmem:[#allocation2 + $0x30] sm:$0xff] %vm654, %v930
      %995 = vst.msk [vmem:[#allocation2 + $0x38] sm:$0xff] %vm654, %v931
      %996 = vst.msk [vmem:[#allocation2 + $0x40] sm:$0xff] %vm654, %v932
      %997 = vst.msk [vmem:[#allocation2 + $0x48] sm:$0xff] %vm654, %v933
      %998 = vst.msk [vmem:[#allocation2 + $0x50] sm:$0xff] %vm654, %v934
      %999 = vst.msk [vmem:[#allocation2 + $0x58] sm:$0xff] %vm654, %v935
      %1000 = vst.msk [vmem:[#allocation2 + $0x60] sm:$0xff] %vm654, %v936
      %1001 = vst.msk [vmem:[#allocation2 + $0x68] sm:$0xff] %vm654, %v937
      %1002 = vst.msk [vmem:[#allocation2 + $0x70] sm:$0xff] %vm654, %v938
      %1003 = vst.msk [vmem:[#allocation2 + $0x78] sm:$0xff] %vm654, %v939
      %1004 = vst.msk [vmem:[#allocation2 + $0x80] sm:$0xff] %vm654, %v940
      %1005 = vst.msk [vmem:[#allocation2 + $0x88] sm:$0xff] %vm654, %v941
      %1006 = vst.msk [vmem:[#allocation2 + $0x90] sm:$0xff] %vm654, %v942
      %1007 = vst.msk [vmem:[#allocation2 + $0x98] sm:$0xff] %vm654, %v943
      %1008 = vst.msk [vmem:[#allocation2 + $0xa0] sm:$0xff] %vm654, %v944
      %1009 = vst.msk [vmem:[#allocation2 + $0xa8] sm:$0xff] %vm654, %v945
      %1010 = vst.msk [vmem:[#allocation2 + $0xb0] sm:$0xff] %vm654, %v946
      %1011 = vst.msk [vmem:[#allocation2 + $0xb8] sm:$0xff] %vm654, %v947
      %1012 = vst.msk [vmem:[#allocation2 + $0xc0] sm:$0xff] %vm654, %v948
      %1013 = vst.msk [vmem:[#allocation2 + $0xc8] sm:$0xff] %vm654, %v949
      %1014 = vst.msk [vmem:[#allocation2 + $0xd0] sm:$0xff] %vm654, %v950
      %1015 = vst.msk [vmem:[#allocation2 + $0xd8] sm:$0xff] %vm654, %v951
      %1016 = vst.msk [vmem:[#allocation2 + $0xe0] sm:$0xff] %vm654, %v952
      %1017 = vst.msk [vmem:[#allocation2 + $0xe8] sm:$0xff] %vm654, %v953
      %1018 = vst.msk [vmem:[#allocation2 + $0xf0] sm:$0xff] %vm654, %v954
      %1019 = vst.msk [vmem:[#allocation2 + $0xf8] sm:$0xff] %vm654, %v955
      %1020 = vst.msk [vmem:[#allocation2 + $0x100] sm:$0xff] %vm654, %v956
      %1021 = vst.msk [vmem:[#allocation2 + $0x108] sm:$0xff] %vm654, %v957
      %1022 = vst.msk [vmem:[#allocation2 + $0x110] sm:$0xff] %vm654, %v958
      %1023 = vst.msk [vmem:[#allocation2 + $0x118] sm:$0xff] %vm654, %v959
      %1024 = vst.msk [vmem:[#allocation2 + $0x120] sm:$0xff] %vm654, %v960
      %1025 = vst.msk [vmem:[#allocation2 + $0x128] sm:$0xff] %vm654, %v961
      %1026 = vst.msk [vmem:[#allocation2 + $0x130] sm:$0xff] %vm654, %v962
      %1027 = vst.msk [vmem:[#allocation2 + $0x138] sm:$0xff] %vm654, %v963
      %1028 = vst.msk [vmem:[#allocation2 + $0x140] sm:$0xff] %vm654, %v964
      %1029 = vst.msk [vmem:[#allocation2 + $0x148] sm:$0xff] %vm654, %v965
      %1030 = vst.msk [vmem:[#allocation2 + $0x150] sm:$0xff] %vm654, %v966
      %1031 = vst.msk [vmem:[#allocation2 + $0x158] sm:$0xff] %vm654, %v967
      %1032 = vst.msk [vmem:[#allocation2 + $0x160] sm:$0xff] %vm654, %v968
      %1033 = vst.msk [vmem:[#allocation2 + $0x168] sm:$0xff] %vm654, %v969
      %1034 = vst.msk [vmem:[#allocation2 + $0x170] sm:$0xff] %vm654, %v970
      %1035 = vst.msk [vmem:[#allocation2 + $0x178] sm:$0xff] %vm654, %v971
      %1036 = vst.msk [vmem:[#allocation2 + $0x180] sm:$0xff] %vm654, %v972
      %1037 = vst.msk [vmem:[#allocation2 + $0x188] sm:$0xff] %vm654, %v973
      %1038 = vst.msk [vmem:[#allocation2 + $0x190] sm:$0xff] %vm654, %v974
      %1039 = vst.msk [vmem:[#allocation2 + $0x198] sm:$0xff] %vm654, %v975
      %1040 = vst.msk [vmem:[#allocation2 + $0x1a0] sm:$0xff] %vm654, %v976
      %1041 = vst.msk [vmem:[#allocation2 + $0x1a8] sm:$0xff] %vm654, %v977
      %1042 = vst.msk [vmem:[#allocation2 + $0x1b0] sm:$0xff] %vm654, %v978
      %1043 = vst.msk [vmem:[#allocation2 + $0x1b8] sm:$0xff] %vm654, %v979
      %1044 = vst.msk [vmem:[#allocation2 + $0x1c0] sm:$0xff] %vm654, %v980
      %1045 = vst.msk [vmem:[#allocation2 + $0x1c8] sm:$0xff] %vm654, %v981
      %1046 = vst.msk [vmem:[#allocation2 + $0x1d0] sm:$0xff] %vm654, %v982
      %1047 = vst.msk [vmem:[#allocation2 + $0x1d8] sm:$0xff] %vm654, %v983
      %1048 = vst.msk [vmem:[#allocation2 + $0x1e0] sm:$0xff] %vm654, %v984
      %1049 = vst.msk [vmem:[#allocation2 + $0x1e8] sm:$0xff] %vm654, %v985
      %1050 = vst.msk [vmem:[#allocation2 + $0x1f0] sm:$0xff] %vm654, %v986
      %1051 = vst.msk [vmem:[#allocation2 + $0x1f8] sm:$0xff] %vm654, %v987
      // Predicated region
      $region49: #{ae_forward.23} parent=43 // pred_check
        %p1052 = pneg %p296
      $region50: #{ae_forward.23} parent=43 // pred_check_branch
        %1054 = sbr.rel (%p1052) target = $region52
      $region51: #{ae_forward.23} parent=43 // pred_region
        %v1055 = vld [vmem:[#allocation2] sm:$0xff]
        %v1056 = vld [vmem:[#allocation2 + $0x8] sm:$0xff]
        %v1057 = vld [vmem:[#allocation2 + $0x10] sm:$0xff]
        %v1058 = vld [vmem:[#allocation2 + $0x18] sm:$0xff]
        %v1059 = vld [vmem:[#allocation2 + $0x20] sm:$0xff]
        %v1060 = vld [vmem:[#allocation2 + $0x28] sm:$0xff]
        %v1061 = vld [vmem:[#allocation2 + $0x30] sm:$0xff]
        %v1062 = vld [vmem:[#allocation2 + $0x38] sm:$0xff]
        %v1063 = vld [vmem:[#allocation2 + $0x40] sm:$0xff]
        %v1064 = vld [vmem:[#allocation2 + $0x48] sm:$0xff]
        %v1065 = vld [vmem:[#allocation2 + $0x50] sm:$0xff]
        %v1066 = vld [vmem:[#allocation2 + $0x58] sm:$0xff]
        %v1067 = vld [vmem:[#allocation2 + $0x60] sm:$0xff]
        %v1068 = vld [vmem:[#allocation2 + $0x68] sm:$0xff]
        %v1069 = vld [vmem:[#allocation2 + $0x70] sm:$0xff]
        %v1070 = vld [vmem:[#allocation2 + $0x78] sm:$0xff]
        %v1071 = vld [vmem:[#allocation2 + $0x80] sm:$0xff]
        %v1072 = vld [vmem:[#allocation2 + $0x88] sm:$0xff]
        %v1073 = vld [vmem:[#allocation2 + $0x90] sm:$0xff]
        %v1074 = vld [vmem:[#allocation2 + $0x98] sm:$0xff]
        %v1075 = vld [vmem:[#allocation2 + $0xa0] sm:$0xff]
        %v1076 = vld [vmem:[#allocation2 + $0xa8] sm:$0xff]
        %v1077 = vld [vmem:[#allocation2 + $0xb0] sm:$0xff]
        %v1078 = vld [vmem:[#allocation2 + $0xb8] sm:$0xff]
        %v1079 = vld [vmem:[#allocation2 + $0xc0] sm:$0xff]
        %v1080 = vld [vmem:[#allocation2 + $0xc8] sm:$0xff]
        %v1081 = vld [vmem:[#allocation2 + $0xd0] sm:$0xff]
        %v1082 = vld [vmem:[#allocation2 + $0xd8] sm:$0xff]
        %v1083 = vld [vmem:[#allocation2 + $0xe0] sm:$0xff]
        %v1084 = vld [vmem:[#allocation2 + $0xe8] sm:$0xff]
        %v1085 = vld [vmem:[#allocation2 + $0xf0] sm:$0xff]
        %v1086 = vld [vmem:[#allocation2 + $0xf8] sm:$0xff]
        %v1087 = vld [vmem:[#allocation2 + $0x100] sm:$0xff]
        %v1088 = vld [vmem:[#allocation2 + $0x108] sm:$0xff]
        %v1089 = vld [vmem:[#allocation2 + $0x110] sm:$0xff]
        %v1090 = vld [vmem:[#allocation2 + $0x118] sm:$0xff]
        %v1091 = vld [vmem:[#allocation2 + $0x120] sm:$0xff]
        %v1092 = vld [vmem:[#allocation2 + $0x128] sm:$0xff]
        %v1093 = vld [vmem:[#allocation2 + $0x130] sm:$0xff]
        %v1094 = vld [vmem:[#allocation2 + $0x138] sm:$0xff]
        %v1095 = vld [vmem:[#allocation2 + $0x140] sm:$0xff]
        %v1096 = vld [vmem:[#allocation2 + $0x148] sm:$0xff]
        %v1097 = vld [vmem:[#allocation2 + $0x150] sm:$0xff]
        %v1098 = vld [vmem:[#allocation2 + $0x158] sm:$0xff]
        %v1099 = vld [vmem:[#allocation2 + $0x160] sm:$0xff]
        %v1100 = vld [vmem:[#allocation2 + $0x168] sm:$0xff]
        %v1101 = vld [vmem:[#allocation2 + $0x170] sm:$0xff]
        %v1102 = vld [vmem:[#allocation2 + $0x178] sm:$0xff]
        %v1103 = vld [vmem:[#allocation2 + $0x180] sm:$0xff]
        %v1104 = vld [vmem:[#allocation2 + $0x188] sm:$0xff]
        %v1105 = vld [vmem:[#allocation2 + $0x190] sm:$0xff]
        %v1106 = vld [vmem:[#allocation2 + $0x198] sm:$0xff]
        %v1107 = vld [vmem:[#allocation2 + $0x1a0] sm:$0xff]
        %v1108 = vld [vmem:[#allocation2 + $0x1a8] sm:$0xff]
        %v1109 = vld [vmem:[#allocation2 + $0x1b0] sm:$0xff]
        %v1110 = vld [vmem:[#allocation2 + $0x1b8] sm:$0xff]
        %v1111 = vld [vmem:[#allocation2 + $0x1c0] sm:$0xff]
        %v1112 = vld [vmem:[#allocation2 + $0x1c8] sm:$0xff]
        %v1113 = vld [vmem:[#allocation2 + $0x1d0] sm:$0xff]
        %v1114 = vld [vmem:[#allocation2 + $0x1d8] sm:$0xff]
        %v1115 = vld [vmem:[#allocation2 + $0x1e0] sm:$0xff]
        %v1116 = vld [vmem:[#allocation2 + $0x1e8] sm:$0xff]
        %v1117 = vld [vmem:[#allocation2 + $0x1f0] sm:$0xff]
        %v1118 = vld [vmem:[#allocation2 + $0x1f8] sm:$0xff]
        %v1119 = vld [vmem:[%s2] sm:$0x1]
        %v1121 = vperm.slane %v1119, 0
        %v1123 = vmul.f32 %v1055, %v1121
        %v1124 = vmul.f32 %v1056, %v1121
        %v1125 = vmul.f32 %v1057, %v1121
        %v1126 = vmul.f32 %v1058, %v1121
        %v1127 = vmul.f32 %v1059, %v1121
        %v1128 = vmul.f32 %v1060, %v1121
        %v1129 = vmul.f32 %v1061, %v1121
        %v1130 = vmul.f32 %v1062, %v1121
        %v1131 = vmul.f32 %v1063, %v1121
        %v1132 = vmul.f32 %v1064, %v1121
        %v1133 = vmul.f32 %v1065, %v1121
        %v1134 = vmul.f32 %v1066, %v1121
        %v1135 = vmul.f32 %v1067, %v1121
        %v1136 = vmul.f32 %v1068, %v1121
        %v1137 = vmul.f32 %v1069, %v1121
        %v1138 = vmul.f32 %v1070, %v1121
        %v1139 = vmul.f32 %v1071, %v1121
        %v1140 = vmul.f32 %v1072, %v1121
        %v1141 = vmul.f32 %v1073, %v1121
        %v1142 = vmul.f32 %v1074, %v1121
        %v1143 = vmul.f32 %v1075, %v1121
        %v1144 = vmul.f32 %v1076, %v1121
        %v1145 = vmul.f32 %v1077, %v1121
        %v1146 = vmul.f32 %v1078, %v1121
        %v1147 = vmul.f32 %v1079, %v1121
        %v1148 = vmul.f32 %v1080, %v1121
        %v1149 = vmul.f32 %v1081, %v1121
        %v1150 = vmul.f32 %v1082, %v1121
        %v1151 = vmul.f32 %v1083, %v1121
        %v1152 = vmul.f32 %v1084, %v1121
        %v1153 = vmul.f32 %v1085, %v1121
        %v1154 = vmul.f32 %v1086, %v1121
        %v1155 = vmul.f32 %v1087, %v1121
        %v1156 = vmul.f32 %v1088, %v1121
        %v1157 = vmul.f32 %v1089, %v1121
        %v1158 = vmul.f32 %v1090, %v1121
        %v1159 = vmul.f32 %v1091, %v1121
        %v1160 = vmul.f32 %v1092, %v1121
        %v1161 = vmul.f32 %v1093, %v1121
        %v1162 = vmul.f32 %v1094, %v1121
        %v1163 = vmul.f32 %v1095, %v1121
        %v1164 = vmul.f32 %v1096, %v1121
        %v1165 = vmul.f32 %v1097, %v1121
        %v1166 = vmul.f32 %v1098, %v1121
        %v1167 = vmul.f32 %v1099, %v1121
        %v1168 = vmul.f32 %v1100, %v1121
        %v1169 = vmul.f32 %v1101, %v1121
        %v1170 = vmul.f32 %v1102, %v1121
        %v1171 = vmul.f32 %v1103, %v1121
        %v1172 = vmul.f32 %v1104, %v1121
        %v1173 = vmul.f32 %v1105, %v1121
        %v1174 = vmul.f32 %v1106, %v1121
        %v1175 = vmul.f32 %v1107, %v1121
        %v1176 = vmul.f32 %v1108, %v1121
        %v1177 = vmul.f32 %v1109, %v1121
        %v1178 = vmul.f32 %v1110, %v1121
        %v1179 = vmul.f32 %v1111, %v1121
        %v1180 = vmul.f32 %v1112, %v1121
        %v1181 = vmul.f32 %v1113, %v1121
        %v1182 = vmul.f32 %v1114, %v1121
        %v1183 = vmul.f32 %v1115, %v1121
        %v1184 = vmul.f32 %v1116, %v1121
        %v1185 = vmul.f32 %v1117, %v1121
        %v1186 = vmul.f32 %v1118, %v1121
        %v1187 = vld [vmem:[%s3] sm:$0x1]
        %v1189 = vperm.slane %v1187, 0
        %v1191 = vadd.f32 %v1123, %v1189
        %v1192 = vadd.f32 %v1124, %v1189
        %v1193 = vadd.f32 %v1125, %v1189
        %v1194 = vadd.f32 %v1126, %v1189
        %v1195 = vadd.f32 %v1127, %v1189
        %v1196 = vadd.f32 %v1128, %v1189
        %v1197 = vadd.f32 %v1129, %v1189
        %v1198 = vadd.f32 %v1130, %v1189
        %v1199 = vadd.f32 %v1131, %v1189
        %v1200 = vadd.f32 %v1132, %v1189
        %v1201 = vadd.f32 %v1133, %v1189
        %v1202 = vadd.f32 %v1134, %v1189
        %v1203 = vadd.f32 %v1135, %v1189
        %v1204 = vadd.f32 %v1136, %v1189
        %v1205 = vadd.f32 %v1137, %v1189
        %v1206 = vadd.f32 %v1138, %v1189
        %v1207 = vadd.f32 %v1139, %v1189
        %v1208 = vadd.f32 %v1140, %v1189
        %v1209 = vadd.f32 %v1141, %v1189
        %v1210 = vadd.f32 %v1142, %v1189
        %v1211 = vadd.f32 %v1143, %v1189
        %v1212 = vadd.f32 %v1144, %v1189
        %v1213 = vadd.f32 %v1145, %v1189
        %v1214 = vadd.f32 %v1146, %v1189
        %v1215 = vadd.f32 %v1147, %v1189
        %v1216 = vadd.f32 %v1148, %v1189
        %v1217 = vadd.f32 %v1149, %v1189
        %v1218 = vadd.f32 %v1150, %v1189
        %v1219 = vadd.f32 %v1151, %v1189
        %v1220 = vadd.f32 %v1152, %v1189
        %v1221 = vadd.f32 %v1153, %v1189
        %v1222 = vadd.f32 %v1154, %v1189
        %v1223 = vadd.f32 %v1155, %v1189
        %v1224 = vadd.f32 %v1156, %v1189
        %v1225 = vadd.f32 %v1157, %v1189
        %v1226 = vadd.f32 %v1158, %v1189
        %v1227 = vadd.f32 %v1159, %v1189
        %v1228 = vadd.f32 %v1160, %v1189
        %v1229 = vadd.f32 %v1161, %v1189
        %v1230 = vadd.f32 %v1162, %v1189
        %v1231 = vadd.f32 %v1163, %v1189
        %v1232 = vadd.f32 %v1164, %v1189
        %v1233 = vadd.f32 %v1165, %v1189
        %v1234 = vadd.f32 %v1166, %v1189
        %v1235 = vadd.f32 %v1167, %v1189
        %v1236 = vadd.f32 %v1168, %v1189
        %v1237 = vadd.f32 %v1169, %v1189
        %v1238 = vadd.f32 %v1170, %v1189
        %v1239 = vadd.f32 %v1171, %v1189
        %v1240 = vadd.f32 %v1172, %v1189
        %v1241 = vadd.f32 %v1173, %v1189
        %v1242 = vadd.f32 %v1174, %v1189
        %v1243 = vadd.f32 %v1175, %v1189
        %v1244 = vadd.f32 %v1176, %v1189
        %v1245 = vadd.f32 %v1177, %v1189
        %v1246 = vadd.f32 %v1178, %v1189
        %v1247 = vadd.f32 %v1179, %v1189
        %v1248 = vadd.f32 %v1180, %v1189
        %v1249 = vadd.f32 %v1181, %v1189
        %v1250 = vadd.f32 %v1182, %v1189
        %v1251 = vadd.f32 %v1183, %v1189
        %v1252 = vadd.f32 %v1184, %v1189
        %v1253 = vadd.f32 %v1185, %v1189
        %v1254 = vadd.f32 %v1186, %v1189
        %v1255 = vmax.f32 %v1191, 0.0
        %v1256 = vmax.f32 %v1192, 0.0
        %v1257 = vmax.f32 %v1193, 0.0
        %v1258 = vmax.f32 %v1194, 0.0
        %v1259 = vmax.f32 %v1195, 0.0
        %v1260 = vmax.f32 %v1196, 0.0
        %v1261 = vmax.f32 %v1197, 0.0
        %v1262 = vmax.f32 %v1198, 0.0
        %v1263 = vmax.f32 %v1199, 0.0
        %v1264 = vmax.f32 %v1200, 0.0
        %v1265 = vmax.f32 %v1201, 0.0
        %v1266 = vmax.f32 %v1202, 0.0
        %v1267 = vmax.f32 %v1203, 0.0
        %v1268 = vmax.f32 %v1204, 0.0
        %v1269 = vmax.f32 %v1205, 0.0
        %v1270 = vmax.f32 %v1206, 0.0
        %v1271 = vmax.f32 %v1207, 0.0
        %v1272 = vmax.f32 %v1208, 0.0
        %v1273 = vmax.f32 %v1209, 0.0
        %v1274 = vmax.f32 %v1210, 0.0
        %v1275 = vmax.f32 %v1211, 0.0
        %v1276 = vmax.f32 %v1212, 0.0
        %v1277 = vmax.f32 %v1213, 0.0
        %v1278 = vmax.f32 %v1214, 0.0
        %v1279 = vmax.f32 %v1215, 0.0
        %v1280 = vmax.f32 %v1216, 0.0
        %v1281 = vmax.f32 %v1217, 0.0
        %v1282 = vmax.f32 %v1218, 0.0
        %v1283 = vmax.f32 %v1219, 0.0
        %v1284 = vmax.f32 %v1220, 0.0
        %v1285 = vmax.f32 %v1221, 0.0
        %v1286 = vmax.f32 %v1222, 0.0
        %v1287 = vmax.f32 %v1223, 0.0
        %v1288 = vmax.f32 %v1224, 0.0
        %v1289 = vmax.f32 %v1225, 0.0
        %v1290 = vmax.f32 %v1226, 0.0
        %v1291 = vmax.f32 %v1227, 0.0
        %v1292 = vmax.f32 %v1228, 0.0
        %v1293 = vmax.f32 %v1229, 0.0
        %v1294 = vmax.f32 %v1230, 0.0
        %v1295 = vmax.f32 %v1231, 0.0
        %v1296 = vmax.f32 %v1232, 0.0
        %v1297 = vmax.f32 %v1233, 0.0
        %v1298 = vmax.f32 %v1234, 0.0
        %v1299 = vmax.f32 %v1235, 0.0
        %v1300 = vmax.f32 %v1236, 0.0
        %v1301 = vmax.f32 %v1237, 0.0
        %v1302 = vmax.f32 %v1238, 0.0
        %v1303 = vmax.f32 %v1239, 0.0
        %v1304 = vmax.f32 %v1240, 0.0
        %v1305 = vmax.f32 %v1241, 0.0
        %v1306 = vmax.f32 %v1242, 0.0
        %v1307 = vmax.f32 %v1243, 0.0
        %v1308 = vmax.f32 %v1244, 0.0
        %v1309 = vmax.f32 %v1245, 0.0
        %v1310 = vmax.f32 %v1246, 0.0
        %v1311 = vmax.f32 %v1247, 0.0
        %v1312 = vmax.f32 %v1248, 0.0
        %v1313 = vmax.f32 %v1249, 0.0
        %v1314 = vmax.f32 %v1250, 0.0
        %v1315 = vmax.f32 %v1251, 0.0
        %v1316 = vmax.f32 %v1252, 0.0
        %v1317 = vmax.f32 %v1253, 0.0
        %v1318 = vmax.f32 %v1254, 0.0
        %v1319 = vpack.c.bf16 %v1256, %v1255
        %v1320 = vpack.c.bf16 %v1258, %v1257
        %v1321 = vpack.c.bf16 %v1260, %v1259
        %v1322 = vpack.c.bf16 %v1262, %v1261
        %v1323 = vpack.c.bf16 %v1264, %v1263
        %v1324 = vpack.c.bf16 %v1266, %v1265
        %v1325 = vpack.c.bf16 %v1268, %v1267
        %v1326 = vpack.c.bf16 %v1270, %v1269
        %v1327 = vpack.c.bf16 %v1272, %v1271
        %v1328 = vpack.c.bf16 %v1274, %v1273
        %v1329 = vpack.c.bf16 %v1276, %v1275
        %v1330 = vpack.c.bf16 %v1278, %v1277
        %v1331 = vpack.c.bf16 %v1280, %v1279
        %v1332 = vpack.c.bf16 %v1282, %v1281
        %v1333 = vpack.c.bf16 %v1284, %v1283
        %v1334 = vpack.c.bf16 %v1286, %v1285
        %v1335 = vpack.c.bf16 %v1288, %v1287
        %v1336 = vpack.c.bf16 %v1290, %v1289
        %v1337 = vpack.c.bf16 %v1292, %v1291
        %v1338 = vpack.c.bf16 %v1294, %v1293
        %v1339 = vpack.c.bf16 %v1296, %v1295
        %v1340 = vpack.c.bf16 %v1298, %v1297
        %v1341 = vpack.c.bf16 %v1300, %v1299
        %v1342 = vpack.c.bf16 %v1302, %v1301
        %v1343 = vpack.c.bf16 %v1304, %v1303
        %v1344 = vpack.c.bf16 %v1306, %v1305
        %v1345 = vpack.c.bf16 %v1308, %v1307
        %v1346 = vpack.c.bf16 %v1310, %v1309
        %v1347 = vpack.c.bf16 %v1312, %v1311
        %v1348 = vpack.c.bf16 %v1314, %v1313
        %v1349 = vpack.c.bf16 %v1316, %v1315
        %v1350 = vpack.c.bf16 %v1318, %v1317
        %v1351 = vld [vmem:[%s4] sm:$0x3]
        %v1352 = vld [vmem:[%s5] sm:$0x1]
        %v1354 = vperm.slane %v1352, 0
        %v1357 = vsel %vm654, %v1319, 0
        %v1360 = vsel %vm654, %v1320, 0
        %v1363 = vsel %vm654, %v1321, 0
        %v1366 = vsel %vm654, %v1322, 0
        %v1369 = vsel %vm654, %v1323, 0
        %v1372 = vsel %vm654, %v1324, 0
        %v1375 = vsel %vm654, %v1325, 0
        %v1378 = vsel %vm654, %v1326, 0
        %v1381 = vsel %vm654, %v1327, 0
        %v1384 = vsel %vm654, %v1328, 0
        %v1387 = vsel %vm654, %v1329, 0
        %v1390 = vsel %vm654, %v1330, 0
        %v1393 = vsel %vm654, %v1331, 0
        %v1396 = vsel %vm654, %v1332, 0
        %v1399 = vsel %vm654, %v1333, 0
        %v1402 = vsel %vm654, %v1334, 0
        %v1405 = vsel %vm654, %v1335, 0
        %v1408 = vsel %vm654, %v1336, 0
        %v1411 = vsel %vm654, %v1337, 0
        %v1414 = vsel %vm654, %v1338, 0
        %v1417 = vsel %vm654, %v1339, 0
        %v1420 = vsel %vm654, %v1340, 0
        %v1423 = vsel %vm654, %v1341, 0
        %v1426 = vsel %vm654, %v1342, 0
        %v1429 = vsel %vm654, %v1343, 0
        %v1432 = vsel %vm654, %v1344, 0
        %v1435 = vsel %vm654, %v1345, 0
        %v1438 = vsel %vm654, %v1346, 0
        %v1441 = vsel %vm654, %v1347, 0
        %v1444 = vsel %vm654, %v1348, 0
        %v1447 = vsel %vm654, %v1349, 0
        %v1450 = vsel %vm654, %v1350, 0
        %v1453 = vsel %vm751, %v1351, 0
        %1455 = vmatpush.bf16.msra.mxu0 0
        %1456 = vmatpush.bf16.msra.mxu0 0
        %1457 = vmatpush.bf16.msra.mxu0 0
        %1458 = vmatpush.bf16.msra.mxu0 0
        %1459 = vmatpush.bf16.msra.mxu0 0
        %1460 = vmatpush.bf16.msra.mxu0 0
        %1461 = vmatpush.bf16.msra.mxu0 0
        %1462 = vmatpush.bf16.msra.mxu0 %v1453
        %1463 = vmatmul.bf16.gmra.mxu0 %v1357
        %v1464 = vpop.f32.mrf.mxu0
        %v1465 = vadd.f32 %v1354, %v1464
        %v1466 = vpop.f32.mrf.mxu0
        %v1467 = vadd.f32 %v1354, %v1466
        %1468 = vmatmul.bf16.gmra.mxu0 %v1360
        %v1469 = vpop.f32.mrf.mxu0
        %v1470 = vadd.f32 %v1354, %v1469
        %v1471 = vpop.f32.mrf.mxu0
        %v1472 = vadd.f32 %v1354, %v1471
        %1473 = vmatmul.bf16.gmra.mxu0 %v1363
        %v1474 = vpop.f32.mrf.mxu0
        %v1475 = vadd.f32 %v1354, %v1474
        %v1476 = vpop.f32.mrf.mxu0
        %v1477 = vadd.f32 %v1354, %v1476
        %1478 = vmatmul.bf16.gmra.mxu0 %v1366
        %v1479 = vpop.f32.mrf.mxu0
        %v1480 = vadd.f32 %v1354, %v1479
        %v1481 = vpop.f32.mrf.mxu0
        %v1482 = vadd.f32 %v1354, %v1481
        %1483 = vmatmul.bf16.gmra.mxu0 %v1369
        %v1484 = vpop.f32.mrf.mxu0
        %v1485 = vadd.f32 %v1354, %v1484
        %v1486 = vpop.f32.mrf.mxu0
        %v1487 = vadd.f32 %v1354, %v1486
        %1488 = vmatmul.bf16.gmra.mxu0 %v1372
        %v1489 = vpop.f32.mrf.mxu0
        %v1490 = vadd.f32 %v1354, %v1489
        %v1491 = vpop.f32.mrf.mxu0
        %v1492 = vadd.f32 %v1354, %v1491
        %1493 = vmatmul.bf16.gmra.mxu0 %v1375
        %v1494 = vpop.f32.mrf.mxu0
        %v1495 = vadd.f32 %v1354, %v1494
        %v1496 = vpop.f32.mrf.mxu0
        %v1497 = vadd.f32 %v1354, %v1496
        %1498 = vmatmul.bf16.gmra.mxu0 %v1378
        %v1499 = vpop.f32.mrf.mxu0
        %v1500 = vadd.f32 %v1354, %v1499
        %v1501 = vpop.f32.mrf.mxu0
        %v1502 = vadd.f32 %v1354, %v1501
        %1503 = vmatmul.bf16.gmra.mxu0 %v1381
        %v1504 = vpop.f32.mrf.mxu0
        %v1505 = vadd.f32 %v1354, %v1504
        %v1506 = vpop.f32.mrf.mxu0
        %v1507 = vadd.f32 %v1354, %v1506
        %1508 = vmatmul.bf16.gmra.mxu0 %v1384
        %v1509 = vpop.f32.mrf.mxu0
        %v1510 = vadd.f32 %v1354, %v1509
        %v1511 = vpop.f32.mrf.mxu0
        %v1512 = vadd.f32 %v1354, %v1511
        %1513 = vmatmul.bf16.gmra.mxu0 %v1387
        %v1514 = vpop.f32.mrf.mxu0
        %v1515 = vadd.f32 %v1354, %v1514
        %v1516 = vpop.f32.mrf.mxu0
        %v1517 = vadd.f32 %v1354, %v1516
        %1518 = vmatmul.bf16.gmra.mxu0 %v1390
        %v1519 = vpop.f32.mrf.mxu0
        %v1520 = vadd.f32 %v1354, %v1519
        %v1521 = vpop.f32.mrf.mxu0
        %v1522 = vadd.f32 %v1354, %v1521
        %1523 = vmatmul.bf16.gmra.mxu0 %v1393
        %v1524 = vpop.f32.mrf.mxu0
        %v1525 = vadd.f32 %v1354, %v1524
        %v1526 = vpop.f32.mrf.mxu0
        %v1527 = vadd.f32 %v1354, %v1526
        %1528 = vmatmul.bf16.gmra.mxu0 %v1396
        %v1529 = vpop.f32.mrf.mxu0
        %v1530 = vadd.f32 %v1354, %v1529
        %v1531 = vpop.f32.mrf.mxu0
        %v1532 = vadd.f32 %v1354, %v1531
        %1533 = vmatmul.bf16.gmra.mxu0 %v1399
        %v1534 = vpop.f32.mrf.mxu0
        %v1535 = vadd.f32 %v1354, %v1534
        %v1536 = vpop.f32.mrf.mxu0
        %v1537 = vadd.f32 %v1354, %v1536
        %1538 = vmatmul.bf16.gmra.mxu0 %v1402
        %v1539 = vpop.f32.mrf.mxu0
        %v1540 = vadd.f32 %v1354, %v1539
        %v1541 = vpop.f32.mrf.mxu0
        %v1542 = vadd.f32 %v1354, %v1541
        %1543 = vmatmul.bf16.gmra.mxu0 %v1405
        %v1544 = vpop.f32.mrf.mxu0
        %v1545 = vadd.f32 %v1354, %v1544
        %v1546 = vpop.f32.mrf.mxu0
        %v1547 = vadd.f32 %v1354, %v1546
        %1548 = vmatmul.bf16.gmra.mxu0 %v1408
        %v1549 = vpop.f32.mrf.mxu0
        %v1550 = vadd.f32 %v1354, %v1549
        %v1551 = vpop.f32.mrf.mxu0
        %v1552 = vadd.f32 %v1354, %v1551
        %1553 = vmatmul.bf16.gmra.mxu0 %v1411
        %v1554 = vpop.f32.mrf.mxu0
        %v1555 = vadd.f32 %v1354, %v1554
        %v1556 = vpop.f32.mrf.mxu0
        %v1557 = vadd.f32 %v1354, %v1556
        %1558 = vmatmul.bf16.gmra.mxu0 %v1414
        %v1559 = vpop.f32.mrf.mxu0
        %v1560 = vadd.f32 %v1354, %v1559
        %v1561 = vpop.f32.mrf.mxu0
        %v1562 = vadd.f32 %v1354, %v1561
        %1563 = vmatmul.bf16.gmra.mxu0 %v1417
        %v1564 = vpop.f32.mrf.mxu0
        %v1565 = vadd.f32 %v1354, %v1564
        %v1566 = vpop.f32.mrf.mxu0
        %v1567 = vadd.f32 %v1354, %v1566
        %1568 = vmatmul.bf16.gmra.mxu0 %v1420
        %v1569 = vpop.f32.mrf.mxu0
        %v1570 = vadd.f32 %v1354, %v1569
        %v1571 = vpop.f32.mrf.mxu0
        %v1572 = vadd.f32 %v1354, %v1571
        %1573 = vmatmul.bf16.gmra.mxu0 %v1423
        %v1574 = vpop.f32.mrf.mxu0
        %v1575 = vadd.f32 %v1354, %v1574
        %v1576 = vpop.f32.mrf.mxu0
        %v1577 = vadd.f32 %v1354, %v1576
        %1578 = vmatmul.bf16.gmra.mxu0 %v1426
        %v1579 = vpop.f32.mrf.mxu0
        %v1580 = vadd.f32 %v1354, %v1579
        %v1581 = vpop.f32.mrf.mxu0
        %v1582 = vadd.f32 %v1354, %v1581
        %1583 = vmatmul.bf16.gmra.mxu0 %v1429
        %v1584 = vpop.f32.mrf.mxu0
        %v1585 = vadd.f32 %v1354, %v1584
        %v1586 = vpop.f32.mrf.mxu0
        %v1587 = vadd.f32 %v1354, %v1586
        %1588 = vmatmul.bf16.gmra.mxu0 %v1432
        %v1589 = vpop.f32.mrf.mxu0
        %v1590 = vadd.f32 %v1354, %v1589
        %v1591 = vpop.f32.mrf.mxu0
        %v1592 = vadd.f32 %v1354, %v1591
        %1593 = vmatmul.bf16.gmra.mxu0 %v1435
        %v1594 = vpop.f32.mrf.mxu0
        %v1595 = vadd.f32 %v1354, %v1594
        %v1596 = vpop.f32.mrf.mxu0
        %v1597 = vadd.f32 %v1354, %v1596
        %1598 = vmatmul.bf16.gmra.mxu0 %v1438
        %v1599 = vpop.f32.mrf.mxu0
        %v1600 = vadd.f32 %v1354, %v1599
        %v1601 = vpop.f32.mrf.mxu0
        %v1602 = vadd.f32 %v1354, %v1601
        %1603 = vmatmul.bf16.gmra.mxu0 %v1441
        %v1604 = vpop.f32.mrf.mxu0
        %v1605 = vadd.f32 %v1354, %v1604
        %v1606 = vpop.f32.mrf.mxu0
        %v1607 = vadd.f32 %v1354, %v1606
        %1608 = vmatmul.bf16.gmra.mxu0 %v1444
        %v1609 = vpop.f32.mrf.mxu0
        %v1610 = vadd.f32 %v1354, %v1609
        %v1611 = vpop.f32.mrf.mxu0
        %v1612 = vadd.f32 %v1354, %v1611
        %1613 = vmatmul.bf16.gmra.mxu0 %v1447
        %v1614 = vpop.f32.mrf.mxu0
        %v1615 = vadd.f32 %v1354, %v1614
        %v1616 = vpop.f32.mrf.mxu0
        %v1617 = vadd.f32 %v1354, %v1616
        %1618 = vmatmul.bf16.gmra.mxu0 %v1450
        %v1619 = vpop.f32.mrf.mxu0
        %v1620 = vadd.f32 %v1354, %v1619
        %v1621 = vpop.f32.mrf.mxu0
        %v1622 = vadd.f32 %v1354, %v1621
        %1623 = vdwg.mxu0
        %vm1624 = vcmask 15360
        %1625 = vst.msk [vmem:[%s293] sm:$0xff] %vm1624, %v1465
        %1626 = vst.msk [vmem:[%s293 + $0x8] sm:$0xff] %vm1624, %v1467
        %1627 = vst.msk [vmem:[%s293 + $0x10] sm:$0xff] %vm1624, %v1470
        %1628 = vst.msk [vmem:[%s293 + $0x18] sm:$0xff] %vm1624, %v1472
        %1629 = vst.msk [vmem:[%s293 + $0x20] sm:$0xff] %vm1624, %v1475
        %1630 = vst.msk [vmem:[%s293 + $0x28] sm:$0xff] %vm1624, %v1477
        %1631 = vst.msk [vmem:[%s293 + $0x30] sm:$0xff] %vm1624, %v1480
        %1632 = vst.msk [vmem:[%s293 + $0x38] sm:$0xff] %vm1624, %v1482
        %1633 = vst.msk [vmem:[%s293 + $0x40] sm:$0xff] %vm1624, %v1485
        %1634 = vst.msk [vmem:[%s293 + $0x48] sm:$0xff] %vm1624, %v1487
        %1635 = vst.msk [vmem:[%s293 + $0x50] sm:$0xff] %vm1624, %v1490
        %1636 = vst.msk [vmem:[%s293 + $0x58] sm:$0xff] %vm1624, %v1492
        %1637 = vst.msk [vmem:[%s293 + $0x60] sm:$0xff] %vm1624, %v1495
        %1638 = vst.msk [vmem:[%s293 + $0x68] sm:$0xff] %vm1624, %v1497
        %1639 = vst.msk [vmem:[%s293 + $0x70] sm:$0xff] %vm1624, %v1500
        %1640 = vst.msk [vmem:[%s293 + $0x78] sm:$0xff] %vm1624, %v1502
        %1641 = vst.msk [vmem:[%s293 + $0x80] sm:$0xff] %vm1624, %v1505
        %1642 = vst.msk [vmem:[%s293 + $0x88] sm:$0xff] %vm1624, %v1507
        %1643 = vst.msk [vmem:[%s293 + $0x90] sm:$0xff] %vm1624, %v1510
        %1644 = vst.msk [vmem:[%s293 + $0x98] sm:$0xff] %vm1624, %v1512
        %1645 = vst.msk [vmem:[%s293 + $0xa0] sm:$0xff] %vm1624, %v1515
        %1646 = vst.msk [vmem:[%s293 + $0xa8] sm:$0xff] %vm1624, %v1517
        %1647 = vst.msk [vmem:[%s293 + $0xb0] sm:$0xff] %vm1624, %v1520
        %1648 = vst.msk [vmem:[%s293 + $0xb8] sm:$0xff] %vm1624, %v1522
        %1649 = vst.msk [vmem:[%s293 + $0xc0] sm:$0xff] %vm1624, %v1525
        %1650 = vst.msk [vmem:[%s293 + $0xc8] sm:$0xff] %vm1624, %v1527
        %1651 = vst.msk [vmem:[%s293 + $0xd0] sm:$0xff] %vm1624, %v1530
        %1652 = vst.msk [vmem:[%s293 + $0xd8] sm:$0xff] %vm1624, %v1532
        %1653 = vst.msk [vmem:[%s293 + $0xe0] sm:$0xff] %vm1624, %v1535
        %1654 = vst.msk [vmem:[%s293 + $0xe8] sm:$0xff] %vm1624, %v1537
        %1655 = vst.msk [vmem:[%s293 + $0xf0] sm:$0xff] %vm1624, %v1540
        %1656 = vst.msk [vmem:[%s293 + $0xf8] sm:$0xff] %vm1624, %v1542
        %1657 = vst.msk [vmem:[%s293 + $0x100] sm:$0xff] %vm1624, %v1545
        %1658 = vst.msk [vmem:[%s293 + $0x108] sm:$0xff] %vm1624, %v1547
        %1659 = vst.msk [vmem:[%s293 + $0x110] sm:$0xff] %vm1624, %v1550
        %1660 = vst.msk [vmem:[%s293 + $0x118] sm:$0xff] %vm1624, %v1552
        %1661 = vst.msk [vmem:[%s293 + $0x120] sm:$0xff] %vm1624, %v1555
        %1662 = vst.msk [vmem:[%s293 + $0x128] sm:$0xff] %vm1624, %v1557
        %1663 = vst.msk [vmem:[%s293 + $0x130] sm:$0xff] %vm1624, %v1560
        %1664 = vst.msk [vmem:[%s293 + $0x138] sm:$0xff] %vm1624, %v1562
        %1665 = vst.msk [vmem:[%s293 + $0x140] sm:$0xff] %vm1624, %v1565
        %1666 = vst.msk [vmem:[%s293 + $0x148] sm:$0xff] %vm1624, %v1567
        %1667 = vst.msk [vmem:[%s293 + $0x150] sm:$0xff] %vm1624, %v1570
        %1668 = vst.msk [vmem:[%s293 + $0x158] sm:$0xff] %vm1624, %v1572
        %1669 = vst.msk [vmem:[%s293 + $0x160] sm:$0xff] %vm1624, %v1575
        %1670 = vst.msk [vmem:[%s293 + $0x168] sm:$0xff] %vm1624, %v1577
        %1671 = vst.msk [vmem:[%s293 + $0x170] sm:$0xff] %vm1624, %v1580
        %1672 = vst.msk [vmem:[%s293 + $0x178] sm:$0xff] %vm1624, %v1582
        %1673 = vst.msk [vmem:[%s293 + $0x180] sm:$0xff] %vm1624, %v1585
        %1674 = vst.msk [vmem:[%s293 + $0x188] sm:$0xff] %vm1624, %v1587
        %1675 = vst.msk [vmem:[%s293 + $0x190] sm:$0xff] %vm1624, %v1590
        %1676 = vst.msk [vmem:[%s293 + $0x198] sm:$0xff] %vm1624, %v1592
        %1677 = vst.msk [vmem:[%s293 + $0x1a0] sm:$0xff] %vm1624, %v1595
        %1678 = vst.msk [vmem:[%s293 + $0x1a8] sm:$0xff] %vm1624, %v1597
        %1679 = vst.msk [vmem:[%s293 + $0x1b0] sm:$0xff] %vm1624, %v1600
        %1680 = vst.msk [vmem:[%s293 + $0x1b8] sm:$0xff] %vm1624, %v1602
        %1681 = vst.msk [vmem:[%s293 + $0x1c0] sm:$0xff] %vm1624, %v1605
        %1682 = vst.msk [vmem:[%s293 + $0x1c8] sm:$0xff] %vm1624, %v1607
        %1683 = vst.msk [vmem:[%s293 + $0x1d0] sm:$0xff] %vm1624, %v1610
        %1684 = vst.msk [vmem:[%s293 + $0x1d8] sm:$0xff] %vm1624, %v1612
        %1685 = vst.msk [vmem:[%s293 + $0x1e0] sm:$0xff] %vm1624, %v1615
        %1686 = vst.msk [vmem:[%s293 + $0x1e8] sm:$0xff] %vm1624, %v1617
        %1687 = vst.msk [vmem:[%s293 + $0x1f0] sm:$0xff] %vm1624, %v1620
        %1688 = vst.msk [vmem:[%s293 + $0x1f8] sm:$0xff] %vm1624, %v1622
      $region52: #{ae_forward.23} parent=43 // pred_fallthru
        _
      %s1689 = smul.u32 64, %s21
      %p1690 = scmp.lt.s32.totalorder %s1689, 127
      %s1691 = scalar_select %p1690, %s1689, 127
      %s1692 = smul.addr %s1691, 8
      %s1693 = scalar_lea.vmem %s6, %s1692
      // Predicated region
      $region53: #{ae_forward.23} parent=43 // pred_check
        %p1694 = pneg %p185
      $region54: #{ae_forward.23} parent=43 // pred_check_branch
        %1696 = sbr.rel (%p1694) target = $region56
      $region55: #{ae_forward.23} parent=43 // pred_region
        %s1697 = smul.u32 64, %s21
      $region56: #{ae_forward.23} parent=43 // pred_fallthru
        _
    $region44: #{ae_forward.23} parent=5 // pred_fallthru
      _
    %p1698 = scmp.le.s32.totalorder 2, %s12
    // Predicated region
    $region57: #{ae_forward.23} parent=5 // pred_check
      %p1699 = pneg %p1698
    $region58: #{ae_forward.23} parent=5 // pred_check_branch
      %1701 = sbr.rel (%p1699) target = $region60
    $region59: #{ae_forward.23} parent=5 // pred_region
      %s1702 = ssub.s32 %s12, 2
      // Predicated region
      $region61: #{ae_forward.23} parent=59 // pred_check
        %p1703 = pneg %p191
      $region62: #{ae_forward.23} parent=59 // pred_check_branch
        %1705 = sbr.rel (%p1703) target = $region64
      $region63: #{ae_forward.23} parent=59 // pred_region
        %s1706 = smul.u32 64, %s23
        %p1707 = scmp.lt.s32.totalorder %s1706, 127
        %s1708 = scalar_select %p1707, %s1706, 127
        %s1709 = smul.addr %s1708, 8
        %s1710 = scalar_lea.vmem %s6, %s1709
      $region64: #{ae_forward.23} parent=59 // pred_fallthru
        _
    $region60: #{ae_forward.23} parent=5 // pred_fallthru
      _
  $region6: #{ae_forward.23} parent=0 // loop_footer
    %s16 = sadd.s32 1, %s12
  $region7: #{ae_forward.23} parent=0 // loop_footer_branch
    %11 = sbr.rel target = $region3
  $region8: #{ae_forward.23} parent=0 // loop_exit
    _

</llo_original>
